<compile_context>
chip_gen: v6e
topology: v6e:2x2x1
jax: 0.10.0
libtpu: 0.0.40
codegen_flags: <defaults>
</compile_context>

<pallas_src>
import functools

import jax
import jax.numpy as jnp
from jax import lax
from jax.experimental import pallas as pl
from jax.experimental.pallas import tpu as pltpu


# 3x3 tap offsets, dy-major: tap index k = (dy + 1) * 3 + (dx + 1).
_OFFSETS = tuple((dy, dx) for dy in (-1, 0, 1) for dx in (-1, 0, 1))

# Stage geometry and per-conv channel padding (cin_pad, cout_pad).
_STAGE_HW = ((32, 32), (16, 16), (8, 8))
_CONV_CFG = ((3, 8), (8, 8), (8, 10), (10, 10), (10, 16), (16, 16))
_CONV_PAD = ((8, 8), (8, 8), (8, 16), (16, 16), (16, 16), (16, 16))
_FC_CFG = ((16 * 4 * 4, 512), (512, 128), (128, 10))


# ---------------------------------------------------------------------------
# In-kernel helpers.
# ---------------------------------------------------------------------------
def _edge_masks(H, W):
    """Zero-padding masks (one per 3x3 tap) over the flattened H*W lane axis."""
    M = H * W
    lane = lax.broadcasted_iota(jnp.int32, (1, M), 1)
    x = lane & (W - 1)                       # H, W are powers of two
    y = lane >> (W.bit_length() - 1)
    masks = []
    for dy, dx in _OFFSETS:
        conds = []
        if dx == -1:
            conds.append(x >= 1)
        elif dx == 1:
            conds.append(x <= W - 2)
        if dy == -1:
            conds.append(y >= 1)
        elif dy == 1:
            conds.append(y <= H - 2)
        m = None
        for c in conds:
            m = c if m is None else jnp.logical_and(m, c)
        masks.append(m)                      # None for the centre tap
    return masks


def _conv3x3_relu(act, w_ref, b_ref, masks, W):
    """3x3 same-conv + bias + ReLU on a (Cp, H*W) f32 activation.

    One MXU matmul with contraction K = 9*Cp: the im2col slab is 9 lane-rolled,
    boundary-masked copies of `act` stacked along sublanes (Cp is 8/16, so
    every piece is sublane aligned and the concat is free of shifts).
    """
    M = act.shape[1]
    pieces = []
    for k, (dy, dx) in enumerate(_OFFSETS):
        s = dy * W + dx
        shifted = act if s == 0 else pltpu.roll(act, (-s) % M, axis=1)
        pieces.append(shifted if masks[k] is None
                      else jnp.where(masks[k], shifted, 0.0))
    slab = jnp.concatenate(pieces, axis=0).astype(jnp.bfloat16)   # (9*Cp, M)
    y = jnp.dot(w_ref[...], slab, preferred_element_type=jnp.float32)
    return jnp.maximum(y + b_ref[...], 0.0)                       # (Cout_p, M)


def _pool2x2(y, sel_ref, W):
    """2x2 / stride-2 max-pool of (Cp, H*W) f32 -> (Cp, (H/2)*(W/2)) f32."""
    M = y.shape[1]
    t = jnp.maximum(y, pltpu.roll(y, M - 1, axis=1))   # max(y[m], y[m+1])
    t = jnp.maximum(t, pltpu.roll(t, M - W, axis=1))   # ... and the row below
    # TODO(synk): replace the one-hot compaction matmul with a strided lane
    # compaction once that is guaranteed portable across Mosaic generations;
    # the matmul is the known-good path and all of it stays in VMEM.
    return jnp.dot(t.astype(jnp.bfloat16), sel_ref[...],
                   preferred_element_type=jnp.float32)


# ---------------------------------------------------------------------------
# The fused whole-network kernel.
# ---------------------------------------------------------------------------
def _cifar10_kernel(x_ref,
                    w11, b11, w12, b12, sel1,
                    w21, b21, w22, b22, sel2,
                    w31, b31, w32, b32, sel3,
                    wf1, bf1, wf2, bf2, wf3, bf3,
                    o_ref, feats_ref, *, batch_block):
    B = batch_block
    masks1 = _edge_masks(32, 32)
    masks2 = _edge_masks(16, 16)
    masks3 = _edge_masks(8, 8)

    # Conv trunk: B images per grid step; the loop bounds per-image live ranges.
    @pl.loop(0, B)
    def _(b):
        h = x_ref[b].astype(jnp.float32)              # (8, 1024), ch 3..7 zero
        h = _conv3x3_relu(h, w11, b11, masks1, 32)    # (8, 1024)
        h = _conv3x3_relu(h, w12, b12, masks1, 32)
        h = _pool2x2(h, sel1, 32)                     # (8, 256)
        h = _conv3x3_relu(h, w21, b21, masks2, 16)    # (16, 256)
        h = _conv3x3_relu(h, w22, b22, masks2, 16)
        h = _pool2x2(h, sel2, 16)                     # (16, 64)
        h = _conv3x3_relu(h, w31, b31, masks3, 8)     # (16, 64)
        h = _conv3x3_relu(h, w32, b32, masks3, 8)
        feats_ref[b] = _pool2x2(h, sel3, 8)           # (16, 16) channel-major

    # FC head over the whole batch block.  Linear(256, 512) decomposed per
    # channel so no in-kernel (16,16)->(256,) flatten/relayout is needed:
    #   Y1[b, o] = sum_c feats[b, c, :] @ W1[c, :, o]
    acc = jnp.zeros((B, 512), jnp.float32)
    for c in range(16):
        xc = feats_ref[:, c, :].astype(jnp.bfloat16)              # (B, 16)
        acc = acc + jnp.dot(xc, wf1[c], preferred_element_type=jnp.float32)
    h = jnp.maximum(acc + bf1[...], 0.0).astype(jnp.bfloat16)     # (B, 512)
    h = jnp.dot(h, wf2[...], preferred_element_type=jnp.float32) + bf2[...]
    h = jnp.maximum(h, 0.0).astype(jnp.bfloat16)                  # (B, 128)
    out = jnp.dot(h, wf3[...], preferred_element_type=jnp.float32) + bf3[...]
    o_ref[0] = out.astype(o_ref.dtype)                            # (B, 128)


# ---------------------------------------------------------------------------
# Wrapper.
# ---------------------------------------------------------------------------
def _pick_batch_block(n, target=32):
    """Largest divisor of n that is <= target; prefer >= 2 grid steps (v7x)."""
    best = 1
    for b in range(1, min(n, target) + 1):
        if n % b == 0:
            best = b
    if best == n and n > 1:
        for b in range(min(n - 1, target), 0, -1):
            if n % b == 0:
                return b
    return best


@functools.partial(jax.jit, static_argnames=("batch_block",))
def cifar10_cnn_forward(x_nchw, params, *, batch_block=None):
    """Cifar10CnnModel.forward: (N, 3, 32, 32) f32 -> (N, 10) f32 logits."""
    N = x_nchw.shape[0]
    B = _pick_batch_block(N) if batch_block is None else batch_block
    assert N % B == 0, "batch_block must divide the batch size"

    # NCHW -> channel-major (N, C, H*W) (free reshape) and zero-pad the input
    # channels 3 -> 8 so the first conv slab is sublane aligned (K = 72).
    x = x_nchw.astype(jnp.float32).reshape(N, 3, 32 * 32)
    x = jnp.pad(x, ((0, 0), (0, 5), (0, 0)))

    def full_spec(a):
        nd = a.ndim
        return pl.BlockSpec(a.shape, lambda i, nd=nd: (0,) * nd)

    kernel = functools.partial(_cifar10_kernel, batch_block=B)
    out = pl.pallas_call(
        kernel,
        out_shape=jax.ShapeDtypeStruct((N // B, B, 128), jnp.float32),
        grid=(N // B,),
        in_specs=[pl.BlockSpec((B, 8, 1024), lambda i: (i, 0, 0))]
                 + [full_spec(a) for a in params],
        out_specs=pl.BlockSpec((1, B, 128), lambda i: (i, 0, 0)),
        scratch_shapes=[pltpu.VMEM((B, 16, 16), jnp.float32)],
        compiler_params=pltpu.CompilerParams(
            dimension_semantics=("parallel",),
            vmem_limit_bytes=32 * 1024 * 1024),
    )(x, *params)
    # Lane-dense padded logits -> (N, 10); reshape and slice are trivial.
    return out.reshape(N, 128)[:, :10]


# ---------------------------------------------------------------------------
# Parameter construction / packing (done once, outside the kernel).
# ---------------------------------------------------------------------------
def init_raw_params(key):
    """PyTorch-default-like init in the original torch layouts (all f32)."""
    keys = jax.random.split(key, len(_CONV_CFG) + len(_FC_CFG))
    convs, fcs = [], []
    for i, (cin, cout) in enumerate(_CONV_CFG):
        k1, k2 = jax.random.split(keys[i])
        bound = 1.0 / (cin * 9) ** 0.5
        convs.append((jax.random.uniform(k1, (cout, cin, 3, 3), jnp.float32,
                                         -bound, bound),
                      jax.random.uniform(k2, (cout,), jnp.float32,
                                         -bound, bound)))
    for i, (cin, cout) in enumerate(_FC_CFG):
        k1, k2 = jax.random.split(keys[len(_CONV_CFG) + i])
        bound = 1.0 / cin ** 0.5
        fcs.append((jax.random.uniform(k1, (cout, cin), jnp.float32,
                                       -bound, bound),
                    jax.random.uniform(k2, (cout,), jnp.float32,
                                       -bound, bound)))
    return {"convs": convs, "fcs": fcs}


def _pack_conv(w, b, cin_pad, cout_pad):
    """torch Conv2d weight (Cout, Cin, 3, 3) -> tap-major (Cout_p, 9*Cin_p) bf16."""
    cout, cin = w.shape[:2]
    w9 = jnp.transpose(w.reshape(cout, cin, 9), (0, 2, 1))        # (cout, 9, cin)
    wp = jnp.zeros((cout_pad, 9, cin_pad), jnp.float32).at[:cout, :, :cin].set(w9)
    bp = jnp.zeros((cout_pad, 1), jnp.float32).at[:cout, 0].set(b)
    return wp.reshape(cout_pad, 9 * cin_pad).astype(jnp.bfloat16), bp


def _pool_selector(H, W):
    """One-hot (H*W, (H/2)*(W/2)) matrix picking the (even y, even x) columns."""
    Ho, Wo = H // 2, W // 2
    q = jnp.arange(Ho * Wo)
    src = 2 * (q // Wo) * W + 2 * (q % Wo)
    sel = jnp.zeros((H * W, Ho * Wo), jnp.float32).at[src, q].set(1.0)
    return sel.astype(jnp.bfloat16)


def pack_params(raw):
    """Repack torch-layout weights into the kernel operand layouts (once)."""
    packed = []
    for s, (H, W) in enumerate(_STAGE_HW):
        for j in range(2):
            idx = 2 * s + j
            w, b = raw["convs"][idx]
            packed.extend(_pack_conv(w, b, *_CONV_PAD[idx]))
        packed.append(_pool_selector(H, W))
    (w1, b1), (w2, b2), (w3, b3) = raw["fcs"]
    packed.append(jnp.transpose(w1).reshape(16, 16, 512).astype(jnp.bfloat16))
    packed.append(b1.reshape(1, 512).astype(jnp.float32))
    packed.append(jnp.transpose(w2).astype(jnp.bfloat16))          # (512, 128)
    packed.append(b2.reshape(1, 128).astype(jnp.float32))
    w3p = jnp.zeros((128, 128), jnp.float32).at[:, :10].set(jnp.transpose(w3))
    b3p = jnp.zeros((1, 128), jnp.float32).at[0, :10].set(b3)
    packed.append(w3p.astype(jnp.bfloat16))
    packed.append(b3p)
    return tuple(packed)


# ---------------------------------------------------------------------------
# Pure-JAX f32 reference of Cifar10CnnModel.forward (for a sanity check).
# ---------------------------------------------------------------------------
def reference_forward(x, raw):
    h = x.astype(jnp.float32)
    for i, (w, b) in enumerate(raw["convs"]):
        h = lax.conv_general_dilated(
            h, w, window_strides=(1, 1), padding="SAME",
            dimension_numbers=("NCHW", "OIHW", "NCHW"),
            precision=lax.Precision.HIGHEST)
        h = jax.nn.relu(h + b.reshape(1, -1, 1, 1))
        if i % 2 == 1:
            h = lax.reduce_window(h, -jnp.inf, lax.max,
                                  (1, 1, 2, 2), (1, 1, 2, 2), "VALID")
    h = h.reshape(h.shape[0], -1)
    for i, (w, b) in enumerate(raw["fcs"]):
        h = jnp.dot(h, w.T, precision=lax.Precision.HIGHEST) + b
        if i < len(raw["fcs"]) - 1:
            h = jax.nn.relu(h)
    return h


if __name__ == "__main__":
    key = jax.random.PRNGKey(0)
    pkey, xkey = jax.random.split(key)
    raw = init_raw_params(pkey)
    params = pack_params(raw)

    # CIFAR-10 geometry (3x32x32) is fixed by the Linear(16*4*4, 512) layer;
    # batch of 8 -> block of 4 images per grid step, 2 grid steps.
    x = jax.random.normal(xkey, (8, 3, 32, 32), dtype=jnp.float32)

    out = jax.block_until_ready(cifar10_cnn_forward(x, params))
    assert out.shape == (8, 10) and out.dtype == jnp.float32
    assert bool(jnp.isfinite(out).all())

    # Loose tolerance: kernel matmuls are bf16 x bf16 with f32 accumulation.
    ref = reference_forward(x, raw)
    diff = float(jnp.max(jnp.abs(out - ref)))
    scale = float(jnp.max(jnp.abs(ref)))
    assert diff < 0.02 + 0.02 * scale, \
        f"kernel/reference mismatch: max abs diff {diff:.4f} (scale {scale:.4f})"
    print("KERNEL_OK")
</pallas_src>

<mosaic_0001>
module attributes {stable_mosaic.version = 11 : i64} {
  func.func @_cifar10_kernel(%arg0: i32, %arg1: memref<4x8x1024xf32, #tpu.memory_space<vmem>>, %arg2: memref<8x72xbf16, #tpu.memory_space<vmem>>, %arg3: memref<8x1xf32, #tpu.memory_space<vmem>>, %arg4: memref<8x72xbf16, #tpu.memory_space<vmem>>, %arg5: memref<8x1xf32, #tpu.memory_space<vmem>>, %arg6: memref<1024x256xbf16, #tpu.memory_space<vmem>>, %arg7: memref<16x72xbf16, #tpu.memory_space<vmem>>, %arg8: memref<16x1xf32, #tpu.memory_space<vmem>>, %arg9: memref<16x144xbf16, #tpu.memory_space<vmem>>, %arg10: memref<16x1xf32, #tpu.memory_space<vmem>>, %arg11: memref<256x64xbf16, #tpu.memory_space<vmem>>, %arg12: memref<16x144xbf16, #tpu.memory_space<vmem>>, %arg13: memref<16x1xf32, #tpu.memory_space<vmem>>, %arg14: memref<16x144xbf16, #tpu.memory_space<vmem>>, %arg15: memref<16x1xf32, #tpu.memory_space<vmem>>, %arg16: memref<64x16xbf16, #tpu.memory_space<vmem>>, %arg17: memref<16x16x512xbf16, #tpu.memory_space<vmem>>, %arg18: memref<1x512xf32, #tpu.memory_space<vmem>>, %arg19: memref<512x128xbf16, #tpu.memory_space<vmem>>, %arg20: memref<1x128xf32, #tpu.memory_space<vmem>>, %arg21: memref<128x128xbf16, #tpu.memory_space<vmem>>, %arg22: memref<1x128xf32, #tpu.memory_space<vmem>>, %arg23: memref<1x4x128xf32, #tpu.memory_space<vmem>>, %arg24: memref<4x16x16xf32, #tpu.memory_space<vmem>>) attributes {dimension_semantics = [#tpu.dimension_semantics<parallel>], iteration_bounds = array<i64: 2>, scalar_prefetch = 0 : i64, scratch_operands = 1 : i64, tpu.core_type = #tpu.core_type<tc>, window_params = [{transform_indices = @transform_0, window_bounds = array<i64: 4, 8, 1024>}, {pipeline_mode = #tpu.pipeline_mode<synchronous>, transform_indices = @transform_1, window_bounds = array<i64: 8, 72>}, {pipeline_mode = #tpu.pipeline_mode<synchronous>, transform_indices = @transform_2, window_bounds = array<i64: 8, 1>}, {pipeline_mode = #tpu.pipeline_mode<synchronous>, transform_indices = @transform_3, window_bounds = array<i64: 8, 72>}, {pipeline_mode = #tpu.pipeline_mode<synchronous>, transform_indices = @transform_4, window_bounds = array<i64: 8, 1>}, {pipeline_mode = #tpu.pipeline_mode<synchronous>, transform_indices = @transform_5, window_bounds = array<i64: 1024, 256>}, {pipeline_mode = #tpu.pipeline_mode<synchronous>, transform_indices = @transform_6, window_bounds = array<i64: 16, 72>}, {pipeline_mode = #tpu.pipeline_mode<synchronous>, transform_indices = @transform_7, window_bounds = array<i64: 16, 1>}, {pipeline_mode = #tpu.pipeline_mode<synchronous>, transform_indices = @transform_8, window_bounds = array<i64: 16, 144>}, {pipeline_mode = #tpu.pipeline_mode<synchronous>, transform_indices = @transform_9, window_bounds = array<i64: 16, 1>}, {pipeline_mode = #tpu.pipeline_mode<synchronous>, transform_indices = @transform_10, window_bounds = array<i64: 256, 64>}, {pipeline_mode = #tpu.pipeline_mode<synchronous>, transform_indices = @transform_11, window_bounds = array<i64: 16, 144>}, {pipeline_mode = #tpu.pipeline_mode<synchronous>, transform_indices = @transform_12, window_bounds = array<i64: 16, 1>}, {pipeline_mode = #tpu.pipeline_mode<synchronous>, transform_indices = @transform_13, window_bounds = array<i64: 16, 144>}, {pipeline_mode = #tpu.pipeline_mode<synchronous>, transform_indices = @transform_14, window_bounds = array<i64: 16, 1>}, {pipeline_mode = #tpu.pipeline_mode<synchronous>, transform_indices = @transform_15, window_bounds = array<i64: 64, 16>}, {pipeline_mode = #tpu.pipeline_mode<synchronous>, transform_indices = @transform_16, window_bounds = array<i64: 16, 16, 512>}, {pipeline_mode = #tpu.pipeline_mode<synchronous>, transform_indices = @transform_17, window_bounds = array<i64: 1, 512>}, {pipeline_mode = #tpu.pipeline_mode<synchronous>, transform_indices = @transform_18, window_bounds = array<i64: 512, 128>}, {pipeline_mode = #tpu.pipeline_mode<synchronous>, transform_indices = @transform_19, window_bounds = array<i64: 1, 128>}, {pipeline_mode = #tpu.pipeline_mode<synchronous>, transform_indices = @transform_20, window_bounds = array<i64: 128, 128>}, {pipeline_mode = #tpu.pipeline_mode<synchronous>, transform_indices = @transform_21, window_bounds = array<i64: 1, 128>}, {transform_indices = @transform_22, window_bounds = array<i64: 1, 4, 128>}]} {
    %0 = tpu.iota {dimensions = array<i32: 1>} : vector<1x1024xi32>
    %c31_i32 = arith.constant 31 : i32
    %1 = vector.broadcast %c31_i32 : i32 to vector<1x1024xi32>
    %2 = arith.andi %0, %1 : vector<1x1024xi32>
    %c5_i32 = arith.constant 5 : i32
    %3 = vector.broadcast %c5_i32 : i32 to vector<1x1024xi32>
    %4 = arith.shrsi %0, %3 : vector<1x1024xi32>
    %c1_i32 = arith.constant 1 : i32
    %5 = vector.broadcast %c1_i32 : i32 to vector<1x1024xi32>
    %6 = arith.cmpi sge, %2, %5 : vector<1x1024xi32>
    %c1_i32_0 = arith.constant 1 : i32
    %7 = vector.broadcast %c1_i32_0 : i32 to vector<1x1024xi32>
    %8 = arith.cmpi sge, %4, %7 : vector<1x1024xi32>
    %9 = arith.andi %6, %8 : vector<1x1024xi1>
    %c1_i32_1 = arith.constant 1 : i32
    %10 = vector.broadcast %c1_i32_1 : i32 to vector<1x1024xi32>
    %11 = arith.cmpi sge, %4, %10 : vector<1x1024xi32>
    %c30_i32 = arith.constant 30 : i32
    %12 = vector.broadcast %c30_i32 : i32 to vector<1x1024xi32>
    %13 = arith.cmpi sle, %2, %12 : vector<1x1024xi32>
    %c1_i32_2 = arith.constant 1 : i32
    %14 = vector.broadcast %c1_i32_2 : i32 to vector<1x1024xi32>
    %15 = arith.cmpi sge, %4, %14 : vector<1x1024xi32>
    %16 = arith.andi %13, %15 : vector<1x1024xi1>
    %c1_i32_3 = arith.constant 1 : i32
    %17 = vector.broadcast %c1_i32_3 : i32 to vector<1x1024xi32>
    %18 = arith.cmpi sge, %2, %17 : vector<1x1024xi32>
    %c30_i32_4 = arith.constant 30 : i32
    %19 = vector.broadcast %c30_i32_4 : i32 to vector<1x1024xi32>
    %20 = arith.cmpi sle, %2, %19 : vector<1x1024xi32>
    %c1_i32_5 = arith.constant 1 : i32
    %21 = vector.broadcast %c1_i32_5 : i32 to vector<1x1024xi32>
    %22 = arith.cmpi sge, %2, %21 : vector<1x1024xi32>
    %c30_i32_6 = arith.constant 30 : i32
    %23 = vector.broadcast %c30_i32_6 : i32 to vector<1x1024xi32>
    %24 = arith.cmpi sle, %4, %23 : vector<1x1024xi32>
    %25 = arith.andi %22, %24 : vector<1x1024xi1>
    %c30_i32_7 = arith.constant 30 : i32
    %26 = vector.broadcast %c30_i32_7 : i32 to vector<1x1024xi32>
    %27 = arith.cmpi sle, %4, %26 : vector<1x1024xi32>
    %c30_i32_8 = arith.constant 30 : i32
    %28 = vector.broadcast %c30_i32_8 : i32 to vector<1x1024xi32>
    %29 = arith.cmpi sle, %2, %28 : vector<1x1024xi32>
    %c30_i32_9 = arith.constant 30 : i32
    %30 = vector.broadcast %c30_i32_9 : i32 to vector<1x1024xi32>
    %31 = arith.cmpi sle, %4, %30 : vector<1x1024xi32>
    %32 = arith.andi %29, %31 : vector<1x1024xi1>
    %33 = tpu.iota {dimensions = array<i32: 1>} : vector<1x256xi32>
    %c15_i32 = arith.constant 15 : i32
    %34 = vector.broadcast %c15_i32 : i32 to vector<1x256xi32>
    %35 = arith.andi %33, %34 : vector<1x256xi32>
    %c4_i32 = arith.constant 4 : i32
    %36 = vector.broadcast %c4_i32 : i32 to vector<1x256xi32>
    %37 = arith.shrsi %33, %36 : vector<1x256xi32>
    %c1_i32_10 = arith.constant 1 : i32
    %38 = vector.broadcast %c1_i32_10 : i32 to vector<1x256xi32>
    %39 = arith.cmpi sge, %35, %38 : vector<1x256xi32>
    %c1_i32_11 = arith.constant 1 : i32
    %40 = vector.broadcast %c1_i32_11 : i32 to vector<1x256xi32>
    %41 = arith.cmpi sge, %37, %40 : vector<1x256xi32>
    %42 = arith.andi %39, %41 : vector<1x256xi1>
    %c1_i32_12 = arith.constant 1 : i32
    %43 = vector.broadcast %c1_i32_12 : i32 to vector<1x256xi32>
    %44 = arith.cmpi sge, %37, %43 : vector<1x256xi32>
    %c14_i32 = arith.constant 14 : i32
    %45 = vector.broadcast %c14_i32 : i32 to vector<1x256xi32>
    %46 = arith.cmpi sle, %35, %45 : vector<1x256xi32>
    %c1_i32_13 = arith.constant 1 : i32
    %47 = vector.broadcast %c1_i32_13 : i32 to vector<1x256xi32>
    %48 = arith.cmpi sge, %37, %47 : vector<1x256xi32>
    %49 = arith.andi %46, %48 : vector<1x256xi1>
    %c1_i32_14 = arith.constant 1 : i32
    %50 = vector.broadcast %c1_i32_14 : i32 to vector<1x256xi32>
    %51 = arith.cmpi sge, %35, %50 : vector<1x256xi32>
    %c14_i32_15 = arith.constant 14 : i32
    %52 = vector.broadcast %c14_i32_15 : i32 to vector<1x256xi32>
    %53 = arith.cmpi sle, %35, %52 : vector<1x256xi32>
    %c1_i32_16 = arith.constant 1 : i32
    %54 = vector.broadcast %c1_i32_16 : i32 to vector<1x256xi32>
    %55 = arith.cmpi sge, %35, %54 : vector<1x256xi32>
    %c14_i32_17 = arith.constant 14 : i32
    %56 = vector.broadcast %c14_i32_17 : i32 to vector<1x256xi32>
    %57 = arith.cmpi sle, %37, %56 : vector<1x256xi32>
    %58 = arith.andi %55, %57 : vector<1x256xi1>
    %c14_i32_18 = arith.constant 14 : i32
    %59 = vector.broadcast %c14_i32_18 : i32 to vector<1x256xi32>
    %60 = arith.cmpi sle, %37, %59 : vector<1x256xi32>
    %c14_i32_19 = arith.constant 14 : i32
    %61 = vector.broadcast %c14_i32_19 : i32 to vector<1x256xi32>
    %62 = arith.cmpi sle, %35, %61 : vector<1x256xi32>
    %c14_i32_20 = arith.constant 14 : i32
    %63 = vector.broadcast %c14_i32_20 : i32 to vector<1x256xi32>
    %64 = arith.cmpi sle, %37, %63 : vector<1x256xi32>
    %65 = arith.andi %62, %64 : vector<1x256xi1>
    %66 = tpu.iota {dimensions = array<i32: 1>} : vector<1x64xi32>
    %c7_i32 = arith.constant 7 : i32
    %67 = vector.broadcast %c7_i32 : i32 to vector<1x64xi32>
    %68 = arith.andi %66, %67 : vector<1x64xi32>
    %c3_i32 = arith.constant 3 : i32
    %69 = vector.broadcast %c3_i32 : i32 to vector<1x64xi32>
    %70 = arith.shrsi %66, %69 : vector<1x64xi32>
    %c1_i32_21 = arith.constant 1 : i32
    %71 = vector.broadcast %c1_i32_21 : i32 to vector<1x64xi32>
    %72 = arith.cmpi sge, %68, %71 : vector<1x64xi32>
    %c1_i32_22 = arith.constant 1 : i32
    %73 = vector.broadcast %c1_i32_22 : i32 to vector<1x64xi32>
    %74 = arith.cmpi sge, %70, %73 : vector<1x64xi32>
    %75 = arith.andi %72, %74 : vector<1x64xi1>
    %c1_i32_23 = arith.constant 1 : i32
    %76 = vector.broadcast %c1_i32_23 : i32 to vector<1x64xi32>
    %77 = arith.cmpi sge, %70, %76 : vector<1x64xi32>
    %c6_i32 = arith.constant 6 : i32
    %78 = vector.broadcast %c6_i32 : i32 to vector<1x64xi32>
    %79 = arith.cmpi sle, %68, %78 : vector<1x64xi32>
    %c1_i32_24 = arith.constant 1 : i32
    %80 = vector.broadcast %c1_i32_24 : i32 to vector<1x64xi32>
    %81 = arith.cmpi sge, %70, %80 : vector<1x64xi32>
    %82 = arith.andi %79, %81 : vector<1x64xi1>
    %c1_i32_25 = arith.constant 1 : i32
    %83 = vector.broadcast %c1_i32_25 : i32 to vector<1x64xi32>
    %84 = arith.cmpi sge, %68, %83 : vector<1x64xi32>
    %c6_i32_26 = arith.constant 6 : i32
    %85 = vector.broadcast %c6_i32_26 : i32 to vector<1x64xi32>
    %86 = arith.cmpi sle, %68, %85 : vector<1x64xi32>
    %c1_i32_27 = arith.constant 1 : i32
    %87 = vector.broadcast %c1_i32_27 : i32 to vector<1x64xi32>
    %88 = arith.cmpi sge, %68, %87 : vector<1x64xi32>
    %c6_i32_28 = arith.constant 6 : i32
    %89 = vector.broadcast %c6_i32_28 : i32 to vector<1x64xi32>
    %90 = arith.cmpi sle, %70, %89 : vector<1x64xi32>
    %91 = arith.andi %88, %90 : vector<1x64xi1>
    %c6_i32_29 = arith.constant 6 : i32
    %92 = vector.broadcast %c6_i32_29 : i32 to vector<1x64xi32>
    %93 = arith.cmpi sle, %70, %92 : vector<1x64xi32>
    %c6_i32_30 = arith.constant 6 : i32
    %94 = vector.broadcast %c6_i32_30 : i32 to vector<1x64xi32>
    %95 = arith.cmpi sle, %68, %94 : vector<1x64xi32>
    %c6_i32_31 = arith.constant 6 : i32
    %96 = vector.broadcast %c6_i32_31 : i32 to vector<1x64xi32>
    %97 = arith.cmpi sle, %70, %96 : vector<1x64xi32>
    %98 = arith.andi %95, %97 : vector<1x64xi1>
    %c0_i32 = arith.constant 0 : i32
    %c4_i32_32 = arith.constant 4 : i32
    %99 = arith.addi %c0_i32, %c4_i32_32 : i32
    %c1_i32_33 = arith.constant 1 : i32
    scf.for %arg25 = %c0_i32 to %99 step %c1_i32_33  : i32 {
      %c1_i32_148 = arith.constant 1 : i32
      %235 = arith.muli %arg25, %c1_i32_148 : i32
      %c0_i32_149 = arith.constant 0 : i32
      %236 = arith.addi %c0_i32_149, %235 : i32
      %237 = arith.index_cast %236 : i32 to index
      %c0_150 = arith.constant 0 : index
      %c0_151 = arith.constant 0 : index
      %238 = vector.load %arg1[%237, %c0_150, %c0_151] : memref<4x8x1024xf32, #tpu.memory_space<vmem>>, vector<1x8x1024xf32>
      %239 = vector.shape_cast %238 : vector<1x8x1024xf32> to vector<8x1024xf32>
      %c33_i32 = arith.constant 33 : i32
      %240 = tpu.dynamic_rotate %239 by %c33_i32 dim 1 : vector<8x1024xf32>, i32 -> vector<8x1024xf32>
      %cst_152 = arith.constant 0.000000e+00 : f32
      %241 = vector.shape_cast %9 : vector<1x1024xi1> to vector<1x1024xi1>
      %242 = vector.broadcast %241 : vector<1x1024xi1> to vector<8x1024xi1>
      %243 = vector.broadcast %cst_152 : f32 to vector<8x1024xf32>
      %244 = arith.select %242, %240, %243 : vector<8x1024xi1>, vector<8x1024xf32>
      %c32_i32 = arith.constant 32 : i32
      %245 = tpu.dynamic_rotate %239 by %c32_i32 dim 1 : vector<8x1024xf32>, i32 -> vector<8x1024xf32>
      %cst_153 = arith.constant 0.000000e+00 : f32
      %246 = vector.shape_cast %11 : vector<1x1024xi1> to vector<1x1024xi1>
      %247 = vector.broadcast %246 : vector<1x1024xi1> to vector<8x1024xi1>
      %248 = vector.broadcast %cst_153 : f32 to vector<8x1024xf32>
      %249 = arith.select %247, %245, %248 : vector<8x1024xi1>, vector<8x1024xf32>
      %c31_i32_154 = arith.constant 31 : i32
      %250 = tpu.dynamic_rotate %239 by %c31_i32_154 dim 1 : vector<8x1024xf32>, i32 -> vector<8x1024xf32>
      %cst_155 = arith.constant 0.000000e+00 : f32
      %251 = vector.shape_cast %16 : vector<1x1024xi1> to vector<1x1024xi1>
      %252 = vector.broadcast %251 : vector<1x1024xi1> to vector<8x1024xi1>
      %253 = vector.broadcast %cst_155 : f32 to vector<8x1024xf32>
      %254 = arith.select %252, %250, %253 : vector<8x1024xi1>, vector<8x1024xf32>
      %c1_i32_156 = arith.constant 1 : i32
      %255 = tpu.dynamic_rotate %239 by %c1_i32_156 dim 1 : vector<8x1024xf32>, i32 -> vector<8x1024xf32>
      %cst_157 = arith.constant 0.000000e+00 : f32
      %256 = vector.shape_cast %18 : vector<1x1024xi1> to vector<1x1024xi1>
      %257 = vector.broadcast %256 : vector<1x1024xi1> to vector<8x1024xi1>
      %258 = vector.broadcast %cst_157 : f32 to vector<8x1024xf32>
      %259 = arith.select %257, %255, %258 : vector<8x1024xi1>, vector<8x1024xf32>
      %c1023_i32 = arith.constant 1023 : i32
      %260 = tpu.dynamic_rotate %239 by %c1023_i32 dim 1 : vector<8x1024xf32>, i32 -> vector<8x1024xf32>
      %cst_158 = arith.constant 0.000000e+00 : f32
      %261 = vector.shape_cast %20 : vector<1x1024xi1> to vector<1x1024xi1>
      %262 = vector.broadcast %261 : vector<1x1024xi1> to vector<8x1024xi1>
      %263 = vector.broadcast %cst_158 : f32 to vector<8x1024xf32>
      %264 = arith.select %262, %260, %263 : vector<8x1024xi1>, vector<8x1024xf32>
      %c993_i32 = arith.constant 993 : i32
      %265 = tpu.dynamic_rotate %239 by %c993_i32 dim 1 : vector<8x1024xf32>, i32 -> vector<8x1024xf32>
      %cst_159 = arith.constant 0.000000e+00 : f32
      %266 = vector.shape_cast %25 : vector<1x1024xi1> to vector<1x1024xi1>
      %267 = vector.broadcast %266 : vector<1x1024xi1> to vector<8x1024xi1>
      %268 = vector.broadcast %cst_159 : f32 to vector<8x1024xf32>
      %269 = arith.select %267, %265, %268 : vector<8x1024xi1>, vector<8x1024xf32>
      %c992_i32 = arith.constant 992 : i32
      %270 = tpu.dynamic_rotate %239 by %c992_i32 dim 1 : vector<8x1024xf32>, i32 -> vector<8x1024xf32>
      %cst_160 = arith.constant 0.000000e+00 : f32
      %271 = vector.shape_cast %27 : vector<1x1024xi1> to vector<1x1024xi1>
      %272 = vector.broadcast %271 : vector<1x1024xi1> to vector<8x1024xi1>
      %273 = vector.broadcast %cst_160 : f32 to vector<8x1024xf32>
      %274 = arith.select %272, %270, %273 : vector<8x1024xi1>, vector<8x1024xf32>
      %c991_i32 = arith.constant 991 : i32
      %275 = tpu.dynamic_rotate %239 by %c991_i32 dim 1 : vector<8x1024xf32>, i32 -> vector<8x1024xf32>
      %cst_161 = arith.constant 0.000000e+00 : f32
      %276 = vector.shape_cast %32 : vector<1x1024xi1> to vector<1x1024xi1>
      %277 = vector.broadcast %276 : vector<1x1024xi1> to vector<8x1024xi1>
      %278 = vector.broadcast %cst_161 : f32 to vector<8x1024xf32>
      %279 = arith.select %277, %275, %278 : vector<8x1024xi1>, vector<8x1024xf32>
      %280 = tpu.concatenate %244, %249, %254, %259, %239, %264, %269, %274, %279 in 0 : vector<8x1024xf32>, vector<8x1024xf32>, vector<8x1024xf32>, vector<8x1024xf32>, vector<8x1024xf32>, vector<8x1024xf32>, vector<8x1024xf32>, vector<8x1024xf32>, vector<8x1024xf32> -> vector<72x1024xf32>
      %281 = arith.truncf %280 : vector<72x1024xf32> to vector<72x1024xbf16>
      %c0_162 = arith.constant 0 : index
      %c0_163 = arith.constant 0 : index
      %282 = vector.load %arg2[%c0_162, %c0_163] : memref<8x72xbf16, #tpu.memory_space<vmem>>, vector<8x72xbf16>
      %cst_164 = arith.constant dense<0.000000e+00> : vector<8x1024xf32>
      %283 = tpu.matmul %282, %281, %cst_164 {dimension_numbers = #tpu.dot_dimension_numbers<[1], [0], [0], [1], [0, 0, 1, 1], [], []>} : vector<8x72xbf16>, vector<72x1024xbf16>, vector<8x1024xf32> -> vector<8x1024xf32>
      %c0_165 = arith.constant 0 : index
      %c0_166 = arith.constant 0 : index
      %284 = vector.load %arg3[%c0_165, %c0_166] : memref<8x1xf32, #tpu.memory_space<vmem>>, vector<8x1xf32>
      %285 = vector.broadcast %284 : vector<8x1xf32> to vector<8x1024xf32>
      %286 = arith.addf %283, %285 : vector<8x1024xf32>
      %cst_167 = arith.constant 0.000000e+00 : f32
      %287 = vector.broadcast %cst_167 : f32 to vector<8x1024xf32>
      %288 = arith.maximumf %286, %287 : vector<8x1024xf32>
      %c33_i32_168 = arith.constant 33 : i32
      %289 = tpu.dynamic_rotate %288 by %c33_i32_168 dim 1 : vector<8x1024xf32>, i32 -> vector<8x1024xf32>
      %cst_169 = arith.constant 0.000000e+00 : f32
      %290 = vector.shape_cast %9 : vector<1x1024xi1> to vector<1x1024xi1>
      %291 = vector.broadcast %290 : vector<1x1024xi1> to vector<8x1024xi1>
      %292 = vector.broadcast %cst_169 : f32 to vector<8x1024xf32>
      %293 = arith.select %291, %289, %292 : vector<8x1024xi1>, vector<8x1024xf32>
      %c32_i32_170 = arith.constant 32 : i32
      %294 = tpu.dynamic_rotate %288 by %c32_i32_170 dim 1 : vector<8x1024xf32>, i32 -> vector<8x1024xf32>
      %cst_171 = arith.constant 0.000000e+00 : f32
      %295 = vector.shape_cast %11 : vector<1x1024xi1> to vector<1x1024xi1>
      %296 = vector.broadcast %295 : vector<1x1024xi1> to vector<8x1024xi1>
      %297 = vector.broadcast %cst_171 : f32 to vector<8x1024xf32>
      %298 = arith.select %296, %294, %297 : vector<8x1024xi1>, vector<8x1024xf32>
      %c31_i32_172 = arith.constant 31 : i32
      %299 = tpu.dynamic_rotate %288 by %c31_i32_172 dim 1 : vector<8x1024xf32>, i32 -> vector<8x1024xf32>
      %cst_173 = arith.constant 0.000000e+00 : f32
      %300 = vector.shape_cast %16 : vector<1x1024xi1> to vector<1x1024xi1>
      %301 = vector.broadcast %300 : vector<1x1024xi1> to vector<8x1024xi1>
      %302 = vector.broadcast %cst_173 : f32 to vector<8x1024xf32>
      %303 = arith.select %301, %299, %302 : vector<8x1024xi1>, vector<8x1024xf32>
      %c1_i32_174 = arith.constant 1 : i32
      %304 = tpu.dynamic_rotate %288 by %c1_i32_174 dim 1 : vector<8x1024xf32>, i32 -> vector<8x1024xf32>
      %cst_175 = arith.constant 0.000000e+00 : f32
      %305 = vector.shape_cast %18 : vector<1x1024xi1> to vector<1x1024xi1>
      %306 = vector.broadcast %305 : vector<1x1024xi1> to vector<8x1024xi1>
      %307 = vector.broadcast %cst_175 : f32 to vector<8x1024xf32>
      %308 = arith.select %306, %304, %307 : vector<8x1024xi1>, vector<8x1024xf32>
      %c1023_i32_176 = arith.constant 1023 : i32
      %309 = tpu.dynamic_rotate %288 by %c1023_i32_176 dim 1 : vector<8x1024xf32>, i32 -> vector<8x1024xf32>
      %cst_177 = arith.constant 0.000000e+00 : f32
      %310 = vector.shape_cast %20 : vector<1x1024xi1> to vector<1x1024xi1>
      %311 = vector.broadcast %310 : vector<1x1024xi1> to vector<8x1024xi1>
      %312 = vector.broadcast %cst_177 : f32 to vector<8x1024xf32>
      %313 = arith.select %311, %309, %312 : vector<8x1024xi1>, vector<8x1024xf32>
      %c993_i32_178 = arith.constant 993 : i32
      %314 = tpu.dynamic_rotate %288 by %c993_i32_178 dim 1 : vector<8x1024xf32>, i32 -> vector<8x1024xf32>
      %cst_179 = arith.constant 0.000000e+00 : f32
      %315 = vector.shape_cast %25 : vector<1x1024xi1> to vector<1x1024xi1>
      %316 = vector.broadcast %315 : vector<1x1024xi1> to vector<8x1024xi1>
      %317 = vector.broadcast %cst_179 : f32 to vector<8x1024xf32>
      %318 = arith.select %316, %314, %317 : vector<8x1024xi1>, vector<8x1024xf32>
      %c992_i32_180 = arith.constant 992 : i32
      %319 = tpu.dynamic_rotate %288 by %c992_i32_180 dim 1 : vector<8x1024xf32>, i32 -> vector<8x1024xf32>
      %cst_181 = arith.constant 0.000000e+00 : f32
      %320 = vector.shape_cast %27 : vector<1x1024xi1> to vector<1x1024xi1>
      %321 = vector.broadcast %320 : vector<1x1024xi1> to vector<8x1024xi1>
      %322 = vector.broadcast %cst_181 : f32 to vector<8x1024xf32>
      %323 = arith.select %321, %319, %322 : vector<8x1024xi1>, vector<8x1024xf32>
      %c991_i32_182 = arith.constant 991 : i32
      %324 = tpu.dynamic_rotate %288 by %c991_i32_182 dim 1 : vector<8x1024xf32>, i32 -> vector<8x1024xf32>
      %cst_183 = arith.constant 0.000000e+00 : f32
      %325 = vector.shape_cast %32 : vector<1x1024xi1> to vector<1x1024xi1>
      %326 = vector.broadcast %325 : vector<1x1024xi1> to vector<8x1024xi1>
      %327 = vector.broadcast %cst_183 : f32 to vector<8x1024xf32>
      %328 = arith.select %326, %324, %327 : vector<8x1024xi1>, vector<8x1024xf32>
      %329 = tpu.concatenate %293, %298, %303, %308, %288, %313, %318, %323, %328 in 0 : vector<8x1024xf32>, vector<8x1024xf32>, vector<8x1024xf32>, vector<8x1024xf32>, vector<8x1024xf32>, vector<8x1024xf32>, vector<8x1024xf32>, vector<8x1024xf32>, vector<8x1024xf32> -> vector<72x1024xf32>
      %330 = arith.truncf %329 : vector<72x1024xf32> to vector<72x1024xbf16>
      %c0_184 = arith.constant 0 : index
      %c0_185 = arith.constant 0 : index
      %331 = vector.load %arg4[%c0_184, %c0_185] : memref<8x72xbf16, #tpu.memory_space<vmem>>, vector<8x72xbf16>
      %cst_186 = arith.constant dense<0.000000e+00> : vector<8x1024xf32>
      %332 = tpu.matmul %331, %330, %cst_186 {dimension_numbers = #tpu.dot_dimension_numbers<[1], [0], [0], [1], [0, 0, 1, 1], [], []>} : vector<8x72xbf16>, vector<72x1024xbf16>, vector<8x1024xf32> -> vector<8x1024xf32>
      %c0_187 = arith.constant 0 : index
      %c0_188 = arith.constant 0 : index
      %333 = vector.load %arg5[%c0_187, %c0_188] : memref<8x1xf32, #tpu.memory_space<vmem>>, vector<8x1xf32>
      %334 = vector.broadcast %333 : vector<8x1xf32> to vector<8x1024xf32>
      %335 = arith.addf %332, %334 : vector<8x1024xf32>
      %cst_189 = arith.constant 0.000000e+00 : f32
      %336 = vector.broadcast %cst_189 : f32 to vector<8x1024xf32>
      %337 = arith.maximumf %335, %336 : vector<8x1024xf32>
      %c1023_i32_190 = arith.constant 1023 : i32
      %338 = tpu.dynamic_rotate %337 by %c1023_i32_190 dim 1 : vector<8x1024xf32>, i32 -> vector<8x1024xf32>
      %339 = arith.maximumf %337, %338 : vector<8x1024xf32>
      %c992_i32_191 = arith.constant 992 : i32
      %340 = tpu.dynamic_rotate %339 by %c992_i32_191 dim 1 : vector<8x1024xf32>, i32 -> vector<8x1024xf32>
      %341 = arith.maximumf %339, %340 : vector<8x1024xf32>
      %342 = arith.truncf %341 : vector<8x1024xf32> to vector<8x1024xbf16>
      %c0_192 = arith.constant 0 : index
      %c0_193 = arith.constant 0 : index
      %343 = vector.load %arg6[%c0_192, %c0_193] : memref<1024x256xbf16, #tpu.memory_space<vmem>>, vector<1024x256xbf16>
      %cst_194 = arith.constant dense<0.000000e+00> : vector<8x256xf32>
      %344 = tpu.matmul %342, %343, %cst_194 {dimension_numbers = #tpu.dot_dimension_numbers<[1], [0], [0], [1], [0, 0, 1, 1], [], []>} : vector<8x1024xbf16>, vector<1024x256xbf16>, vector<8x256xf32> -> vector<8x256xf32>
      %c17_i32 = arith.constant 17 : i32
      %345 = tpu.dynamic_rotate %344 by %c17_i32 dim 1 : vector<8x256xf32>, i32 -> vector<8x256xf32>
      %cst_195 = arith.constant 0.000000e+00 : f32
      %346 = vector.shape_cast %42 : vector<1x256xi1> to vector<1x256xi1>
      %347 = vector.broadcast %346 : vector<1x256xi1> to vector<8x256xi1>
      %348 = vector.broadcast %cst_195 : f32 to vector<8x256xf32>
      %349 = arith.select %347, %345, %348 : vector<8x256xi1>, vector<8x256xf32>
      %c16_i32 = arith.constant 16 : i32
      %350 = tpu.dynamic_rotate %344 by %c16_i32 dim 1 : vector<8x256xf32>, i32 -> vector<8x256xf32>
      %cst_196 = arith.constant 0.000000e+00 : f32
      %351 = vector.shape_cast %44 : vector<1x256xi1> to vector<1x256xi1>
      %352 = vector.broadcast %351 : vector<1x256xi1> to vector<8x256xi1>
      %353 = vector.broadcast %cst_196 : f32 to vector<8x256xf32>
      %354 = arith.select %352, %350, %353 : vector<8x256xi1>, vector<8x256xf32>
      %c15_i32_197 = arith.constant 15 : i32
      %355 = tpu.dynamic_rotate %344 by %c15_i32_197 dim 1 : vector<8x256xf32>, i32 -> vector<8x256xf32>
      %cst_198 = arith.constant 0.000000e+00 : f32
      %356 = vector.shape_cast %49 : vector<1x256xi1> to vector<1x256xi1>
      %357 = vector.broadcast %356 : vector<1x256xi1> to vector<8x256xi1>
      %358 = vector.broadcast %cst_198 : f32 to vector<8x256xf32>
      %359 = arith.select %357, %355, %358 : vector<8x256xi1>, vector<8x256xf32>
      %c1_i32_199 = arith.constant 1 : i32
      %360 = tpu.dynamic_rotate %344 by %c1_i32_199 dim 1 : vector<8x256xf32>, i32 -> vector<8x256xf32>
      %cst_200 = arith.constant 0.000000e+00 : f32
      %361 = vector.shape_cast %51 : vector<1x256xi1> to vector<1x256xi1>
      %362 = vector.broadcast %361 : vector<1x256xi1> to vector<8x256xi1>
      %363 = vector.broadcast %cst_200 : f32 to vector<8x256xf32>
      %364 = arith.select %362, %360, %363 : vector<8x256xi1>, vector<8x256xf32>
      %c255_i32 = arith.constant 255 : i32
      %365 = tpu.dynamic_rotate %344 by %c255_i32 dim 1 : vector<8x256xf32>, i32 -> vector<8x256xf32>
      %cst_201 = arith.constant 0.000000e+00 : f32
      %366 = vector.shape_cast %53 : vector<1x256xi1> to vector<1x256xi1>
      %367 = vector.broadcast %366 : vector<1x256xi1> to vector<8x256xi1>
      %368 = vector.broadcast %cst_201 : f32 to vector<8x256xf32>
      %369 = arith.select %367, %365, %368 : vector<8x256xi1>, vector<8x256xf32>
      %c241_i32 = arith.constant 241 : i32
      %370 = tpu.dynamic_rotate %344 by %c241_i32 dim 1 : vector<8x256xf32>, i32 -> vector<8x256xf32>
      %cst_202 = arith.constant 0.000000e+00 : f32
      %371 = vector.shape_cast %58 : vector<1x256xi1> to vector<1x256xi1>
      %372 = vector.broadcast %371 : vector<1x256xi1> to vector<8x256xi1>
      %373 = vector.broadcast %cst_202 : f32 to vector<8x256xf32>
      %374 = arith.select %372, %370, %373 : vector<8x256xi1>, vector<8x256xf32>
      %c240_i32 = arith.constant 240 : i32
      %375 = tpu.dynamic_rotate %344 by %c240_i32 dim 1 : vector<8x256xf32>, i32 -> vector<8x256xf32>
      %cst_203 = arith.constant 0.000000e+00 : f32
      %376 = vector.shape_cast %60 : vector<1x256xi1> to vector<1x256xi1>
      %377 = vector.broadcast %376 : vector<1x256xi1> to vector<8x256xi1>
      %378 = vector.broadcast %cst_203 : f32 to vector<8x256xf32>
      %379 = arith.select %377, %375, %378 : vector<8x256xi1>, vector<8x256xf32>
      %c239_i32 = arith.constant 239 : i32
      %380 = tpu.dynamic_rotate %344 by %c239_i32 dim 1 : vector<8x256xf32>, i32 -> vector<8x256xf32>
      %cst_204 = arith.constant 0.000000e+00 : f32
      %381 = vector.shape_cast %65 : vector<1x256xi1> to vector<1x256xi1>
      %382 = vector.broadcast %381 : vector<1x256xi1> to vector<8x256xi1>
      %383 = vector.broadcast %cst_204 : f32 to vector<8x256xf32>
      %384 = arith.select %382, %380, %383 : vector<8x256xi1>, vector<8x256xf32>
      %385 = tpu.concatenate %349, %354, %359, %364, %344, %369, %374, %379, %384 in 0 : vector<8x256xf32>, vector<8x256xf32>, vector<8x256xf32>, vector<8x256xf32>, vector<8x256xf32>, vector<8x256xf32>, vector<8x256xf32>, vector<8x256xf32>, vector<8x256xf32> -> vector<72x256xf32>
      %386 = arith.truncf %385 : vector<72x256xf32> to vector<72x256xbf16>
      %c0_205 = arith.constant 0 : index
      %c0_206 = arith.constant 0 : index
      %387 = vector.load %arg7[%c0_205, %c0_206] : memref<16x72xbf16, #tpu.memory_space<vmem>>, vector<16x72xbf16>
      %cst_207 = arith.constant dense<0.000000e+00> : vector<16x256xf32>
      %388 = tpu.matmul %387, %386, %cst_207 {dimension_numbers = #tpu.dot_dimension_numbers<[1], [0], [0], [1], [0, 0, 1, 1], [], []>} : vector<16x72xbf16>, vector<72x256xbf16>, vector<16x256xf32> -> vector<16x256xf32>
      %c0_208 = arith.constant 0 : index
      %c0_209 = arith.constant 0 : index
      %389 = vector.load %arg8[%c0_208, %c0_209] : memref<16x1xf32, #tpu.memory_space<vmem>>, vector<16x1xf32>
      %390 = vector.broadcast %389 : vector<16x1xf32> to vector<16x256xf32>
      %391 = arith.addf %388, %390 : vector<16x256xf32>
      %cst_210 = arith.constant 0.000000e+00 : f32
      %392 = vector.broadcast %cst_210 : f32 to vector<16x256xf32>
      %393 = arith.maximumf %391, %392 : vector<16x256xf32>
      %c17_i32_211 = arith.constant 17 : i32
      %394 = tpu.dynamic_rotate %393 by %c17_i32_211 dim 1 : vector<16x256xf32>, i32 -> vector<16x256xf32>
      %cst_212 = arith.constant 0.000000e+00 : f32
      %395 = vector.shape_cast %42 : vector<1x256xi1> to vector<1x256xi1>
      %396 = vector.broadcast %395 : vector<1x256xi1> to vector<16x256xi1>
      %397 = vector.broadcast %cst_212 : f32 to vector<16x256xf32>
      %398 = arith.select %396, %394, %397 : vector<16x256xi1>, vector<16x256xf32>
      %c16_i32_213 = arith.constant 16 : i32
      %399 = tpu.dynamic_rotate %393 by %c16_i32_213 dim 1 : vector<16x256xf32>, i32 -> vector<16x256xf32>
      %cst_214 = arith.constant 0.000000e+00 : f32
      %400 = vector.shape_cast %44 : vector<1x256xi1> to vector<1x256xi1>
      %401 = vector.broadcast %400 : vector<1x256xi1> to vector<16x256xi1>
      %402 = vector.broadcast %cst_214 : f32 to vector<16x256xf32>
      %403 = arith.select %401, %399, %402 : vector<16x256xi1>, vector<16x256xf32>
      %c15_i32_215 = arith.constant 15 : i32
      %404 = tpu.dynamic_rotate %393 by %c15_i32_215 dim 1 : vector<16x256xf32>, i32 -> vector<16x256xf32>
      %cst_216 = arith.constant 0.000000e+00 : f32
      %405 = vector.shape_cast %49 : vector<1x256xi1> to vector<1x256xi1>
      %406 = vector.broadcast %405 : vector<1x256xi1> to vector<16x256xi1>
      %407 = vector.broadcast %cst_216 : f32 to vector<16x256xf32>
      %408 = arith.select %406, %404, %407 : vector<16x256xi1>, vector<16x256xf32>
      %c1_i32_217 = arith.constant 1 : i32
      %409 = tpu.dynamic_rotate %393 by %c1_i32_217 dim 1 : vector<16x256xf32>, i32 -> vector<16x256xf32>
      %cst_218 = arith.constant 0.000000e+00 : f32
      %410 = vector.shape_cast %51 : vector<1x256xi1> to vector<1x256xi1>
      %411 = vector.broadcast %410 : vector<1x256xi1> to vector<16x256xi1>
      %412 = vector.broadcast %cst_218 : f32 to vector<16x256xf32>
      %413 = arith.select %411, %409, %412 : vector<16x256xi1>, vector<16x256xf32>
      %c255_i32_219 = arith.constant 255 : i32
      %414 = tpu.dynamic_rotate %393 by %c255_i32_219 dim 1 : vector<16x256xf32>, i32 -> vector<16x256xf32>
      %cst_220 = arith.constant 0.000000e+00 : f32
      %415 = vector.shape_cast %53 : vector<1x256xi1> to vector<1x256xi1>
      %416 = vector.broadcast %415 : vector<1x256xi1> to vector<16x256xi1>
      %417 = vector.broadcast %cst_220 : f32 to vector<16x256xf32>
      %418 = arith.select %416, %414, %417 : vector<16x256xi1>, vector<16x256xf32>
      %c241_i32_221 = arith.constant 241 : i32
      %419 = tpu.dynamic_rotate %393 by %c241_i32_221 dim 1 : vector<16x256xf32>, i32 -> vector<16x256xf32>
      %cst_222 = arith.constant 0.000000e+00 : f32
      %420 = vector.shape_cast %58 : vector<1x256xi1> to vector<1x256xi1>
      %421 = vector.broadcast %420 : vector<1x256xi1> to vector<16x256xi1>
      %422 = vector.broadcast %cst_222 : f32 to vector<16x256xf32>
      %423 = arith.select %421, %419, %422 : vector<16x256xi1>, vector<16x256xf32>
      %c240_i32_223 = arith.constant 240 : i32
      %424 = tpu.dynamic_rotate %393 by %c240_i32_223 dim 1 : vector<16x256xf32>, i32 -> vector<16x256xf32>
      %cst_224 = arith.constant 0.000000e+00 : f32
      %425 = vector.shape_cast %60 : vector<1x256xi1> to vector<1x256xi1>
      %426 = vector.broadcast %425 : vector<1x256xi1> to vector<16x256xi1>
      %427 = vector.broadcast %cst_224 : f32 to vector<16x256xf32>
      %428 = arith.select %426, %424, %427 : vector<16x256xi1>, vector<16x256xf32>
      %c239_i32_225 = arith.constant 239 : i32
      %429 = tpu.dynamic_rotate %393 by %c239_i32_225 dim 1 : vector<16x256xf32>, i32 -> vector<16x256xf32>
      %cst_226 = arith.constant 0.000000e+00 : f32
      %430 = vector.shape_cast %65 : vector<1x256xi1> to vector<1x256xi1>
      %431 = vector.broadcast %430 : vector<1x256xi1> to vector<16x256xi1>
      %432 = vector.broadcast %cst_226 : f32 to vector<16x256xf32>
      %433 = arith.select %431, %429, %432 : vector<16x256xi1>, vector<16x256xf32>
      %434 = tpu.concatenate %398, %403, %408, %413, %393, %418, %423, %428, %433 in 0 : vector<16x256xf32>, vector<16x256xf32>, vector<16x256xf32>, vector<16x256xf32>, vector<16x256xf32>, vector<16x256xf32>, vector<16x256xf32>, vector<16x256xf32>, vector<16x256xf32> -> vector<144x256xf32>
      %435 = arith.truncf %434 : vector<144x256xf32> to vector<144x256xbf16>
      %c0_227 = arith.constant 0 : index
      %c0_228 = arith.constant 0 : index
      %436 = vector.load %arg9[%c0_227, %c0_228] : memref<16x144xbf16, #tpu.memory_space<vmem>>, vector<16x144xbf16>
      %cst_229 = arith.constant dense<0.000000e+00> : vector<16x256xf32>
      %437 = tpu.matmul %436, %435, %cst_229 {dimension_numbers = #tpu.dot_dimension_numbers<[1], [0], [0], [1], [0, 0, 1, 1], [], []>} : vector<16x144xbf16>, vector<144x256xbf16>, vector<16x256xf32> -> vector<16x256xf32>
      %c0_230 = arith.constant 0 : index
      %c0_231 = arith.constant 0 : index
      %438 = vector.load %arg10[%c0_230, %c0_231] : memref<16x1xf32, #tpu.memory_space<vmem>>, vector<16x1xf32>
      %439 = vector.broadcast %438 : vector<16x1xf32> to vector<16x256xf32>
      %440 = arith.addf %437, %439 : vector<16x256xf32>
      %cst_232 = arith.constant 0.000000e+00 : f32
      %441 = vector.broadcast %cst_232 : f32 to vector<16x256xf32>
      %442 = arith.maximumf %440, %441 : vector<16x256xf32>
      %c255_i32_233 = arith.constant 255 : i32
      %443 = tpu.dynamic_rotate %442 by %c255_i32_233 dim 1 : vector<16x256xf32>, i32 -> vector<16x256xf32>
      %444 = arith.maximumf %442, %443 : vector<16x256xf32>
      %c240_i32_234 = arith.constant 240 : i32
      %445 = tpu.dynamic_rotate %444 by %c240_i32_234 dim 1 : vector<16x256xf32>, i32 -> vector<16x256xf32>
      %446 = arith.maximumf %444, %445 : vector<16x256xf32>
      %447 = arith.truncf %446 : vector<16x256xf32> to vector<16x256xbf16>
      %c0_235 = arith.constant 0 : index
      %c0_236 = arith.constant 0 : index
      %448 = vector.load %arg11[%c0_235, %c0_236] : memref<256x64xbf16, #tpu.memory_space<vmem>>, vector<256x64xbf16>
      %cst_237 = arith.constant dense<0.000000e+00> : vector<16x64xf32>
      %449 = tpu.matmul %447, %448, %cst_237 {dimension_numbers = #tpu.dot_dimension_numbers<[1], [0], [0], [1], [0, 0, 1, 1], [], []>} : vector<16x256xbf16>, vector<256x64xbf16>, vector<16x64xf32> -> vector<16x64xf32>
      %c9_i32 = arith.constant 9 : i32
      %450 = tpu.dynamic_rotate %449 by %c9_i32 dim 1 : vector<16x64xf32>, i32 -> vector<16x64xf32>
      %cst_238 = arith.constant 0.000000e+00 : f32
      %451 = vector.shape_cast %75 : vector<1x64xi1> to vector<1x64xi1>
      %452 = vector.broadcast %451 : vector<1x64xi1> to vector<16x64xi1>
      %453 = vector.broadcast %cst_238 : f32 to vector<16x64xf32>
      %454 = arith.select %452, %450, %453 : vector<16x64xi1>, vector<16x64xf32>
      %c8_i32 = arith.constant 8 : i32
      %455 = tpu.dynamic_rotate %449 by %c8_i32 dim 1 : vector<16x64xf32>, i32 -> vector<16x64xf32>
      %cst_239 = arith.constant 0.000000e+00 : f32
      %456 = vector.shape_cast %77 : vector<1x64xi1> to vector<1x64xi1>
      %457 = vector.broadcast %456 : vector<1x64xi1> to vector<16x64xi1>
      %458 = vector.broadcast %cst_239 : f32 to vector<16x64xf32>
      %459 = arith.select %457, %455, %458 : vector<16x64xi1>, vector<16x64xf32>
      %c7_i32_240 = arith.constant 7 : i32
      %460 = tpu.dynamic_rotate %449 by %c7_i32_240 dim 1 : vector<16x64xf32>, i32 -> vector<16x64xf32>
      %cst_241 = arith.constant 0.000000e+00 : f32
      %461 = vector.shape_cast %82 : vector<1x64xi1> to vector<1x64xi1>
      %462 = vector.broadcast %461 : vector<1x64xi1> to vector<16x64xi1>
      %463 = vector.broadcast %cst_241 : f32 to vector<16x64xf32>
      %464 = arith.select %462, %460, %463 : vector<16x64xi1>, vector<16x64xf32>
      %c1_i32_242 = arith.constant 1 : i32
      %465 = tpu.dynamic_rotate %449 by %c1_i32_242 dim 1 : vector<16x64xf32>, i32 -> vector<16x64xf32>
      %cst_243 = arith.constant 0.000000e+00 : f32
      %466 = vector.shape_cast %84 : vector<1x64xi1> to vector<1x64xi1>
      %467 = vector.broadcast %466 : vector<1x64xi1> to vector<16x64xi1>
      %468 = vector.broadcast %cst_243 : f32 to vector<16x64xf32>
      %469 = arith.select %467, %465, %468 : vector<16x64xi1>, vector<16x64xf32>
      %c63_i32 = arith.constant 63 : i32
      %470 = tpu.dynamic_rotate %449 by %c63_i32 dim 1 : vector<16x64xf32>, i32 -> vector<16x64xf32>
      %cst_244 = arith.constant 0.000000e+00 : f32
      %471 = vector.shape_cast %86 : vector<1x64xi1> to vector<1x64xi1>
      %472 = vector.broadcast %471 : vector<1x64xi1> to vector<16x64xi1>
      %473 = vector.broadcast %cst_244 : f32 to vector<16x64xf32>
      %474 = arith.select %472, %470, %473 : vector<16x64xi1>, vector<16x64xf32>
      %c57_i32 = arith.constant 57 : i32
      %475 = tpu.dynamic_rotate %449 by %c57_i32 dim 1 : vector<16x64xf32>, i32 -> vector<16x64xf32>
      %cst_245 = arith.constant 0.000000e+00 : f32
      %476 = vector.shape_cast %91 : vector<1x64xi1> to vector<1x64xi1>
      %477 = vector.broadcast %476 : vector<1x64xi1> to vector<16x64xi1>
      %478 = vector.broadcast %cst_245 : f32 to vector<16x64xf32>
      %479 = arith.select %477, %475, %478 : vector<16x64xi1>, vector<16x64xf32>
      %c56_i32 = arith.constant 56 : i32
      %480 = tpu.dynamic_rotate %449 by %c56_i32 dim 1 : vector<16x64xf32>, i32 -> vector<16x64xf32>
      %cst_246 = arith.constant 0.000000e+00 : f32
      %481 = vector.shape_cast %93 : vector<1x64xi1> to vector<1x64xi1>
      %482 = vector.broadcast %481 : vector<1x64xi1> to vector<16x64xi1>
      %483 = vector.broadcast %cst_246 : f32 to vector<16x64xf32>
      %484 = arith.select %482, %480, %483 : vector<16x64xi1>, vector<16x64xf32>
      %c55_i32 = arith.constant 55 : i32
      %485 = tpu.dynamic_rotate %449 by %c55_i32 dim 1 : vector<16x64xf32>, i32 -> vector<16x64xf32>
      %cst_247 = arith.constant 0.000000e+00 : f32
      %486 = vector.shape_cast %98 : vector<1x64xi1> to vector<1x64xi1>
      %487 = vector.broadcast %486 : vector<1x64xi1> to vector<16x64xi1>
      %488 = vector.broadcast %cst_247 : f32 to vector<16x64xf32>
      %489 = arith.select %487, %485, %488 : vector<16x64xi1>, vector<16x64xf32>
      %490 = tpu.concatenate %454, %459, %464, %469, %449, %474, %479, %484, %489 in 0 : vector<16x64xf32>, vector<16x64xf32>, vector<16x64xf32>, vector<16x64xf32>, vector<16x64xf32>, vector<16x64xf32>, vector<16x64xf32>, vector<16x64xf32>, vector<16x64xf32> -> vector<144x64xf32>
      %491 = arith.truncf %490 : vector<144x64xf32> to vector<144x64xbf16>
      %c0_248 = arith.constant 0 : index
      %c0_249 = arith.constant 0 : index
      %492 = vector.load %arg12[%c0_248, %c0_249] : memref<16x144xbf16, #tpu.memory_space<vmem>>, vector<16x144xbf16>
      %cst_250 = arith.constant dense<0.000000e+00> : vector<16x64xf32>
      %493 = tpu.matmul %492, %491, %cst_250 {dimension_numbers = #tpu.dot_dimension_numbers<[1], [0], [0], [1], [0, 0, 1, 1], [], []>} : vector<16x144xbf16>, vector<144x64xbf16>, vector<16x64xf32> -> vector<16x64xf32>
      %c0_251 = arith.constant 0 : index
      %c0_252 = arith.constant 0 : index
      %494 = vector.load %arg13[%c0_251, %c0_252] : memref<16x1xf32, #tpu.memory_space<vmem>>, vector<16x1xf32>
      %495 = vector.broadcast %494 : vector<16x1xf32> to vector<16x64xf32>
      %496 = arith.addf %493, %495 : vector<16x64xf32>
      %cst_253 = arith.constant 0.000000e+00 : f32
      %497 = vector.broadcast %cst_253 : f32 to vector<16x64xf32>
      %498 = arith.maximumf %496, %497 : vector<16x64xf32>
      %c9_i32_254 = arith.constant 9 : i32
      %499 = tpu.dynamic_rotate %498 by %c9_i32_254 dim 1 : vector<16x64xf32>, i32 -> vector<16x64xf32>
      %cst_255 = arith.constant 0.000000e+00 : f32
      %500 = vector.shape_cast %75 : vector<1x64xi1> to vector<1x64xi1>
      %501 = vector.broadcast %500 : vector<1x64xi1> to vector<16x64xi1>
      %502 = vector.broadcast %cst_255 : f32 to vector<16x64xf32>
      %503 = arith.select %501, %499, %502 : vector<16x64xi1>, vector<16x64xf32>
      %c8_i32_256 = arith.constant 8 : i32
      %504 = tpu.dynamic_rotate %498 by %c8_i32_256 dim 1 : vector<16x64xf32>, i32 -> vector<16x64xf32>
      %cst_257 = arith.constant 0.000000e+00 : f32
      %505 = vector.shape_cast %77 : vector<1x64xi1> to vector<1x64xi1>
      %506 = vector.broadcast %505 : vector<1x64xi1> to vector<16x64xi1>
      %507 = vector.broadcast %cst_257 : f32 to vector<16x64xf32>
      %508 = arith.select %506, %504, %507 : vector<16x64xi1>, vector<16x64xf32>
      %c7_i32_258 = arith.constant 7 : i32
      %509 = tpu.dynamic_rotate %498 by %c7_i32_258 dim 1 : vector<16x64xf32>, i32 -> vector<16x64xf32>
      %cst_259 = arith.constant 0.000000e+00 : f32
      %510 = vector.shape_cast %82 : vector<1x64xi1> to vector<1x64xi1>
      %511 = vector.broadcast %510 : vector<1x64xi1> to vector<16x64xi1>
      %512 = vector.broadcast %cst_259 : f32 to vector<16x64xf32>
      %513 = arith.select %511, %509, %512 : vector<16x64xi1>, vector<16x64xf32>
      %c1_i32_260 = arith.constant 1 : i32
      %514 = tpu.dynamic_rotate %498 by %c1_i32_260 dim 1 : vector<16x64xf32>, i32 -> vector<16x64xf32>
      %cst_261 = arith.constant 0.000000e+00 : f32
      %515 = vector.shape_cast %84 : vector<1x64xi1> to vector<1x64xi1>
      %516 = vector.broadcast %515 : vector<1x64xi1> to vector<16x64xi1>
      %517 = vector.broadcast %cst_261 : f32 to vector<16x64xf32>
      %518 = arith.select %516, %514, %517 : vector<16x64xi1>, vector<16x64xf32>
      %c63_i32_262 = arith.constant 63 : i32
      %519 = tpu.dynamic_rotate %498 by %c63_i32_262 dim 1 : vector<16x64xf32>, i32 -> vector<16x64xf32>
      %cst_263 = arith.constant 0.000000e+00 : f32
      %520 = vector.shape_cast %86 : vector<1x64xi1> to vector<1x64xi1>
      %521 = vector.broadcast %520 : vector<1x64xi1> to vector<16x64xi1>
      %522 = vector.broadcast %cst_263 : f32 to vector<16x64xf32>
      %523 = arith.select %521, %519, %522 : vector<16x64xi1>, vector<16x64xf32>
      %c57_i32_264 = arith.constant 57 : i32
      %524 = tpu.dynamic_rotate %498 by %c57_i32_264 dim 1 : vector<16x64xf32>, i32 -> vector<16x64xf32>
      %cst_265 = arith.constant 0.000000e+00 : f32
      %525 = vector.shape_cast %91 : vector<1x64xi1> to vector<1x64xi1>
      %526 = vector.broadcast %525 : vector<1x64xi1> to vector<16x64xi1>
      %527 = vector.broadcast %cst_265 : f32 to vector<16x64xf32>
      %528 = arith.select %526, %524, %527 : vector<16x64xi1>, vector<16x64xf32>
      %c56_i32_266 = arith.constant 56 : i32
      %529 = tpu.dynamic_rotate %498 by %c56_i32_266 dim 1 : vector<16x64xf32>, i32 -> vector<16x64xf32>
      %cst_267 = arith.constant 0.000000e+00 : f32
      %530 = vector.shape_cast %93 : vector<1x64xi1> to vector<1x64xi1>
      %531 = vector.broadcast %530 : vector<1x64xi1> to vector<16x64xi1>
      %532 = vector.broadcast %cst_267 : f32 to vector<16x64xf32>
      %533 = arith.select %531, %529, %532 : vector<16x64xi1>, vector<16x64xf32>
      %c55_i32_268 = arith.constant 55 : i32
      %534 = tpu.dynamic_rotate %498 by %c55_i32_268 dim 1 : vector<16x64xf32>, i32 -> vector<16x64xf32>
      %cst_269 = arith.constant 0.000000e+00 : f32
      %535 = vector.shape_cast %98 : vector<1x64xi1> to vector<1x64xi1>
      %536 = vector.broadcast %535 : vector<1x64xi1> to vector<16x64xi1>
      %537 = vector.broadcast %cst_269 : f32 to vector<16x64xf32>
      %538 = arith.select %536, %534, %537 : vector<16x64xi1>, vector<16x64xf32>
      %539 = tpu.concatenate %503, %508, %513, %518, %498, %523, %528, %533, %538 in 0 : vector<16x64xf32>, vector<16x64xf32>, vector<16x64xf32>, vector<16x64xf32>, vector<16x64xf32>, vector<16x64xf32>, vector<16x64xf32>, vector<16x64xf32>, vector<16x64xf32> -> vector<144x64xf32>
      %540 = arith.truncf %539 : vector<144x64xf32> to vector<144x64xbf16>
      %c0_270 = arith.constant 0 : index
      %c0_271 = arith.constant 0 : index
      %541 = vector.load %arg14[%c0_270, %c0_271] : memref<16x144xbf16, #tpu.memory_space<vmem>>, vector<16x144xbf16>
      %cst_272 = arith.constant dense<0.000000e+00> : vector<16x64xf32>
      %542 = tpu.matmul %541, %540, %cst_272 {dimension_numbers = #tpu.dot_dimension_numbers<[1], [0], [0], [1], [0, 0, 1, 1], [], []>} : vector<16x144xbf16>, vector<144x64xbf16>, vector<16x64xf32> -> vector<16x64xf32>
      %c0_273 = arith.constant 0 : index
      %c0_274 = arith.constant 0 : index
      %543 = vector.load %arg15[%c0_273, %c0_274] : memref<16x1xf32, #tpu.memory_space<vmem>>, vector<16x1xf32>
      %544 = vector.broadcast %543 : vector<16x1xf32> to vector<16x64xf32>
      %545 = arith.addf %542, %544 : vector<16x64xf32>
      %cst_275 = arith.constant 0.000000e+00 : f32
      %546 = vector.broadcast %cst_275 : f32 to vector<16x64xf32>
      %547 = arith.maximumf %545, %546 : vector<16x64xf32>
      %c63_i32_276 = arith.constant 63 : i32
      %548 = tpu.dynamic_rotate %547 by %c63_i32_276 dim 1 : vector<16x64xf32>, i32 -> vector<16x64xf32>
      %549 = arith.maximumf %547, %548 : vector<16x64xf32>
      %c56_i32_277 = arith.constant 56 : i32
      %550 = tpu.dynamic_rotate %549 by %c56_i32_277 dim 1 : vector<16x64xf32>, i32 -> vector<16x64xf32>
      %551 = arith.maximumf %549, %550 : vector<16x64xf32>
      %552 = arith.truncf %551 : vector<16x64xf32> to vector<16x64xbf16>
      %c0_278 = arith.constant 0 : index
      %c0_279 = arith.constant 0 : index
      %553 = vector.load %arg16[%c0_278, %c0_279] : memref<64x16xbf16, #tpu.memory_space<vmem>>, vector<64x16xbf16>
      %cst_280 = arith.constant dense<0.000000e+00> : vector<16x16xf32>
      %554 = tpu.matmul %552, %553, %cst_280 {dimension_numbers = #tpu.dot_dimension_numbers<[1], [0], [0], [1], [0, 0, 1, 1], [], []>} : vector<16x64xbf16>, vector<64x16xbf16>, vector<16x16xf32> -> vector<16x16xf32>
      %555 = arith.index_cast %236 : i32 to index
      %c0_281 = arith.constant 0 : index
      %c0_282 = arith.constant 0 : index
      %556 = vector.load %arg24[%555, %c0_281, %c0_282] : memref<4x16x16xf32, #tpu.memory_space<vmem>>, vector<1x16x16xf32>
      %557 = vector.shape_cast %556 : vector<1x16x16xf32> to vector<16x16xf32>
      %558 = vector.shape_cast %554 : vector<16x16xf32> to vector<1x16x16xf32>
      tpu.vector_store %arg24[%555, %c0_281, %c0_282], %558 {strides = array<i32>} : memref<4x16x16xf32, #tpu.memory_space<vmem>>, vector<1x16x16xf32>,
    }
    %c4_i32_34 = arith.constant 4 : i32
    %cst = arith.constant 0.000000e+00 : f32
    %100 = vector.broadcast %cst : f32 to vector<4x512xf32>
    %c0 = arith.constant 0 : index
    %c0_35 = arith.constant 0 : index
    %c0_36 = arith.constant 0 : index
    %101 = vector.load %arg24[%c0, %c0_35, %c0_36] : memref<4x16x16xf32, #tpu.memory_space<vmem>>, vector<4x1x16xf32>
    %102 = vector.shape_cast %101 : vector<4x1x16xf32> to vector<4x16xf32>
    %103 = arith.truncf %102 : vector<4x16xf32> to vector<4x16xbf16>
    %c0_37 = arith.constant 0 : index
    %c0_38 = arith.constant 0 : index
    %c0_39 = arith.constant 0 : index
    %104 = vector.load %arg17[%c0_37, %c0_38, %c0_39] : memref<16x16x512xbf16, #tpu.memory_space<vmem>>, vector<1x16x512xbf16>
    %105 = vector.shape_cast %104 : vector<1x16x512xbf16> to vector<16x512xbf16>
    %cst_40 = arith.constant dense<0.000000e+00> : vector<4x512xf32>
    %106 = tpu.matmul %103, %105, %cst_40 {dimension_numbers = #tpu.dot_dimension_numbers<[1], [0], [0], [1], [0, 0, 1, 1], [], []>} : vector<4x16xbf16>, vector<16x512xbf16>, vector<4x512xf32> -> vector<4x512xf32>
    %107 = arith.addf %100, %106 : vector<4x512xf32>
    %c0_41 = arith.constant 0 : index
    %c1 = arith.constant 1 : index
    %c0_42 = arith.constant 0 : index
    %108 = vector.load %arg24[%c0_41, %c1, %c0_42] : memref<4x16x16xf32, #tpu.memory_space<vmem>>, vector<4x1x16xf32>
    %109 = vector.shape_cast %108 : vector<4x1x16xf32> to vector<4x16xf32>
    %110 = arith.truncf %109 : vector<4x16xf32> to vector<4x16xbf16>
    %c1_43 = arith.constant 1 : index
    %c0_44 = arith.constant 0 : index
    %c0_45 = arith.constant 0 : index
    %111 = vector.load %arg17[%c1_43, %c0_44, %c0_45] : memref<16x16x512xbf16, #tpu.memory_space<vmem>>, vector<1x16x512xbf16>
    %112 = vector.shape_cast %111 : vector<1x16x512xbf16> to vector<16x512xbf16>
    %cst_46 = arith.constant dense<0.000000e+00> : vector<4x512xf32>
    %113 = tpu.matmul %110, %112, %cst_46 {dimension_numbers = #tpu.dot_dimension_numbers<[1], [0], [0], [1], [0, 0, 1, 1], [], []>} : vector<4x16xbf16>, vector<16x512xbf16>, vector<4x512xf32> -> vector<4x512xf32>
    %114 = arith.addf %107, %113 : vector<4x512xf32>
    %c0_47 = arith.constant 0 : index
    %c2 = arith.constant 2 : index
    %c0_48 = arith.constant 0 : index
    %115 = vector.load %arg24[%c0_47, %c2, %c0_48] : memref<4x16x16xf32, #tpu.memory_space<vmem>>, vector<4x1x16xf32>
    %116 = vector.shape_cast %115 : vector<4x1x16xf32> to vector<4x16xf32>
    %117 = arith.truncf %116 : vector<4x16xf32> to vector<4x16xbf16>
    %c2_49 = arith.constant 2 : index
    %c0_50 = arith.constant 0 : index
    %c0_51 = arith.constant 0 : index
    %118 = vector.load %arg17[%c2_49, %c0_50, %c0_51] : memref<16x16x512xbf16, #tpu.memory_space<vmem>>, vector<1x16x512xbf16>
    %119 = vector.shape_cast %118 : vector<1x16x512xbf16> to vector<16x512xbf16>
    %cst_52 = arith.constant dense<0.000000e+00> : vector<4x512xf32>
    %120 = tpu.matmul %117, %119, %cst_52 {dimension_numbers = #tpu.dot_dimension_numbers<[1], [0], [0], [1], [0, 0, 1, 1], [], []>} : vector<4x16xbf16>, vector<16x512xbf16>, vector<4x512xf32> -> vector<4x512xf32>
    %121 = arith.addf %114, %120 : vector<4x512xf32>
    %c0_53 = arith.constant 0 : index
    %c3 = arith.constant 3 : index
    %c0_54 = arith.constant 0 : index
    %122 = vector.load %arg24[%c0_53, %c3, %c0_54] : memref<4x16x16xf32, #tpu.memory_space<vmem>>, vector<4x1x16xf32>
    %123 = vector.shape_cast %122 : vector<4x1x16xf32> to vector<4x16xf32>
    %124 = arith.truncf %123 : vector<4x16xf32> to vector<4x16xbf16>
    %c3_55 = arith.constant 3 : index
    %c0_56 = arith.constant 0 : index
    %c0_57 = arith.constant 0 : index
    %125 = vector.load %arg17[%c3_55, %c0_56, %c0_57] : memref<16x16x512xbf16, #tpu.memory_space<vmem>>, vector<1x16x512xbf16>
    %126 = vector.shape_cast %125 : vector<1x16x512xbf16> to vector<16x512xbf16>
    %cst_58 = arith.constant dense<0.000000e+00> : vector<4x512xf32>
    %127 = tpu.matmul %124, %126, %cst_58 {dimension_numbers = #tpu.dot_dimension_numbers<[1], [0], [0], [1], [0, 0, 1, 1], [], []>} : vector<4x16xbf16>, vector<16x512xbf16>, vector<4x512xf32> -> vector<4x512xf32>
    %128 = arith.addf %121, %127 : vector<4x512xf32>
    %c0_59 = arith.constant 0 : index
    %c4 = arith.constant 4 : index
    %c0_60 = arith.constant 0 : index
    %129 = vector.load %arg24[%c0_59, %c4, %c0_60] : memref<4x16x16xf32, #tpu.memory_space<vmem>>, vector<4x1x16xf32>
    %130 = vector.shape_cast %129 : vector<4x1x16xf32> to vector<4x16xf32>
    %131 = arith.truncf %130 : vector<4x16xf32> to vector<4x16xbf16>
    %c4_61 = arith.constant 4 : index
    %c0_62 = arith.constant 0 : index
    %c0_63 = arith.constant 0 : index
    %132 = vector.load %arg17[%c4_61, %c0_62, %c0_63] : memref<16x16x512xbf16, #tpu.memory_space<vmem>>, vector<1x16x512xbf16>
    %133 = vector.shape_cast %132 : vector<1x16x512xbf16> to vector<16x512xbf16>
    %cst_64 = arith.constant dense<0.000000e+00> : vector<4x512xf32>
    %134 = tpu.matmul %131, %133, %cst_64 {dimension_numbers = #tpu.dot_dimension_numbers<[1], [0], [0], [1], [0, 0, 1, 1], [], []>} : vector<4x16xbf16>, vector<16x512xbf16>, vector<4x512xf32> -> vector<4x512xf32>
    %135 = arith.addf %128, %134 : vector<4x512xf32>
    %c0_65 = arith.constant 0 : index
    %c5 = arith.constant 5 : index
    %c0_66 = arith.constant 0 : index
    %136 = vector.load %arg24[%c0_65, %c5, %c0_66] : memref<4x16x16xf32, #tpu.memory_space<vmem>>, vector<4x1x16xf32>
    %137 = vector.shape_cast %136 : vector<4x1x16xf32> to vector<4x16xf32>
    %138 = arith.truncf %137 : vector<4x16xf32> to vector<4x16xbf16>
    %c5_67 = arith.constant 5 : index
    %c0_68 = arith.constant 0 : index
    %c0_69 = arith.constant 0 : index
    %139 = vector.load %arg17[%c5_67, %c0_68, %c0_69] : memref<16x16x512xbf16, #tpu.memory_space<vmem>>, vector<1x16x512xbf16>
    %140 = vector.shape_cast %139 : vector<1x16x512xbf16> to vector<16x512xbf16>
    %cst_70 = arith.constant dense<0.000000e+00> : vector<4x512xf32>
    %141 = tpu.matmul %138, %140, %cst_70 {dimension_numbers = #tpu.dot_dimension_numbers<[1], [0], [0], [1], [0, 0, 1, 1], [], []>} : vector<4x16xbf16>, vector<16x512xbf16>, vector<4x512xf32> -> vector<4x512xf32>
    %142 = arith.addf %135, %141 : vector<4x512xf32>
    %c0_71 = arith.constant 0 : index
    %c6 = arith.constant 6 : index
    %c0_72 = arith.constant 0 : index
    %143 = vector.load %arg24[%c0_71, %c6, %c0_72] : memref<4x16x16xf32, #tpu.memory_space<vmem>>, vector<4x1x16xf32>
    %144 = vector.shape_cast %143 : vector<4x1x16xf32> to vector<4x16xf32>
    %145 = arith.truncf %144 : vector<4x16xf32> to vector<4x16xbf16>
    %c6_73 = arith.constant 6 : index
    %c0_74 = arith.constant 0 : index
    %c0_75 = arith.constant 0 : index
    %146 = vector.load %arg17[%c6_73, %c0_74, %c0_75] : memref<16x16x512xbf16, #tpu.memory_space<vmem>>, vector<1x16x512xbf16>
    %147 = vector.shape_cast %146 : vector<1x16x512xbf16> to vector<16x512xbf16>
    %cst_76 = arith.constant dense<0.000000e+00> : vector<4x512xf32>
    %148 = tpu.matmul %145, %147, %cst_76 {dimension_numbers = #tpu.dot_dimension_numbers<[1], [0], [0], [1], [0, 0, 1, 1], [], []>} : vector<4x16xbf16>, vector<16x512xbf16>, vector<4x512xf32> -> vector<4x512xf32>
    %149 = arith.addf %142, %148 : vector<4x512xf32>
    %c0_77 = arith.constant 0 : index
    %c7 = arith.constant 7 : index
    %c0_78 = arith.constant 0 : index
    %150 = vector.load %arg24[%c0_77, %c7, %c0_78] : memref<4x16x16xf32, #tpu.memory_space<vmem>>, vector<4x1x16xf32>
    %151 = vector.shape_cast %150 : vector<4x1x16xf32> to vector<4x16xf32>
    %152 = arith.truncf %151 : vector<4x16xf32> to vector<4x16xbf16>
    %c7_79 = arith.constant 7 : index
    %c0_80 = arith.constant 0 : index
    %c0_81 = arith.constant 0 : index
    %153 = vector.load %arg17[%c7_79, %c0_80, %c0_81] : memref<16x16x512xbf16, #tpu.memory_space<vmem>>, vector<1x16x512xbf16>
    %154 = vector.shape_cast %153 : vector<1x16x512xbf16> to vector<16x512xbf16>
    %cst_82 = arith.constant dense<0.000000e+00> : vector<4x512xf32>
    %155 = tpu.matmul %152, %154, %cst_82 {dimension_numbers = #tpu.dot_dimension_numbers<[1], [0], [0], [1], [0, 0, 1, 1], [], []>} : vector<4x16xbf16>, vector<16x512xbf16>, vector<4x512xf32> -> vector<4x512xf32>
    %156 = arith.addf %149, %155 : vector<4x512xf32>
    %c0_83 = arith.constant 0 : index
    %c8 = arith.constant 8 : index
    %c0_84 = arith.constant 0 : index
    %157 = vector.load %arg24[%c0_83, %c8, %c0_84] : memref<4x16x16xf32, #tpu.memory_space<vmem>>, vector<4x1x16xf32>
    %158 = vector.shape_cast %157 : vector<4x1x16xf32> to vector<4x16xf32>
    %159 = arith.truncf %158 : vector<4x16xf32> to vector<4x16xbf16>
    %c8_85 = arith.constant 8 : index
    %c0_86 = arith.constant 0 : index
    %c0_87 = arith.constant 0 : index
    %160 = vector.load %arg17[%c8_85, %c0_86, %c0_87] : memref<16x16x512xbf16, #tpu.memory_space<vmem>>, vector<1x16x512xbf16>
    %161 = vector.shape_cast %160 : vector<1x16x512xbf16> to vector<16x512xbf16>
    %cst_88 = arith.constant dense<0.000000e+00> : vector<4x512xf32>
    %162 = tpu.matmul %159, %161, %cst_88 {dimension_numbers = #tpu.dot_dimension_numbers<[1], [0], [0], [1], [0, 0, 1, 1], [], []>} : vector<4x16xbf16>, vector<16x512xbf16>, vector<4x512xf32> -> vector<4x512xf32>
    %163 = arith.addf %156, %162 : vector<4x512xf32>
    %c0_89 = arith.constant 0 : index
    %c9 = arith.constant 9 : index
    %c0_90 = arith.constant 0 : index
    %164 = vector.load %arg24[%c0_89, %c9, %c0_90] : memref<4x16x16xf32, #tpu.memory_space<vmem>>, vector<4x1x16xf32>
    %165 = vector.shape_cast %164 : vector<4x1x16xf32> to vector<4x16xf32>
    %166 = arith.truncf %165 : vector<4x16xf32> to vector<4x16xbf16>
    %c9_91 = arith.constant 9 : index
    %c0_92 = arith.constant 0 : index
    %c0_93 = arith.constant 0 : index
    %167 = vector.load %arg17[%c9_91, %c0_92, %c0_93] : memref<16x16x512xbf16, #tpu.memory_space<vmem>>, vector<1x16x512xbf16>
    %168 = vector.shape_cast %167 : vector<1x16x512xbf16> to vector<16x512xbf16>
    %cst_94 = arith.constant dense<0.000000e+00> : vector<4x512xf32>
    %169 = tpu.matmul %166, %168, %cst_94 {dimension_numbers = #tpu.dot_dimension_numbers<[1], [0], [0], [1], [0, 0, 1, 1], [], []>} : vector<4x16xbf16>, vector<16x512xbf16>, vector<4x512xf32> -> vector<4x512xf32>
    %170 = arith.addf %163, %169 : vector<4x512xf32>
    %c0_95 = arith.constant 0 : index
    %c10 = arith.constant 10 : index
    %c0_96 = arith.constant 0 : index
    %171 = vector.load %arg24[%c0_95, %c10, %c0_96] : memref<4x16x16xf32, #tpu.memory_space<vmem>>, vector<4x1x16xf32>
    %172 = vector.shape_cast %171 : vector<4x1x16xf32> to vector<4x16xf32>
    %173 = arith.truncf %172 : vector<4x16xf32> to vector<4x16xbf16>
    %c10_97 = arith.constant 10 : index
    %c0_98 = arith.constant 0 : index
    %c0_99 = arith.constant 0 : index
    %174 = vector.load %arg17[%c10_97, %c0_98, %c0_99] : memref<16x16x512xbf16, #tpu.memory_space<vmem>>, vector<1x16x512xbf16>
    %175 = vector.shape_cast %174 : vector<1x16x512xbf16> to vector<16x512xbf16>
    %cst_100 = arith.constant dense<0.000000e+00> : vector<4x512xf32>
    %176 = tpu.matmul %173, %175, %cst_100 {dimension_numbers = #tpu.dot_dimension_numbers<[1], [0], [0], [1], [0, 0, 1, 1], [], []>} : vector<4x16xbf16>, vector<16x512xbf16>, vector<4x512xf32> -> vector<4x512xf32>
    %177 = arith.addf %170, %176 : vector<4x512xf32>
    %c0_101 = arith.constant 0 : index
    %c11 = arith.constant 11 : index
    %c0_102 = arith.constant 0 : index
    %178 = vector.load %arg24[%c0_101, %c11, %c0_102] : memref<4x16x16xf32, #tpu.memory_space<vmem>>, vector<4x1x16xf32>
    %179 = vector.shape_cast %178 : vector<4x1x16xf32> to vector<4x16xf32>
    %180 = arith.truncf %179 : vector<4x16xf32> to vector<4x16xbf16>
    %c11_103 = arith.constant 11 : index
    %c0_104 = arith.constant 0 : index
    %c0_105 = arith.constant 0 : index
    %181 = vector.load %arg17[%c11_103, %c0_104, %c0_105] : memref<16x16x512xbf16, #tpu.memory_space<vmem>>, vector<1x16x512xbf16>
    %182 = vector.shape_cast %181 : vector<1x16x512xbf16> to vector<16x512xbf16>
    %cst_106 = arith.constant dense<0.000000e+00> : vector<4x512xf32>
    %183 = tpu.matmul %180, %182, %cst_106 {dimension_numbers = #tpu.dot_dimension_numbers<[1], [0], [0], [1], [0, 0, 1, 1], [], []>} : vector<4x16xbf16>, vector<16x512xbf16>, vector<4x512xf32> -> vector<4x512xf32>
    %184 = arith.addf %177, %183 : vector<4x512xf32>
    %c0_107 = arith.constant 0 : index
    %c12 = arith.constant 12 : index
    %c0_108 = arith.constant 0 : index
    %185 = vector.load %arg24[%c0_107, %c12, %c0_108] : memref<4x16x16xf32, #tpu.memory_space<vmem>>, vector<4x1x16xf32>
    %186 = vector.shape_cast %185 : vector<4x1x16xf32> to vector<4x16xf32>
    %187 = arith.truncf %186 : vector<4x16xf32> to vector<4x16xbf16>
    %c12_109 = arith.constant 12 : index
    %c0_110 = arith.constant 0 : index
    %c0_111 = arith.constant 0 : index
    %188 = vector.load %arg17[%c12_109, %c0_110, %c0_111] : memref<16x16x512xbf16, #tpu.memory_space<vmem>>, vector<1x16x512xbf16>
    %189 = vector.shape_cast %188 : vector<1x16x512xbf16> to vector<16x512xbf16>
    %cst_112 = arith.constant dense<0.000000e+00> : vector<4x512xf32>
    %190 = tpu.matmul %187, %189, %cst_112 {dimension_numbers = #tpu.dot_dimension_numbers<[1], [0], [0], [1], [0, 0, 1, 1], [], []>} : vector<4x16xbf16>, vector<16x512xbf16>, vector<4x512xf32> -> vector<4x512xf32>
    %191 = arith.addf %184, %190 : vector<4x512xf32>
    %c0_113 = arith.constant 0 : index
    %c13 = arith.constant 13 : index
    %c0_114 = arith.constant 0 : index
    %192 = vector.load %arg24[%c0_113, %c13, %c0_114] : memref<4x16x16xf32, #tpu.memory_space<vmem>>, vector<4x1x16xf32>
    %193 = vector.shape_cast %192 : vector<4x1x16xf32> to vector<4x16xf32>
    %194 = arith.truncf %193 : vector<4x16xf32> to vector<4x16xbf16>
    %c13_115 = arith.constant 13 : index
    %c0_116 = arith.constant 0 : index
    %c0_117 = arith.constant 0 : index
    %195 = vector.load %arg17[%c13_115, %c0_116, %c0_117] : memref<16x16x512xbf16, #tpu.memory_space<vmem>>, vector<1x16x512xbf16>
    %196 = vector.shape_cast %195 : vector<1x16x512xbf16> to vector<16x512xbf16>
    %cst_118 = arith.constant dense<0.000000e+00> : vector<4x512xf32>
    %197 = tpu.matmul %194, %196, %cst_118 {dimension_numbers = #tpu.dot_dimension_numbers<[1], [0], [0], [1], [0, 0, 1, 1], [], []>} : vector<4x16xbf16>, vector<16x512xbf16>, vector<4x512xf32> -> vector<4x512xf32>
    %198 = arith.addf %191, %197 : vector<4x512xf32>
    %c0_119 = arith.constant 0 : index
    %c14 = arith.constant 14 : index
    %c0_120 = arith.constant 0 : index
    %199 = vector.load %arg24[%c0_119, %c14, %c0_120] : memref<4x16x16xf32, #tpu.memory_space<vmem>>, vector<4x1x16xf32>
    %200 = vector.shape_cast %199 : vector<4x1x16xf32> to vector<4x16xf32>
    %201 = arith.truncf %200 : vector<4x16xf32> to vector<4x16xbf16>
    %c14_121 = arith.constant 14 : index
    %c0_122 = arith.constant 0 : index
    %c0_123 = arith.constant 0 : index
    %202 = vector.load %arg17[%c14_121, %c0_122, %c0_123] : memref<16x16x512xbf16, #tpu.memory_space<vmem>>, vector<1x16x512xbf16>
    %203 = vector.shape_cast %202 : vector<1x16x512xbf16> to vector<16x512xbf16>
    %cst_124 = arith.constant dense<0.000000e+00> : vector<4x512xf32>
    %204 = tpu.matmul %201, %203, %cst_124 {dimension_numbers = #tpu.dot_dimension_numbers<[1], [0], [0], [1], [0, 0, 1, 1], [], []>} : vector<4x16xbf16>, vector<16x512xbf16>, vector<4x512xf32> -> vector<4x512xf32>
    %205 = arith.addf %198, %204 : vector<4x512xf32>
    %c0_125 = arith.constant 0 : index
    %c15 = arith.constant 15 : index
    %c0_126 = arith.constant 0 : index
    %206 = vector.load %arg24[%c0_125, %c15, %c0_126] : memref<4x16x16xf32, #tpu.memory_space<vmem>>, vector<4x1x16xf32>
    %207 = vector.shape_cast %206 : vector<4x1x16xf32> to vector<4x16xf32>
    %208 = arith.truncf %207 : vector<4x16xf32> to vector<4x16xbf16>
    %c15_127 = arith.constant 15 : index
    %c0_128 = arith.constant 0 : index
    %c0_129 = arith.constant 0 : index
    %209 = vector.load %arg17[%c15_127, %c0_128, %c0_129] : memref<16x16x512xbf16, #tpu.memory_space<vmem>>, vector<1x16x512xbf16>
    %210 = vector.shape_cast %209 : vector<1x16x512xbf16> to vector<16x512xbf16>
    %cst_130 = arith.constant dense<0.000000e+00> : vector<4x512xf32>
    %211 = tpu.matmul %208, %210, %cst_130 {dimension_numbers = #tpu.dot_dimension_numbers<[1], [0], [0], [1], [0, 0, 1, 1], [], []>} : vector<4x16xbf16>, vector<16x512xbf16>, vector<4x512xf32> -> vector<4x512xf32>
    %212 = arith.addf %205, %211 : vector<4x512xf32>
    %c0_131 = arith.constant 0 : index
    %c0_132 = arith.constant 0 : index
    %213 = vector.load %arg18[%c0_131, %c0_132] : memref<1x512xf32, #tpu.memory_space<vmem>>, vector<1x512xf32>
    %214 = vector.broadcast %213 : vector<1x512xf32> to vector<4x512xf32>
    %215 = arith.addf %212, %214 : vector<4x512xf32>
    %cst_133 = arith.constant 0.000000e+00 : f32
    %216 = vector.broadcast %cst_133 : f32 to vector<4x512xf32>
    %217 = arith.maximumf %215, %216 : vector<4x512xf32>
    %218 = arith.truncf %217 : vector<4x512xf32> to vector<4x512xbf16>
    %c0_134 = arith.constant 0 : index
    %c0_135 = arith.constant 0 : index
    %219 = vector.load %arg19[%c0_134, %c0_135] : memref<512x128xbf16, #tpu.memory_space<vmem>>, vector<512x128xbf16>
    %cst_136 = arith.constant dense<0.000000e+00> : vector<4x128xf32>
    %220 = tpu.matmul %218, %219, %cst_136 {dimension_numbers = #tpu.dot_dimension_numbers<[1], [0], [0], [1], [0, 0, 1, 1], [], []>} : vector<4x512xbf16>, vector<512x128xbf16>, vector<4x128xf32> -> vector<4x128xf32>
    %c0_137 = arith.constant 0 : index
    %c0_138 = arith.constant 0 : index
    %221 = vector.load %arg20[%c0_137, %c0_138] : memref<1x128xf32, #tpu.memory_space<vmem>>, vector<1x128xf32>
    %222 = vector.broadcast %221 : vector<1x128xf32> to vector<4x128xf32>
    %223 = arith.addf %220, %222 : vector<4x128xf32>
    %cst_139 = arith.constant 0.000000e+00 : f32
    %224 = vector.broadcast %cst_139 : f32 to vector<4x128xf32>
    %225 = arith.maximumf %223, %224 : vector<4x128xf32>
    %226 = arith.truncf %225 : vector<4x128xf32> to vector<4x128xbf16>
    %c0_140 = arith.constant 0 : index
    %c0_141 = arith.constant 0 : index
    %227 = vector.load %arg21[%c0_140, %c0_141] : memref<128x128xbf16, #tpu.memory_space<vmem>>, vector<128x128xbf16>
    %cst_142 = arith.constant dense<0.000000e+00> : vector<4x128xf32>
    %228 = tpu.matmul %226, %227, %cst_142 {dimension_numbers = #tpu.dot_dimension_numbers<[1], [0], [0], [1], [0, 0, 1, 1], [], []>} : vector<4x128xbf16>, vector<128x128xbf16>, vector<4x128xf32> -> vector<4x128xf32>
    %c0_143 = arith.constant 0 : index
    %c0_144 = arith.constant 0 : index
    %229 = vector.load %arg22[%c0_143, %c0_144] : memref<1x128xf32, #tpu.memory_space<vmem>>, vector<1x128xf32>
    %230 = vector.broadcast %229 : vector<1x128xf32> to vector<4x128xf32>
    %231 = arith.addf %228, %230 : vector<4x128xf32>
    %c0_145 = arith.constant 0 : index
    %c0_146 = arith.constant 0 : index
    %c0_147 = arith.constant 0 : index
    %232 = vector.load %arg23[%c0_145, %c0_146, %c0_147] : memref<1x4x128xf32, #tpu.memory_space<vmem>>, vector<1x4x128xf32>
    %233 = vector.shape_cast %232 : vector<1x4x128xf32> to vector<4x128xf32>
    %234 = vector.shape_cast %231 : vector<4x128xf32> to vector<1x4x128xf32>
    tpu.vector_store %arg23[%c0_145, %c0_146, %c0_147], %234 {strides = array<i32>} : memref<1x4x128xf32, #tpu.memory_space<vmem>>, vector<1x4x128xf32>,
    return
  }
  func.func @transform_0(%arg0: i32) -> (i32, i32, i32) {
    %c0_i32 = arith.constant 0 : i32
    %c0_i32_0 = arith.constant 0 : i32
    %c0_i32_1 = arith.constant 0 : i32
    return %arg0, %c0_i32, %c0_i32_0 : i32, i32, i32
  }
  func.func @transform_1(%arg0: i32) -> (i32, i32) {
    %c0_i32 = arith.constant 0 : i32
    %c0_i32_0 = arith.constant 0 : i32
    %c0_i32_1 = arith.constant 0 : i32
    return %c0_i32, %c0_i32_0 : i32, i32
  }
  func.func @transform_2(%arg0: i32) -> (i32, i32) {
    %c0_i32 = arith.constant 0 : i32
    %c0_i32_0 = arith.constant 0 : i32
    %c0_i32_1 = arith.constant 0 : i32
    return %c0_i32, %c0_i32_0 : i32, i32
  }
  func.func @transform_3(%arg0: i32) -> (i32, i32) {
    %c0_i32 = arith.constant 0 : i32
    %c0_i32_0 = arith.constant 0 : i32
    %c0_i32_1 = arith.constant 0 : i32
    return %c0_i32, %c0_i32_0 : i32, i32
  }
  func.func @transform_4(%arg0: i32) -> (i32, i32) {
    %c0_i32 = arith.constant 0 : i32
    %c0_i32_0 = arith.constant 0 : i32
    %c0_i32_1 = arith.constant 0 : i32
    return %c0_i32, %c0_i32_0 : i32, i32
  }
  func.func @transform_5(%arg0: i32) -> (i32, i32) {
    %c0_i32 = arith.constant 0 : i32
    %c0_i32_0 = arith.constant 0 : i32
    %c0_i32_1 = arith.constant 0 : i32
    return %c0_i32, %c0_i32_0 : i32, i32
  }
  func.func @transform_6(%arg0: i32) -> (i32, i32) {
    %c0_i32 = arith.constant 0 : i32
    %c0_i32_0 = arith.constant 0 : i32
    %c0_i32_1 = arith.constant 0 : i32
    return %c0_i32, %c0_i32_0 : i32, i32
  }
  func.func @transform_7(%arg0: i32) -> (i32, i32) {
    %c0_i32 = arith.constant 0 : i32
    %c0_i32_0 = arith.constant 0 : i32
    %c0_i32_1 = arith.constant 0 : i32
    return %c0_i32, %c0_i32_0 : i32, i32
  }
  func.func @transform_8(%arg0: i32) -> (i32, i32) {
    %c0_i32 = arith.constant 0 : i32
    %c0_i32_0 = arith.constant 0 : i32
    %c0_i32_1 = arith.constant 0 : i32
    return %c0_i32, %c0_i32_0 : i32, i32
  }
  func.func @transform_9(%arg0: i32) -> (i32, i32) {
    %c0_i32 = arith.constant 0 : i32
    %c0_i32_0 = arith.constant 0 : i32
    %c0_i32_1 = arith.constant 0 : i32
    return %c0_i32, %c0_i32_0 : i32, i32
  }
  func.func @transform_10(%arg0: i32) -> (i32, i32) {
    %c0_i32 = arith.constant 0 : i32
    %c0_i32_0 = arith.constant 0 : i32
    %c0_i32_1 = arith.constant 0 : i32
    return %c0_i32, %c0_i32_0 : i32, i32
  }
  func.func @transform_11(%arg0: i32) -> (i32, i32) {
    %c0_i32 = arith.constant 0 : i32
    %c0_i32_0 = arith.constant 0 : i32
    %c0_i32_1 = arith.constant 0 : i32
    return %c0_i32, %c0_i32_0 : i32, i32
  }
  func.func @transform_12(%arg0: i32) -> (i32, i32) {
    %c0_i32 = arith.constant 0 : i32
    %c0_i32_0 = arith.constant 0 : i32
    %c0_i32_1 = arith.constant 0 : i32
    return %c0_i32, %c0_i32_0 : i32, i32
  }
  func.func @transform_13(%arg0: i32) -> (i32, i32) {
    %c0_i32 = arith.constant 0 : i32
    %c0_i32_0 = arith.constant 0 : i32
    %c0_i32_1 = arith.constant 0 : i32
    return %c0_i32, %c0_i32_0 : i32, i32
  }
  func.func @transform_14(%arg0: i32) -> (i32, i32) {
    %c0_i32 = arith.constant 0 : i32
    %c0_i32_0 = arith.constant 0 : i32
    %c0_i32_1 = arith.constant 0 : i32
    return %c0_i32, %c0_i32_0 : i32, i32
  }
  func.func @transform_15(%arg0: i32) -> (i32, i32) {
    %c0_i32 = arith.constant 0 : i32
    %c0_i32_0 = arith.constant 0 : i32
    %c0_i32_1 = arith.constant 0 : i32
    return %c0_i32, %c0_i32_0 : i32, i32
  }
  func.func @transform_16(%arg0: i32) -> (i32, i32, i32) {
    %c0_i32 = arith.constant 0 : i32
    %c0_i32_0 = arith.constant 0 : i32
    %c0_i32_1 = arith.constant 0 : i32
    %c0_i32_2 = arith.constant 0 : i32
    return %c0_i32, %c0_i32_0, %c0_i32_1 : i32, i32, i32
  }
  func.func @transform_17(%arg0: i32) -> (i32, i32) {
    %c0_i32 = arith.constant 0 : i32
    %c0_i32_0 = arith.constant 0 : i32
    %c0_i32_1 = arith.constant 0 : i32
    return %c0_i32, %c0_i32_0 : i32, i32
  }
  func.func @transform_18(%arg0: i32) -> (i32, i32) {
    %c0_i32 = arith.constant 0 : i32
    %c0_i32_0 = arith.constant 0 : i32
    %c0_i32_1 = arith.constant 0 : i32
    return %c0_i32, %c0_i32_0 : i32, i32
  }
  func.func @transform_19(%arg0: i32) -> (i32, i32) {
    %c0_i32 = arith.constant 0 : i32
    %c0_i32_0 = arith.constant 0 : i32
    %c0_i32_1 = arith.constant 0 : i32
    return %c0_i32, %c0_i32_0 : i32, i32
  }
  func.func @transform_20(%arg0: i32) -> (i32, i32) {
    %c0_i32 = arith.constant 0 : i32
    %c0_i32_0 = arith.constant 0 : i32
    %c0_i32_1 = arith.constant 0 : i32
    return %c0_i32, %c0_i32_0 : i32, i32
  }
  func.func @transform_21(%arg0: i32) -> (i32, i32) {
    %c0_i32 = arith.constant 0 : i32
    %c0_i32_0 = arith.constant 0 : i32
    %c0_i32_1 = arith.constant 0 : i32
    return %c0_i32, %c0_i32_0 : i32, i32
  }
  func.func @transform_22(%arg0: i32) -> (i32, i32, i32) {
    %c0_i32 = arith.constant 0 : i32
    %c0_i32_0 = arith.constant 0 : i32
    %c0_i32_1 = arith.constant 0 : i32
    return %arg0, %c0_i32, %c0_i32_0 : i32, i32, i32
  }
}

</mosaic_0001>

<llo_original>
// kernel: cifar10_cnn_forward.1
$region0: #{cifar10_cnn_forward.1}
  #allocation0 [shape = 'u32[]', space=smem, size = 0x4, offset = 0x4, fixed_abs, tag = 'smem constant byte address 0x4 - core index']
  #allocation1 [shape = 'u32[144,128]{1,0:T(1,128)}', space=vmem, size = 0x12000, scoped, tag = 'internal scratch']
  #allocation2 [shape = 'f32[4,16,16]{2,1,0:T(8,128)}', space=vmem, size = 0x8000, scoped, tag = 'scratch operand']
  %s0 = inlined_call_operand.vmem [shape: f32[8,8,1024], index: 0, kind: input, shape index: {}]
  %s1 = inlined_call_operand.vmem [shape: bf16[8,72], index: 1, kind: input, shape index: {}]
  %s2 = inlined_call_operand.vmem [shape: f32[8,1], index: 2, kind: input, shape index: {}]
  %s3 = inlined_call_operand.vmem [shape: bf16[8,72], index: 3, kind: input, shape index: {}]
  %s4 = inlined_call_operand.vmem [shape: f32[8,1], index: 4, kind: input, shape index: {}]
  %s5 = inlined_call_operand.vmem [shape: bf16[1024,256], index: 5, kind: input, shape index: {}]
  %s6 = inlined_call_operand.vmem [shape: bf16[16,72], index: 6, kind: input, shape index: {}]
  %s7 = inlined_call_operand.vmem [shape: f32[16,1], index: 7, kind: input, shape index: {}]
  %s8 = inlined_call_operand.vmem [shape: bf16[16,144], index: 8, kind: input, shape index: {}]
  %s9 = inlined_call_operand.vmem [shape: f32[16,1], index: 9, kind: input, shape index: {}]
  %s10 = inlined_call_operand.vmem [shape: bf16[256,64], index: 10, kind: input, shape index: {}]
  %s11 = inlined_call_operand.vmem [shape: bf16[16,144], index: 11, kind: input, shape index: {}]
  %s12 = inlined_call_operand.vmem [shape: f32[16,1], index: 12, kind: input, shape index: {}]
  %s13 = inlined_call_operand.vmem [shape: bf16[16,144], index: 13, kind: input, shape index: {}]
  %s14 = inlined_call_operand.vmem [shape: f32[16,1], index: 14, kind: input, shape index: {}]
  %s15 = inlined_call_operand.vmem [shape: bf16[64,16], index: 15, kind: input, shape index: {}]
  %s16 = inlined_call_operand.vmem [shape: bf16[16,16,512], index: 16, kind: input, shape index: {}]
  %s17 = inlined_call_operand.vmem [shape: f32[1,512], index: 17, kind: input, shape index: {}]
  %s18 = inlined_call_operand.vmem [shape: bf16[512,128], index: 18, kind: input, shape index: {}]
  %s19 = inlined_call_operand.vmem [shape: f32[1,128], index: 19, kind: input, shape index: {}]
  %s20 = inlined_call_operand.vmem [shape: bf16[128,128], index: 20, kind: input, shape index: {}]
  %s21 = inlined_call_operand.vmem [shape: f32[1,128], index: 21, kind: input, shape index: {}]
  %s22 = inlined_call_operand.hbm [shape: f32[2,4,128], index: 22, kind: output, shape index: {}]
  %s23 = sld [smem:[#allocation0]]
  $region128: #{cifar10_cnn_forward.1} parent=0
    _
  %s25 = ssub.s32 1, %s23
  %s26 = scalar_select 0, %s25, %s23
  $region1: #{cifar10_cnn_forward.1} parent=0
    #allocation3 [shape = 'u8[4096]{0}', space=vmem, size = 0x1000, scoped, tag = 'output window, operand 0']
    #allocation4 [shape = 's32[2]{0}', space=sflag, size = 0x8, scoped, tag = 'scoped memory for cifar10_cnn_forward.1']
    %27 = vsyncpa [#allocation4], 0
    %s28 = scalar_lea.sflag [#allocation4], 1
    %29 = vsyncpa %s28, 0
    loop: start=0, step=1, limit=4
    $region2: #{cifar10_cnn_forward.1} parent=1 // loop_pre_header
      _
    $region3: #{cifar10_cnn_forward.1} parent=1 // loop_header
      %s31 = sphi 0, %s35
      %p32 = scmp.ge.s32.totalorder %s31, 4
      %s41 = sphi 0, %s43
      %s44 = sphi 0, %s41
      %s45 = sphi 0, %s44
      %s61 = sphi 0, %s45
      %s65 = sphi 0, %s65
      %s67 = sphi 0, %s65
      %s68 = sphi 0, %s67
      %s82 = sphi 0, %s68
      %s86 = sphi 0, %s86
      %s88 = sphi 0, %s86
      %s89 = sphi 0, %s88
      %s103 = sphi 0, %s89
      %s107 = sphi 0, %s107
      %s109 = sphi 0, %s107
      %s110 = sphi 0, %s109
      %s124 = sphi 0, %s110
      %s128 = sphi 0, %s128
      %s130 = sphi 0, %s128
      %s131 = sphi 0, %s130
      %s145 = sphi 0, %s131
      %s149 = sphi 0, %s149
      %s151 = sphi 0, %s149
      %s152 = sphi 0, %s151
      %s166 = sphi 0, %s152
      %s170 = sphi 0, %s170
      %s172 = sphi 0, %s170
      %s173 = sphi 0, %s172
      %s187 = sphi 0, %s173
      %s191 = sphi 0, %s191
      %s193 = sphi 0, %s191
      %s194 = sphi 0, %s193
      %s208 = sphi 0, %s194
      %s212 = sphi 0, %s212
      %s214 = sphi 0, %s212
      %s215 = sphi 0, %s214
      %s229 = sphi 0, %s215
      %s233 = sphi 0, %s233
      %s235 = sphi 0, %s233
      %s236 = sphi 0, %s235
      %s250 = sphi 0, %s236
      %s254 = sphi 0, %s254
      %s256 = sphi 0, %s254
      %s257 = sphi 0, %s256
      %s271 = sphi 0, %s257
      %s275 = sphi 0, %s275
      %s277 = sphi 0, %s275
      %s278 = sphi 0, %s277
      %s292 = sphi 0, %s278
      %s296 = sphi 0, %s296
      %s298 = sphi 0, %s296
      %s299 = sphi 0, %s298
      %s313 = sphi 0, %s299
      %s317 = sphi 0, %s317
      %s319 = sphi 0, %s317
      %s320 = sphi 0, %s319
      %s334 = sphi 0, %s320
      %s338 = sphi 0, %s338
      %s340 = sphi 0, %s338
      %s341 = sphi 0, %s340
      %s355 = sphi 0, %s341
      %s359 = sphi 0, %s359
      %s361 = sphi 0, %s359
      %s362 = sphi 0, %s361
      %s376 = sphi 0, %s362
      %s380 = sphi 0, %s380
      %s382 = sphi 0, %s380
      %s383 = sphi 0, %s382
      %s397 = sphi 0, %s383
      %s401 = sphi 0, %s401
      %s403 = sphi 0, %s401
      %s404 = sphi 0, %s403
      %s418 = sphi 0, %s404
      %s422 = sphi 0, %s422
      %s424 = sphi 0, %s422
      %s425 = sphi 0, %s424
      %s439 = sphi 0, %s425
      %s443 = sphi 0, %s443
      %s445 = sphi 0, %s443
      %s446 = sphi 0, %s445
      %s460 = sphi 0, %s446
      %s464 = sphi 0, %s464
      %s466 = sphi 0, %s464
      %s467 = sphi 0, %s466
      %s481 = sphi 0, %s467
      %s485 = sphi 0, %s485
      %s487 = sphi 0, %s485
      %s488 = sphi 0, %s487
      %s502 = sphi 0, %s488
      %s508 = sphi 0, %s510
      %s511 = sphi 0, %s508
      %s512 = sphi 0, %s511
      %s528 = sphi 0, %s512
    $region4: #{cifar10_cnn_forward.1} parent=1 // loop_header_branch
      %34 = sbr.rel (%p32) target = $region8
    $region5: #{cifar10_cnn_forward.1} parent=1 // loop_body
      %s36 = ssub.s32 %s31, 1
      %s37 = ssub.s32 %s31, 2
      %s38 = sadd.s32 %s31, 1
      %s39 = ssub.s32 %s31, %s38
      %p40 = scmp.eq.s32.totalorder %s39, 0
      %s42 = sadd.s32 %s41, 1
      %s43 = scalar_select %p40, %s41, %s42
      %p46 = pneg %p40
      %p47 = scmp.eq.s32.totalorder %s31, 1
      %p48 = por %p46, %p47
      %p49 = scmp.ne.s32.totalorder %s41, %s44
      %p50 = scmp.eq.s32.totalorder %s31, 0
      %p51 = por %p49, %p50
      %p52 = scmp.ne.s32.totalorder %s41, %s44
      %p53 = scmp.eq.s32.totalorder %s36, 1
      %p54 = por %p52, %p53
      %p55 = scmp.ne.s32.totalorder %s44, %s45
      %p56 = scmp.eq.s32.totalorder %s36, 0
      %p57 = por %p55, %p56
      %p58 = scmp.ne.s32.totalorder %s44, %s45
      %p59 = scmp.eq.s32.totalorder %s37, 1
      %p60 = por %p58, %p59
      %p62 = scmp.ne.s32.totalorder %s45, %s61
      %p63 = scmp.eq.s32.totalorder %s37, 0
      %p64 = por %p62, %p63
      %s66 = sadd.s32 %s65, 1
      %p69 = scmp.eq.s32.totalorder %s31, 1
      %p70 = scmp.ne.s32.totalorder %s65, %s67
      %p71 = scmp.eq.s32.totalorder %s31, 0
      %p72 = por %p70, %p71
      %p73 = scmp.ne.s32.totalorder %s65, %s67
      %p74 = scmp.eq.s32.totalorder %s36, 1
      %p75 = por %p73, %p74
      %p76 = scmp.ne.s32.totalorder %s67, %s68
      %p77 = scmp.eq.s32.totalorder %s36, 0
      %p78 = por %p76, %p77
      %p79 = scmp.ne.s32.totalorder %s67, %s68
      %p80 = scmp.eq.s32.totalorder %s37, 1
      %p81 = por %p79, %p80
      %p83 = scmp.ne.s32.totalorder %s68, %s82
      %p84 = scmp.eq.s32.totalorder %s37, 0
      %p85 = por %p83, %p84
      %s87 = sadd.s32 %s86, 1
      %p90 = scmp.eq.s32.totalorder %s31, 1
      %p91 = scmp.ne.s32.totalorder %s86, %s88
      %p92 = scmp.eq.s32.totalorder %s31, 0
      %p93 = por %p91, %p92
      %p94 = scmp.ne.s32.totalorder %s86, %s88
      %p95 = scmp.eq.s32.totalorder %s36, 1
      %p96 = por %p94, %p95
      %p97 = scmp.ne.s32.totalorder %s88, %s89
      %p98 = scmp.eq.s32.totalorder %s36, 0
      %p99 = por %p97, %p98
      %p100 = scmp.ne.s32.totalorder %s88, %s89
      %p101 = scmp.eq.s32.totalorder %s37, 1
      %p102 = por %p100, %p101
      %p104 = scmp.ne.s32.totalorder %s89, %s103
      %p105 = scmp.eq.s32.totalorder %s37, 0
      %p106 = por %p104, %p105
      %s108 = sadd.s32 %s107, 1
      %p111 = scmp.eq.s32.totalorder %s31, 1
      %p112 = scmp.ne.s32.totalorder %s107, %s109
      %p113 = scmp.eq.s32.totalorder %s31, 0
      %p114 = por %p112, %p113
      %p115 = scmp.ne.s32.totalorder %s107, %s109
      %p116 = scmp.eq.s32.totalorder %s36, 1
      %p117 = por %p115, %p116
      %p118 = scmp.ne.s32.totalorder %s109, %s110
      %p119 = scmp.eq.s32.totalorder %s36, 0
      %p120 = por %p118, %p119
      %p121 = scmp.ne.s32.totalorder %s109, %s110
      %p122 = scmp.eq.s32.totalorder %s37, 1
      %p123 = por %p121, %p122
      %p125 = scmp.ne.s32.totalorder %s110, %s124
      %p126 = scmp.eq.s32.totalorder %s37, 0
      %p127 = por %p125, %p126
      %s129 = sadd.s32 %s128, 1
      %p132 = scmp.eq.s32.totalorder %s31, 1
      %p133 = scmp.ne.s32.totalorder %s128, %s130
      %p134 = scmp.eq.s32.totalorder %s31, 0
      %p135 = por %p133, %p134
      %p136 = scmp.ne.s32.totalorder %s128, %s130
      %p137 = scmp.eq.s32.totalorder %s36, 1
      %p138 = por %p136, %p137
      %p139 = scmp.ne.s32.totalorder %s130, %s131
      %p140 = scmp.eq.s32.totalorder %s36, 0
      %p141 = por %p139, %p140
      %p142 = scmp.ne.s32.totalorder %s130, %s131
      %p143 = scmp.eq.s32.totalorder %s37, 1
      %p144 = por %p142, %p143
      %p146 = scmp.ne.s32.totalorder %s131, %s145
      %p147 = scmp.eq.s32.totalorder %s37, 0
      %p148 = por %p146, %p147
      %s150 = sadd.s32 %s149, 1
      %p153 = scmp.eq.s32.totalorder %s31, 1
      %p154 = scmp.ne.s32.totalorder %s149, %s151
      %p155 = scmp.eq.s32.totalorder %s31, 0
      %p156 = por %p154, %p155
      %p157 = scmp.ne.s32.totalorder %s149, %s151
      %p158 = scmp.eq.s32.totalorder %s36, 1
      %p159 = por %p157, %p158
      %p160 = scmp.ne.s32.totalorder %s151, %s152
      %p161 = scmp.eq.s32.totalorder %s36, 0
      %p162 = por %p160, %p161
      %p163 = scmp.ne.s32.totalorder %s151, %s152
      %p164 = scmp.eq.s32.totalorder %s37, 1
      %p165 = por %p163, %p164
      %p167 = scmp.ne.s32.totalorder %s152, %s166
      %p168 = scmp.eq.s32.totalorder %s37, 0
      %p169 = por %p167, %p168
      %s171 = sadd.s32 %s170, 1
      %p174 = scmp.eq.s32.totalorder %s31, 1
      %p175 = scmp.ne.s32.totalorder %s170, %s172
      %p176 = scmp.eq.s32.totalorder %s31, 0
      %p177 = por %p175, %p176
      %p178 = scmp.ne.s32.totalorder %s170, %s172
      %p179 = scmp.eq.s32.totalorder %s36, 1
      %p180 = por %p178, %p179
      %p181 = scmp.ne.s32.totalorder %s172, %s173
      %p182 = scmp.eq.s32.totalorder %s36, 0
      %p183 = por %p181, %p182
      %p184 = scmp.ne.s32.totalorder %s172, %s173
      %p185 = scmp.eq.s32.totalorder %s37, 1
      %p186 = por %p184, %p185
      %p188 = scmp.ne.s32.totalorder %s173, %s187
      %p189 = scmp.eq.s32.totalorder %s37, 0
      %p190 = por %p188, %p189
      %s192 = sadd.s32 %s191, 1
      %p195 = scmp.eq.s32.totalorder %s31, 1
      %p196 = scmp.ne.s32.totalorder %s191, %s193
      %p197 = scmp.eq.s32.totalorder %s31, 0
      %p198 = por %p196, %p197
      %p199 = scmp.ne.s32.totalorder %s191, %s193
      %p200 = scmp.eq.s32.totalorder %s36, 1
      %p201 = por %p199, %p200
      %p202 = scmp.ne.s32.totalorder %s193, %s194
      %p203 = scmp.eq.s32.totalorder %s36, 0
      %p204 = por %p202, %p203
      %p205 = scmp.ne.s32.totalorder %s193, %s194
      %p206 = scmp.eq.s32.totalorder %s37, 1
      %p207 = por %p205, %p206
      %p209 = scmp.ne.s32.totalorder %s194, %s208
      %p210 = scmp.eq.s32.totalorder %s37, 0
      %p211 = por %p209, %p210
      %s213 = sadd.s32 %s212, 1
      %p216 = scmp.eq.s32.totalorder %s31, 1
      %p217 = scmp.ne.s32.totalorder %s212, %s214
      %p218 = scmp.eq.s32.totalorder %s31, 0
      %p219 = por %p217, %p218
      %p220 = scmp.ne.s32.totalorder %s212, %s214
      %p221 = scmp.eq.s32.totalorder %s36, 1
      %p222 = por %p220, %p221
      %p223 = scmp.ne.s32.totalorder %s214, %s215
      %p224 = scmp.eq.s32.totalorder %s36, 0
      %p225 = por %p223, %p224
      %p226 = scmp.ne.s32.totalorder %s214, %s215
      %p227 = scmp.eq.s32.totalorder %s37, 1
      %p228 = por %p226, %p227
      %p230 = scmp.ne.s32.totalorder %s215, %s229
      %p231 = scmp.eq.s32.totalorder %s37, 0
      %p232 = por %p230, %p231
      %s234 = sadd.s32 %s233, 1
      %p237 = scmp.eq.s32.totalorder %s31, 1
      %p238 = scmp.ne.s32.totalorder %s233, %s235
      %p239 = scmp.eq.s32.totalorder %s31, 0
      %p240 = por %p238, %p239
      %p241 = scmp.ne.s32.totalorder %s233, %s235
      %p242 = scmp.eq.s32.totalorder %s36, 1
      %p243 = por %p241, %p242
      %p244 = scmp.ne.s32.totalorder %s235, %s236
      %p245 = scmp.eq.s32.totalorder %s36, 0
      %p246 = por %p244, %p245
      %p247 = scmp.ne.s32.totalorder %s235, %s236
      %p248 = scmp.eq.s32.totalorder %s37, 1
      %p249 = por %p247, %p248
      %p251 = scmp.ne.s32.totalorder %s236, %s250
      %p252 = scmp.eq.s32.totalorder %s37, 0
      %p253 = por %p251, %p252
      %s255 = sadd.s32 %s254, 1
      %p258 = scmp.eq.s32.totalorder %s31, 1
      %p259 = scmp.ne.s32.totalorder %s254, %s256
      %p260 = scmp.eq.s32.totalorder %s31, 0
      %p261 = por %p259, %p260
      %p262 = scmp.ne.s32.totalorder %s254, %s256
      %p263 = scmp.eq.s32.totalorder %s36, 1
      %p264 = por %p262, %p263
      %p265 = scmp.ne.s32.totalorder %s256, %s257
      %p266 = scmp.eq.s32.totalorder %s36, 0
      %p267 = por %p265, %p266
      %p268 = scmp.ne.s32.totalorder %s256, %s257
      %p269 = scmp.eq.s32.totalorder %s37, 1
      %p270 = por %p268, %p269
      %p272 = scmp.ne.s32.totalorder %s257, %s271
      %p273 = scmp.eq.s32.totalorder %s37, 0
      %p274 = por %p272, %p273
      %s276 = sadd.s32 %s275, 1
      %p279 = scmp.eq.s32.totalorder %s31, 1
      %p280 = scmp.ne.s32.totalorder %s275, %s277
      %p281 = scmp.eq.s32.totalorder %s31, 0
      %p282 = por %p280, %p281
      %p283 = scmp.ne.s32.totalorder %s275, %s277
      %p284 = scmp.eq.s32.totalorder %s36, 1
      %p285 = por %p283, %p284
      %p286 = scmp.ne.s32.totalorder %s277, %s278
      %p287 = scmp.eq.s32.totalorder %s36, 0
      %p288 = por %p286, %p287
      %p289 = scmp.ne.s32.totalorder %s277, %s278
      %p290 = scmp.eq.s32.totalorder %s37, 1
      %p291 = por %p289, %p290
      %p293 = scmp.ne.s32.totalorder %s278, %s292
      %p294 = scmp.eq.s32.totalorder %s37, 0
      %p295 = por %p293, %p294
      %s297 = sadd.s32 %s296, 1
      %p300 = scmp.eq.s32.totalorder %s31, 1
      %p301 = scmp.ne.s32.totalorder %s296, %s298
      %p302 = scmp.eq.s32.totalorder %s31, 0
      %p303 = por %p301, %p302
      %p304 = scmp.ne.s32.totalorder %s296, %s298
      %p305 = scmp.eq.s32.totalorder %s36, 1
      %p306 = por %p304, %p305
      %p307 = scmp.ne.s32.totalorder %s298, %s299
      %p308 = scmp.eq.s32.totalorder %s36, 0
      %p309 = por %p307, %p308
      %p310 = scmp.ne.s32.totalorder %s298, %s299
      %p311 = scmp.eq.s32.totalorder %s37, 1
      %p312 = por %p310, %p311
      %p314 = scmp.ne.s32.totalorder %s299, %s313
      %p315 = scmp.eq.s32.totalorder %s37, 0
      %p316 = por %p314, %p315
      %s318 = sadd.s32 %s317, 1
      %p321 = scmp.eq.s32.totalorder %s31, 1
      %p322 = scmp.ne.s32.totalorder %s317, %s319
      %p323 = scmp.eq.s32.totalorder %s31, 0
      %p324 = por %p322, %p323
      %p325 = scmp.ne.s32.totalorder %s317, %s319
      %p326 = scmp.eq.s32.totalorder %s36, 1
      %p327 = por %p325, %p326
      %p328 = scmp.ne.s32.totalorder %s319, %s320
      %p329 = scmp.eq.s32.totalorder %s36, 0
      %p330 = por %p328, %p329
      %p331 = scmp.ne.s32.totalorder %s319, %s320
      %p332 = scmp.eq.s32.totalorder %s37, 1
      %p333 = por %p331, %p332
      %p335 = scmp.ne.s32.totalorder %s320, %s334
      %p336 = scmp.eq.s32.totalorder %s37, 0
      %p337 = por %p335, %p336
      %s339 = sadd.s32 %s338, 1
      %p342 = scmp.eq.s32.totalorder %s31, 1
      %p343 = scmp.ne.s32.totalorder %s338, %s340
      %p344 = scmp.eq.s32.totalorder %s31, 0
      %p345 = por %p343, %p344
      %p346 = scmp.ne.s32.totalorder %s338, %s340
      %p347 = scmp.eq.s32.totalorder %s36, 1
      %p348 = por %p346, %p347
      %p349 = scmp.ne.s32.totalorder %s340, %s341
      %p350 = scmp.eq.s32.totalorder %s36, 0
      %p351 = por %p349, %p350
      %p352 = scmp.ne.s32.totalorder %s340, %s341
      %p353 = scmp.eq.s32.totalorder %s37, 1
      %p354 = por %p352, %p353
      %p356 = scmp.ne.s32.totalorder %s341, %s355
      %p357 = scmp.eq.s32.totalorder %s37, 0
      %p358 = por %p356, %p357
      %s360 = sadd.s32 %s359, 1
      %p363 = scmp.eq.s32.totalorder %s31, 1
      %p364 = scmp.ne.s32.totalorder %s359, %s361
      %p365 = scmp.eq.s32.totalorder %s31, 0
      %p366 = por %p364, %p365
      %p367 = scmp.ne.s32.totalorder %s359, %s361
      %p368 = scmp.eq.s32.totalorder %s36, 1
      %p369 = por %p367, %p368
      %p370 = scmp.ne.s32.totalorder %s361, %s362
      %p371 = scmp.eq.s32.totalorder %s36, 0
      %p372 = por %p370, %p371
      %p373 = scmp.ne.s32.totalorder %s361, %s362
      %p374 = scmp.eq.s32.totalorder %s37, 1
      %p375 = por %p373, %p374
      %p377 = scmp.ne.s32.totalorder %s362, %s376
      %p378 = scmp.eq.s32.totalorder %s37, 0
      %p379 = por %p377, %p378
      %s381 = sadd.s32 %s380, 1
      %p384 = scmp.eq.s32.totalorder %s31, 1
      %p385 = scmp.ne.s32.totalorder %s380, %s382
      %p386 = scmp.eq.s32.totalorder %s31, 0
      %p387 = por %p385, %p386
      %p388 = scmp.ne.s32.totalorder %s380, %s382
      %p389 = scmp.eq.s32.totalorder %s36, 1
      %p390 = por %p388, %p389
      %p391 = scmp.ne.s32.totalorder %s382, %s383
      %p392 = scmp.eq.s32.totalorder %s36, 0
      %p393 = por %p391, %p392
      %p394 = scmp.ne.s32.totalorder %s382, %s383
      %p395 = scmp.eq.s32.totalorder %s37, 1
      %p396 = por %p394, %p395
      %p398 = scmp.ne.s32.totalorder %s383, %s397
      %p399 = scmp.eq.s32.totalorder %s37, 0
      %p400 = por %p398, %p399
      %s402 = sadd.s32 %s401, 1
      %p405 = scmp.eq.s32.totalorder %s31, 1
      %p406 = scmp.ne.s32.totalorder %s401, %s403
      %p407 = scmp.eq.s32.totalorder %s31, 0
      %p408 = por %p406, %p407
      %p409 = scmp.ne.s32.totalorder %s401, %s403
      %p410 = scmp.eq.s32.totalorder %s36, 1
      %p411 = por %p409, %p410
      %p412 = scmp.ne.s32.totalorder %s403, %s404
      %p413 = scmp.eq.s32.totalorder %s36, 0
      %p414 = por %p412, %p413
      %p415 = scmp.ne.s32.totalorder %s403, %s404
      %p416 = scmp.eq.s32.totalorder %s37, 1
      %p417 = por %p415, %p416
      %p419 = scmp.ne.s32.totalorder %s404, %s418
      %p420 = scmp.eq.s32.totalorder %s37, 0
      %p421 = por %p419, %p420
      %s423 = sadd.s32 %s422, 1
      %p426 = scmp.eq.s32.totalorder %s31, 1
      %p427 = scmp.ne.s32.totalorder %s422, %s424
      %p428 = scmp.eq.s32.totalorder %s31, 0
      %p429 = por %p427, %p428
      %p430 = scmp.ne.s32.totalorder %s422, %s424
      %p431 = scmp.eq.s32.totalorder %s36, 1
      %p432 = por %p430, %p431
      %p433 = scmp.ne.s32.totalorder %s424, %s425
      %p434 = scmp.eq.s32.totalorder %s36, 0
      %p435 = por %p433, %p434
      %p436 = scmp.ne.s32.totalorder %s424, %s425
      %p437 = scmp.eq.s32.totalorder %s37, 1
      %p438 = por %p436, %p437
      %p440 = scmp.ne.s32.totalorder %s425, %s439
      %p441 = scmp.eq.s32.totalorder %s37, 0
      %p442 = por %p440, %p441
      %s444 = sadd.s32 %s443, 1
      %p447 = scmp.eq.s32.totalorder %s31, 1
      %p448 = scmp.ne.s32.totalorder %s443, %s445
      %p449 = scmp.eq.s32.totalorder %s31, 0
      %p450 = por %p448, %p449
      %p451 = scmp.ne.s32.totalorder %s443, %s445
      %p452 = scmp.eq.s32.totalorder %s36, 1
      %p453 = por %p451, %p452
      %p454 = scmp.ne.s32.totalorder %s445, %s446
      %p455 = scmp.eq.s32.totalorder %s36, 0
      %p456 = por %p454, %p455
      %p457 = scmp.ne.s32.totalorder %s445, %s446
      %p458 = scmp.eq.s32.totalorder %s37, 1
      %p459 = por %p457, %p458
      %p461 = scmp.ne.s32.totalorder %s446, %s460
      %p462 = scmp.eq.s32.totalorder %s37, 0
      %p463 = por %p461, %p462
      %s465 = sadd.s32 %s464, 1
      %p468 = scmp.eq.s32.totalorder %s31, 1
      %p469 = scmp.ne.s32.totalorder %s464, %s466
      %p470 = scmp.eq.s32.totalorder %s31, 0
      %p471 = por %p469, %p470
      %p472 = scmp.ne.s32.totalorder %s464, %s466
      %p473 = scmp.eq.s32.totalorder %s36, 1
      %p474 = por %p472, %p473
      %p475 = scmp.ne.s32.totalorder %s466, %s467
      %p476 = scmp.eq.s32.totalorder %s36, 0
      %p477 = por %p475, %p476
      %p478 = scmp.ne.s32.totalorder %s466, %s467
      %p479 = scmp.eq.s32.totalorder %s37, 1
      %p480 = por %p478, %p479
      %p482 = scmp.ne.s32.totalorder %s467, %s481
      %p483 = scmp.eq.s32.totalorder %s37, 0
      %p484 = por %p482, %p483
      %s486 = sadd.s32 %s485, 1
      %p489 = scmp.eq.s32.totalorder %s31, 1
      %p490 = scmp.ne.s32.totalorder %s485, %s487
      %p491 = scmp.eq.s32.totalorder %s31, 0
      %p492 = por %p490, %p491
      %p493 = scmp.ne.s32.totalorder %s485, %s487
      %p494 = scmp.eq.s32.totalorder %s36, 1
      %p495 = por %p493, %p494
      %p496 = scmp.ne.s32.totalorder %s487, %s488
      %p497 = scmp.eq.s32.totalorder %s36, 0
      %p498 = por %p496, %p497
      %p499 = scmp.ne.s32.totalorder %s487, %s488
      %p500 = scmp.eq.s32.totalorder %s37, 1
      %p501 = por %p499, %p500
      %p503 = scmp.ne.s32.totalorder %s488, %s502
      %p504 = scmp.eq.s32.totalorder %s37, 0
      %p505 = por %p503, %p504
      %s506 = ssub.s32 %s31, %s38
      %p507 = scmp.eq.s32.totalorder %s506, 0
      %s509 = sadd.s32 %s508, 1
      %s510 = scalar_select %p507, %s508, %s509
      %p513 = pneg %p507
      %p514 = scmp.eq.s32.totalorder %s31, 1
      %p515 = por %p513, %p514
      %p516 = scmp.ne.s32.totalorder %s508, %s511
      %p517 = scmp.eq.s32.totalorder %s31, 0
      %p518 = por %p516, %p517
      %p519 = scmp.ne.s32.totalorder %s508, %s511
      %p520 = scmp.eq.s32.totalorder %s36, 1
      %p521 = por %p519, %p520
      %p522 = scmp.ne.s32.totalorder %s511, %s512
      %p523 = scmp.eq.s32.totalorder %s36, 0
      %p524 = por %p522, %p523
      %p525 = scmp.ne.s32.totalorder %s511, %s512
      %p526 = scmp.eq.s32.totalorder %s37, 1
      %p527 = por %p525, %p526
      %p529 = scmp.ne.s32.totalorder %s512, %s528
      %p530 = scmp.eq.s32.totalorder %s37, 0
      %p531 = por %p529, %p530
      %p532 = scmp.le.s32.totalorder 1, %s31
      %p533 = scmp.lt.s32.totalorder %s31, 3
      %p534 = pnand %p532, %p533
      %p535 = pneg %p534
      // Predicated region
      $region9: #{cifar10_cnn_forward.1} parent=5 // pred_check
        _
      $region10: #{cifar10_cnn_forward.1} parent=5 // pred_check_branch
        %537 = sbr.rel (%p534) target = $region12
      $region11: #{cifar10_cnn_forward.1} parent=5 // pred_region
        %s538 = ssub.s32 %s31, 1
        // Predicated region
        $region13: #{cifar10_cnn_forward.1} parent=11 // pred_check
          %p539 = pneg %p78
        $region14: #{cifar10_cnn_forward.1} parent=11 // pred_check_branch
          %541 = sbr.rel (%p539) target = $region16
        $region15: #{cifar10_cnn_forward.1} parent=11 // pred_region
          _
        $region16: #{cifar10_cnn_forward.1} parent=11 // pred_fallthru
          _
        // Predicated region
        $region17: #{cifar10_cnn_forward.1} parent=11 // pred_check
          %p542 = pneg %p99
        $region18: #{cifar10_cnn_forward.1} parent=11 // pred_check_branch
          %544 = sbr.rel (%p542) target = $region20
        $region19: #{cifar10_cnn_forward.1} parent=11 // pred_region
          _
        $region20: #{cifar10_cnn_forward.1} parent=11 // pred_fallthru
          _
        // Predicated region
        $region21: #{cifar10_cnn_forward.1} parent=11 // pred_check
          %p545 = pneg %p120
        $region22: #{cifar10_cnn_forward.1} parent=11 // pred_check_branch
          %547 = sbr.rel (%p545) target = $region24
        $region23: #{cifar10_cnn_forward.1} parent=11 // pred_region
          _
        $region24: #{cifar10_cnn_forward.1} parent=11 // pred_fallthru
          _
        // Predicated region
        $region25: #{cifar10_cnn_forward.1} parent=11 // pred_check
          %p548 = pneg %p141
        $region26: #{cifar10_cnn_forward.1} parent=11 // pred_check_branch
          %550 = sbr.rel (%p548) target = $region28
        $region27: #{cifar10_cnn_forward.1} parent=11 // pred_region
          _
        $region28: #{cifar10_cnn_forward.1} parent=11 // pred_fallthru
          _
        // Predicated region
        $region29: #{cifar10_cnn_forward.1} parent=11 // pred_check
          %p551 = pneg %p162
        $region30: #{cifar10_cnn_forward.1} parent=11 // pred_check_branch
          %553 = sbr.rel (%p551) target = $region32
        $region31: #{cifar10_cnn_forward.1} parent=11 // pred_region
          _
        $region32: #{cifar10_cnn_forward.1} parent=11 // pred_fallthru
          _
        // Predicated region
        $region33: #{cifar10_cnn_forward.1} parent=11 // pred_check
          %p554 = pneg %p183
        $region34: #{cifar10_cnn_forward.1} parent=11 // pred_check_branch
          %556 = sbr.rel (%p554) target = $region36
        $region35: #{cifar10_cnn_forward.1} parent=11 // pred_region
          _
        $region36: #{cifar10_cnn_forward.1} parent=11 // pred_fallthru
          _
        // Predicated region
        $region37: #{cifar10_cnn_forward.1} parent=11 // pred_check
          %p557 = pneg %p204
        $region38: #{cifar10_cnn_forward.1} parent=11 // pred_check_branch
          %559 = sbr.rel (%p557) target = $region40
        $region39: #{cifar10_cnn_forward.1} parent=11 // pred_region
          _
        $region40: #{cifar10_cnn_forward.1} parent=11 // pred_fallthru
          _
        // Predicated region
        $region41: #{cifar10_cnn_forward.1} parent=11 // pred_check
          %p560 = pneg %p225
        $region42: #{cifar10_cnn_forward.1} parent=11 // pred_check_branch
          %562 = sbr.rel (%p560) target = $region44
        $region43: #{cifar10_cnn_forward.1} parent=11 // pred_region
          _
        $region44: #{cifar10_cnn_forward.1} parent=11 // pred_fallthru
          _
        // Predicated region
        $region45: #{cifar10_cnn_forward.1} parent=11 // pred_check
          %p563 = pneg %p246
        $region46: #{cifar10_cnn_forward.1} parent=11 // pred_check_branch
          %565 = sbr.rel (%p563) target = $region48
        $region47: #{cifar10_cnn_forward.1} parent=11 // pred_region
          _
        $region48: #{cifar10_cnn_forward.1} parent=11 // pred_fallthru
          _
        // Predicated region
        $region49: #{cifar10_cnn_forward.1} parent=11 // pred_check
          %p566 = pneg %p267
        $region50: #{cifar10_cnn_forward.1} parent=11 // pred_check_branch
          %568 = sbr.rel (%p566) target = $region52
        $region51: #{cifar10_cnn_forward.1} parent=11 // pred_region
          _
        $region52: #{cifar10_cnn_forward.1} parent=11 // pred_fallthru
          _
        // Predicated region
        $region53: #{cifar10_cnn_forward.1} parent=11 // pred_check
          %p569 = pneg %p288
        $region54: #{cifar10_cnn_forward.1} parent=11 // pred_check_branch
          %571 = sbr.rel (%p569) target = $region56
        $region55: #{cifar10_cnn_forward.1} parent=11 // pred_region
          _
        $region56: #{cifar10_cnn_forward.1} parent=11 // pred_fallthru
          _
        // Predicated region
        $region57: #{cifar10_cnn_forward.1} parent=11 // pred_check
          %p572 = pneg %p309
        $region58: #{cifar10_cnn_forward.1} parent=11 // pred_check_branch
          %574 = sbr.rel (%p572) target = $region60
        $region59: #{cifar10_cnn_forward.1} parent=11 // pred_region
          _
        $region60: #{cifar10_cnn_forward.1} parent=11 // pred_fallthru
          _
        // Predicated region
        $region61: #{cifar10_cnn_forward.1} parent=11 // pred_check
          %p575 = pneg %p330
        $region62: #{cifar10_cnn_forward.1} parent=11 // pred_check_branch
          %577 = sbr.rel (%p575) target = $region64
        $region63: #{cifar10_cnn_forward.1} parent=11 // pred_region
          _
        $region64: #{cifar10_cnn_forward.1} parent=11 // pred_fallthru
          _
        // Predicated region
        $region65: #{cifar10_cnn_forward.1} parent=11 // pred_check
          %p578 = pneg %p351
        $region66: #{cifar10_cnn_forward.1} parent=11 // pred_check_branch
          %580 = sbr.rel (%p578) target = $region68
        $region67: #{cifar10_cnn_forward.1} parent=11 // pred_region
          _
        $region68: #{cifar10_cnn_forward.1} parent=11 // pred_fallthru
          _
        // Predicated region
        $region69: #{cifar10_cnn_forward.1} parent=11 // pred_check
          %p581 = pneg %p372
        $region70: #{cifar10_cnn_forward.1} parent=11 // pred_check_branch
          %583 = sbr.rel (%p581) target = $region72
        $region71: #{cifar10_cnn_forward.1} parent=11 // pred_region
          _
        $region72: #{cifar10_cnn_forward.1} parent=11 // pred_fallthru
          _
        // Predicated region
        $region73: #{cifar10_cnn_forward.1} parent=11 // pred_check
          %p584 = pneg %p393
        $region74: #{cifar10_cnn_forward.1} parent=11 // pred_check_branch
          %586 = sbr.rel (%p584) target = $region76
        $region75: #{cifar10_cnn_forward.1} parent=11 // pred_region
          _
        $region76: #{cifar10_cnn_forward.1} parent=11 // pred_fallthru
          _
        // Predicated region
        $region77: #{cifar10_cnn_forward.1} parent=11 // pred_check
          %p587 = pneg %p414
        $region78: #{cifar10_cnn_forward.1} parent=11 // pred_check_branch
          %589 = sbr.rel (%p587) target = $region80
        $region79: #{cifar10_cnn_forward.1} parent=11 // pred_region
          _
        $region80: #{cifar10_cnn_forward.1} parent=11 // pred_fallthru
          _
        // Predicated region
        $region81: #{cifar10_cnn_forward.1} parent=11 // pred_check
          %p590 = pneg %p435
        $region82: #{cifar10_cnn_forward.1} parent=11 // pred_check_branch
          %592 = sbr.rel (%p590) target = $region84
        $region83: #{cifar10_cnn_forward.1} parent=11 // pred_region
          _
        $region84: #{cifar10_cnn_forward.1} parent=11 // pred_fallthru
          _
        // Predicated region
        $region85: #{cifar10_cnn_forward.1} parent=11 // pred_check
          %p593 = pneg %p456
        $region86: #{cifar10_cnn_forward.1} parent=11 // pred_check_branch
          %595 = sbr.rel (%p593) target = $region88
        $region87: #{cifar10_cnn_forward.1} parent=11 // pred_region
          _
        $region88: #{cifar10_cnn_forward.1} parent=11 // pred_fallthru
          _
        // Predicated region
        $region89: #{cifar10_cnn_forward.1} parent=11 // pred_check
          %p596 = pneg %p477
        $region90: #{cifar10_cnn_forward.1} parent=11 // pred_check_branch
          %598 = sbr.rel (%p596) target = $region92
        $region91: #{cifar10_cnn_forward.1} parent=11 // pred_region
          _
        $region92: #{cifar10_cnn_forward.1} parent=11 // pred_fallthru
          _
        // Predicated region
        $region93: #{cifar10_cnn_forward.1} parent=11 // pred_check
          %p599 = pneg %p498
        $region94: #{cifar10_cnn_forward.1} parent=11 // pred_check_branch
          %601 = sbr.rel (%p599) target = $region96
        $region95: #{cifar10_cnn_forward.1} parent=11 // pred_region
          _
        $region96: #{cifar10_cnn_forward.1} parent=11 // pred_fallthru
          _
      $region12: #{cifar10_cnn_forward.1} parent=5 // pred_fallthru
        _
      %p602 = scmp.lt.s32.totalorder %s31, 2
      // Predicated region
      $region97: #{cifar10_cnn_forward.1} parent=5 // pred_check
        %p603 = pneg %p602
      $region98: #{cifar10_cnn_forward.1} parent=5 // pred_check_branch
        %605 = sbr.rel (%p603) target = $region100
      $region99: #{cifar10_cnn_forward.1} parent=5 // pred_region
        // Predicated region
        $region101: #{cifar10_cnn_forward.1} parent=99 // pred_check
          %p606 = pneg %p51
        $region102: #{cifar10_cnn_forward.1} parent=99 // pred_check_branch
          %608 = sbr.rel (%p606) target = $region104
        $region103: #{cifar10_cnn_forward.1} parent=99 // pred_region
          %s609 = smul.u32 4, %s31
          %p610 = scmp.lt.s32.totalorder %s609, 7
          %s611 = scalar_select %p610, %s609, 7
          %s612 = smul.addr %s611, 8
          %s613 = smul.addr %s612, 8
          %s614 = scalar_lea.vmem %s0, %s613
          %s615 = smul.u32 4, %s31
        $region104: #{cifar10_cnn_forward.1} parent=99 // pred_fallthru
          _
      $region100: #{cifar10_cnn_forward.1} parent=5 // pred_fallthru
        _
      %p616 = scmp.le.s32.totalorder 1, %s31
      %p617 = scmp.lt.s32.totalorder %s31, 3
      %p618 = pnand %p616, %p617
      %p619 = pneg %p618
      // Predicated region
      $region105: #{cifar10_cnn_forward.1} parent=5 // pred_check
        _
      $region106: #{cifar10_cnn_forward.1} parent=5 // pred_check_branch
        %621 = sbr.rel (%p618) target = $region108
      $region107: #{cifar10_cnn_forward.1} parent=5 // pred_region
        %s622 = ssub.s32 %s31, 1
        %s623 = smul.u32 4, %s36
        %p624 = scmp.lt.s32.totalorder %s623, 7
        %s625 = scalar_select %p624, %s623, 7
        %s626 = smul.addr %s625, 8
        %s627 = smul.addr %s626, 8
        %s628 = scalar_lea.vmem %s0, %s627
        %p629 = pneg %p57
        %p630 = pneg %p54
        %p631 = pneg %p78
        %p632 = pneg %p75
        %p633 = pneg %p99
        %p634 = pneg %p96
        %p635 = pneg %p120
        %p636 = pneg %p117
        %p637 = pneg %p141
        %p638 = pneg %p138
        %p639 = pneg %p162
        %p640 = pneg %p159
        %p641 = pneg %p183
        %p642 = pneg %p180
        %p643 = pneg %p204
        %p644 = pneg %p201
        %p645 = pneg %p225
        %p646 = pneg %p222
        %p647 = pneg %p246
        %p648 = pneg %p243
        %p649 = pneg %p267
        %p650 = pneg %p264
        %p651 = pneg %p288
        %p652 = pneg %p285
        %p653 = pneg %p309
        %p654 = pneg %p306
        %p655 = pneg %p330
        %p656 = pneg %p327
        %p657 = pneg %p351
        %p658 = pneg %p348
        %p659 = pneg %p372
        %p660 = pneg %p369
        %p661 = pneg %p393
        %p662 = pneg %p390
        %p663 = pneg %p414
        %p664 = pneg %p411
        %p665 = pneg %p435
        %p666 = pneg %p432
        %p667 = pneg %p456
        %p668 = pneg %p453
        %p669 = pneg %p477
        %p670 = pneg %p474
        %p671 = pneg %p498
        %p672 = pneg %p495
        %p673 = pneg %p524
        %p674 = pneg %p521
        %s675 = sand.u32 %s511, 1
        %s676 = scalar_lea.sflag [#allocation4], %s675
        %s677 = sand.u32 %s511, 1
        %s678 = smul.addr %s677, 4
        %s679 = scalar_lea.vmem [#allocation3], %s678
        %s680 = smul.u32 4, %s36
        %p681 = scmp.lt.s32.totalorder %s680, 7
        %s682 = scalar_select %p681, %s680, 7
        %s683 = smul.addr %s682, 8
        %s684 = smul.addr %s683, 8
        %s685 = scalar_lea.vmem %s0, %s684
        %s686 = smul.u32 4, %s36
        %v688 = vlaneseq
        %v689 = vand.u32 %v688, 127
        %v690 = vadd.s32 %v689, 128
        %v691 = vadd.s32 %v689, 256
        %v692 = vadd.s32 %v689, 384
        %v693 = vadd.s32 %v689, 512
        %v694 = vadd.s32 %v689, 640
        %v695 = vadd.s32 %v689, 768
        %v696 = vadd.s32 %v689, 896
        %v697 = vand.u32 %v689, 31
        %v698 = vand.u32 %v690, 31
        %v699 = vand.u32 %v691, 31
        %v700 = vand.u32 %v692, 31
        %v701 = vand.u32 %v693, 31
        %v702 = vand.u32 %v694, 31
        %v703 = vand.u32 %v695, 31
        %v704 = vand.u32 %v696, 31
        %v705 = vshra.s32 %v689, 5
        %v706 = vshra.s32 %v690, 5
        %v707 = vshra.s32 %v691, 5
        %v708 = vshra.s32 %v692, 5
        %v709 = vshra.s32 %v693, 5
        %v710 = vshra.s32 %v694, 5
        %v711 = vshra.s32 %v695, 5
        %v712 = vshra.s32 %v696, 5
        %vm713 = vcmp.ge.s32.totalorder %v697, 1
        %vm714 = vcmp.ge.s32.totalorder %v698, 1
        %vm715 = vcmp.ge.s32.totalorder %v699, 1
        %vm716 = vcmp.ge.s32.totalorder %v700, 1
        %vm717 = vcmp.ge.s32.totalorder %v701, 1
        %vm718 = vcmp.ge.s32.totalorder %v702, 1
        %vm719 = vcmp.ge.s32.totalorder %v703, 1
        %vm720 = vcmp.ge.s32.totalorder %v704, 1
        %vm721 = vcmp.ge.s32.totalorder %v705, 1
        %vm722 = vcmp.ge.s32.totalorder %v706, 1
        %vm723 = vcmp.ge.s32.totalorder %v707, 1
        %vm724 = vcmp.ge.s32.totalorder %v708, 1
        %vm725 = vcmp.ge.s32.totalorder %v709, 1
        %vm726 = vcmp.ge.s32.totalorder %v710, 1
        %vm727 = vcmp.ge.s32.totalorder %v711, 1
        %vm728 = vcmp.ge.s32.totalorder %v712, 1
        %vm729 = vmand %vm713, %vm721
        %vm730 = vmand %vm714, %vm722
        %vm731 = vmand %vm715, %vm723
        %vm732 = vmand %vm716, %vm724
        %vm733 = vmand %vm717, %vm725
        %vm734 = vmand %vm718, %vm726
        %vm735 = vmand %vm719, %vm727
        %vm736 = vmand %vm720, %vm728
        %vm737 = vcmp.le.s32.totalorder %v697, 30
        %vm738 = vcmp.le.s32.totalorder %v698, 30
        %vm739 = vcmp.le.s32.totalorder %v699, 30
        %vm740 = vcmp.le.s32.totalorder %v700, 30
        %vm741 = vcmp.le.s32.totalorder %v701, 30
        %vm742 = vcmp.le.s32.totalorder %v702, 30
        %vm743 = vcmp.le.s32.totalorder %v703, 30
        %vm744 = vcmp.le.s32.totalorder %v704, 30
        %vm745 = vmand %vm737, %vm721
        %vm746 = vmand %vm738, %vm722
        %vm747 = vmand %vm739, %vm723
        %vm748 = vmand %vm740, %vm724
        %vm749 = vmand %vm741, %vm725
        %vm750 = vmand %vm742, %vm726
        %vm751 = vmand %vm743, %vm727
        %vm752 = vmand %vm744, %vm728
        %vm753 = vcmp.le.s32.totalorder %v705, 30
        %vm754 = vcmp.le.s32.totalorder %v706, 30
        %vm755 = vcmp.le.s32.totalorder %v707, 30
        %vm756 = vcmp.le.s32.totalorder %v708, 30
        %vm757 = vcmp.le.s32.totalorder %v709, 30
        %vm758 = vcmp.le.s32.totalorder %v710, 30
        %vm759 = vcmp.le.s32.totalorder %v711, 30
        %vm760 = vcmp.le.s32.totalorder %v712, 30
        %vm761 = vmand %vm713, %vm753
        %vm762 = vmand %vm714, %vm754
        %vm763 = vmand %vm715, %vm755
        %vm764 = vmand %vm716, %vm756
        %vm765 = vmand %vm717, %vm757
        %vm766 = vmand %vm718, %vm758
        %vm767 = vmand %vm719, %vm759
        %vm768 = vmand %vm720, %vm760
        %vm769 = vmand %vm737, %vm753
        %vm770 = vmand %vm738, %vm754
        %vm771 = vmand %vm739, %vm755
        %vm772 = vmand %vm740, %vm756
        %vm773 = vmand %vm741, %vm757
        %vm774 = vmand %vm742, %vm758
        %vm775 = vmand %vm743, %vm759
        %vm776 = vmand %vm744, %vm760
        %v777 = vand.u32 %v689, 15
        %v778 = vand.u32 %v690, 15
        %v779 = vshra.s32 %v689, 4
        %v780 = vshra.s32 %v690, 4
        %vm781 = vcmp.ge.s32.totalorder %v777, 1
        %vm782 = vcmp.ge.s32.totalorder %v778, 1
        %vm783 = vcmp.ge.s32.totalorder %v779, 1
        %vm784 = vcmp.ge.s32.totalorder %v780, 1
        %vm785 = vmand %vm781, %vm783
        %vm786 = vmand %vm782, %vm784
        %vm787 = vcmp.le.s32.totalorder %v777, 14
        %vm788 = vcmp.le.s32.totalorder %v778, 14
        %vm789 = vmand %vm787, %vm783
        %vm790 = vmand %vm788, %vm784
        %vm791 = vcmp.le.s32.totalorder %v779, 14
        %vm792 = vcmp.le.s32.totalorder %v780, 14
        %vm793 = vmand %vm781, %vm791
        %vm794 = vmand %vm782, %vm792
        %vm795 = vmand %vm787, %vm791
        %vm796 = vmand %vm788, %vm792
        %v797 = vand.u32 %v689, 7
        %v798 = vshra.s32 %v689, 3
        %vm799 = vcmp.ge.s32.totalorder %v797, 1
        %vm800 = vcmp.ge.s32.totalorder %v798, 1
        %vm801 = vmand %vm799, %vm800
        %vm802 = vcmp.le.s32.totalorder %v797, 6
        %vm803 = vmand %vm802, %vm800
        %vm804 = vcmp.le.s32.totalorder %v798, 6
        %vm805 = vmand %vm799, %vm804
        %vm806 = vmand %vm802, %vm804
        loop: start=0, step=1, limit=4
        $region109: #{cifar10_cnn_forward.1} parent=107 // loop_pre_header
          _
        $region110: #{cifar10_cnn_forward.1} parent=107 // loop_header
          %s808 = sphi 0, %s812
          %p809 = scmp.ge.s32.totalorder %s808, 4
        $region111: #{cifar10_cnn_forward.1} parent=107 // loop_header_branch
          %811 = sbr.rel (%p809) target = $region115
        $region112: #{cifar10_cnn_forward.1} parent=107 // loop_body
          %s813 = smul.u32 %s808, 8
          %s814 = smul.addr %s813, 8
          %s815 = scalar_lea.vmem %s685, %s814
          %v816 = vld [vmem:[%s815] sm:$0xff]
          %v817 = vld [vmem:[%s815 + $0x8] sm:$0xff]
          %v818 = vld [vmem:[%s815 + $0x10] sm:$0xff]
          %v819 = vld [vmem:[%s815 + $0x18] sm:$0xff]
          %v820 = vld [vmem:[%s815 + $0x20] sm:$0xff]
          %v821 = vld [vmem:[%s815 + $0x28] sm:$0xff]
          %v822 = vld [vmem:[%s815 + $0x30] sm:$0xff]
          %v823 = vld [vmem:[%s815 + $0x38] sm:$0xff]
          %824 = vrot.lane.b32.xlu0 %v816, 33
          %v825 = vpop.permute.xlu0 %824
          %826 = vrot.lane.b32.xlu0 %v817, 33
          %v827 = vpop.permute.xlu0 %826
          %828 = vrot.lane.b32.xlu0 %v818, 33
          %v829 = vpop.permute.xlu0 %828
          %830 = vrot.lane.b32.xlu0 %v819, 33
          %v831 = vpop.permute.xlu0 %830
          %832 = vrot.lane.b32.xlu0 %v820, 33
          %v833 = vpop.permute.xlu0 %832
          %834 = vrot.lane.b32.xlu0 %v821, 33
          %v835 = vpop.permute.xlu0 %834
          %836 = vrot.lane.b32.xlu0 %v822, 33
          %v837 = vpop.permute.xlu0 %836
          %838 = vrot.lane.b32.xlu0 %v823, 33
          %v839 = vpop.permute.xlu0 %838
          %vm840 = vcmp.lt.s32.totalorder %v689, 33
          %v841 = vsel %vm840, %v837, %v839
          %v842 = vsel %vm840, %v835, %v837
          %v843 = vsel %vm840, %v833, %v835
          %v844 = vsel %vm840, %v831, %v833
          %v845 = vsel %vm840, %v829, %v831
          %v846 = vsel %vm840, %v827, %v829
          %v847 = vsel %vm840, %v825, %v827
          %v848 = vsel %vm840, %v839, %v825
          %v849 = vsel %vm729, 1, 0
          %v850 = vsel %vm730, 1, 0
          %v851 = vsel %vm731, 1, 0
          %v852 = vsel %vm732, 1, 0
          %v853 = vsel %vm733, 1, 0
          %v854 = vsel %vm734, 1, 0
          %v855 = vsel %vm735, 1, 0
          %v856 = vsel %vm736, 1, 0
          %vm857 = vcmp.eq.s32.totalorder %v849, 1
          %vm858 = vcmp.eq.s32.totalorder %v850, 1
          %vm859 = vcmp.eq.s32.totalorder %v851, 1
          %vm860 = vcmp.eq.s32.totalorder %v852, 1
          %vm861 = vcmp.eq.s32.totalorder %v853, 1
          %vm862 = vcmp.eq.s32.totalorder %v854, 1
          %vm863 = vcmp.eq.s32.totalorder %v855, 1
          %vm864 = vcmp.eq.s32.totalorder %v856, 1
          %v865 = vsel %vm857, %v848, 0.0
          %v866 = vsel %vm858, %v847, 0.0
          %v867 = vsel %vm859, %v846, 0.0
          %v868 = vsel %vm860, %v845, 0.0
          %v869 = vsel %vm861, %v844, 0.0
          %v870 = vsel %vm862, %v843, 0.0
          %v871 = vsel %vm863, %v842, 0.0
          %v872 = vsel %vm864, %v841, 0.0
          %873 = vrot.lane.b32.xlu0 %v816, 32
          %v874 = vpop.permute.xlu0 %873
          %875 = vrot.lane.b32.xlu0 %v817, 32
          %v876 = vpop.permute.xlu0 %875
          %877 = vrot.lane.b32.xlu0 %v818, 32
          %v878 = vpop.permute.xlu0 %877
          %879 = vrot.lane.b32.xlu0 %v819, 32
          %v880 = vpop.permute.xlu0 %879
          %881 = vrot.lane.b32.xlu0 %v820, 32
          %v882 = vpop.permute.xlu0 %881
          %883 = vrot.lane.b32.xlu0 %v821, 32
          %v884 = vpop.permute.xlu0 %883
          %885 = vrot.lane.b32.xlu0 %v822, 32
          %v886 = vpop.permute.xlu0 %885
          %887 = vrot.lane.b32.xlu0 %v823, 32
          %v888 = vpop.permute.xlu0 %887
          %vm889 = vcmp.lt.s32.totalorder %v689, 32
          %v890 = vsel %vm889, %v886, %v888
          %v891 = vsel %vm889, %v884, %v886
          %v892 = vsel %vm889, %v882, %v884
          %v893 = vsel %vm889, %v880, %v882
          %v894 = vsel %vm889, %v878, %v880
          %v895 = vsel %vm889, %v876, %v878
          %v896 = vsel %vm889, %v874, %v876
          %v897 = vsel %vm889, %v888, %v874
          %v898 = vsel %vm721, 1, 0
          %v899 = vsel %vm722, 1, 0
          %v900 = vsel %vm723, 1, 0
          %v901 = vsel %vm724, 1, 0
          %v902 = vsel %vm725, 1, 0
          %v903 = vsel %vm726, 1, 0
          %v904 = vsel %vm727, 1, 0
          %v905 = vsel %vm728, 1, 0
          %vm906 = vcmp.eq.s32.totalorder %v898, 1
          %vm907 = vcmp.eq.s32.totalorder %v899, 1
          %vm908 = vcmp.eq.s32.totalorder %v900, 1
          %vm909 = vcmp.eq.s32.totalorder %v901, 1
          %vm910 = vcmp.eq.s32.totalorder %v902, 1
          %vm911 = vcmp.eq.s32.totalorder %v903, 1
          %vm912 = vcmp.eq.s32.totalorder %v904, 1
          %vm913 = vcmp.eq.s32.totalorder %v905, 1
          %v914 = vsel %vm906, %v897, 0.0
          %v915 = vsel %vm907, %v896, 0.0
          %v916 = vsel %vm908, %v895, 0.0
          %v917 = vsel %vm909, %v894, 0.0
          %v918 = vsel %vm910, %v893, 0.0
          %v919 = vsel %vm911, %v892, 0.0
          %v920 = vsel %vm912, %v891, 0.0
          %v921 = vsel %vm913, %v890, 0.0
          %922 = vrot.lane.b32.xlu0 %v816, 31
          %v923 = vpop.permute.xlu0 %922
          %924 = vrot.lane.b32.xlu0 %v817, 31
          %v925 = vpop.permute.xlu0 %924
          %926 = vrot.lane.b32.xlu0 %v818, 31
          %v927 = vpop.permute.xlu0 %926
          %928 = vrot.lane.b32.xlu0 %v819, 31
          %v929 = vpop.permute.xlu0 %928
          %930 = vrot.lane.b32.xlu0 %v820, 31
          %v931 = vpop.permute.xlu0 %930
          %932 = vrot.lane.b32.xlu0 %v821, 31
          %v933 = vpop.permute.xlu0 %932
          %934 = vrot.lane.b32.xlu0 %v822, 31
          %v935 = vpop.permute.xlu0 %934
          %936 = vrot.lane.b32.xlu0 %v823, 31
          %v937 = vpop.permute.xlu0 %936
          %vm938 = vcmp.lt.s32.totalorder %v689, 31
          %v939 = vsel %vm938, %v935, %v937
          %v940 = vsel %vm938, %v933, %v935
          %v941 = vsel %vm938, %v931, %v933
          %v942 = vsel %vm938, %v929, %v931
          %v943 = vsel %vm938, %v927, %v929
          %v944 = vsel %vm938, %v925, %v927
          %v945 = vsel %vm938, %v923, %v925
          %v946 = vsel %vm938, %v937, %v923
          %v947 = vsel %vm745, 1, 0
          %v948 = vsel %vm746, 1, 0
          %v949 = vsel %vm747, 1, 0
          %v950 = vsel %vm748, 1, 0
          %v951 = vsel %vm749, 1, 0
          %v952 = vsel %vm750, 1, 0
          %v953 = vsel %vm751, 1, 0
          %v954 = vsel %vm752, 1, 0
          %vm955 = vcmp.eq.s32.totalorder %v947, 1
          %vm956 = vcmp.eq.s32.totalorder %v948, 1
          %vm957 = vcmp.eq.s32.totalorder %v949, 1
          %vm958 = vcmp.eq.s32.totalorder %v950, 1
          %vm959 = vcmp.eq.s32.totalorder %v951, 1
          %vm960 = vcmp.eq.s32.totalorder %v952, 1
          %vm961 = vcmp.eq.s32.totalorder %v953, 1
          %vm962 = vcmp.eq.s32.totalorder %v954, 1
          %v963 = vsel %vm955, %v946, 0.0
          %v964 = vsel %vm956, %v945, 0.0
          %v965 = vsel %vm957, %v944, 0.0
          %v966 = vsel %vm958, %v943, 0.0
          %v967 = vsel %vm959, %v942, 0.0
          %v968 = vsel %vm960, %v941, 0.0
          %v969 = vsel %vm961, %v940, 0.0
          %v970 = vsel %vm962, %v939, 0.0
          %971 = vrot.lane.b32.xlu0 %v816, 1
          %v972 = vpop.permute.xlu0 %971
          %973 = vrot.lane.b32.xlu0 %v817, 1
          %v974 = vpop.permute.xlu0 %973
          %975 = vrot.lane.b32.xlu0 %v818, 1
          %v976 = vpop.permute.xlu0 %975
          %977 = vrot.lane.b32.xlu0 %v819, 1
          %v978 = vpop.permute.xlu0 %977
          %979 = vrot.lane.b32.xlu0 %v820, 1
          %v980 = vpop.permute.xlu0 %979
          %981 = vrot.lane.b32.xlu0 %v821, 1
          %v982 = vpop.permute.xlu0 %981
          %983 = vrot.lane.b32.xlu0 %v822, 1
          %v984 = vpop.permute.xlu0 %983
          %985 = vrot.lane.b32.xlu0 %v823, 1
          %v986 = vpop.permute.xlu0 %985
          %vm987 = vcmp.lt.s32.totalorder %v689, 1
          %v988 = vsel %vm987, %v984, %v986
          %v989 = vsel %vm987, %v982, %v984
          %v990 = vsel %vm987, %v980, %v982
          %v991 = vsel %vm987, %v978, %v980
          %v992 = vsel %vm987, %v976, %v978
          %v993 = vsel %vm987, %v974, %v976
          %v994 = vsel %vm987, %v972, %v974
          %v995 = vsel %vm987, %v986, %v972
          %v996 = vsel %vm713, 1, 0
          %v997 = vsel %vm714, 1, 0
          %v998 = vsel %vm715, 1, 0
          %v999 = vsel %vm716, 1, 0
          %v1000 = vsel %vm717, 1, 0
          %v1001 = vsel %vm718, 1, 0
          %v1002 = vsel %vm719, 1, 0
          %v1003 = vsel %vm720, 1, 0
          %vm1004 = vcmp.eq.s32.totalorder %v996, 1
          %vm1005 = vcmp.eq.s32.totalorder %v997, 1
          %vm1006 = vcmp.eq.s32.totalorder %v998, 1
          %vm1007 = vcmp.eq.s32.totalorder %v999, 1
          %vm1008 = vcmp.eq.s32.totalorder %v1000, 1
          %vm1009 = vcmp.eq.s32.totalorder %v1001, 1
          %vm1010 = vcmp.eq.s32.totalorder %v1002, 1
          %vm1011 = vcmp.eq.s32.totalorder %v1003, 1
          %v1012 = vsel %vm1004, %v995, 0.0
          %v1013 = vsel %vm1005, %v994, 0.0
          %v1014 = vsel %vm1006, %v993, 0.0
          %v1015 = vsel %vm1007, %v992, 0.0
          %v1016 = vsel %vm1008, %v991, 0.0
          %v1017 = vsel %vm1009, %v990, 0.0
          %v1018 = vsel %vm1010, %v989, 0.0
          %v1019 = vsel %vm1011, %v988, 0.0
          %1020 = vrot.lane.b32.xlu0 %v816, 127
          %v1021 = vpop.permute.xlu0 %1020
          %1022 = vrot.lane.b32.xlu0 %v817, 127
          %v1023 = vpop.permute.xlu0 %1022
          %1024 = vrot.lane.b32.xlu0 %v818, 127
          %v1025 = vpop.permute.xlu0 %1024
          %1026 = vrot.lane.b32.xlu0 %v819, 127
          %v1027 = vpop.permute.xlu0 %1026
          %1028 = vrot.lane.b32.xlu0 %v820, 127
          %v1029 = vpop.permute.xlu0 %1028
          %1030 = vrot.lane.b32.xlu0 %v821, 127
          %v1031 = vpop.permute.xlu0 %1030
          %1032 = vrot.lane.b32.xlu0 %v822, 127
          %v1033 = vpop.permute.xlu0 %1032
          %1034 = vrot.lane.b32.xlu0 %v823, 127
          %v1035 = vpop.permute.xlu0 %1034
          %vm1036 = vcmp.lt.s32.totalorder %v689, 127
          %v1037 = vsel %vm1036, %v1033, %v1035
          %v1038 = vsel %vm1036, %v1031, %v1033
          %v1039 = vsel %vm1036, %v1029, %v1031
          %v1040 = vsel %vm1036, %v1027, %v1029
          %v1041 = vsel %vm1036, %v1025, %v1027
          %v1042 = vsel %vm1036, %v1023, %v1025
          %v1043 = vsel %vm1036, %v1021, %v1023
          %v1044 = vsel %vm1036, %v1035, %v1021
          %v1045 = vsel %vm737, 1, 0
          %v1046 = vsel %vm738, 1, 0
          %v1047 = vsel %vm739, 1, 0
          %v1048 = vsel %vm740, 1, 0
          %v1049 = vsel %vm741, 1, 0
          %v1050 = vsel %vm742, 1, 0
          %v1051 = vsel %vm743, 1, 0
          %v1052 = vsel %vm744, 1, 0
          %vm1053 = vcmp.eq.s32.totalorder %v1045, 1
          %vm1054 = vcmp.eq.s32.totalorder %v1046, 1
          %vm1055 = vcmp.eq.s32.totalorder %v1047, 1
          %vm1056 = vcmp.eq.s32.totalorder %v1048, 1
          %vm1057 = vcmp.eq.s32.totalorder %v1049, 1
          %vm1058 = vcmp.eq.s32.totalorder %v1050, 1
          %vm1059 = vcmp.eq.s32.totalorder %v1051, 1
          %vm1060 = vcmp.eq.s32.totalorder %v1052, 1
          %v1061 = vsel %vm1053, %v1043, 0.0
          %v1062 = vsel %vm1054, %v1042, 0.0
          %v1063 = vsel %vm1055, %v1041, 0.0
          %v1064 = vsel %vm1056, %v1040, 0.0
          %v1065 = vsel %vm1057, %v1039, 0.0
          %v1066 = vsel %vm1058, %v1038, 0.0
          %v1067 = vsel %vm1059, %v1037, 0.0
          %v1068 = vsel %vm1060, %v1044, 0.0
          %1069 = vrot.lane.b32.xlu0 %v816, 97
          %v1070 = vpop.permute.xlu0 %1069
          %1071 = vrot.lane.b32.xlu0 %v817, 97
          %v1072 = vpop.permute.xlu0 %1071
          %1073 = vrot.lane.b32.xlu0 %v818, 97
          %v1074 = vpop.permute.xlu0 %1073
          %1075 = vrot.lane.b32.xlu0 %v819, 97
          %v1076 = vpop.permute.xlu0 %1075
          %1077 = vrot.lane.b32.xlu0 %v820, 97
          %v1078 = vpop.permute.xlu0 %1077
          %1079 = vrot.lane.b32.xlu0 %v821, 97
          %v1080 = vpop.permute.xlu0 %1079
          %1081 = vrot.lane.b32.xlu0 %v822, 97
          %v1082 = vpop.permute.xlu0 %1081
          %1083 = vrot.lane.b32.xlu0 %v823, 97
          %v1084 = vpop.permute.xlu0 %1083
          %vm1085 = vcmp.lt.s32.totalorder %v689, 97
          %v1086 = vsel %vm1085, %v1082, %v1084
          %v1087 = vsel %vm1085, %v1080, %v1082
          %v1088 = vsel %vm1085, %v1078, %v1080
          %v1089 = vsel %vm1085, %v1076, %v1078
          %v1090 = vsel %vm1085, %v1074, %v1076
          %v1091 = vsel %vm1085, %v1072, %v1074
          %v1092 = vsel %vm1085, %v1070, %v1072
          %v1093 = vsel %vm1085, %v1084, %v1070
          %v1094 = vsel %vm761, 1, 0
          %v1095 = vsel %vm762, 1, 0
          %v1096 = vsel %vm763, 1, 0
          %v1097 = vsel %vm764, 1, 0
          %v1098 = vsel %vm765, 1, 0
          %v1099 = vsel %vm766, 1, 0
          %v1100 = vsel %vm767, 1, 0
          %v1101 = vsel %vm768, 1, 0
          %vm1102 = vcmp.eq.s32.totalorder %v1094, 1
          %vm1103 = vcmp.eq.s32.totalorder %v1095, 1
          %vm1104 = vcmp.eq.s32.totalorder %v1096, 1
          %vm1105 = vcmp.eq.s32.totalorder %v1097, 1
          %vm1106 = vcmp.eq.s32.totalorder %v1098, 1
          %vm1107 = vcmp.eq.s32.totalorder %v1099, 1
          %vm1108 = vcmp.eq.s32.totalorder %v1100, 1
          %vm1109 = vcmp.eq.s32.totalorder %v1101, 1
          %v1110 = vsel %vm1102, %v1092, 0.0
          %v1111 = vsel %vm1103, %v1091, 0.0
          %v1112 = vsel %vm1104, %v1090, 0.0
          %v1113 = vsel %vm1105, %v1089, 0.0
          %v1114 = vsel %vm1106, %v1088, 0.0
          %v1115 = vsel %vm1107, %v1087, 0.0
          %v1116 = vsel %vm1108, %v1086, 0.0
          %v1117 = vsel %vm1109, %v1093, 0.0
          %1118 = vrot.lane.b32.xlu0 %v816, 96
          %v1119 = vpop.permute.xlu0 %1118
          %1120 = vrot.lane.b32.xlu0 %v817, 96
          %v1121 = vpop.permute.xlu0 %1120
          %1122 = vrot.lane.b32.xlu0 %v818, 96
          %v1123 = vpop.permute.xlu0 %1122
          %1124 = vrot.lane.b32.xlu0 %v819, 96
          %v1125 = vpop.permute.xlu0 %1124
          %1126 = vrot.lane.b32.xlu0 %v820, 96
          %v1127 = vpop.permute.xlu0 %1126
          %1128 = vrot.lane.b32.xlu0 %v821, 96
          %v1129 = vpop.permute.xlu0 %1128
          %1130 = vrot.lane.b32.xlu0 %v822, 96
          %v1131 = vpop.permute.xlu0 %1130
          %1132 = vrot.lane.b32.xlu0 %v823, 96
          %v1133 = vpop.permute.xlu0 %1132
          %vm1134 = vcmp.lt.s32.totalorder %v689, 96
          %v1135 = vsel %vm1134, %v1131, %v1133
          %v1136 = vsel %vm1134, %v1129, %v1131
          %v1137 = vsel %vm1134, %v1127, %v1129
          %v1138 = vsel %vm1134, %v1125, %v1127
          %v1139 = vsel %vm1134, %v1123, %v1125
          %v1140 = vsel %vm1134, %v1121, %v1123
          %v1141 = vsel %vm1134, %v1119, %v1121
          %v1142 = vsel %vm1134, %v1133, %v1119
          %v1143 = vsel %vm753, 1, 0
          %v1144 = vsel %vm754, 1, 0
          %v1145 = vsel %vm755, 1, 0
          %v1146 = vsel %vm756, 1, 0
          %v1147 = vsel %vm757, 1, 0
          %v1148 = vsel %vm758, 1, 0
          %v1149 = vsel %vm759, 1, 0
          %v1150 = vsel %vm760, 1, 0
          %vm1151 = vcmp.eq.s32.totalorder %v1143, 1
          %vm1152 = vcmp.eq.s32.totalorder %v1144, 1
          %vm1153 = vcmp.eq.s32.totalorder %v1145, 1
          %vm1154 = vcmp.eq.s32.totalorder %v1146, 1
          %vm1155 = vcmp.eq.s32.totalorder %v1147, 1
          %vm1156 = vcmp.eq.s32.totalorder %v1148, 1
          %vm1157 = vcmp.eq.s32.totalorder %v1149, 1
          %vm1158 = vcmp.eq.s32.totalorder %v1150, 1
          %v1159 = vsel %vm1151, %v1141, 0.0
          %v1160 = vsel %vm1152, %v1140, 0.0
          %v1161 = vsel %vm1153, %v1139, 0.0
          %v1162 = vsel %vm1154, %v1138, 0.0
          %v1163 = vsel %vm1155, %v1137, 0.0
          %v1164 = vsel %vm1156, %v1136, 0.0
          %v1165 = vsel %vm1157, %v1135, 0.0
          %v1166 = vsel %vm1158, %v1142, 0.0
          %1167 = vrot.lane.b32.xlu0 %v816, 95
          %v1168 = vpop.permute.xlu0 %1167
          %1169 = vrot.lane.b32.xlu0 %v817, 95
          %v1170 = vpop.permute.xlu0 %1169
          %1171 = vrot.lane.b32.xlu0 %v818, 95
          %v1172 = vpop.permute.xlu0 %1171
          %1173 = vrot.lane.b32.xlu0 %v819, 95
          %v1174 = vpop.permute.xlu0 %1173
          %1175 = vrot.lane.b32.xlu0 %v820, 95
          %v1176 = vpop.permute.xlu0 %1175
          %1177 = vrot.lane.b32.xlu0 %v821, 95
          %v1178 = vpop.permute.xlu0 %1177
          %1179 = vrot.lane.b32.xlu0 %v822, 95
          %v1180 = vpop.permute.xlu0 %1179
          %1181 = vrot.lane.b32.xlu0 %v823, 95
          %v1182 = vpop.permute.xlu0 %1181
          %vm1183 = vcmp.lt.s32.totalorder %v689, 95
          %v1184 = vsel %vm1183, %v1180, %v1182
          %v1185 = vsel %vm1183, %v1178, %v1180
          %v1186 = vsel %vm1183, %v1176, %v1178
          %v1187 = vsel %vm1183, %v1174, %v1176
          %v1188 = vsel %vm1183, %v1172, %v1174
          %v1189 = vsel %vm1183, %v1170, %v1172
          %v1190 = vsel %vm1183, %v1168, %v1170
          %v1191 = vsel %vm1183, %v1182, %v1168
          %v1192 = vsel %vm769, 1, 0
          %v1193 = vsel %vm770, 1, 0
          %v1194 = vsel %vm771, 1, 0
          %v1195 = vsel %vm772, 1, 0
          %v1196 = vsel %vm773, 1, 0
          %v1197 = vsel %vm774, 1, 0
          %v1198 = vsel %vm775, 1, 0
          %v1199 = vsel %vm776, 1, 0
          %vm1200 = vcmp.eq.s32.totalorder %v1192, 1
          %vm1201 = vcmp.eq.s32.totalorder %v1193, 1
          %vm1202 = vcmp.eq.s32.totalorder %v1194, 1
          %vm1203 = vcmp.eq.s32.totalorder %v1195, 1
          %vm1204 = vcmp.eq.s32.totalorder %v1196, 1
          %vm1205 = vcmp.eq.s32.totalorder %v1197, 1
          %vm1206 = vcmp.eq.s32.totalorder %v1198, 1
          %vm1207 = vcmp.eq.s32.totalorder %v1199, 1
          %v1208 = vsel %vm1200, %v1190, 0.0
          %v1209 = vsel %vm1201, %v1189, 0.0
          %v1210 = vsel %vm1202, %v1188, 0.0
          %v1211 = vsel %vm1203, %v1187, 0.0
          %v1212 = vsel %vm1204, %v1186, 0.0
          %v1213 = vsel %vm1205, %v1185, 0.0
          %v1214 = vsel %vm1206, %v1184, 0.0
          %v1215 = vsel %vm1207, %v1191, 0.0
          %v1216 = vpack.c.bf16 %v914, %v865
          %v1217 = vpack.c.bf16 %v915, %v866
          %v1218 = vpack.c.bf16 %v916, %v867
          %v1219 = vpack.c.bf16 %v917, %v868
          %v1220 = vpack.c.bf16 %v918, %v869
          %v1221 = vpack.c.bf16 %v919, %v870
          %v1222 = vpack.c.bf16 %v920, %v871
          %v1223 = vpack.c.bf16 %v921, %v872
          %v1224 = vpack.c.bf16 %v1012, %v963
          %v1225 = vpack.c.bf16 %v1013, %v964
          %v1226 = vpack.c.bf16 %v1014, %v965
          %v1227 = vpack.c.bf16 %v1015, %v966
          %v1228 = vpack.c.bf16 %v1016, %v967
          %v1229 = vpack.c.bf16 %v1017, %v968
          %v1230 = vpack.c.bf16 %v1018, %v969
          %v1231 = vpack.c.bf16 %v1019, %v970
          %v1232 = vpack.c.bf16 %v1061, %v816
          %v1233 = vpack.c.bf16 %v1062, %v817
          %v1234 = vpack.c.bf16 %v1063, %v818
          %v1235 = vpack.c.bf16 %v1064, %v819
          %v1236 = vpack.c.bf16 %v1065, %v820
          %v1237 = vpack.c.bf16 %v1066, %v821
          %v1238 = vpack.c.bf16 %v1067, %v822
          %v1239 = vpack.c.bf16 %v1068, %v823
          %v1240 = vpack.c.bf16 %v1159, %v1110
          %v1241 = vpack.c.bf16 %v1160, %v1111
          %v1242 = vpack.c.bf16 %v1161, %v1112
          %v1243 = vpack.c.bf16 %v1162, %v1113
          %v1244 = vpack.c.bf16 %v1163, %v1114
          %v1245 = vpack.c.bf16 %v1164, %v1115
          %v1246 = vpack.c.bf16 %v1165, %v1116
          %v1247 = vpack.c.bf16 %v1166, %v1117
          %v1248 = vpack.c.bf16 %v1208, %v1208
          %v1249 = vpack.c.bf16 %v1209, %v1209
          %v1250 = vpack.c.bf16 %v1210, %v1210
          %v1251 = vpack.c.bf16 %v1211, %v1211
          %v1252 = vpack.c.bf16 %v1212, %v1212
          %v1253 = vpack.c.bf16 %v1213, %v1213
          %v1254 = vpack.c.bf16 %v1214, %v1214
          %v1255 = vpack.c.bf16 %v1215, %v1215
          %v1256 = vld [vmem:[%s1] sm:$0xf]
          %v1257 = vld [vmem:[%s2] sm:$0xff]
          %1259 = vset.pattern.permute.xlu0 0
          %1260 = vperm.xlu0 %1259, %v1257
          %v1261 = vpop.permute.xlu0 %1260
          %vm1263 = vcmask 588800
          %v1265 = vsel %vm1263, %v1256, 0
          %vm1267 = vcmask 1043456
          %v1269 = vsel %vm1267, %v1248, 0
          %v1272 = vsel %vm1267, %v1249, 0
          %v1275 = vsel %vm1267, %v1250, 0
          %v1278 = vsel %vm1267, %v1251, 0
          %v1281 = vsel %vm1267, %v1252, 0
          %v1284 = vsel %vm1267, %v1253, 0
          %v1287 = vsel %vm1267, %v1254, 0
          %v1290 = vsel %vm1267, %v1255, 0
          %1292 = vmatprep.subr.bf16.mxu0 0
          %1293 = vmatpush1.bf16.msra.mxu0 0
          %1294 = vmatprep.subr.bf16.mxu0 0
          %1295 = vmatpush1.bf16.msra.mxu0 0
          %1296 = vmatprep.subr.bf16.mxu0 0
          %1297 = vmatpush1.bf16.msra.mxu0 0
          %1298 = vmatprep.subr.bf16.mxu0 %v1272
          %1299 = vmatpush1.bf16.msra.mxu0 %v1269
          %1300 = vmatprep.subr.bf16.mxu0 %v1241
          %1301 = vmatpush1.bf16.msra.mxu0 %v1240
          %1302 = vmatprep.subr.bf16.mxu0 %v1233
          %1303 = vmatpush1.bf16.msra.mxu0 %v1232
          %1304 = vmatprep.subr.bf16.mxu0 %v1225
          %1305 = vmatpush1.bf16.msra.mxu0 %v1224
          %1306 = vmatprep.subr.bf16.mxu0 %v1217
          %1307 = vmatpush1.bf16.msra.mxu0 %v1216
          %1308 = vmatprep.subr.bf16.mxu0 0
          %1309 = vmatpush2.bf16.msra.mxu0 0
          %1310 = vmatprep.subr.bf16.mxu0 0
          %1311 = vmatpush2.bf16.msra.mxu0 0
          %1312 = vmatprep.subr.bf16.mxu0 0
          %1313 = vmatpush2.bf16.msra.mxu0 0
          %1314 = vmatprep.subr.bf16.mxu0 0
          %1315 = vmatpush2.bf16.msra.mxu0 0
          %1316 = vmatprep.subr.bf16.mxu0 0
          %1317 = vmatpush2.bf16.msra.mxu0 0
          %1318 = vmatprep.subr.bf16.mxu0 0
          %1319 = vmatpush2.bf16.msra.mxu0 0
          %1320 = vmatprep.subr.bf16.mxu0 0
          %1321 = vmatpush2.bf16.msra.mxu0 0
          %1322 = vmatprep.subr.bf16.mxu0 0
          %1323 = vmatpush2.bf16.msra.mxu0 0
          %1324 = vmatprep.mubr.bf16.mxu0 0
          %1325 = vmatmul.mubr.bf16.gmra.mxu0 %v1265
          %v1326 = vpop.f32.mrf.mxu0
          %v1327 = vadd.f32 %v1261, %v1326
          %v1328 = vpop.f32.mrf.mxu0
          %v1329 = vadd.f32 %v1261, %v1328
          %v1330 = vpop.f32.mrf.mxu0
          %v1331 = vpop.f32.mrf.mxu0
          %1332 = vdwg.mxu0
          %1333 = vmatprep.subr.bf16.mxu0 0
          %1334 = vmatpush1.bf16.msra.mxu0 0
          %1335 = vmatprep.subr.bf16.mxu0 0
          %1336 = vmatpush1.bf16.msra.mxu0 0
          %1337 = vmatprep.subr.bf16.mxu0 0
          %1338 = vmatpush1.bf16.msra.mxu0 0
          %1339 = vmatprep.subr.bf16.mxu0 %v1278
          %1340 = vmatpush1.bf16.msra.mxu0 %v1275
          %1341 = vmatprep.subr.bf16.mxu0 %v1243
          %1342 = vmatpush1.bf16.msra.mxu0 %v1242
          %1343 = vmatprep.subr.bf16.mxu0 %v1235
          %1344 = vmatpush1.bf16.msra.mxu0 %v1234
          %1345 = vmatprep.subr.bf16.mxu0 %v1227
          %1346 = vmatpush1.bf16.msra.mxu0 %v1226
          %1347 = vmatprep.subr.bf16.mxu0 %v1219
          %1348 = vmatpush1.bf16.msra.mxu0 %v1218
          %1349 = vmatprep.subr.bf16.mxu0 0
          %1350 = vmatpush2.bf16.msra.mxu0 0
          %1351 = vmatprep.subr.bf16.mxu0 0
          %1352 = vmatpush2.bf16.msra.mxu0 0
          %1353 = vmatprep.subr.bf16.mxu0 0
          %1354 = vmatpush2.bf16.msra.mxu0 0
          %1355 = vmatprep.subr.bf16.mxu0 0
          %1356 = vmatpush2.bf16.msra.mxu0 0
          %1357 = vmatprep.subr.bf16.mxu0 0
          %1358 = vmatpush2.bf16.msra.mxu0 0
          %1359 = vmatprep.subr.bf16.mxu0 0
          %1360 = vmatpush2.bf16.msra.mxu0 0
          %1361 = vmatprep.subr.bf16.mxu0 0
          %1362 = vmatpush2.bf16.msra.mxu0 0
          %1363 = vmatprep.subr.bf16.mxu0 0
          %1364 = vmatpush2.bf16.msra.mxu0 0
          %1365 = vmatprep.mubr.bf16.mxu0 0
          %1366 = vmatmul.mubr.bf16.gmra.mxu0 %v1265
          %v1367 = vpop.f32.mrf.mxu0
          %v1368 = vadd.f32 %v1261, %v1367
          %v1369 = vpop.f32.mrf.mxu0
          %v1370 = vadd.f32 %v1261, %v1369
          %v1371 = vpop.f32.mrf.mxu0
          %v1372 = vpop.f32.mrf.mxu0
          %1373 = vdwg.mxu0
          %1374 = vmatprep.subr.bf16.mxu0 0
          %1375 = vmatpush1.bf16.msra.mxu0 0
          %1376 = vmatprep.subr.bf16.mxu0 0
          %1377 = vmatpush1.bf16.msra.mxu0 0
          %1378 = vmatprep.subr.bf16.mxu0 0
          %1379 = vmatpush1.bf16.msra.mxu0 0
          %1380 = vmatprep.subr.bf16.mxu0 %v1284
          %1381 = vmatpush1.bf16.msra.mxu0 %v1281
          %1382 = vmatprep.subr.bf16.mxu0 %v1245
          %1383 = vmatpush1.bf16.msra.mxu0 %v1244
          %1384 = vmatprep.subr.bf16.mxu0 %v1237
          %1385 = vmatpush1.bf16.msra.mxu0 %v1236
          %1386 = vmatprep.subr.bf16.mxu0 %v1229
          %1387 = vmatpush1.bf16.msra.mxu0 %v1228
          %1388 = vmatprep.subr.bf16.mxu0 %v1221
          %1389 = vmatpush1.bf16.msra.mxu0 %v1220
          %1390 = vmatprep.subr.bf16.mxu0 0
          %1391 = vmatpush2.bf16.msra.mxu0 0
          %1392 = vmatprep.subr.bf16.mxu0 0
          %1393 = vmatpush2.bf16.msra.mxu0 0
          %1394 = vmatprep.subr.bf16.mxu0 0
          %1395 = vmatpush2.bf16.msra.mxu0 0
          %1396 = vmatprep.subr.bf16.mxu0 0
          %1397 = vmatpush2.bf16.msra.mxu0 0
          %1398 = vmatprep.subr.bf16.mxu0 0
          %1399 = vmatpush2.bf16.msra.mxu0 0
          %1400 = vmatprep.subr.bf16.mxu0 0
          %1401 = vmatpush2.bf16.msra.mxu0 0
          %1402 = vmatprep.subr.bf16.mxu0 0
          %1403 = vmatpush2.bf16.msra.mxu0 0
          %1404 = vmatprep.subr.bf16.mxu0 0
          %1405 = vmatpush2.bf16.msra.mxu0 0
          %1406 = vmatprep.mubr.bf16.mxu0 0
          %1407 = vmatmul.mubr.bf16.gmra.mxu0 %v1265
          %v1408 = vpop.f32.mrf.mxu0
          %v1409 = vadd.f32 %v1261, %v1408
          %v1410 = vpop.f32.mrf.mxu0
          %v1411 = vadd.f32 %v1261, %v1410
          %v1412 = vpop.f32.mrf.mxu0
          %v1413 = vpop.f32.mrf.mxu0
          %1414 = vdwg.mxu0
          %1415 = vmatprep.subr.bf16.mxu0 0
          %1416 = vmatpush1.bf16.msra.mxu0 0
          %1417 = vmatprep.subr.bf16.mxu0 0
          %1418 = vmatpush1.bf16.msra.mxu0 0
          %1419 = vmatprep.subr.bf16.mxu0 0
          %1420 = vmatpush1.bf16.msra.mxu0 0
          %1421 = vmatprep.subr.bf16.mxu0 %v1290
          %1422 = vmatpush1.bf16.msra.mxu0 %v1287
          %1423 = vmatprep.subr.bf16.mxu0 %v1247
          %1424 = vmatpush1.bf16.msra.mxu0 %v1246
          %1425 = vmatprep.subr.bf16.mxu0 %v1239
          %1426 = vmatpush1.bf16.msra.mxu0 %v1238
          %1427 = vmatprep.subr.bf16.mxu0 %v1231
          %1428 = vmatpush1.bf16.msra.mxu0 %v1230
          %1429 = vmatprep.subr.bf16.mxu0 %v1223
          %1430 = vmatpush1.bf16.msra.mxu0 %v1222
          %1431 = vmatprep.subr.bf16.mxu0 0
          %1432 = vmatpush2.bf16.msra.mxu0 0
          %1433 = vmatprep.subr.bf16.mxu0 0
          %1434 = vmatpush2.bf16.msra.mxu0 0
          %1435 = vmatprep.subr.bf16.mxu0 0
          %1436 = vmatpush2.bf16.msra.mxu0 0
          %1437 = vmatprep.subr.bf16.mxu0 0
          %1438 = vmatpush2.bf16.msra.mxu0 0
          %1439 = vmatprep.subr.bf16.mxu0 0
          %1440 = vmatpush2.bf16.msra.mxu0 0
          %1441 = vmatprep.subr.bf16.mxu0 0
          %1442 = vmatpush2.bf16.msra.mxu0 0
          %1443 = vmatprep.subr.bf16.mxu0 0
          %1444 = vmatpush2.bf16.msra.mxu0 0
          %1445 = vmatprep.subr.bf16.mxu0 0
          %1446 = vmatpush2.bf16.msra.mxu0 0
          %1447 = vmatprep.mubr.bf16.mxu0 0
          %1448 = vmatmul.mubr.bf16.gmra.mxu0 %v1265
          %v1449 = vpop.f32.mrf.mxu0
          %v1450 = vadd.f32 %v1261, %v1449
          %v1451 = vpop.f32.mrf.mxu0
          %v1452 = vadd.f32 %v1261, %v1451
          %v1453 = vpop.f32.mrf.mxu0
          %v1454 = vpop.f32.mrf.mxu0
          %1455 = vdwg.mxu0
          %v1456 = vmax.f32 %v1327, 0.0
          %v1457 = vmax.f32 %v1329, 0.0
          %v1458 = vmax.f32 %v1368, 0.0
          %v1459 = vmax.f32 %v1370, 0.0
          %v1460 = vmax.f32 %v1409, 0.0
          %v1461 = vmax.f32 %v1411, 0.0
          %v1462 = vmax.f32 %v1450, 0.0
          %v1463 = vmax.f32 %v1452, 0.0
          %1464 = vrot.lane.b32.xlu0 %v1456, 33
          %v1465 = vpop.permute.xlu0 %1464
          %1466 = vrot.lane.b32.xlu0 %v1457, 33
          %v1467 = vpop.permute.xlu0 %1466
          %1468 = vrot.lane.b32.xlu0 %v1458, 33
          %v1469 = vpop.permute.xlu0 %1468
          %1470 = vrot.lane.b32.xlu0 %v1459, 33
          %v1471 = vpop.permute.xlu0 %1470
          %1472 = vrot.lane.b32.xlu0 %v1460, 33
          %v1473 = vpop.permute.xlu0 %1472
          %1474 = vrot.lane.b32.xlu0 %v1461, 33
          %v1475 = vpop.permute.xlu0 %1474
          %1476 = vrot.lane.b32.xlu0 %v1462, 33
          %v1477 = vpop.permute.xlu0 %1476
          %1478 = vrot.lane.b32.xlu0 %v1463, 33
          %v1479 = vpop.permute.xlu0 %1478
          %v1480 = vsel %vm840, %v1477, %v1479
          %v1481 = vsel %vm840, %v1475, %v1477
          %v1482 = vsel %vm840, %v1473, %v1475
          %v1483 = vsel %vm840, %v1471, %v1473
          %v1484 = vsel %vm840, %v1469, %v1471
          %v1485 = vsel %vm840, %v1467, %v1469
          %v1486 = vsel %vm840, %v1465, %v1467
          %v1487 = vsel %vm840, %v1479, %v1465
          %v1488 = vsel %vm857, %v1487, 0.0
          %v1489 = vsel %vm858, %v1486, 0.0
          %v1490 = vsel %vm859, %v1485, 0.0
          %v1491 = vsel %vm860, %v1484, 0.0
          %v1492 = vsel %vm861, %v1483, 0.0
          %v1493 = vsel %vm862, %v1482, 0.0
          %v1494 = vsel %vm863, %v1481, 0.0
          %v1495 = vsel %vm864, %v1480, 0.0
          %1496 = vrot.lane.b32.xlu0 %v1456, 32
          %v1497 = vpop.permute.xlu0 %1496
          %1498 = vrot.lane.b32.xlu0 %v1457, 32
          %v1499 = vpop.permute.xlu0 %1498
          %1500 = vrot.lane.b32.xlu0 %v1458, 32
          %v1501 = vpop.permute.xlu0 %1500
          %1502 = vrot.lane.b32.xlu0 %v1459, 32
          %v1503 = vpop.permute.xlu0 %1502
          %1504 = vrot.lane.b32.xlu0 %v1460, 32
          %v1505 = vpop.permute.xlu0 %1504
          %1506 = vrot.lane.b32.xlu0 %v1461, 32
          %v1507 = vpop.permute.xlu0 %1506
          %1508 = vrot.lane.b32.xlu0 %v1462, 32
          %v1509 = vpop.permute.xlu0 %1508
          %1510 = vrot.lane.b32.xlu0 %v1463, 32
          %v1511 = vpop.permute.xlu0 %1510
          %v1512 = vsel %vm889, %v1509, %v1511
          %v1513 = vsel %vm889, %v1507, %v1509
          %v1514 = vsel %vm889, %v1505, %v1507
          %v1515 = vsel %vm889, %v1503, %v1505
          %v1516 = vsel %vm889, %v1501, %v1503
          %v1517 = vsel %vm889, %v1499, %v1501
          %v1518 = vsel %vm889, %v1497, %v1499
          %v1519 = vsel %vm889, %v1511, %v1497
          %v1520 = vsel %vm906, %v1519, 0.0
          %v1521 = vsel %vm907, %v1518, 0.0
          %v1522 = vsel %vm908, %v1517, 0.0
          %v1523 = vsel %vm909, %v1516, 0.0
          %v1524 = vsel %vm910, %v1515, 0.0
          %v1525 = vsel %vm911, %v1514, 0.0
          %v1526 = vsel %vm912, %v1513, 0.0
          %v1527 = vsel %vm913, %v1512, 0.0
          %1528 = vrot.lane.b32.xlu0 %v1456, 31
          %v1529 = vpop.permute.xlu0 %1528
          %1530 = vrot.lane.b32.xlu0 %v1457, 31
          %v1531 = vpop.permute.xlu0 %1530
          %1532 = vrot.lane.b32.xlu0 %v1458, 31
          %v1533 = vpop.permute.xlu0 %1532
          %1534 = vrot.lane.b32.xlu0 %v1459, 31
          %v1535 = vpop.permute.xlu0 %1534
          %1536 = vrot.lane.b32.xlu0 %v1460, 31
          %v1537 = vpop.permute.xlu0 %1536
          %1538 = vrot.lane.b32.xlu0 %v1461, 31
          %v1539 = vpop.permute.xlu0 %1538
          %1540 = vrot.lane.b32.xlu0 %v1462, 31
          %v1541 = vpop.permute.xlu0 %1540
          %1542 = vrot.lane.b32.xlu0 %v1463, 31
          %v1543 = vpop.permute.xlu0 %1542
          %v1544 = vsel %vm938, %v1541, %v1543
          %v1545 = vsel %vm938, %v1539, %v1541
          %v1546 = vsel %vm938, %v1537, %v1539
          %v1547 = vsel %vm938, %v1535, %v1537
          %v1548 = vsel %vm938, %v1533, %v1535
          %v1549 = vsel %vm938, %v1531, %v1533
          %v1550 = vsel %vm938, %v1529, %v1531
          %v1551 = vsel %vm938, %v1543, %v1529
          %v1552 = vsel %vm955, %v1551, 0.0
          %v1553 = vsel %vm956, %v1550, 0.0
          %v1554 = vsel %vm957, %v1549, 0.0
          %v1555 = vsel %vm958, %v1548, 0.0
          %v1556 = vsel %vm959, %v1547, 0.0
          %v1557 = vsel %vm960, %v1546, 0.0
          %v1558 = vsel %vm961, %v1545, 0.0
          %v1559 = vsel %vm962, %v1544, 0.0
          %1560 = vrot.lane.b32.xlu0 %v1456, 1
          %v1561 = vpop.permute.xlu0 %1560
          %1562 = vrot.lane.b32.xlu0 %v1457, 1
          %v1563 = vpop.permute.xlu0 %1562
          %1564 = vrot.lane.b32.xlu0 %v1458, 1
          %v1565 = vpop.permute.xlu0 %1564
          %1566 = vrot.lane.b32.xlu0 %v1459, 1
          %v1567 = vpop.permute.xlu0 %1566
          %1568 = vrot.lane.b32.xlu0 %v1460, 1
          %v1569 = vpop.permute.xlu0 %1568
          %1570 = vrot.lane.b32.xlu0 %v1461, 1
          %v1571 = vpop.permute.xlu0 %1570
          %1572 = vrot.lane.b32.xlu0 %v1462, 1
          %v1573 = vpop.permute.xlu0 %1572
          %1574 = vrot.lane.b32.xlu0 %v1463, 1
          %v1575 = vpop.permute.xlu0 %1574
          %v1576 = vsel %vm987, %v1573, %v1575
          %v1577 = vsel %vm987, %v1571, %v1573
          %v1578 = vsel %vm987, %v1569, %v1571
          %v1579 = vsel %vm987, %v1567, %v1569
          %v1580 = vsel %vm987, %v1565, %v1567
          %v1581 = vsel %vm987, %v1563, %v1565
          %v1582 = vsel %vm987, %v1561, %v1563
          %v1583 = vsel %vm987, %v1575, %v1561
          %v1584 = vsel %vm1004, %v1583, 0.0
          %v1585 = vsel %vm1005, %v1582, 0.0
          %v1586 = vsel %vm1006, %v1581, 0.0
          %v1587 = vsel %vm1007, %v1580, 0.0
          %v1588 = vsel %vm1008, %v1579, 0.0
          %v1589 = vsel %vm1009, %v1578, 0.0
          %v1590 = vsel %vm1010, %v1577, 0.0
          %v1591 = vsel %vm1011, %v1576, 0.0
          %1592 = vrot.lane.b32.xlu0 %v1456, 127
          %v1593 = vpop.permute.xlu0 %1592
          %1594 = vrot.lane.b32.xlu0 %v1457, 127
          %v1595 = vpop.permute.xlu0 %1594
          %1596 = vrot.lane.b32.xlu0 %v1458, 127
          %v1597 = vpop.permute.xlu0 %1596
          %1598 = vrot.lane.b32.xlu0 %v1459, 127
          %v1599 = vpop.permute.xlu0 %1598
          %1600 = vrot.lane.b32.xlu0 %v1460, 127
          %v1601 = vpop.permute.xlu0 %1600
          %1602 = vrot.lane.b32.xlu0 %v1461, 127
          %v1603 = vpop.permute.xlu0 %1602
          %1604 = vrot.lane.b32.xlu0 %v1462, 127
          %v1605 = vpop.permute.xlu0 %1604
          %1606 = vrot.lane.b32.xlu0 %v1463, 127
          %v1607 = vpop.permute.xlu0 %1606
          %v1608 = vsel %vm1036, %v1605, %v1607
          %v1609 = vsel %vm1036, %v1603, %v1605
          %v1610 = vsel %vm1036, %v1601, %v1603
          %v1611 = vsel %vm1036, %v1599, %v1601
          %v1612 = vsel %vm1036, %v1597, %v1599
          %v1613 = vsel %vm1036, %v1595, %v1597
          %v1614 = vsel %vm1036, %v1593, %v1595
          %v1615 = vsel %vm1036, %v1607, %v1593
          %v1616 = vsel %vm1053, %v1614, 0.0
          %v1617 = vsel %vm1054, %v1613, 0.0
          %v1618 = vsel %vm1055, %v1612, 0.0
          %v1619 = vsel %vm1056, %v1611, 0.0
          %v1620 = vsel %vm1057, %v1610, 0.0
          %v1621 = vsel %vm1058, %v1609, 0.0
          %v1622 = vsel %vm1059, %v1608, 0.0
          %v1623 = vsel %vm1060, %v1615, 0.0
          %1624 = vrot.lane.b32.xlu0 %v1456, 97
          %v1625 = vpop.permute.xlu0 %1624
          %1626 = vrot.lane.b32.xlu0 %v1457, 97
          %v1627 = vpop.permute.xlu0 %1626
          %1628 = vrot.lane.b32.xlu0 %v1458, 97
          %v1629 = vpop.permute.xlu0 %1628
          %1630 = vrot.lane.b32.xlu0 %v1459, 97
          %v1631 = vpop.permute.xlu0 %1630
          %1632 = vrot.lane.b32.xlu0 %v1460, 97
          %v1633 = vpop.permute.xlu0 %1632
          %1634 = vrot.lane.b32.xlu0 %v1461, 97
          %v1635 = vpop.permute.xlu0 %1634
          %1636 = vrot.lane.b32.xlu0 %v1462, 97
          %v1637 = vpop.permute.xlu0 %1636
          %1638 = vrot.lane.b32.xlu0 %v1463, 97
          %v1639 = vpop.permute.xlu0 %1638
          %v1640 = vsel %vm1085, %v1637, %v1639
          %v1641 = vsel %vm1085, %v1635, %v1637
          %v1642 = vsel %vm1085, %v1633, %v1635
          %v1643 = vsel %vm1085, %v1631, %v1633
          %v1644 = vsel %vm1085, %v1629, %v1631
          %v1645 = vsel %vm1085, %v1627, %v1629
          %v1646 = vsel %vm1085, %v1625, %v1627
          %v1647 = vsel %vm1085, %v1639, %v1625
          %v1648 = vsel %vm1102, %v1646, 0.0
          %v1649 = vsel %vm1103, %v1645, 0.0
          %v1650 = vsel %vm1104, %v1644, 0.0
          %v1651 = vsel %vm1105, %v1643, 0.0
          %v1652 = vsel %vm1106, %v1642, 0.0
          %v1653 = vsel %vm1107, %v1641, 0.0
          %v1654 = vsel %vm1108, %v1640, 0.0
          %v1655 = vsel %vm1109, %v1647, 0.0
          %1656 = vrot.lane.b32.xlu0 %v1456, 96
          %v1657 = vpop.permute.xlu0 %1656
          %1658 = vrot.lane.b32.xlu0 %v1457, 96
          %v1659 = vpop.permute.xlu0 %1658
          %1660 = vrot.lane.b32.xlu0 %v1458, 96
          %v1661 = vpop.permute.xlu0 %1660
          %1662 = vrot.lane.b32.xlu0 %v1459, 96
          %v1663 = vpop.permute.xlu0 %1662
          %1664 = vrot.lane.b32.xlu0 %v1460, 96
          %v1665 = vpop.permute.xlu0 %1664
          %1666 = vrot.lane.b32.xlu0 %v1461, 96
          %v1667 = vpop.permute.xlu0 %1666
          %1668 = vrot.lane.b32.xlu0 %v1462, 96
          %v1669 = vpop.permute.xlu0 %1668
          %1670 = vrot.lane.b32.xlu0 %v1463, 96
          %v1671 = vpop.permute.xlu0 %1670
          %v1672 = vsel %vm1134, %v1669, %v1671
          %v1673 = vsel %vm1134, %v1667, %v1669
          %v1674 = vsel %vm1134, %v1665, %v1667
          %v1675 = vsel %vm1134, %v1663, %v1665
          %v1676 = vsel %vm1134, %v1661, %v1663
          %v1677 = vsel %vm1134, %v1659, %v1661
          %v1678 = vsel %vm1134, %v1657, %v1659
          %v1679 = vsel %vm1134, %v1671, %v1657
          %v1680 = vsel %vm1151, %v1678, 0.0
          %v1681 = vsel %vm1152, %v1677, 0.0
          %v1682 = vsel %vm1153, %v1676, 0.0
          %v1683 = vsel %vm1154, %v1675, 0.0
          %v1684 = vsel %vm1155, %v1674, 0.0
          %v1685 = vsel %vm1156, %v1673, 0.0
          %v1686 = vsel %vm1157, %v1672, 0.0
          %v1687 = vsel %vm1158, %v1679, 0.0
          %1688 = vrot.lane.b32.xlu0 %v1456, 95
          %v1689 = vpop.permute.xlu0 %1688
          %1690 = vrot.lane.b32.xlu0 %v1457, 95
          %v1691 = vpop.permute.xlu0 %1690
          %1692 = vrot.lane.b32.xlu0 %v1458, 95
          %v1693 = vpop.permute.xlu0 %1692
          %1694 = vrot.lane.b32.xlu0 %v1459, 95
          %v1695 = vpop.permute.xlu0 %1694
          %1696 = vrot.lane.b32.xlu0 %v1460, 95
          %v1697 = vpop.permute.xlu0 %1696
          %1698 = vrot.lane.b32.xlu0 %v1461, 95
          %v1699 = vpop.permute.xlu0 %1698
          %1700 = vrot.lane.b32.xlu0 %v1462, 95
          %v1701 = vpop.permute.xlu0 %1700
          %1702 = vrot.lane.b32.xlu0 %v1463, 95
          %v1703 = vpop.permute.xlu0 %1702
          %v1704 = vsel %vm1183, %v1701, %v1703
          %v1705 = vsel %vm1183, %v1699, %v1701
          %v1706 = vsel %vm1183, %v1697, %v1699
          %v1707 = vsel %vm1183, %v1695, %v1697
          %v1708 = vsel %vm1183, %v1693, %v1695
          %v1709 = vsel %vm1183, %v1691, %v1693
          %v1710 = vsel %vm1183, %v1689, %v1691
          %v1711 = vsel %vm1183, %v1703, %v1689
          %v1712 = vsel %vm1200, %v1710, 0.0
          %v1713 = vsel %vm1201, %v1709, 0.0
          %v1714 = vsel %vm1202, %v1708, 0.0
          %v1715 = vsel %vm1203, %v1707, 0.0
          %v1716 = vsel %vm1204, %v1706, 0.0
          %v1717 = vsel %vm1205, %v1705, 0.0
          %v1718 = vsel %vm1206, %v1704, 0.0
          %v1719 = vsel %vm1207, %v1711, 0.0
          %v1720 = vpack.c.bf16 %v1520, %v1488
          %v1721 = vpack.c.bf16 %v1521, %v1489
          %v1722 = vpack.c.bf16 %v1522, %v1490
          %v1723 = vpack.c.bf16 %v1523, %v1491
          %v1724 = vpack.c.bf16 %v1524, %v1492
          %v1725 = vpack.c.bf16 %v1525, %v1493
          %v1726 = vpack.c.bf16 %v1526, %v1494
          %v1727 = vpack.c.bf16 %v1527, %v1495
          %v1728 = vpack.c.bf16 %v1584, %v1552
          %v1729 = vpack.c.bf16 %v1585, %v1553
          %v1730 = vpack.c.bf16 %v1586, %v1554
          %v1731 = vpack.c.bf16 %v1587, %v1555
          %v1732 = vpack.c.bf16 %v1588, %v1556
          %v1733 = vpack.c.bf16 %v1589, %v1557
          %v1734 = vpack.c.bf16 %v1590, %v1558
          %v1735 = vpack.c.bf16 %v1591, %v1559
          %v1736 = vpack.c.bf16 %v1616, %v1456
          %v1737 = vpack.c.bf16 %v1617, %v1457
          %v1738 = vpack.c.bf16 %v1618, %v1458
          %v1739 = vpack.c.bf16 %v1619, %v1459
          %v1740 = vpack.c.bf16 %v1620, %v1460
          %v1741 = vpack.c.bf16 %v1621, %v1461
          %v1742 = vpack.c.bf16 %v1622, %v1462
          %v1743 = vpack.c.bf16 %v1623, %v1463
          %v1744 = vpack.c.bf16 %v1680, %v1648
          %v1745 = vpack.c.bf16 %v1681, %v1649
          %v1746 = vpack.c.bf16 %v1682, %v1650
          %v1747 = vpack.c.bf16 %v1683, %v1651
          %v1748 = vpack.c.bf16 %v1684, %v1652
          %v1749 = vpack.c.bf16 %v1685, %v1653
          %v1750 = vpack.c.bf16 %v1686, %v1654
          %v1751 = vpack.c.bf16 %v1687, %v1655
          %v1752 = vpack.c.bf16 %v1712, %v1712
          %v1753 = vpack.c.bf16 %v1713, %v1713
          %v1754 = vpack.c.bf16 %v1714, %v1714
          %v1755 = vpack.c.bf16 %v1715, %v1715
          %v1756 = vpack.c.bf16 %v1716, %v1716
          %v1757 = vpack.c.bf16 %v1717, %v1717
          %v1758 = vpack.c.bf16 %v1718, %v1718
          %v1759 = vpack.c.bf16 %v1719, %v1719
          %v1760 = vld [vmem:[%s3] sm:$0xf]
          %v1761 = vld [vmem:[%s4] sm:$0xff]
          %1763 = vset.pattern.permute.xlu0 0
          %1764 = vperm.xlu0 %1763, %v1761
          %v1765 = vpop.permute.xlu0 %1764
          %v1768 = vsel %vm1263, %v1760, 0
          %v1771 = vsel %vm1267, %v1752, 0
          %v1774 = vsel %vm1267, %v1753, 0
          %v1777 = vsel %vm1267, %v1754, 0
          %v1780 = vsel %vm1267, %v1755, 0
          %v1783 = vsel %vm1267, %v1756, 0
          %v1786 = vsel %vm1267, %v1757, 0
          %v1789 = vsel %vm1267, %v1758, 0
          %v1792 = vsel %vm1267, %v1759, 0
          %1794 = vmatprep.subr.bf16.mxu0 0
          %1795 = vmatpush1.bf16.msra.mxu0 0
          %1796 = vmatprep.subr.bf16.mxu0 0
          %1797 = vmatpush1.bf16.msra.mxu0 0
          %1798 = vmatprep.subr.bf16.mxu0 0
          %1799 = vmatpush1.bf16.msra.mxu0 0
          %1800 = vmatprep.subr.bf16.mxu0 %v1774
          %1801 = vmatpush1.bf16.msra.mxu0 %v1771
          %1802 = vmatprep.subr.bf16.mxu0 %v1745
          %1803 = vmatpush1.bf16.msra.mxu0 %v1744
          %1804 = vmatprep.subr.bf16.mxu0 %v1737
          %1805 = vmatpush1.bf16.msra.mxu0 %v1736
          %1806 = vmatprep.subr.bf16.mxu0 %v1729
          %1807 = vmatpush1.bf16.msra.mxu0 %v1728
          %1808 = vmatprep.subr.bf16.mxu0 %v1721
          %1809 = vmatpush1.bf16.msra.mxu0 %v1720
          %1810 = vmatprep.subr.bf16.mxu0 0
          %1811 = vmatpush2.bf16.msra.mxu0 0
          %1812 = vmatprep.subr.bf16.mxu0 0
          %1813 = vmatpush2.bf16.msra.mxu0 0
          %1814 = vmatprep.subr.bf16.mxu0 0
          %1815 = vmatpush2.bf16.msra.mxu0 0
          %1816 = vmatprep.subr.bf16.mxu0 0
          %1817 = vmatpush2.bf16.msra.mxu0 0
          %1818 = vmatprep.subr.bf16.mxu0 0
          %1819 = vmatpush2.bf16.msra.mxu0 0
          %1820 = vmatprep.subr.bf16.mxu0 0
          %1821 = vmatpush2.bf16.msra.mxu0 0
          %1822 = vmatprep.subr.bf16.mxu0 0
          %1823 = vmatpush2.bf16.msra.mxu0 0
          %1824 = vmatprep.subr.bf16.mxu0 0
          %1825 = vmatpush2.bf16.msra.mxu0 0
          %1826 = vmatprep.mubr.bf16.mxu0 0
          %1827 = vmatmul.mubr.bf16.gmra.mxu0 %v1768
          %v1828 = vpop.f32.mrf.mxu0
          %v1829 = vadd.f32 %v1765, %v1828
          %v1830 = vpop.f32.mrf.mxu0
          %v1831 = vadd.f32 %v1765, %v1830
          %v1832 = vpop.f32.mrf.mxu0
          %v1833 = vpop.f32.mrf.mxu0
          %1834 = vdwg.mxu0
          %1835 = vmatprep.subr.bf16.mxu0 0
          %1836 = vmatpush1.bf16.msra.mxu0 0
          %1837 = vmatprep.subr.bf16.mxu0 0
          %1838 = vmatpush1.bf16.msra.mxu0 0
          %1839 = vmatprep.subr.bf16.mxu0 0
          %1840 = vmatpush1.bf16.msra.mxu0 0
          %1841 = vmatprep.subr.bf16.mxu0 %v1780
          %1842 = vmatpush1.bf16.msra.mxu0 %v1777
          %1843 = vmatprep.subr.bf16.mxu0 %v1747
          %1844 = vmatpush1.bf16.msra.mxu0 %v1746
          %1845 = vmatprep.subr.bf16.mxu0 %v1739
          %1846 = vmatpush1.bf16.msra.mxu0 %v1738
          %1847 = vmatprep.subr.bf16.mxu0 %v1731
          %1848 = vmatpush1.bf16.msra.mxu0 %v1730
          %1849 = vmatprep.subr.bf16.mxu0 %v1723
          %1850 = vmatpush1.bf16.msra.mxu0 %v1722
          %1851 = vmatprep.subr.bf16.mxu0 0
          %1852 = vmatpush2.bf16.msra.mxu0 0
          %1853 = vmatprep.subr.bf16.mxu0 0
          %1854 = vmatpush2.bf16.msra.mxu0 0
          %1855 = vmatprep.subr.bf16.mxu0 0
          %1856 = vmatpush2.bf16.msra.mxu0 0
          %1857 = vmatprep.subr.bf16.mxu0 0
          %1858 = vmatpush2.bf16.msra.mxu0 0
          %1859 = vmatprep.subr.bf16.mxu0 0
          %1860 = vmatpush2.bf16.msra.mxu0 0
          %1861 = vmatprep.subr.bf16.mxu0 0
          %1862 = vmatpush2.bf16.msra.mxu0 0
          %1863 = vmatprep.subr.bf16.mxu0 0
          %1864 = vmatpush2.bf16.msra.mxu0 0
          %1865 = vmatprep.subr.bf16.mxu0 0
          %1866 = vmatpush2.bf16.msra.mxu0 0
          %1867 = vmatprep.mubr.bf16.mxu0 0
          %1868 = vmatmul.mubr.bf16.gmra.mxu0 %v1768
          %v1869 = vpop.f32.mrf.mxu0
          %v1870 = vadd.f32 %v1765, %v1869
          %v1871 = vpop.f32.mrf.mxu0
          %v1872 = vadd.f32 %v1765, %v1871
          %v1873 = vpop.f32.mrf.mxu0
          %v1874 = vpop.f32.mrf.mxu0
          %1875 = vdwg.mxu0
          %1876 = vmatprep.subr.bf16.mxu0 0
          %1877 = vmatpush1.bf16.msra.mxu0 0
          %1878 = vmatprep.subr.bf16.mxu0 0
          %1879 = vmatpush1.bf16.msra.mxu0 0
          %1880 = vmatprep.subr.bf16.mxu0 0
          %1881 = vmatpush1.bf16.msra.mxu0 0
          %1882 = vmatprep.subr.bf16.mxu0 %v1786
          %1883 = vmatpush1.bf16.msra.mxu0 %v1783
          %1884 = vmatprep.subr.bf16.mxu0 %v1749
          %1885 = vmatpush1.bf16.msra.mxu0 %v1748
          %1886 = vmatprep.subr.bf16.mxu0 %v1741
          %1887 = vmatpush1.bf16.msra.mxu0 %v1740
          %1888 = vmatprep.subr.bf16.mxu0 %v1733
          %1889 = vmatpush1.bf16.msra.mxu0 %v1732
          %1890 = vmatprep.subr.bf16.mxu0 %v1725
          %1891 = vmatpush1.bf16.msra.mxu0 %v1724
          %1892 = vmatprep.subr.bf16.mxu0 0
          %1893 = vmatpush2.bf16.msra.mxu0 0
          %1894 = vmatprep.subr.bf16.mxu0 0
          %1895 = vmatpush2.bf16.msra.mxu0 0
          %1896 = vmatprep.subr.bf16.mxu0 0
          %1897 = vmatpush2.bf16.msra.mxu0 0
          %1898 = vmatprep.subr.bf16.mxu0 0
          %1899 = vmatpush2.bf16.msra.mxu0 0
          %1900 = vmatprep.subr.bf16.mxu0 0
          %1901 = vmatpush2.bf16.msra.mxu0 0
          %1902 = vmatprep.subr.bf16.mxu0 0
          %1903 = vmatpush2.bf16.msra.mxu0 0
          %1904 = vmatprep.subr.bf16.mxu0 0
          %1905 = vmatpush2.bf16.msra.mxu0 0
          %1906 = vmatprep.subr.bf16.mxu0 0
          %1907 = vmatpush2.bf16.msra.mxu0 0
          %1908 = vmatprep.mubr.bf16.mxu0 0
          %1909 = vmatmul.mubr.bf16.gmra.mxu0 %v1768
          %v1910 = vpop.f32.mrf.mxu0
          %v1911 = vadd.f32 %v1765, %v1910
          %v1912 = vpop.f32.mrf.mxu0
          %v1913 = vadd.f32 %v1765, %v1912
          %v1914 = vpop.f32.mrf.mxu0
          %v1915 = vpop.f32.mrf.mxu0
          %1916 = vdwg.mxu0
          %1917 = vmatprep.subr.bf16.mxu0 0
          %1918 = vmatpush1.bf16.msra.mxu0 0
          %1919 = vmatprep.subr.bf16.mxu0 0
          %1920 = vmatpush1.bf16.msra.mxu0 0
          %1921 = vmatprep.subr.bf16.mxu0 0
          %1922 = vmatpush1.bf16.msra.mxu0 0
          %1923 = vmatprep.subr.bf16.mxu0 %v1792
          %1924 = vmatpush1.bf16.msra.mxu0 %v1789
          %1925 = vmatprep.subr.bf16.mxu0 %v1751
          %1926 = vmatpush1.bf16.msra.mxu0 %v1750
          %1927 = vmatprep.subr.bf16.mxu0 %v1743
          %1928 = vmatpush1.bf16.msra.mxu0 %v1742
          %1929 = vmatprep.subr.bf16.mxu0 %v1735
          %1930 = vmatpush1.bf16.msra.mxu0 %v1734
          %1931 = vmatprep.subr.bf16.mxu0 %v1727
          %1932 = vmatpush1.bf16.msra.mxu0 %v1726
          %1933 = vmatprep.subr.bf16.mxu0 0
          %1934 = vmatpush2.bf16.msra.mxu0 0
          %1935 = vmatprep.subr.bf16.mxu0 0
          %1936 = vmatpush2.bf16.msra.mxu0 0
          %1937 = vmatprep.subr.bf16.mxu0 0
          %1938 = vmatpush2.bf16.msra.mxu0 0
          %1939 = vmatprep.subr.bf16.mxu0 0
          %1940 = vmatpush2.bf16.msra.mxu0 0
          %1941 = vmatprep.subr.bf16.mxu0 0
          %1942 = vmatpush2.bf16.msra.mxu0 0
          %1943 = vmatprep.subr.bf16.mxu0 0
          %1944 = vmatpush2.bf16.msra.mxu0 0
          %1945 = vmatprep.subr.bf16.mxu0 0
          %1946 = vmatpush2.bf16.msra.mxu0 0
          %1947 = vmatprep.subr.bf16.mxu0 0
          %1948 = vmatpush2.bf16.msra.mxu0 0
          %1949 = vmatprep.mubr.bf16.mxu0 0
          %1950 = vmatmul.mubr.bf16.gmra.mxu0 %v1768
          %v1951 = vpop.f32.mrf.mxu0
          %v1952 = vadd.f32 %v1765, %v1951
          %v1953 = vpop.f32.mrf.mxu0
          %v1954 = vadd.f32 %v1765, %v1953
          %v1955 = vpop.f32.mrf.mxu0
          %v1956 = vpop.f32.mrf.mxu0
          %1957 = vdwg.mxu0
          %v1958 = vmax.f32 %v1829, 0.0
          %v1959 = vmax.f32 %v1831, 0.0
          %v1960 = vmax.f32 %v1870, 0.0
          %v1961 = vmax.f32 %v1872, 0.0
          %v1962 = vmax.f32 %v1911, 0.0
          %v1963 = vmax.f32 %v1913, 0.0
          %v1964 = vmax.f32 %v1952, 0.0
          %v1965 = vmax.f32 %v1954, 0.0
          %1966 = vrot.lane.b32.xlu0 %v1958, 127
          %v1967 = vpop.permute.xlu0 %1966
          %1968 = vrot.lane.b32.xlu0 %v1959, 127
          %v1969 = vpop.permute.xlu0 %1968
          %1970 = vrot.lane.b32.xlu0 %v1960, 127
          %v1971 = vpop.permute.xlu0 %1970
          %1972 = vrot.lane.b32.xlu0 %v1961, 127
          %v1973 = vpop.permute.xlu0 %1972
          %1974 = vrot.lane.b32.xlu0 %v1962, 127
          %v1975 = vpop.permute.xlu0 %1974
          %1976 = vrot.lane.b32.xlu0 %v1963, 127
          %v1977 = vpop.permute.xlu0 %1976
          %1978 = vrot.lane.b32.xlu0 %v1964, 127
          %v1979 = vpop.permute.xlu0 %1978
          %1980 = vrot.lane.b32.xlu0 %v1965, 127
          %v1981 = vpop.permute.xlu0 %1980
          %v1982 = vsel %vm1036, %v1979, %v1981
          %v1983 = vsel %vm1036, %v1977, %v1979
          %v1984 = vsel %vm1036, %v1975, %v1977
          %v1985 = vsel %vm1036, %v1973, %v1975
          %v1986 = vsel %vm1036, %v1971, %v1973
          %v1987 = vsel %vm1036, %v1969, %v1971
          %v1988 = vsel %vm1036, %v1967, %v1969
          %v1989 = vsel %vm1036, %v1981, %v1967
          %v1990 = vmax.f32 %v1958, %v1988
          %v1991 = vmax.f32 %v1959, %v1987
          %v1992 = vmax.f32 %v1960, %v1986
          %v1993 = vmax.f32 %v1961, %v1985
          %v1994 = vmax.f32 %v1962, %v1984
          %v1995 = vmax.f32 %v1963, %v1983
          %v1996 = vmax.f32 %v1964, %v1982
          %v1997 = vmax.f32 %v1965, %v1989
          %1998 = vrot.lane.b32.xlu0 %v1990, 96
          %v1999 = vpop.permute.xlu0 %1998
          %2000 = vrot.lane.b32.xlu0 %v1991, 96
          %v2001 = vpop.permute.xlu0 %2000
          %2002 = vrot.lane.b32.xlu0 %v1992, 96
          %v2003 = vpop.permute.xlu0 %2002
          %2004 = vrot.lane.b32.xlu0 %v1993, 96
          %v2005 = vpop.permute.xlu0 %2004
          %2006 = vrot.lane.b32.xlu0 %v1994, 96
          %v2007 = vpop.permute.xlu0 %2006
          %2008 = vrot.lane.b32.xlu0 %v1995, 96
          %v2009 = vpop.permute.xlu0 %2008
          %2010 = vrot.lane.b32.xlu0 %v1996, 96
          %v2011 = vpop.permute.xlu0 %2010
          %2012 = vrot.lane.b32.xlu0 %v1997, 96
          %v2013 = vpop.permute.xlu0 %2012
          %v2014 = vsel %vm1134, %v2011, %v2013
          %v2015 = vsel %vm1134, %v2009, %v2011
          %v2016 = vsel %vm1134, %v2007, %v2009
          %v2017 = vsel %vm1134, %v2005, %v2007
          %v2018 = vsel %vm1134, %v2003, %v2005
          %v2019 = vsel %vm1134, %v2001, %v2003
          %v2020 = vsel %vm1134, %v1999, %v2001
          %v2021 = vsel %vm1134, %v2013, %v1999
          %v2022 = vmax.f32 %v1990, %v2020
          %v2023 = vmax.f32 %v1991, %v2019
          %v2024 = vmax.f32 %v1992, %v2018
          %v2025 = vmax.f32 %v1993, %v2017
          %v2026 = vmax.f32 %v1994, %v2016
          %v2027 = vmax.f32 %v1995, %v2015
          %v2028 = vmax.f32 %v1996, %v2014
          %v2029 = vmax.f32 %v1997, %v2021
          %v2030 = vpack.c.bf16 %v2022, %v2022
          %v2031 = vpack.c.bf16 %v2023, %v2023
          %v2032 = vpack.c.bf16 %v2024, %v2024
          %v2033 = vpack.c.bf16 %v2025, %v2025
          %v2034 = vpack.c.bf16 %v2026, %v2026
          %v2035 = vpack.c.bf16 %v2027, %v2027
          %v2036 = vpack.c.bf16 %v2028, %v2028
          %v2037 = vpack.c.bf16 %v2029, %v2029
          %v2038 = vld [vmem:[%s5] sm:$0xff]
          %v2039 = vld [vmem:[%s5 + $0x8] sm:$0xff]
          %v2040 = vld [vmem:[%s5 + $0x10] sm:$0xff]
          %v2041 = vld [vmem:[%s5 + $0x18] sm:$0xff]
          %v2042 = vld [vmem:[%s5 + $0x20] sm:$0xff]
          %v2043 = vld [vmem:[%s5 + $0x28] sm:$0xff]
          %v2044 = vld [vmem:[%s5 + $0x30] sm:$0xff]
          %v2045 = vld [vmem:[%s5 + $0x38] sm:$0xff]
          %v2046 = vld [vmem:[%s5 + $0x40] sm:$0xff]
          %v2047 = vld [vmem:[%s5 + $0x48] sm:$0xff]
          %v2048 = vld [vmem:[%s5 + $0x50] sm:$0xff]
          %v2049 = vld [vmem:[%s5 + $0x58] sm:$0xff]
          %v2050 = vld [vmem:[%s5 + $0x60] sm:$0xff]
          %v2051 = vld [vmem:[%s5 + $0x68] sm:$0xff]
          %v2052 = vld [vmem:[%s5 + $0x70] sm:$0xff]
          %v2053 = vld [vmem:[%s5 + $0x78] sm:$0xff]
          %v2054 = vld [vmem:[%s5 + $0x80] sm:$0xff]
          %v2055 = vld [vmem:[%s5 + $0x88] sm:$0xff]
          %v2056 = vld [vmem:[%s5 + $0x90] sm:$0xff]
          %v2057 = vld [vmem:[%s5 + $0x98] sm:$0xff]
          %v2058 = vld [vmem:[%s5 + $0xa0] sm:$0xff]
          %v2059 = vld [vmem:[%s5 + $0xa8] sm:$0xff]
          %v2060 = vld [vmem:[%s5 + $0xb0] sm:$0xff]
          %v2061 = vld [vmem:[%s5 + $0xb8] sm:$0xff]
          %v2062 = vld [vmem:[%s5 + $0xc0] sm:$0xff]
          %v2063 = vld [vmem:[%s5 + $0xc8] sm:$0xff]
          %v2064 = vld [vmem:[%s5 + $0xd0] sm:$0xff]
          %v2065 = vld [vmem:[%s5 + $0xd8] sm:$0xff]
          %v2066 = vld [vmem:[%s5 + $0xe0] sm:$0xff]
          %v2067 = vld [vmem:[%s5 + $0xe8] sm:$0xff]
          %v2068 = vld [vmem:[%s5 + $0xf0] sm:$0xff]
          %v2069 = vld [vmem:[%s5 + $0xf8] sm:$0xff]
          %v2070 = vld [vmem:[%s5 + $0x100] sm:$0xff]
          %v2071 = vld [vmem:[%s5 + $0x108] sm:$0xff]
          %v2072 = vld [vmem:[%s5 + $0x110] sm:$0xff]
          %v2073 = vld [vmem:[%s5 + $0x118] sm:$0xff]
          %v2074 = vld [vmem:[%s5 + $0x120] sm:$0xff]
          %v2075 = vld [vmem:[%s5 + $0x128] sm:$0xff]
          %v2076 = vld [vmem:[%s5 + $0x130] sm:$0xff]
          %v2077 = vld [vmem:[%s5 + $0x138] sm:$0xff]
          %v2078 = vld [vmem:[%s5 + $0x140] sm:$0xff]
          %v2079 = vld [vmem:[%s5 + $0x148] sm:$0xff]
          %v2080 = vld [vmem:[%s5 + $0x150] sm:$0xff]
          %v2081 = vld [vmem:[%s5 + $0x158] sm:$0xff]
          %v2082 = vld [vmem:[%s5 + $0x160] sm:$0xff]
          %v2083 = vld [vmem:[%s5 + $0x168] sm:$0xff]
          %v2084 = vld [vmem:[%s5 + $0x170] sm:$0xff]
          %v2085 = vld [vmem:[%s5 + $0x178] sm:$0xff]
          %v2086 = vld [vmem:[%s5 + $0x180] sm:$0xff]
          %v2087 = vld [vmem:[%s5 + $0x188] sm:$0xff]
          %v2088 = vld [vmem:[%s5 + $0x190] sm:$0xff]
          %v2089 = vld [vmem:[%s5 + $0x198] sm:$0xff]
          %v2090 = vld [vmem:[%s5 + $0x1a0] sm:$0xff]
          %v2091 = vld [vmem:[%s5 + $0x1a8] sm:$0xff]
          %v2092 = vld [vmem:[%s5 + $0x1b0] sm:$0xff]
          %v2093 = vld [vmem:[%s5 + $0x1b8] sm:$0xff]
          %v2094 = vld [vmem:[%s5 + $0x1c0] sm:$0xff]
          %v2095 = vld [vmem:[%s5 + $0x1c8] sm:$0xff]
          %v2096 = vld [vmem:[%s5 + $0x1d0] sm:$0xff]
          %v2097 = vld [vmem:[%s5 + $0x1d8] sm:$0xff]
          %v2098 = vld [vmem:[%s5 + $0x1e0] sm:$0xff]
          %v2099 = vld [vmem:[%s5 + $0x1e8] sm:$0xff]
          %v2100 = vld [vmem:[%s5 + $0x1f0] sm:$0xff]
          %v2101 = vld [vmem:[%s5 + $0x1f8] sm:$0xff]
          %v2102 = vld [vmem:[%s5 + $0x200] sm:$0xff]
          %v2103 = vld [vmem:[%s5 + $0x208] sm:$0xff]
          %v2104 = vld [vmem:[%s5 + $0x210] sm:$0xff]
          %v2105 = vld [vmem:[%s5 + $0x218] sm:$0xff]
          %v2106 = vld [vmem:[%s5 + $0x220] sm:$0xff]
          %v2107 = vld [vmem:[%s5 + $0x228] sm:$0xff]
          %v2108 = vld [vmem:[%s5 + $0x230] sm:$0xff]
          %v2109 = vld [vmem:[%s5 + $0x238] sm:$0xff]
          %v2110 = vld [vmem:[%s5 + $0x240] sm:$0xff]
          %v2111 = vld [vmem:[%s5 + $0x248] sm:$0xff]
          %v2112 = vld [vmem:[%s5 + $0x250] sm:$0xff]
          %v2113 = vld [vmem:[%s5 + $0x258] sm:$0xff]
          %v2114 = vld [vmem:[%s5 + $0x260] sm:$0xff]
          %v2115 = vld [vmem:[%s5 + $0x268] sm:$0xff]
          %v2116 = vld [vmem:[%s5 + $0x270] sm:$0xff]
          %v2117 = vld [vmem:[%s5 + $0x278] sm:$0xff]
          %v2118 = vld [vmem:[%s5 + $0x280] sm:$0xff]
          %v2119 = vld [vmem:[%s5 + $0x288] sm:$0xff]
          %v2120 = vld [vmem:[%s5 + $0x290] sm:$0xff]
          %v2121 = vld [vmem:[%s5 + $0x298] sm:$0xff]
          %v2122 = vld [vmem:[%s5 + $0x2a0] sm:$0xff]
          %v2123 = vld [vmem:[%s5 + $0x2a8] sm:$0xff]
          %v2124 = vld [vmem:[%s5 + $0x2b0] sm:$0xff]
          %v2125 = vld [vmem:[%s5 + $0x2b8] sm:$0xff]
          %v2126 = vld [vmem:[%s5 + $0x2c0] sm:$0xff]
          %v2127 = vld [vmem:[%s5 + $0x2c8] sm:$0xff]
          %v2128 = vld [vmem:[%s5 + $0x2d0] sm:$0xff]
          %v2129 = vld [vmem:[%s5 + $0x2d8] sm:$0xff]
          %v2130 = vld [vmem:[%s5 + $0x2e0] sm:$0xff]
          %v2131 = vld [vmem:[%s5 + $0x2e8] sm:$0xff]
          %v2132 = vld [vmem:[%s5 + $0x2f0] sm:$0xff]
          %v2133 = vld [vmem:[%s5 + $0x2f8] sm:$0xff]
          %v2134 = vld [vmem:[%s5 + $0x300] sm:$0xff]
          %v2135 = vld [vmem:[%s5 + $0x308] sm:$0xff]
          %v2136 = vld [vmem:[%s5 + $0x310] sm:$0xff]
          %v2137 = vld [vmem:[%s5 + $0x318] sm:$0xff]
          %v2138 = vld [vmem:[%s5 + $0x320] sm:$0xff]
          %v2139 = vld [vmem:[%s5 + $0x328] sm:$0xff]
          %v2140 = vld [vmem:[%s5 + $0x330] sm:$0xff]
          %v2141 = vld [vmem:[%s5 + $0x338] sm:$0xff]
          %v2142 = vld [vmem:[%s5 + $0x340] sm:$0xff]
          %v2143 = vld [vmem:[%s5 + $0x348] sm:$0xff]
          %v2144 = vld [vmem:[%s5 + $0x350] sm:$0xff]
          %v2145 = vld [vmem:[%s5 + $0x358] sm:$0xff]
          %v2146 = vld [vmem:[%s5 + $0x360] sm:$0xff]
          %v2147 = vld [vmem:[%s5 + $0x368] sm:$0xff]
          %v2148 = vld [vmem:[%s5 + $0x370] sm:$0xff]
          %v2149 = vld [vmem:[%s5 + $0x378] sm:$0xff]
          %v2150 = vld [vmem:[%s5 + $0x380] sm:$0xff]
          %v2151 = vld [vmem:[%s5 + $0x388] sm:$0xff]
          %v2152 = vld [vmem:[%s5 + $0x390] sm:$0xff]
          %v2153 = vld [vmem:[%s5 + $0x398] sm:$0xff]
          %v2154 = vld [vmem:[%s5 + $0x3a0] sm:$0xff]
          %v2155 = vld [vmem:[%s5 + $0x3a8] sm:$0xff]
          %v2156 = vld [vmem:[%s5 + $0x3b0] sm:$0xff]
          %v2157 = vld [vmem:[%s5 + $0x3b8] sm:$0xff]
          %v2158 = vld [vmem:[%s5 + $0x3c0] sm:$0xff]
          %v2159 = vld [vmem:[%s5 + $0x3c8] sm:$0xff]
          %v2160 = vld [vmem:[%s5 + $0x3d0] sm:$0xff]
          %v2161 = vld [vmem:[%s5 + $0x3d8] sm:$0xff]
          %v2162 = vld [vmem:[%s5 + $0x3e0] sm:$0xff]
          %v2163 = vld [vmem:[%s5 + $0x3e8] sm:$0xff]
          %v2164 = vld [vmem:[%s5 + $0x3f0] sm:$0xff]
          %v2165 = vld [vmem:[%s5 + $0x3f8] sm:$0xff]
          %v2294 = vunpack.c.l.b16 %v2038
          %v2295 = vunpack.c.h.b16 %v2038
          %v2296 = vunpack.c.l.b16 %v2039
          %v2297 = vunpack.c.h.b16 %v2039
          %v2298 = vunpack.c.l.b16 %v2040
          %v2299 = vunpack.c.h.b16 %v2040
          %v2300 = vunpack.c.l.b16 %v2041
          %v2301 = vunpack.c.h.b16 %v2041
          %v2302 = vunpack.c.l.b16 %v2042
          %v2303 = vunpack.c.h.b16 %v2042
          %v2304 = vunpack.c.l.b16 %v2043
          %v2305 = vunpack.c.h.b16 %v2043
          %v2306 = vunpack.c.l.b16 %v2044
          %v2307 = vunpack.c.h.b16 %v2044
          %v2308 = vunpack.c.l.b16 %v2045
          %v2309 = vunpack.c.h.b16 %v2045
          %v2310 = vunpack.c.l.b16 %v2046
          %v2311 = vunpack.c.h.b16 %v2046
          %v2312 = vunpack.c.l.b16 %v2047
          %v2313 = vunpack.c.h.b16 %v2047
          %v2314 = vunpack.c.l.b16 %v2048
          %v2315 = vunpack.c.h.b16 %v2048
          %v2316 = vunpack.c.l.b16 %v2049
          %v2317 = vunpack.c.h.b16 %v2049
          %v2318 = vunpack.c.l.b16 %v2050
          %v2319 = vunpack.c.h.b16 %v2050
          %v2320 = vunpack.c.l.b16 %v2051
          %v2321 = vunpack.c.h.b16 %v2051
          %v2322 = vunpack.c.l.b16 %v2052
          %v2323 = vunpack.c.h.b16 %v2052
          %v2324 = vunpack.c.l.b16 %v2053
          %v2325 = vunpack.c.h.b16 %v2053
          %v2326 = vunpack.c.l.b16 %v2054
          %v2327 = vunpack.c.h.b16 %v2054
          %v2328 = vunpack.c.l.b16 %v2055
          %v2329 = vunpack.c.h.b16 %v2055
          %v2330 = vunpack.c.l.b16 %v2056
          %v2331 = vunpack.c.h.b16 %v2056
          %v2332 = vunpack.c.l.b16 %v2057
          %v2333 = vunpack.c.h.b16 %v2057
          %v2334 = vunpack.c.l.b16 %v2058
          %v2335 = vunpack.c.h.b16 %v2058
          %v2336 = vunpack.c.l.b16 %v2059
          %v2337 = vunpack.c.h.b16 %v2059
          %v2338 = vunpack.c.l.b16 %v2060
          %v2339 = vunpack.c.h.b16 %v2060
          %v2340 = vunpack.c.l.b16 %v2061
          %v2341 = vunpack.c.h.b16 %v2061
          %v2342 = vunpack.c.l.b16 %v2062
          %v2343 = vunpack.c.h.b16 %v2062
          %v2344 = vunpack.c.l.b16 %v2063
          %v2345 = vunpack.c.h.b16 %v2063
          %v2346 = vunpack.c.l.b16 %v2064
          %v2347 = vunpack.c.h.b16 %v2064
          %v2348 = vunpack.c.l.b16 %v2065
          %v2349 = vunpack.c.h.b16 %v2065
          %v2350 = vunpack.c.l.b16 %v2066
          %v2351 = vunpack.c.h.b16 %v2066
          %v2352 = vunpack.c.l.b16 %v2067
          %v2353 = vunpack.c.h.b16 %v2067
          %v2354 = vunpack.c.l.b16 %v2068
          %v2355 = vunpack.c.h.b16 %v2068
          %v2356 = vunpack.c.l.b16 %v2069
          %v2357 = vunpack.c.h.b16 %v2069
          %v2358 = vunpack.c.l.b16 %v2070
          %v2359 = vunpack.c.h.b16 %v2070
          %v2360 = vunpack.c.l.b16 %v2071
          %v2361 = vunpack.c.h.b16 %v2071
          %v2362 = vunpack.c.l.b16 %v2072
          %v2363 = vunpack.c.h.b16 %v2072
          %v2364 = vunpack.c.l.b16 %v2073
          %v2365 = vunpack.c.h.b16 %v2073
          %v2366 = vunpack.c.l.b16 %v2074
          %v2367 = vunpack.c.h.b16 %v2074
          %v2368 = vunpack.c.l.b16 %v2075
          %v2369 = vunpack.c.h.b16 %v2075
          %v2370 = vunpack.c.l.b16 %v2076
          %v2371 = vunpack.c.h.b16 %v2076
          %v2372 = vunpack.c.l.b16 %v2077
          %v2373 = vunpack.c.h.b16 %v2077
          %v2374 = vunpack.c.l.b16 %v2078
          %v2375 = vunpack.c.h.b16 %v2078
          %v2376 = vunpack.c.l.b16 %v2079
          %v2377 = vunpack.c.h.b16 %v2079
          %v2378 = vunpack.c.l.b16 %v2080
          %v2379 = vunpack.c.h.b16 %v2080
          %v2380 = vunpack.c.l.b16 %v2081
          %v2381 = vunpack.c.h.b16 %v2081
          %v2382 = vunpack.c.l.b16 %v2082
          %v2383 = vunpack.c.h.b16 %v2082
          %v2384 = vunpack.c.l.b16 %v2083
          %v2385 = vunpack.c.h.b16 %v2083
          %v2386 = vunpack.c.l.b16 %v2084
          %v2387 = vunpack.c.h.b16 %v2084
          %v2388 = vunpack.c.l.b16 %v2085
          %v2389 = vunpack.c.h.b16 %v2085
          %v2390 = vunpack.c.l.b16 %v2086
          %v2391 = vunpack.c.h.b16 %v2086
          %v2392 = vunpack.c.l.b16 %v2087
          %v2393 = vunpack.c.h.b16 %v2087
          %v2394 = vunpack.c.l.b16 %v2088
          %v2395 = vunpack.c.h.b16 %v2088
          %v2396 = vunpack.c.l.b16 %v2089
          %v2397 = vunpack.c.h.b16 %v2089
          %v2398 = vunpack.c.l.b16 %v2090
          %v2399 = vunpack.c.h.b16 %v2090
          %v2400 = vunpack.c.l.b16 %v2091
          %v2401 = vunpack.c.h.b16 %v2091
          %v2402 = vunpack.c.l.b16 %v2092
          %v2403 = vunpack.c.h.b16 %v2092
          %v2404 = vunpack.c.l.b16 %v2093
          %v2405 = vunpack.c.h.b16 %v2093
          %v2406 = vunpack.c.l.b16 %v2094
          %v2407 = vunpack.c.h.b16 %v2094
          %v2408 = vunpack.c.l.b16 %v2095
          %v2409 = vunpack.c.h.b16 %v2095
          %v2410 = vunpack.c.l.b16 %v2096
          %v2411 = vunpack.c.h.b16 %v2096
          %v2412 = vunpack.c.l.b16 %v2097
          %v2413 = vunpack.c.h.b16 %v2097
          %v2414 = vunpack.c.l.b16 %v2098
          %v2415 = vunpack.c.h.b16 %v2098
          %v2416 = vunpack.c.l.b16 %v2099
          %v2417 = vunpack.c.h.b16 %v2099
          %v2418 = vunpack.c.l.b16 %v2100
          %v2419 = vunpack.c.h.b16 %v2100
          %v2420 = vunpack.c.l.b16 %v2101
          %v2421 = vunpack.c.h.b16 %v2101
          %v2422 = vunpack.c.l.b16 %v2102
          %v2423 = vunpack.c.h.b16 %v2102
          %v2424 = vunpack.c.l.b16 %v2103
          %v2425 = vunpack.c.h.b16 %v2103
          %v2426 = vunpack.c.l.b16 %v2104
          %v2427 = vunpack.c.h.b16 %v2104
          %v2428 = vunpack.c.l.b16 %v2105
          %v2429 = vunpack.c.h.b16 %v2105
          %v2430 = vunpack.c.l.b16 %v2106
          %v2431 = vunpack.c.h.b16 %v2106
          %v2432 = vunpack.c.l.b16 %v2107
          %v2433 = vunpack.c.h.b16 %v2107
          %v2434 = vunpack.c.l.b16 %v2108
          %v2435 = vunpack.c.h.b16 %v2108
          %v2436 = vunpack.c.l.b16 %v2109
          %v2437 = vunpack.c.h.b16 %v2109
          %v2438 = vunpack.c.l.b16 %v2110
          %v2439 = vunpack.c.h.b16 %v2110
          %v2440 = vunpack.c.l.b16 %v2111
          %v2441 = vunpack.c.h.b16 %v2111
          %v2442 = vunpack.c.l.b16 %v2112
          %v2443 = vunpack.c.h.b16 %v2112
          %v2444 = vunpack.c.l.b16 %v2113
          %v2445 = vunpack.c.h.b16 %v2113
          %v2446 = vunpack.c.l.b16 %v2114
          %v2447 = vunpack.c.h.b16 %v2114
          %v2448 = vunpack.c.l.b16 %v2115
          %v2449 = vunpack.c.h.b16 %v2115
          %v2450 = vunpack.c.l.b16 %v2116
          %v2451 = vunpack.c.h.b16 %v2116
          %v2452 = vunpack.c.l.b16 %v2117
          %v2453 = vunpack.c.h.b16 %v2117
          %v2454 = vunpack.c.l.b16 %v2118
          %v2455 = vunpack.c.h.b16 %v2118
          %v2456 = vunpack.c.l.b16 %v2119
          %v2457 = vunpack.c.h.b16 %v2119
          %v2458 = vunpack.c.l.b16 %v2120
          %v2459 = vunpack.c.h.b16 %v2120
          %v2460 = vunpack.c.l.b16 %v2121
          %v2461 = vunpack.c.h.b16 %v2121
          %v2462 = vunpack.c.l.b16 %v2122
          %v2463 = vunpack.c.h.b16 %v2122
          %v2464 = vunpack.c.l.b16 %v2123
          %v2465 = vunpack.c.h.b16 %v2123
          %v2466 = vunpack.c.l.b16 %v2124
          %v2467 = vunpack.c.h.b16 %v2124
          %v2468 = vunpack.c.l.b16 %v2125
          %v2469 = vunpack.c.h.b16 %v2125
          %v2470 = vunpack.c.l.b16 %v2126
          %v2471 = vunpack.c.h.b16 %v2126
          %v2472 = vunpack.c.l.b16 %v2127
          %v2473 = vunpack.c.h.b16 %v2127
          %v2474 = vunpack.c.l.b16 %v2128
          %v2475 = vunpack.c.h.b16 %v2128
          %v2476 = vunpack.c.l.b16 %v2129
          %v2477 = vunpack.c.h.b16 %v2129
          %v2478 = vunpack.c.l.b16 %v2130
          %v2479 = vunpack.c.h.b16 %v2130
          %v2480 = vunpack.c.l.b16 %v2131
          %v2481 = vunpack.c.h.b16 %v2131
          %v2482 = vunpack.c.l.b16 %v2132
          %v2483 = vunpack.c.h.b16 %v2132
          %v2484 = vunpack.c.l.b16 %v2133
          %v2485 = vunpack.c.h.b16 %v2133
          %v2486 = vunpack.c.l.b16 %v2134
          %v2487 = vunpack.c.h.b16 %v2134
          %v2488 = vunpack.c.l.b16 %v2135
          %v2489 = vunpack.c.h.b16 %v2135
          %v2490 = vunpack.c.l.b16 %v2136
          %v2491 = vunpack.c.h.b16 %v2136
          %v2492 = vunpack.c.l.b16 %v2137
          %v2493 = vunpack.c.h.b16 %v2137
          %v2494 = vunpack.c.l.b16 %v2138
          %v2495 = vunpack.c.h.b16 %v2138
          %v2496 = vunpack.c.l.b16 %v2139
          %v2497 = vunpack.c.h.b16 %v2139
          %v2498 = vunpack.c.l.b16 %v2140
          %v2499 = vunpack.c.h.b16 %v2140
          %v2500 = vunpack.c.l.b16 %v2141
          %v2501 = vunpack.c.h.b16 %v2141
          %v2502 = vunpack.c.l.b16 %v2142
          %v2503 = vunpack.c.h.b16 %v2142
          %v2504 = vunpack.c.l.b16 %v2143
          %v2505 = vunpack.c.h.b16 %v2143
          %v2506 = vunpack.c.l.b16 %v2144
          %v2507 = vunpack.c.h.b16 %v2144
          %v2508 = vunpack.c.l.b16 %v2145
          %v2509 = vunpack.c.h.b16 %v2145
          %v2510 = vunpack.c.l.b16 %v2146
          %v2511 = vunpack.c.h.b16 %v2146
          %v2512 = vunpack.c.l.b16 %v2147
          %v2513 = vunpack.c.h.b16 %v2147
          %v2514 = vunpack.c.l.b16 %v2148
          %v2515 = vunpack.c.h.b16 %v2148
          %v2516 = vunpack.c.l.b16 %v2149
          %v2517 = vunpack.c.h.b16 %v2149
          %v2518 = vunpack.c.l.b16 %v2150
          %v2519 = vunpack.c.h.b16 %v2150
          %v2520 = vunpack.c.l.b16 %v2151
          %v2521 = vunpack.c.h.b16 %v2151
          %v2522 = vunpack.c.l.b16 %v2152
          %v2523 = vunpack.c.h.b16 %v2152
          %v2524 = vunpack.c.l.b16 %v2153
          %v2525 = vunpack.c.h.b16 %v2153
          %v2526 = vunpack.c.l.b16 %v2154
          %v2527 = vunpack.c.h.b16 %v2154
          %v2528 = vunpack.c.l.b16 %v2155
          %v2529 = vunpack.c.h.b16 %v2155
          %v2530 = vunpack.c.l.b16 %v2156
          %v2531 = vunpack.c.h.b16 %v2156
          %v2532 = vunpack.c.l.b16 %v2157
          %v2533 = vunpack.c.h.b16 %v2157
          %v2534 = vunpack.c.l.b16 %v2158
          %v2535 = vunpack.c.h.b16 %v2158
          %v2536 = vunpack.c.l.b16 %v2159
          %v2537 = vunpack.c.h.b16 %v2159
          %v2538 = vunpack.c.l.b16 %v2160
          %v2539 = vunpack.c.h.b16 %v2160
          %v2540 = vunpack.c.l.b16 %v2161
          %v2541 = vunpack.c.h.b16 %v2161
          %v2542 = vunpack.c.l.b16 %v2162
          %v2543 = vunpack.c.h.b16 %v2162
          %v2544 = vunpack.c.l.b16 %v2163
          %v2545 = vunpack.c.h.b16 %v2163
          %v2546 = vunpack.c.l.b16 %v2164
          %v2547 = vunpack.c.h.b16 %v2164
          %v2548 = vunpack.c.l.b16 %v2165
          %v2549 = vunpack.c.h.b16 %v2165
          %v2550 = vpack.c.b16 %v2296, %v2294
          %v2551 = vpack.c.b16 %v2297, %v2295
          %v2552 = vpack.c.b16 %v2300, %v2298
          %v2553 = vpack.c.b16 %v2301, %v2299
          %v2554 = vpack.c.b16 %v2304, %v2302
          %v2555 = vpack.c.b16 %v2305, %v2303
          %v2556 = vpack.c.b16 %v2308, %v2306
          %v2557 = vpack.c.b16 %v2309, %v2307
          %v2558 = vpack.c.b16 %v2312, %v2310
          %v2559 = vpack.c.b16 %v2313, %v2311
          %v2560 = vpack.c.b16 %v2316, %v2314
          %v2561 = vpack.c.b16 %v2317, %v2315
          %v2562 = vpack.c.b16 %v2320, %v2318
          %v2563 = vpack.c.b16 %v2321, %v2319
          %v2564 = vpack.c.b16 %v2324, %v2322
          %v2565 = vpack.c.b16 %v2325, %v2323
          %v2566 = vpack.c.b16 %v2328, %v2326
          %v2567 = vpack.c.b16 %v2329, %v2327
          %v2568 = vpack.c.b16 %v2332, %v2330
          %v2569 = vpack.c.b16 %v2333, %v2331
          %v2570 = vpack.c.b16 %v2336, %v2334
          %v2571 = vpack.c.b16 %v2337, %v2335
          %v2572 = vpack.c.b16 %v2340, %v2338
          %v2573 = vpack.c.b16 %v2341, %v2339
          %v2574 = vpack.c.b16 %v2344, %v2342
          %v2575 = vpack.c.b16 %v2345, %v2343
          %v2576 = vpack.c.b16 %v2348, %v2346
          %v2577 = vpack.c.b16 %v2349, %v2347
          %v2578 = vpack.c.b16 %v2352, %v2350
          %v2579 = vpack.c.b16 %v2353, %v2351
          %v2580 = vpack.c.b16 %v2356, %v2354
          %v2581 = vpack.c.b16 %v2357, %v2355
          %v2582 = vpack.c.b16 %v2360, %v2358
          %v2583 = vpack.c.b16 %v2361, %v2359
          %v2584 = vpack.c.b16 %v2364, %v2362
          %v2585 = vpack.c.b16 %v2365, %v2363
          %v2586 = vpack.c.b16 %v2368, %v2366
          %v2587 = vpack.c.b16 %v2369, %v2367
          %v2588 = vpack.c.b16 %v2372, %v2370
          %v2589 = vpack.c.b16 %v2373, %v2371
          %v2590 = vpack.c.b16 %v2376, %v2374
          %v2591 = vpack.c.b16 %v2377, %v2375
          %v2592 = vpack.c.b16 %v2380, %v2378
          %v2593 = vpack.c.b16 %v2381, %v2379
          %v2594 = vpack.c.b16 %v2384, %v2382
          %v2595 = vpack.c.b16 %v2385, %v2383
          %v2596 = vpack.c.b16 %v2388, %v2386
          %v2597 = vpack.c.b16 %v2389, %v2387
          %v2598 = vpack.c.b16 %v2392, %v2390
          %v2599 = vpack.c.b16 %v2393, %v2391
          %v2600 = vpack.c.b16 %v2396, %v2394
          %v2601 = vpack.c.b16 %v2397, %v2395
          %v2602 = vpack.c.b16 %v2400, %v2398
          %v2603 = vpack.c.b16 %v2401, %v2399
          %v2604 = vpack.c.b16 %v2404, %v2402
          %v2605 = vpack.c.b16 %v2405, %v2403
          %v2606 = vpack.c.b16 %v2408, %v2406
          %v2607 = vpack.c.b16 %v2409, %v2407
          %v2608 = vpack.c.b16 %v2412, %v2410
          %v2609 = vpack.c.b16 %v2413, %v2411
          %v2610 = vpack.c.b16 %v2416, %v2414
          %v2611 = vpack.c.b16 %v2417, %v2415
          %v2612 = vpack.c.b16 %v2420, %v2418
          %v2613 = vpack.c.b16 %v2421, %v2419
          %v2614 = vpack.c.b16 %v2424, %v2422
          %v2615 = vpack.c.b16 %v2425, %v2423
          %v2616 = vpack.c.b16 %v2428, %v2426
          %v2617 = vpack.c.b16 %v2429, %v2427
          %v2618 = vpack.c.b16 %v2432, %v2430
          %v2619 = vpack.c.b16 %v2433, %v2431
          %v2620 = vpack.c.b16 %v2436, %v2434
          %v2621 = vpack.c.b16 %v2437, %v2435
          %v2622 = vpack.c.b16 %v2440, %v2438
          %v2623 = vpack.c.b16 %v2441, %v2439
          %v2624 = vpack.c.b16 %v2444, %v2442
          %v2625 = vpack.c.b16 %v2445, %v2443
          %v2626 = vpack.c.b16 %v2448, %v2446
          %v2627 = vpack.c.b16 %v2449, %v2447
          %v2628 = vpack.c.b16 %v2452, %v2450
          %v2629 = vpack.c.b16 %v2453, %v2451
          %v2630 = vpack.c.b16 %v2456, %v2454
          %v2631 = vpack.c.b16 %v2457, %v2455
          %v2632 = vpack.c.b16 %v2460, %v2458
          %v2633 = vpack.c.b16 %v2461, %v2459
          %v2634 = vpack.c.b16 %v2464, %v2462
          %v2635 = vpack.c.b16 %v2465, %v2463
          %v2636 = vpack.c.b16 %v2468, %v2466
          %v2637 = vpack.c.b16 %v2469, %v2467
          %v2638 = vpack.c.b16 %v2472, %v2470
          %v2639 = vpack.c.b16 %v2473, %v2471
          %v2640 = vpack.c.b16 %v2476, %v2474
          %v2641 = vpack.c.b16 %v2477, %v2475
          %v2642 = vpack.c.b16 %v2480, %v2478
          %v2643 = vpack.c.b16 %v2481, %v2479
          %v2644 = vpack.c.b16 %v2484, %v2482
          %v2645 = vpack.c.b16 %v2485, %v2483
          %v2646 = vpack.c.b16 %v2488, %v2486
          %v2647 = vpack.c.b16 %v2489, %v2487
          %v2648 = vpack.c.b16 %v2492, %v2490
          %v2649 = vpack.c.b16 %v2493, %v2491
          %v2650 = vpack.c.b16 %v2496, %v2494
          %v2651 = vpack.c.b16 %v2497, %v2495
          %v2652 = vpack.c.b16 %v2500, %v2498
          %v2653 = vpack.c.b16 %v2501, %v2499
          %v2654 = vpack.c.b16 %v2504, %v2502
          %v2655 = vpack.c.b16 %v2505, %v2503
          %v2656 = vpack.c.b16 %v2508, %v2506
          %v2657 = vpack.c.b16 %v2509, %v2507
          %v2658 = vpack.c.b16 %v2512, %v2510
          %v2659 = vpack.c.b16 %v2513, %v2511
          %v2660 = vpack.c.b16 %v2516, %v2514
          %v2661 = vpack.c.b16 %v2517, %v2515
          %v2662 = vpack.c.b16 %v2520, %v2518
          %v2663 = vpack.c.b16 %v2521, %v2519
          %v2664 = vpack.c.b16 %v2524, %v2522
          %v2665 = vpack.c.b16 %v2525, %v2523
          %v2666 = vpack.c.b16 %v2528, %v2526
          %v2667 = vpack.c.b16 %v2529, %v2527
          %v2668 = vpack.c.b16 %v2532, %v2530
          %v2669 = vpack.c.b16 %v2533, %v2531
          %v2670 = vpack.c.b16 %v2536, %v2534
          %v2671 = vpack.c.b16 %v2537, %v2535
          %v2672 = vpack.c.b16 %v2540, %v2538
          %v2673 = vpack.c.b16 %v2541, %v2539
          %v2674 = vpack.c.b16 %v2544, %v2542
          %v2675 = vpack.c.b16 %v2545, %v2543
          %v2676 = vpack.c.b16 %v2548, %v2546
          %v2677 = vpack.c.b16 %v2549, %v2547
          %2806 = vmatprep.subr.bf16.mxu0 %v2565
          %2807 = vmatpush1.bf16.msra.mxu0 %v2564
          %2808 = vmatprep.subr.bf16.mxu0 %v2563
          %2809 = vmatpush1.bf16.msra.mxu0 %v2562
          %2810 = vmatprep.subr.bf16.mxu0 %v2561
          %2811 = vmatpush1.bf16.msra.mxu0 %v2560
          %2812 = vmatprep.subr.bf16.mxu0 %v2559
          %2813 = vmatpush1.bf16.msra.mxu0 %v2558
          %2814 = vmatprep.subr.bf16.mxu0 %v2557
          %2815 = vmatpush1.bf16.msra.mxu0 %v2556
          %2816 = vmatprep.subr.bf16.mxu0 %v2555
          %2817 = vmatpush1.bf16.msra.mxu0 %v2554
          %2818 = vmatprep.subr.bf16.mxu0 %v2553
          %2819 = vmatpush1.bf16.msra.mxu0 %v2552
          %2820 = vmatprep.subr.bf16.mxu0 %v2551
          %2821 = vmatpush1.bf16.msra.mxu0 %v2550
          %2822 = vmatprep.subr.bf16.mxu0 %v2581
          %2823 = vmatpush2.bf16.msra.mxu0 %v2580
          %2824 = vmatprep.subr.bf16.mxu0 %v2579
          %2825 = vmatpush2.bf16.msra.mxu0 %v2578
          %2826 = vmatprep.subr.bf16.mxu0 %v2577
          %2827 = vmatpush2.bf16.msra.mxu0 %v2576
          %2828 = vmatprep.subr.bf16.mxu0 %v2575
          %2829 = vmatpush2.bf16.msra.mxu0 %v2574
          %2830 = vmatprep.subr.bf16.mxu0 %v2573
          %2831 = vmatpush2.bf16.msra.mxu0 %v2572
          %2832 = vmatprep.subr.bf16.mxu0 %v2571
          %2833 = vmatpush2.bf16.msra.mxu0 %v2570
          %2834 = vmatprep.subr.bf16.mxu0 %v2569
          %2835 = vmatpush2.bf16.msra.mxu0 %v2568
          %2836 = vmatprep.subr.bf16.mxu0 %v2567
          %2837 = vmatpush2.bf16.msra.mxu0 %v2566
          %2838 = vmatprep.mubr.bf16.mxu0 %v2031
          %2839 = vmatmul.mubr.bf16.gmra.mxu0 %v2030
          %v2840 = vpop.f32.mrf.mxu0
          %v2841 = vadd.f32 0.0, %v2840
          %v2842 = vpop.f32.mrf.mxu0
          %v2843 = vadd.f32 0.0, %v2842
          %v2844 = vpop.f32.mrf.mxu0
          %v2845 = vpop.f32.mrf.mxu0
          %2846 = vdwg.mxu0
          %2847 = vmatprep.subr.bf16.mxu0 %v2597
          %2848 = vmatpush1.bf16.msra.mxu0 %v2596
          %2849 = vmatprep.subr.bf16.mxu0 %v2595
          %2850 = vmatpush1.bf16.msra.mxu0 %v2594
          %2851 = vmatprep.subr.bf16.mxu0 %v2593
          %2852 = vmatpush1.bf16.msra.mxu0 %v2592
          %2853 = vmatprep.subr.bf16.mxu0 %v2591
          %2854 = vmatpush1.bf16.msra.mxu0 %v2590
          %2855 = vmatprep.subr.bf16.mxu0 %v2589
          %2856 = vmatpush1.bf16.msra.mxu0 %v2588
          %2857 = vmatprep.subr.bf16.mxu0 %v2587
          %2858 = vmatpush1.bf16.msra.mxu0 %v2586
          %2859 = vmatprep.subr.bf16.mxu0 %v2585
          %2860 = vmatpush1.bf16.msra.mxu0 %v2584
          %2861 = vmatprep.subr.bf16.mxu0 %v2583
          %2862 = vmatpush1.bf16.msra.mxu0 %v2582
          %2863 = vmatprep.subr.bf16.mxu0 %v2613
          %2864 = vmatpush2.bf16.msra.mxu0 %v2612
          %2865 = vmatprep.subr.bf16.mxu0 %v2611
          %2866 = vmatpush2.bf16.msra.mxu0 %v2610
          %2867 = vmatprep.subr.bf16.mxu0 %v2609
          %2868 = vmatpush2.bf16.msra.mxu0 %v2608
          %2869 = vmatprep.subr.bf16.mxu0 %v2607
          %2870 = vmatpush2.bf16.msra.mxu0 %v2606
          %2871 = vmatprep.subr.bf16.mxu0 %v2605
          %2872 = vmatpush2.bf16.msra.mxu0 %v2604
          %2873 = vmatprep.subr.bf16.mxu0 %v2603
          %2874 = vmatpush2.bf16.msra.mxu0 %v2602
          %2875 = vmatprep.subr.bf16.mxu0 %v2601
          %2876 = vmatpush2.bf16.msra.mxu0 %v2600
          %2877 = vmatprep.subr.bf16.mxu0 %v2599
          %2878 = vmatpush2.bf16.msra.mxu0 %v2598
          %2879 = vmatprep.mubr.bf16.mxu0 %v2033
          %2880 = vmatmul.mubr.bf16.gmra.mxu0 %v2032
          %v2881 = vpop.f32.mrf.mxu0
          %v2882 = vadd.f32 %v2841, %v2881
          %v2883 = vpop.f32.mrf.mxu0
          %v2884 = vadd.f32 %v2843, %v2883
          %v2885 = vpop.f32.mrf.mxu0
          %v2886 = vpop.f32.mrf.mxu0
          %2887 = vdwg.mxu0
          %2888 = vmatprep.subr.bf16.mxu0 %v2629
          %2889 = vmatpush1.bf16.msra.mxu0 %v2628
          %2890 = vmatprep.subr.bf16.mxu0 %v2627
          %2891 = vmatpush1.bf16.msra.mxu0 %v2626
          %2892 = vmatprep.subr.bf16.mxu0 %v2625
          %2893 = vmatpush1.bf16.msra.mxu0 %v2624
          %2894 = vmatprep.subr.bf16.mxu0 %v2623
          %2895 = vmatpush1.bf16.msra.mxu0 %v2622
          %2896 = vmatprep.subr.bf16.mxu0 %v2621
          %2897 = vmatpush1.bf16.msra.mxu0 %v2620
          %2898 = vmatprep.subr.bf16.mxu0 %v2619
          %2899 = vmatpush1.bf16.msra.mxu0 %v2618
          %2900 = vmatprep.subr.bf16.mxu0 %v2617
          %2901 = vmatpush1.bf16.msra.mxu0 %v2616
          %2902 = vmatprep.subr.bf16.mxu0 %v2615
          %2903 = vmatpush1.bf16.msra.mxu0 %v2614
          %2904 = vmatprep.subr.bf16.mxu0 %v2645
          %2905 = vmatpush2.bf16.msra.mxu0 %v2644
          %2906 = vmatprep.subr.bf16.mxu0 %v2643
          %2907 = vmatpush2.bf16.msra.mxu0 %v2642
          %2908 = vmatprep.subr.bf16.mxu0 %v2641
          %2909 = vmatpush2.bf16.msra.mxu0 %v2640
          %2910 = vmatprep.subr.bf16.mxu0 %v2639
          %2911 = vmatpush2.bf16.msra.mxu0 %v2638
          %2912 = vmatprep.subr.bf16.mxu0 %v2637
          %2913 = vmatpush2.bf16.msra.mxu0 %v2636
          %2914 = vmatprep.subr.bf16.mxu0 %v2635
          %2915 = vmatpush2.bf16.msra.mxu0 %v2634
          %2916 = vmatprep.subr.bf16.mxu0 %v2633
          %2917 = vmatpush2.bf16.msra.mxu0 %v2632
          %2918 = vmatprep.subr.bf16.mxu0 %v2631
          %2919 = vmatpush2.bf16.msra.mxu0 %v2630
          %2920 = vmatprep.mubr.bf16.mxu0 %v2035
          %2921 = vmatmul.mubr.bf16.gmra.mxu0 %v2034
          %v2922 = vpop.f32.mrf.mxu0
          %v2923 = vadd.f32 %v2882, %v2922
          %v2924 = vpop.f32.mrf.mxu0
          %v2925 = vadd.f32 %v2884, %v2924
          %v2926 = vpop.f32.mrf.mxu0
          %v2927 = vpop.f32.mrf.mxu0
          %2928 = vdwg.mxu0
          %2929 = vmatprep.subr.bf16.mxu0 %v2661
          %2930 = vmatpush1.bf16.msra.mxu0 %v2660
          %2931 = vmatprep.subr.bf16.mxu0 %v2659
          %2932 = vmatpush1.bf16.msra.mxu0 %v2658
          %2933 = vmatprep.subr.bf16.mxu0 %v2657
          %2934 = vmatpush1.bf16.msra.mxu0 %v2656
          %2935 = vmatprep.subr.bf16.mxu0 %v2655
          %2936 = vmatpush1.bf16.msra.mxu0 %v2654
          %2937 = vmatprep.subr.bf16.mxu0 %v2653
          %2938 = vmatpush1.bf16.msra.mxu0 %v2652
          %2939 = vmatprep.subr.bf16.mxu0 %v2651
          %2940 = vmatpush1.bf16.msra.mxu0 %v2650
          %2941 = vmatprep.subr.bf16.mxu0 %v2649
          %2942 = vmatpush1.bf16.msra.mxu0 %v2648
          %2943 = vmatprep.subr.bf16.mxu0 %v2647
          %2944 = vmatpush1.bf16.msra.mxu0 %v2646
          %2945 = vmatprep.subr.bf16.mxu0 %v2677
          %2946 = vmatpush2.bf16.msra.mxu0 %v2676
          %2947 = vmatprep.subr.bf16.mxu0 %v2675
          %2948 = vmatpush2.bf16.msra.mxu0 %v2674
          %2949 = vmatprep.subr.bf16.mxu0 %v2673
          %2950 = vmatpush2.bf16.msra.mxu0 %v2672
          %2951 = vmatprep.subr.bf16.mxu0 %v2671
          %2952 = vmatpush2.bf16.msra.mxu0 %v2670
          %2953 = vmatprep.subr.bf16.mxu0 %v2669
          %2954 = vmatpush2.bf16.msra.mxu0 %v2668
          %2955 = vmatprep.subr.bf16.mxu0 %v2667
          %2956 = vmatpush2.bf16.msra.mxu0 %v2666
          %2957 = vmatprep.subr.bf16.mxu0 %v2665
          %2958 = vmatpush2.bf16.msra.mxu0 %v2664
          %2959 = vmatprep.subr.bf16.mxu0 %v2663
          %2960 = vmatpush2.bf16.msra.mxu0 %v2662
          %2961 = vmatprep.mubr.bf16.mxu0 %v2037
          %2962 = vmatmul.mubr.bf16.gmra.mxu0 %v2036
          %v2963 = vpop.f32.mrf.mxu0
          %v2964 = vadd.f32 %v2923, %v2963
          %v2965 = vpop.f32.mrf.mxu0
          %v2966 = vadd.f32 %v2925, %v2965
          %v2967 = vpop.f32.mrf.mxu0
          %v2968 = vpop.f32.mrf.mxu0
          %2969 = vdwg.mxu0
          %2970 = vrot.lane.b32.xlu0 %v2964, 17
          %v2971 = vpop.permute.xlu0 %2970
          %2972 = vrot.lane.b32.xlu0 %v2966, 17
          %v2973 = vpop.permute.xlu0 %2972
          %vm2974 = vcmp.lt.s32.totalorder %v689, 17
          %v2975 = vsel %vm2974, %v2971, %v2973
          %v2976 = vsel %vm2974, %v2973, %v2971
          %v2977 = vsel %vm785, 1, 0
          %v2978 = vsel %vm786, 1, 0
          %vm2979 = vcmp.eq.s32.totalorder %v2977, 1
          %vm2980 = vcmp.eq.s32.totalorder %v2978, 1
          %v2981 = vsel %vm2979, %v2976, 0.0
          %v2982 = vsel %vm2980, %v2975, 0.0
          %2983 = vrot.lane.b32.xlu0 %v2964, 16
          %v2984 = vpop.permute.xlu0 %2983
          %2985 = vrot.lane.b32.xlu0 %v2966, 16
          %v2986 = vpop.permute.xlu0 %2985
          %vm2987 = vcmp.lt.s32.totalorder %v689, 16
          %v2988 = vsel %vm2987, %v2984, %v2986
          %v2989 = vsel %vm2987, %v2986, %v2984
          %v2990 = vsel %vm783, 1, 0
          %v2991 = vsel %vm784, 1, 0
          %vm2992 = vcmp.eq.s32.totalorder %v2990, 1
          %vm2993 = vcmp.eq.s32.totalorder %v2991, 1
          %v2994 = vsel %vm2992, %v2989, 0.0
          %v2995 = vsel %vm2993, %v2988, 0.0
          %2996 = vrot.lane.b32.xlu0 %v2964, 15
          %v2997 = vpop.permute.xlu0 %2996
          %2998 = vrot.lane.b32.xlu0 %v2966, 15
          %v2999 = vpop.permute.xlu0 %2998
          %vm3000 = vcmp.lt.s32.totalorder %v689, 15
          %v3001 = vsel %vm3000, %v2997, %v2999
          %v3002 = vsel %vm3000, %v2999, %v2997
          %v3003 = vsel %vm789, 1, 0
          %v3004 = vsel %vm790, 1, 0
          %vm3005 = vcmp.eq.s32.totalorder %v3003, 1
          %vm3006 = vcmp.eq.s32.totalorder %v3004, 1
          %v3007 = vsel %vm3005, %v3002, 0.0
          %v3008 = vsel %vm3006, %v3001, 0.0
          %3009 = vrot.lane.b32.xlu0 %v2964, 1
          %v3010 = vpop.permute.xlu0 %3009
          %3011 = vrot.lane.b32.xlu0 %v2966, 1
          %v3012 = vpop.permute.xlu0 %3011
          %v3013 = vsel %vm987, %v3010, %v3012
          %v3014 = vsel %vm987, %v3012, %v3010
          %v3015 = vsel %vm781, 1, 0
          %v3016 = vsel %vm782, 1, 0
          %vm3017 = vcmp.eq.s32.totalorder %v3015, 1
          %vm3018 = vcmp.eq.s32.totalorder %v3016, 1
          %v3019 = vsel %vm3017, %v3014, 0.0
          %v3020 = vsel %vm3018, %v3013, 0.0
          %3021 = vrot.lane.b32.xlu0 %v2964, 127
          %v3022 = vpop.permute.xlu0 %3021
          %3023 = vrot.lane.b32.xlu0 %v2966, 127
          %v3024 = vpop.permute.xlu0 %3023
          %v3025 = vsel %vm1036, %v3022, %v3024
          %v3026 = vsel %vm1036, %v3024, %v3022
          %v3027 = vsel %vm787, 1, 0
          %v3028 = vsel %vm788, 1, 0
          %vm3029 = vcmp.eq.s32.totalorder %v3027, 1
          %vm3030 = vcmp.eq.s32.totalorder %v3028, 1
          %v3031 = vsel %vm3029, %v3025, 0.0
          %v3032 = vsel %vm3030, %v3026, 0.0
          %3033 = vrot.lane.b32.xlu0 %v2964, 113
          %v3034 = vpop.permute.xlu0 %3033
          %3035 = vrot.lane.b32.xlu0 %v2966, 113
          %v3036 = vpop.permute.xlu0 %3035
          %vm3037 = vcmp.lt.s32.totalorder %v689, 113
          %v3038 = vsel %vm3037, %v3034, %v3036
          %v3039 = vsel %vm3037, %v3036, %v3034
          %v3040 = vsel %vm793, 1, 0
          %v3041 = vsel %vm794, 1, 0
          %vm3042 = vcmp.eq.s32.totalorder %v3040, 1
          %vm3043 = vcmp.eq.s32.totalorder %v3041, 1
          %v3044 = vsel %vm3042, %v3038, 0.0
          %v3045 = vsel %vm3043, %v3039, 0.0
          %3046 = vrot.lane.b32.xlu0 %v2964, 112
          %v3047 = vpop.permute.xlu0 %3046
          %3048 = vrot.lane.b32.xlu0 %v2966, 112
          %v3049 = vpop.permute.xlu0 %3048
          %vm3050 = vcmp.lt.s32.totalorder %v689, 112
          %v3051 = vsel %vm3050, %v3047, %v3049
          %v3052 = vsel %vm3050, %v3049, %v3047
          %v3053 = vsel %vm791, 1, 0
          %v3054 = vsel %vm792, 1, 0
          %vm3055 = vcmp.eq.s32.totalorder %v3053, 1
          %vm3056 = vcmp.eq.s32.totalorder %v3054, 1
          %v3057 = vsel %vm3055, %v3051, 0.0
          %v3058 = vsel %vm3056, %v3052, 0.0
          %3059 = vrot.lane.b32.xlu0 %v2964, 111
          %v3060 = vpop.permute.xlu0 %3059
          %3061 = vrot.lane.b32.xlu0 %v2966, 111
          %v3062 = vpop.permute.xlu0 %3061
          %vm3063 = vcmp.lt.s32.totalorder %v689, 111
          %v3064 = vsel %vm3063, %v3060, %v3062
          %v3065 = vsel %vm3063, %v3062, %v3060
          %v3066 = vsel %vm795, 1, 0
          %v3067 = vsel %vm796, 1, 0
          %vm3068 = vcmp.eq.s32.totalorder %v3066, 1
          %vm3069 = vcmp.eq.s32.totalorder %v3067, 1
          %v3070 = vsel %vm3068, %v3064, 0.0
          %v3071 = vsel %vm3069, %v3065, 0.0
          %v3072 = vpack.c.bf16 %v2994, %v2981
          %v3073 = vpack.c.bf16 %v2995, %v2982
          %v3074 = vpack.c.bf16 %v3019, %v3007
          %v3075 = vpack.c.bf16 %v3020, %v3008
          %v3076 = vpack.c.bf16 %v3031, %v2964
          %v3077 = vpack.c.bf16 %v3032, %v2966
          %v3078 = vpack.c.bf16 %v3057, %v3044
          %v3079 = vpack.c.bf16 %v3058, %v3045
          %v3080 = vpack.c.bf16 %v3070, %v3070
          %v3081 = vpack.c.bf16 %v3071, %v3071
          %v3082 = vld [vmem:[%s6] sm:$0xf]
          %v3083 = vld [vmem:[%s6 + $0x4] sm:$0xf]
          %v3084 = vld [vmem:[%s7] sm:$0xff]
          %v3085 = vld [vmem:[%s7 + $0x8] sm:$0xff]
          %3087 = vset.pattern.permute.xlu0 0
          %3088 = vperm.xlu0 %3087, %v3084
          %v3089 = vpop.permute.xlu0 %3088
          %3092 = vset.pattern.permute.xlu0 0
          %3093 = vperm.xlu0 %3092, %v3085
          %v3094 = vpop.permute.xlu0 %3093
          %v3098 = vunpack.c.l.b16 %v3082
          %v3099 = vunpack.c.l.b16 %v3083
          %v3100 = vpack.c.b16 %v3099, %v3098
          %v3102 = vsel %vm1263, %v3100, 0
          %v3105 = vsel %vm1267, %v3080, 0
          %v3108 = vsel %vm1267, %v3081, 0
          %3110 = vmatprep.subr.bf16.mxu0 0
          %3111 = vmatpush1.bf16.msra.mxu0 0
          %3112 = vmatprep.subr.bf16.mxu0 0
          %3113 = vmatpush1.bf16.msra.mxu0 0
          %3114 = vmatprep.subr.bf16.mxu0 0
          %3115 = vmatpush1.bf16.msra.mxu0 0
          %3116 = vmatprep.subr.bf16.mxu0 %v3108
          %3117 = vmatpush1.bf16.msra.mxu0 %v3105
          %3118 = vmatprep.subr.bf16.mxu0 %v3079
          %3119 = vmatpush1.bf16.msra.mxu0 %v3078
          %3120 = vmatprep.subr.bf16.mxu0 %v3077
          %3121 = vmatpush1.bf16.msra.mxu0 %v3076
          %3122 = vmatprep.subr.bf16.mxu0 %v3075
          %3123 = vmatpush1.bf16.msra.mxu0 %v3074
          %3124 = vmatprep.subr.bf16.mxu0 %v3073
          %3125 = vmatpush1.bf16.msra.mxu0 %v3072
          %3126 = vmatprep.subr.bf16.mxu0 0
          %3127 = vmatpush2.bf16.msra.mxu0 0
          %3128 = vmatprep.subr.bf16.mxu0 0
          %3129 = vmatpush2.bf16.msra.mxu0 0
          %3130 = vmatprep.subr.bf16.mxu0 0
          %3131 = vmatpush2.bf16.msra.mxu0 0
          %3132 = vmatprep.subr.bf16.mxu0 0
          %3133 = vmatpush2.bf16.msra.mxu0 0
          %3134 = vmatprep.subr.bf16.mxu0 0
          %3135 = vmatpush2.bf16.msra.mxu0 0
          %3136 = vmatprep.subr.bf16.mxu0 0
          %3137 = vmatpush2.bf16.msra.mxu0 0
          %3138 = vmatprep.subr.bf16.mxu0 0
          %3139 = vmatpush2.bf16.msra.mxu0 0
          %3140 = vmatprep.subr.bf16.mxu0 0
          %3141 = vmatpush2.bf16.msra.mxu0 0
          %3142 = vmatprep.mubr.bf16.mxu0 0
          %3143 = vmatmul.mubr.bf16.gmra.mxu0 %v3102
          %v3144 = vpop.f32.mrf.mxu0
          %v3145 = vadd.f32 %v3089, %v3144
          %v3146 = vpop.f32.mrf.mxu0
          %v3147 = vadd.f32 %v3089, %v3146
          %v3148 = vpop.f32.mrf.mxu0
          %v3149 = vadd.f32 %v3094, %v3148
          %v3150 = vpop.f32.mrf.mxu0
          %v3151 = vadd.f32 %v3094, %v3150
          %3152 = vdwg.mxu0
          %v3153 = vmax.f32 %v3145, 0.0
          %v3154 = vmax.f32 %v3147, 0.0
          %v3155 = vmax.f32 %v3149, 0.0
          %v3156 = vmax.f32 %v3151, 0.0
          %3157 = vrot.lane.b32.xlu0 %v3153, 17
          %v3158 = vpop.permute.xlu0 %3157
          %3159 = vrot.lane.b32.xlu0 %v3155, 17
          %v3160 = vpop.permute.xlu0 %3159
          %3161 = vrot.lane.b32.xlu0 %v3154, 17
          %v3162 = vpop.permute.xlu0 %3161
          %3163 = vrot.lane.b32.xlu0 %v3156, 17
          %v3164 = vpop.permute.xlu0 %3163
          %v3165 = vsel %vm2974, %v3158, %v3162
          %v3166 = vsel %vm2974, %v3160, %v3164
          %v3167 = vsel %vm2974, %v3162, %v3158
          %v3168 = vsel %vm2974, %v3164, %v3160
          %v3169 = vsel %vm2979, %v3167, 0.0
          %v3170 = vsel %vm2980, %v3165, 0.0
          %v3171 = vsel %vm2979, %v3168, 0.0
          %v3172 = vsel %vm2980, %v3166, 0.0
          %3173 = vrot.lane.b32.xlu0 %v3153, 16
          %v3174 = vpop.permute.xlu0 %3173
          %3175 = vrot.lane.b32.xlu0 %v3155, 16
          %v3176 = vpop.permute.xlu0 %3175
          %3177 = vrot.lane.b32.xlu0 %v3154, 16
          %v3178 = vpop.permute.xlu0 %3177
          %3179 = vrot.lane.b32.xlu0 %v3156, 16
          %v3180 = vpop.permute.xlu0 %3179
          %v3181 = vsel %vm2987, %v3174, %v3178
          %v3182 = vsel %vm2987, %v3176, %v3180
          %v3183 = vsel %vm2987, %v3178, %v3174
          %v3184 = vsel %vm2987, %v3180, %v3176
          %v3185 = vsel %vm2992, %v3183, 0.0
          %v3186 = vsel %vm2993, %v3181, 0.0
          %v3187 = vsel %vm2992, %v3184, 0.0
          %v3188 = vsel %vm2993, %v3182, 0.0
          %3189 = vrot.lane.b32.xlu0 %v3153, 15
          %v3190 = vpop.permute.xlu0 %3189
          %3191 = vrot.lane.b32.xlu0 %v3155, 15
          %v3192 = vpop.permute.xlu0 %3191
          %3193 = vrot.lane.b32.xlu0 %v3154, 15
          %v3194 = vpop.permute.xlu0 %3193
          %3195 = vrot.lane.b32.xlu0 %v3156, 15
          %v3196 = vpop.permute.xlu0 %3195
          %v3197 = vsel %vm3000, %v3190, %v3194
          %v3198 = vsel %vm3000, %v3192, %v3196
          %v3199 = vsel %vm3000, %v3194, %v3190
          %v3200 = vsel %vm3000, %v3196, %v3192
          %v3201 = vsel %vm3005, %v3199, 0.0
          %v3202 = vsel %vm3006, %v3197, 0.0
          %v3203 = vsel %vm3005, %v3200, 0.0
          %v3204 = vsel %vm3006, %v3198, 0.0
          %3205 = vrot.lane.b32.xlu0 %v3153, 1
          %v3206 = vpop.permute.xlu0 %3205
          %3207 = vrot.lane.b32.xlu0 %v3155, 1
          %v3208 = vpop.permute.xlu0 %3207
          %3209 = vrot.lane.b32.xlu0 %v3154, 1
          %v3210 = vpop.permute.xlu0 %3209
          %3211 = vrot.lane.b32.xlu0 %v3156, 1
          %v3212 = vpop.permute.xlu0 %3211
          %v3213 = vsel %vm987, %v3206, %v3210
          %v3214 = vsel %vm987, %v3208, %v3212
          %v3215 = vsel %vm987, %v3210, %v3206
          %v3216 = vsel %vm987, %v3212, %v3208
          %v3217 = vsel %vm3017, %v3215, 0.0
          %v3218 = vsel %vm3018, %v3213, 0.0
          %v3219 = vsel %vm3017, %v3216, 0.0
          %v3220 = vsel %vm3018, %v3214, 0.0
          %3221 = vrot.lane.b32.xlu0 %v3153, 127
          %v3222 = vpop.permute.xlu0 %3221
          %3223 = vrot.lane.b32.xlu0 %v3155, 127
          %v3224 = vpop.permute.xlu0 %3223
          %3225 = vrot.lane.b32.xlu0 %v3154, 127
          %v3226 = vpop.permute.xlu0 %3225
          %3227 = vrot.lane.b32.xlu0 %v3156, 127
          %v3228 = vpop.permute.xlu0 %3227
          %v3229 = vsel %vm1036, %v3222, %v3226
          %v3230 = vsel %vm1036, %v3224, %v3228
          %v3231 = vsel %vm1036, %v3226, %v3222
          %v3232 = vsel %vm1036, %v3228, %v3224
          %v3233 = vsel %vm3029, %v3229, 0.0
          %v3234 = vsel %vm3030, %v3231, 0.0
          %v3235 = vsel %vm3029, %v3230, 0.0
          %v3236 = vsel %vm3030, %v3232, 0.0
          %3237 = vrot.lane.b32.xlu0 %v3153, 113
          %v3238 = vpop.permute.xlu0 %3237
          %3239 = vrot.lane.b32.xlu0 %v3155, 113
          %v3240 = vpop.permute.xlu0 %3239
          %3241 = vrot.lane.b32.xlu0 %v3154, 113
          %v3242 = vpop.permute.xlu0 %3241
          %3243 = vrot.lane.b32.xlu0 %v3156, 113
          %v3244 = vpop.permute.xlu0 %3243
          %v3245 = vsel %vm3037, %v3238, %v3242
          %v3246 = vsel %vm3037, %v3240, %v3244
          %v3247 = vsel %vm3037, %v3242, %v3238
          %v3248 = vsel %vm3037, %v3244, %v3240
          %v3249 = vsel %vm3042, %v3245, 0.0
          %v3250 = vsel %vm3043, %v3247, 0.0
          %v3251 = vsel %vm3042, %v3246, 0.0
          %v3252 = vsel %vm3043, %v3248, 0.0
          %3253 = vrot.lane.b32.xlu0 %v3153, 112
          %v3254 = vpop.permute.xlu0 %3253
          %3255 = vrot.lane.b32.xlu0 %v3155, 112
          %v3256 = vpop.permute.xlu0 %3255
          %3257 = vrot.lane.b32.xlu0 %v3154, 112
          %v3258 = vpop.permute.xlu0 %3257
          %3259 = vrot.lane.b32.xlu0 %v3156, 112
          %v3260 = vpop.permute.xlu0 %3259
          %v3261 = vsel %vm3050, %v3254, %v3258
          %v3262 = vsel %vm3050, %v3256, %v3260
          %v3263 = vsel %vm3050, %v3258, %v3254
          %v3264 = vsel %vm3050, %v3260, %v3256
          %v3265 = vsel %vm3055, %v3261, 0.0
          %v3266 = vsel %vm3056, %v3263, 0.0
          %v3267 = vsel %vm3055, %v3262, 0.0
          %v3268 = vsel %vm3056, %v3264, 0.0
          %3269 = vrot.lane.b32.xlu0 %v3153, 111
          %v3270 = vpop.permute.xlu0 %3269
          %3271 = vrot.lane.b32.xlu0 %v3155, 111
          %v3272 = vpop.permute.xlu0 %3271
          %3273 = vrot.lane.b32.xlu0 %v3154, 111
          %v3274 = vpop.permute.xlu0 %3273
          %3275 = vrot.lane.b32.xlu0 %v3156, 111
          %v3276 = vpop.permute.xlu0 %3275
          %v3277 = vsel %vm3063, %v3270, %v3274
          %v3278 = vsel %vm3063, %v3272, %v3276
          %v3279 = vsel %vm3063, %v3274, %v3270
          %v3280 = vsel %vm3063, %v3276, %v3272
          %v3281 = vsel %vm3068, %v3277, 0.0
          %v3282 = vsel %vm3069, %v3279, 0.0
          %v3283 = vsel %vm3068, %v3278, 0.0
          %v3284 = vsel %vm3069, %v3280, 0.0
          %v3285 = vpack.c.bf16 %v3171, %v3169
          %v3286 = vpack.c.bf16 %v3172, %v3170
          %v3287 = vpack.c.bf16 %v3187, %v3185
          %v3288 = vpack.c.bf16 %v3188, %v3186
          %v3289 = vpack.c.bf16 %v3203, %v3201
          %v3290 = vpack.c.bf16 %v3204, %v3202
          %v3291 = vpack.c.bf16 %v3219, %v3217
          %v3292 = vpack.c.bf16 %v3220, %v3218
          %v3293 = vpack.c.bf16 %v3155, %v3153
          %v3294 = vpack.c.bf16 %v3156, %v3154
          %v3295 = vpack.c.bf16 %v3235, %v3233
          %v3296 = vpack.c.bf16 %v3236, %v3234
          %v3297 = vpack.c.bf16 %v3251, %v3249
          %v3298 = vpack.c.bf16 %v3252, %v3250
          %v3299 = vpack.c.bf16 %v3267, %v3265
          %v3300 = vpack.c.bf16 %v3268, %v3266
          %v3301 = vpack.c.bf16 %v3283, %v3281
          %v3302 = vpack.c.bf16 %v3284, %v3282
          %v3303 = vld [vmem:[%s8] sm:$0xff]
          %v3304 = vld [vmem:[%s8 + $0x8] sm:$0xff]
          %v3305 = vld [vmem:[%s9] sm:$0xff]
          %v3306 = vld [vmem:[%s9 + $0x8] sm:$0xff]
          %3308 = vset.pattern.permute.xlu0 0
          %3309 = vperm.xlu0 %3308, %v3305
          %v3310 = vpop.permute.xlu0 %3309
          %3313 = vset.pattern.permute.xlu0 0
          %3314 = vperm.xlu0 %3313, %v3306
          %v3315 = vpop.permute.xlu0 %3314
          %v3319 = vunpack.c.l.b16 %v3303
          %v3320 = vunpack.c.h.b16 %v3303
          %v3321 = vunpack.c.l.b16 %v3304
          %v3322 = vunpack.c.h.b16 %v3304
          %v3323 = vpack.c.b16 %v3321, %v3319
          %v3324 = vpack.c.b16 %v3322, %v3320
          %vm3326 = vcmask 130048
          %v3328 = vsel %vm3326, %v3324, 0
          %3330 = vmatprep.subr.bf16.mxu0 %v3300
          %3331 = vmatpush1.bf16.msra.mxu0 %v3299
          %3332 = vmatprep.subr.bf16.mxu0 %v3298
          %3333 = vmatpush1.bf16.msra.mxu0 %v3297
          %3334 = vmatprep.subr.bf16.mxu0 %v3296
          %3335 = vmatpush1.bf16.msra.mxu0 %v3295
          %3336 = vmatprep.subr.bf16.mxu0 %v3294
          %3337 = vmatpush1.bf16.msra.mxu0 %v3293
          %3338 = vmatprep.subr.bf16.mxu0 %v3292
          %3339 = vmatpush1.bf16.msra.mxu0 %v3291
          %3340 = vmatprep.subr.bf16.mxu0 %v3290
          %3341 = vmatpush1.bf16.msra.mxu0 %v3289
          %3342 = vmatprep.subr.bf16.mxu0 %v3288
          %3343 = vmatpush1.bf16.msra.mxu0 %v3287
          %3344 = vmatprep.subr.bf16.mxu0 %v3286
          %3345 = vmatpush1.bf16.msra.mxu0 %v3285
          %3346 = vmatprep.subr.bf16.mxu0 0
          %3347 = vmatpush2.bf16.msra.mxu0 0
          %3348 = vmatprep.subr.bf16.mxu0 0
          %3349 = vmatpush2.bf16.msra.mxu0 0
          %3350 = vmatprep.subr.bf16.mxu0 0
          %3351 = vmatpush2.bf16.msra.mxu0 0
          %3352 = vmatprep.subr.bf16.mxu0 0
          %3353 = vmatpush2.bf16.msra.mxu0 0
          %3354 = vmatprep.subr.bf16.mxu0 0
          %3355 = vmatpush2.bf16.msra.mxu0 0
          %3356 = vmatprep.subr.bf16.mxu0 0
          %3357 = vmatpush2.bf16.msra.mxu0 0
          %3358 = vmatprep.subr.bf16.mxu0 0
          %3359 = vmatpush2.bf16.msra.mxu0 0
          %3360 = vmatprep.subr.bf16.mxu0 %v3302
          %3361 = vmatpush2.bf16.msra.mxu0 %v3301
          %3362 = vmatprep.mubr.bf16.mxu0 %v3328
          %3363 = vmatmul.mubr.bf16.gmra.mxu0 %v3323
          %v3364 = vpop.f32.mrf.mxu0
          %v3365 = vadd.f32 %v3310, %v3364
          %v3366 = vpop.f32.mrf.mxu0
          %v3367 = vadd.f32 %v3310, %v3366
          %v3368 = vpop.f32.mrf.mxu0
          %v3369 = vadd.f32 %v3315, %v3368
          %v3370 = vpop.f32.mrf.mxu0
          %v3371 = vadd.f32 %v3315, %v3370
          %3372 = vdwg.mxu0
          %v3373 = vmax.f32 %v3365, 0.0
          %v3374 = vmax.f32 %v3367, 0.0
          %v3375 = vmax.f32 %v3369, 0.0
          %v3376 = vmax.f32 %v3371, 0.0
          %3377 = vrot.lane.b32.xlu0 %v3373, 127
          %v3378 = vpop.permute.xlu0 %3377
          %3379 = vrot.lane.b32.xlu0 %v3375, 127
          %v3380 = vpop.permute.xlu0 %3379
          %3381 = vrot.lane.b32.xlu0 %v3374, 127
          %v3382 = vpop.permute.xlu0 %3381
          %3383 = vrot.lane.b32.xlu0 %v3376, 127
          %v3384 = vpop.permute.xlu0 %3383
          %v3385 = vsel %vm1036, %v3378, %v3382
          %v3386 = vsel %vm1036, %v3380, %v3384
          %v3387 = vsel %vm1036, %v3382, %v3378
          %v3388 = vsel %vm1036, %v3384, %v3380
          %v3389 = vmax.f32 %v3373, %v3385
          %v3390 = vmax.f32 %v3374, %v3387
          %v3391 = vmax.f32 %v3375, %v3386
          %v3392 = vmax.f32 %v3376, %v3388
          %3393 = vrot.lane.b32.xlu0 %v3389, 112
          %v3394 = vpop.permute.xlu0 %3393
          %3395 = vrot.lane.b32.xlu0 %v3391, 112
          %v3396 = vpop.permute.xlu0 %3395
          %3397 = vrot.lane.b32.xlu0 %v3390, 112
          %v3398 = vpop.permute.xlu0 %3397
          %3399 = vrot.lane.b32.xlu0 %v3392, 112
          %v3400 = vpop.permute.xlu0 %3399
          %v3401 = vsel %vm3050, %v3394, %v3398
          %v3402 = vsel %vm3050, %v3396, %v3400
          %v3403 = vsel %vm3050, %v3398, %v3394
          %v3404 = vsel %vm3050, %v3400, %v3396
          %v3405 = vmax.f32 %v3389, %v3401
          %v3406 = vmax.f32 %v3390, %v3403
          %v3407 = vmax.f32 %v3391, %v3402
          %v3408 = vmax.f32 %v3392, %v3404
          %v3409 = vpack.c.bf16 %v3407, %v3405
          %v3410 = vpack.c.bf16 %v3408, %v3406
          %v3411 = vld [vmem:[%s10] sm:$0xf]
          %v3412 = vld [vmem:[%s10 + $0x4] sm:$0xf]
          %v3413 = vld [vmem:[%s10 + $0x8] sm:$0xf]
          %v3414 = vld [vmem:[%s10 + $0xc] sm:$0xf]
          %v3415 = vld [vmem:[%s10 + $0x10] sm:$0xf]
          %v3416 = vld [vmem:[%s10 + $0x14] sm:$0xf]
          %v3417 = vld [vmem:[%s10 + $0x18] sm:$0xf]
          %v3418 = vld [vmem:[%s10 + $0x1c] sm:$0xf]
          %v3419 = vld [vmem:[%s10 + $0x20] sm:$0xf]
          %v3420 = vld [vmem:[%s10 + $0x24] sm:$0xf]
          %v3421 = vld [vmem:[%s10 + $0x28] sm:$0xf]
          %v3422 = vld [vmem:[%s10 + $0x2c] sm:$0xf]
          %v3423 = vld [vmem:[%s10 + $0x30] sm:$0xf]
          %v3424 = vld [vmem:[%s10 + $0x34] sm:$0xf]
          %v3425 = vld [vmem:[%s10 + $0x38] sm:$0xf]
          %v3426 = vld [vmem:[%s10 + $0x3c] sm:$0xf]
          %v3427 = vld [vmem:[%s10 + $0x40] sm:$0xf]
          %v3428 = vld [vmem:[%s10 + $0x44] sm:$0xf]
          %v3429 = vld [vmem:[%s10 + $0x48] sm:$0xf]
          %v3430 = vld [vmem:[%s10 + $0x4c] sm:$0xf]
          %v3431 = vld [vmem:[%s10 + $0x50] sm:$0xf]
          %v3432 = vld [vmem:[%s10 + $0x54] sm:$0xf]
          %v3433 = vld [vmem:[%s10 + $0x58] sm:$0xf]
          %v3434 = vld [vmem:[%s10 + $0x5c] sm:$0xf]
          %v3435 = vld [vmem:[%s10 + $0x60] sm:$0xf]
          %v3436 = vld [vmem:[%s10 + $0x64] sm:$0xf]
          %v3437 = vld [vmem:[%s10 + $0x68] sm:$0xf]
          %v3438 = vld [vmem:[%s10 + $0x6c] sm:$0xf]
          %v3439 = vld [vmem:[%s10 + $0x70] sm:$0xf]
          %v3440 = vld [vmem:[%s10 + $0x74] sm:$0xf]
          %v3441 = vld [vmem:[%s10 + $0x78] sm:$0xf]
          %v3442 = vld [vmem:[%s10 + $0x7c] sm:$0xf]
          %v3475 = vunpack.c.l.b16 %v3411
          %v3476 = vunpack.c.l.b16 %v3412
          %v3477 = vunpack.c.l.b16 %v3413
          %v3478 = vunpack.c.l.b16 %v3414
          %v3479 = vunpack.c.l.b16 %v3415
          %v3480 = vunpack.c.l.b16 %v3416
          %v3481 = vunpack.c.l.b16 %v3417
          %v3482 = vunpack.c.l.b16 %v3418
          %v3483 = vunpack.c.l.b16 %v3419
          %v3484 = vunpack.c.l.b16 %v3420
          %v3485 = vunpack.c.l.b16 %v3421
          %v3486 = vunpack.c.l.b16 %v3422
          %v3487 = vunpack.c.l.b16 %v3423
          %v3488 = vunpack.c.l.b16 %v3424
          %v3489 = vunpack.c.l.b16 %v3425
          %v3490 = vunpack.c.l.b16 %v3426
          %v3491 = vunpack.c.l.b16 %v3427
          %v3492 = vunpack.c.l.b16 %v3428
          %v3493 = vunpack.c.l.b16 %v3429
          %v3494 = vunpack.c.l.b16 %v3430
          %v3495 = vunpack.c.l.b16 %v3431
          %v3496 = vunpack.c.l.b16 %v3432
          %v3497 = vunpack.c.l.b16 %v3433
          %v3498 = vunpack.c.l.b16 %v3434
          %v3499 = vunpack.c.l.b16 %v3435
          %v3500 = vunpack.c.l.b16 %v3436
          %v3501 = vunpack.c.l.b16 %v3437
          %v3502 = vunpack.c.l.b16 %v3438
          %v3503 = vunpack.c.l.b16 %v3439
          %v3504 = vunpack.c.l.b16 %v3440
          %v3505 = vunpack.c.l.b16 %v3441
          %v3506 = vunpack.c.l.b16 %v3442
          %v3507 = vpack.c.b16 %v3476, %v3475
          %v3508 = vpack.c.b16 %v3478, %v3477
          %v3509 = vpack.c.b16 %v3480, %v3479
          %v3510 = vpack.c.b16 %v3482, %v3481
          %v3511 = vpack.c.b16 %v3484, %v3483
          %v3512 = vpack.c.b16 %v3486, %v3485
          %v3513 = vpack.c.b16 %v3488, %v3487
          %v3514 = vpack.c.b16 %v3490, %v3489
          %v3515 = vpack.c.b16 %v3492, %v3491
          %v3516 = vpack.c.b16 %v3494, %v3493
          %v3517 = vpack.c.b16 %v3496, %v3495
          %v3518 = vpack.c.b16 %v3498, %v3497
          %v3519 = vpack.c.b16 %v3500, %v3499
          %v3520 = vpack.c.b16 %v3502, %v3501
          %v3521 = vpack.c.b16 %v3504, %v3503
          %v3522 = vpack.c.b16 %v3506, %v3505
          %3539 = vmatprep.subr.bf16.mxu0 0
          %3540 = vmatpush1.bf16.msra.mxu0 %v3514
          %3541 = vmatprep.subr.bf16.mxu0 0
          %3542 = vmatpush1.bf16.msra.mxu0 %v3513
          %3543 = vmatprep.subr.bf16.mxu0 0
          %3544 = vmatpush1.bf16.msra.mxu0 %v3512
          %3545 = vmatprep.subr.bf16.mxu0 0
          %3546 = vmatpush1.bf16.msra.mxu0 %v3511
          %3547 = vmatprep.subr.bf16.mxu0 0
          %3548 = vmatpush1.bf16.msra.mxu0 %v3510
          %3549 = vmatprep.subr.bf16.mxu0 0
          %3550 = vmatpush1.bf16.msra.mxu0 %v3509
          %3551 = vmatprep.subr.bf16.mxu0 0
          %3552 = vmatpush1.bf16.msra.mxu0 %v3508
          %3553 = vmatprep.subr.bf16.mxu0 0
          %3554 = vmatpush1.bf16.msra.mxu0 %v3507
          %3555 = vmatprep.subr.bf16.mxu0 0
          %3556 = vmatpush2.bf16.msra.mxu0 %v3522
          %3557 = vmatprep.subr.bf16.mxu0 0
          %3558 = vmatpush2.bf16.msra.mxu0 %v3521
          %3559 = vmatprep.subr.bf16.mxu0 0
          %3560 = vmatpush2.bf16.msra.mxu0 %v3520
          %3561 = vmatprep.subr.bf16.mxu0 0
          %3562 = vmatpush2.bf16.msra.mxu0 %v3519
          %3563 = vmatprep.subr.bf16.mxu0 0
          %3564 = vmatpush2.bf16.msra.mxu0 %v3518
          %3565 = vmatprep.subr.bf16.mxu0 0
          %3566 = vmatpush2.bf16.msra.mxu0 %v3517
          %3567 = vmatprep.subr.bf16.mxu0 0
          %3568 = vmatpush2.bf16.msra.mxu0 %v3516
          %3569 = vmatprep.subr.bf16.mxu0 0
          %3570 = vmatpush2.bf16.msra.mxu0 %v3515
          %3571 = vmatprep.mubr.bf16.mxu0 %v3410
          %3572 = vmatmul.mubr.bf16.gmra.mxu0 %v3409
          %v3573 = vpop.f32.mrf.mxu0
          %v3574 = vadd.f32 0.0, %v3573
          %v3575 = vpop.f32.mrf.mxu0
          %v3576 = vpop.f32.mrf.mxu0
          %v3577 = vadd.f32 0.0, %v3576
          %v3578 = vpop.f32.mrf.mxu0
          %3579 = vdwg.mxu0
          %vm3580 = vcmask 1048064
          %3581 = vrot.lane.b32.xlu0 %v3574, 64
          %v3582 = vpop.permute.xlu0 %3581
          %v3583 = vsel %vm3580, %v3582, %v3574
          %3584 = vrot.lane.b32.xlu0 %v3577, 64
          %v3585 = vpop.permute.xlu0 %3584
          %v3586 = vsel %vm3580, %v3585, %v3577
          %3587 = vrot.lane.b32.xlu0 %v3583, 64
          %v3588 = vpop.permute.xlu0 %3587
          %3589 = vrot.lane.b32.xlu0 %v3586, 64
          %v3590 = vpop.permute.xlu0 %3589
          %v3591 = vsel %vm3580, %v3588, %v3574
          %v3592 = vsel %vm3580, %v3590, %v3577
          %v3593 = vsel %vm801, 1, 0
          %vm3594 = vcmp.eq.s32.totalorder %v3593, 1
          %3597 = vrot.lane.b32.xlu0 %v3591, 73
          %v3598 = vpop.permute.xlu0 %3597
          %3599 = vrot.lane.b32.xlu0 %v3592, 73
          %v3600 = vpop.permute.xlu0 %3599
          %v3603 = vsel %vm3594, %v3598, 0.0
          %v3604 = vsel %vm3594, %v3600, 0.0
          %v3605 = vsel %vm800, 1, 0
          %vm3606 = vcmp.eq.s32.totalorder %v3605, 1
          %3607 = vrot.lane.b32.xlu0 %v3591, 72
          %v3608 = vpop.permute.xlu0 %3607
          %3609 = vrot.lane.b32.xlu0 %v3592, 72
          %v3610 = vpop.permute.xlu0 %3609
          %v3613 = vsel %vm3606, %v3608, 0.0
          %v3614 = vsel %vm3606, %v3610, 0.0
          %v3615 = vsel %vm803, 1, 0
          %vm3616 = vcmp.eq.s32.totalorder %v3615, 1
          %3617 = vrot.lane.b32.xlu0 %v3591, 71
          %v3618 = vpop.permute.xlu0 %3617
          %3619 = vrot.lane.b32.xlu0 %v3592, 71
          %v3620 = vpop.permute.xlu0 %3619
          %v3623 = vsel %vm3616, %v3618, 0.0
          %v3624 = vsel %vm3616, %v3620, 0.0
          %v3625 = vsel %vm799, 1, 0
          %vm3626 = vcmp.eq.s32.totalorder %v3625, 1
          %3627 = vrot.lane.b32.xlu0 %v3591, 65
          %v3628 = vpop.permute.xlu0 %3627
          %3629 = vrot.lane.b32.xlu0 %v3592, 65
          %v3630 = vpop.permute.xlu0 %3629
          %v3633 = vsel %vm3626, %v3628, 0.0
          %v3634 = vsel %vm3626, %v3630, 0.0
          %v3635 = vsel %vm802, 1, 0
          %vm3636 = vcmp.eq.s32.totalorder %v3635, 1
          %3637 = vrot.lane.b32.xlu0 %v3591, 127
          %v3638 = vpop.permute.xlu0 %3637
          %3639 = vrot.lane.b32.xlu0 %v3592, 127
          %v3640 = vpop.permute.xlu0 %3639
          %v3643 = vsel %vm3636, %v3638, 0.0
          %v3644 = vsel %vm3636, %v3640, 0.0
          %v3645 = vsel %vm805, 1, 0
          %vm3646 = vcmp.eq.s32.totalorder %v3645, 1
          %3647 = vrot.lane.b32.xlu0 %v3591, 121
          %v3648 = vpop.permute.xlu0 %3647
          %3649 = vrot.lane.b32.xlu0 %v3592, 121
          %v3650 = vpop.permute.xlu0 %3649
          %v3653 = vsel %vm3646, %v3648, 0.0
          %v3654 = vsel %vm3646, %v3650, 0.0
          %v3655 = vsel %vm804, 1, 0
          %vm3656 = vcmp.eq.s32.totalorder %v3655, 1
          %3657 = vrot.lane.b32.xlu0 %v3591, 120
          %v3658 = vpop.permute.xlu0 %3657
          %3659 = vrot.lane.b32.xlu0 %v3592, 120
          %v3660 = vpop.permute.xlu0 %3659
          %v3663 = vsel %vm3656, %v3658, 0.0
          %v3664 = vsel %vm3656, %v3660, 0.0
          %v3665 = vsel %vm806, 1, 0
          %vm3666 = vcmp.eq.s32.totalorder %v3665, 1
          %3667 = vrot.lane.b32.xlu0 %v3591, 119
          %v3668 = vpop.permute.xlu0 %3667
          %3669 = vrot.lane.b32.xlu0 %v3592, 119
          %v3670 = vpop.permute.xlu0 %3669
          %v3673 = vsel %vm3666, %v3668, 0.0
          %v3674 = vsel %vm3666, %v3670, 0.0
          %v3675 = vpack.c.bf16 %v3604, %v3603
          %v3676 = vpack.c.bf16 %v3614, %v3613
          %v3677 = vpack.c.bf16 %v3624, %v3623
          %v3678 = vpack.c.bf16 %v3634, %v3633
          %v3679 = vpack.c.bf16 %v3577, %v3574
          %v3680 = vpack.c.bf16 %v3644, %v3643
          %v3681 = vpack.c.bf16 %v3654, %v3653
          %v3682 = vpack.c.bf16 %v3664, %v3663
          %v3683 = vpack.c.bf16 %v3674, %v3673
          %v3684 = vld [vmem:[%s11] sm:$0xff]
          %v3685 = vld [vmem:[%s11 + $0x8] sm:$0xff]
          %v3686 = vld [vmem:[%s12] sm:$0xff]
          %v3687 = vld [vmem:[%s12 + $0x8] sm:$0xff]
          %3689 = vset.pattern.permute.xlu0 0
          %3690 = vperm.xlu0 %3689, %v3686
          %v3691 = vpop.permute.xlu0 %3690
          %3694 = vset.pattern.permute.xlu0 0
          %3695 = vperm.xlu0 %3694, %v3687
          %v3696 = vpop.permute.xlu0 %3695
          %v3700 = vunpack.c.l.b16 %v3684
          %v3701 = vunpack.c.h.b16 %v3684
          %v3702 = vunpack.c.l.b16 %v3685
          %v3703 = vunpack.c.h.b16 %v3685
          %v3704 = vpack.c.b16 %v3702, %v3700
          %v3705 = vpack.c.b16 %v3703, %v3701
          %v3708 = vsel %vm3326, %v3705, 0
          %3710 = vmatprep.subr.bf16.mxu0 0
          %3711 = vmatpush1.bf16.msra.mxu0 %v3682
          %3712 = vmatprep.subr.bf16.mxu0 0
          %3713 = vmatpush1.bf16.msra.mxu0 %v3681
          %3714 = vmatprep.subr.bf16.mxu0 0
          %3715 = vmatpush1.bf16.msra.mxu0 %v3680
          %3716 = vmatprep.subr.bf16.mxu0 0
          %3717 = vmatpush1.bf16.msra.mxu0 %v3679
          %3718 = vmatprep.subr.bf16.mxu0 0
          %3719 = vmatpush1.bf16.msra.mxu0 %v3678
          %3720 = vmatprep.subr.bf16.mxu0 0
          %3721 = vmatpush1.bf16.msra.mxu0 %v3677
          %3722 = vmatprep.subr.bf16.mxu0 0
          %3723 = vmatpush1.bf16.msra.mxu0 %v3676
          %3724 = vmatprep.subr.bf16.mxu0 0
          %3725 = vmatpush1.bf16.msra.mxu0 %v3675
          %3726 = vmatprep.subr.bf16.mxu0 0
          %3727 = vmatpush2.bf16.msra.mxu0 0
          %3728 = vmatprep.subr.bf16.mxu0 0
          %3729 = vmatpush2.bf16.msra.mxu0 0
          %3730 = vmatprep.subr.bf16.mxu0 0
          %3731 = vmatpush2.bf16.msra.mxu0 0
          %3732 = vmatprep.subr.bf16.mxu0 0
          %3733 = vmatpush2.bf16.msra.mxu0 0
          %3734 = vmatprep.subr.bf16.mxu0 0
          %3735 = vmatpush2.bf16.msra.mxu0 0
          %3736 = vmatprep.subr.bf16.mxu0 0
          %3737 = vmatpush2.bf16.msra.mxu0 0
          %3738 = vmatprep.subr.bf16.mxu0 0
          %3739 = vmatpush2.bf16.msra.mxu0 0
          %3740 = vmatprep.subr.bf16.mxu0 0
          %3741 = vmatpush2.bf16.msra.mxu0 %v3683
          %3742 = vmatprep.mubr.bf16.mxu0 %v3708
          %3743 = vmatmul.mubr.bf16.gmra.mxu0 %v3704
          %v3744 = vpop.f32.mrf.mxu0
          %v3745 = vadd.f32 %v3691, %v3744
          %v3746 = vpop.f32.mrf.mxu0
          %v3747 = vpop.f32.mrf.mxu0
          %v3748 = vadd.f32 %v3696, %v3747
          %v3749 = vpop.f32.mrf.mxu0
          %3750 = vdwg.mxu0
          %v3751 = vmax.f32 %v3745, 0.0
          %v3752 = vmax.f32 %v3748, 0.0
          %3753 = vrot.lane.b32.xlu0 %v3751, 64
          %v3754 = vpop.permute.xlu0 %3753
          %v3755 = vsel %vm3580, %v3754, %v3751
          %3756 = vrot.lane.b32.xlu0 %v3752, 64
          %v3757 = vpop.permute.xlu0 %3756
          %v3758 = vsel %vm3580, %v3757, %v3752
          %3759 = vrot.lane.b32.xlu0 %v3755, 64
          %v3760 = vpop.permute.xlu0 %3759
          %3761 = vrot.lane.b32.xlu0 %v3758, 64
          %v3762 = vpop.permute.xlu0 %3761
          %v3763 = vsel %vm3580, %v3760, %v3751
          %v3764 = vsel %vm3580, %v3762, %v3752
          %3767 = vrot.lane.b32.xlu0 %v3763, 73
          %v3768 = vpop.permute.xlu0 %3767
          %3769 = vrot.lane.b32.xlu0 %v3764, 73
          %v3770 = vpop.permute.xlu0 %3769
          %v3773 = vsel %vm3594, %v3768, 0.0
          %v3774 = vsel %vm3594, %v3770, 0.0
          %3775 = vrot.lane.b32.xlu0 %v3763, 72
          %v3776 = vpop.permute.xlu0 %3775
          %3777 = vrot.lane.b32.xlu0 %v3764, 72
          %v3778 = vpop.permute.xlu0 %3777
          %v3781 = vsel %vm3606, %v3776, 0.0
          %v3782 = vsel %vm3606, %v3778, 0.0
          %3783 = vrot.lane.b32.xlu0 %v3763, 71
          %v3784 = vpop.permute.xlu0 %3783
          %3785 = vrot.lane.b32.xlu0 %v3764, 71
          %v3786 = vpop.permute.xlu0 %3785
          %v3789 = vsel %vm3616, %v3784, 0.0
          %v3790 = vsel %vm3616, %v3786, 0.0
          %3791 = vrot.lane.b32.xlu0 %v3763, 65
          %v3792 = vpop.permute.xlu0 %3791
          %3793 = vrot.lane.b32.xlu0 %v3764, 65
          %v3794 = vpop.permute.xlu0 %3793
          %v3797 = vsel %vm3626, %v3792, 0.0
          %v3798 = vsel %vm3626, %v3794, 0.0
          %3799 = vrot.lane.b32.xlu0 %v3763, 127
          %v3800 = vpop.permute.xlu0 %3799
          %3801 = vrot.lane.b32.xlu0 %v3764, 127
          %v3802 = vpop.permute.xlu0 %3801
          %v3805 = vsel %vm3636, %v3800, 0.0
          %v3806 = vsel %vm3636, %v3802, 0.0
          %3807 = vrot.lane.b32.xlu0 %v3763, 121
          %v3808 = vpop.permute.xlu0 %3807
          %3809 = vrot.lane.b32.xlu0 %v3764, 121
          %v3810 = vpop.permute.xlu0 %3809
          %v3813 = vsel %vm3646, %v3808, 0.0
          %v3814 = vsel %vm3646, %v3810, 0.0
          %3815 = vrot.lane.b32.xlu0 %v3763, 120
          %v3816 = vpop.permute.xlu0 %3815
          %3817 = vrot.lane.b32.xlu0 %v3764, 120
          %v3818 = vpop.permute.xlu0 %3817
          %v3821 = vsel %vm3656, %v3816, 0.0
          %v3822 = vsel %vm3656, %v3818, 0.0
          %3823 = vrot.lane.b32.xlu0 %v3763, 119
          %v3824 = vpop.permute.xlu0 %3823
          %3825 = vrot.lane.b32.xlu0 %v3764, 119
          %v3826 = vpop.permute.xlu0 %3825
          %v3829 = vsel %vm3666, %v3824, 0.0
          %v3830 = vsel %vm3666, %v3826, 0.0
          %v3831 = vpack.c.bf16 %v3774, %v3773
          %v3832 = vpack.c.bf16 %v3782, %v3781
          %v3833 = vpack.c.bf16 %v3790, %v3789
          %v3834 = vpack.c.bf16 %v3798, %v3797
          %v3835 = vpack.c.bf16 %v3752, %v3751
          %v3836 = vpack.c.bf16 %v3806, %v3805
          %v3837 = vpack.c.bf16 %v3814, %v3813
          %v3838 = vpack.c.bf16 %v3822, %v3821
          %v3839 = vpack.c.bf16 %v3830, %v3829
          %v3840 = vld [vmem:[%s13] sm:$0xff]
          %v3841 = vld [vmem:[%s13 + $0x8] sm:$0xff]
          %v3842 = vld [vmem:[%s14] sm:$0xff]
          %v3843 = vld [vmem:[%s14 + $0x8] sm:$0xff]
          %3845 = vset.pattern.permute.xlu0 0
          %3846 = vperm.xlu0 %3845, %v3842
          %v3847 = vpop.permute.xlu0 %3846
          %3850 = vset.pattern.permute.xlu0 0
          %3851 = vperm.xlu0 %3850, %v3843
          %v3852 = vpop.permute.xlu0 %3851
          %v3856 = vunpack.c.l.b16 %v3840
          %v3857 = vunpack.c.h.b16 %v3840
          %v3858 = vunpack.c.l.b16 %v3841
          %v3859 = vunpack.c.h.b16 %v3841
          %v3860 = vpack.c.b16 %v3858, %v3856
          %v3861 = vpack.c.b16 %v3859, %v3857
          %v3864 = vsel %vm3326, %v3861, 0
          %3866 = vmatprep.subr.bf16.mxu0 0
          %3867 = vmatpush1.bf16.msra.mxu0 %v3838
          %3868 = vmatprep.subr.bf16.mxu0 0
          %3869 = vmatpush1.bf16.msra.mxu0 %v3837
          %3870 = vmatprep.subr.bf16.mxu0 0
          %3871 = vmatpush1.bf16.msra.mxu0 %v3836
          %3872 = vmatprep.subr.bf16.mxu0 0
          %3873 = vmatpush1.bf16.msra.mxu0 %v3835
          %3874 = vmatprep.subr.bf16.mxu0 0
          %3875 = vmatpush1.bf16.msra.mxu0 %v3834
          %3876 = vmatprep.subr.bf16.mxu0 0
          %3877 = vmatpush1.bf16.msra.mxu0 %v3833
          %3878 = vmatprep.subr.bf16.mxu0 0
          %3879 = vmatpush1.bf16.msra.mxu0 %v3832
          %3880 = vmatprep.subr.bf16.mxu0 0
          %3881 = vmatpush1.bf16.msra.mxu0 %v3831
          %3882 = vmatprep.subr.bf16.mxu0 0
          %3883 = vmatpush2.bf16.msra.mxu0 0
          %3884 = vmatprep.subr.bf16.mxu0 0
          %3885 = vmatpush2.bf16.msra.mxu0 0
          %3886 = vmatprep.subr.bf16.mxu0 0
          %3887 = vmatpush2.bf16.msra.mxu0 0
          %3888 = vmatprep.subr.bf16.mxu0 0
          %3889 = vmatpush2.bf16.msra.mxu0 0
          %3890 = vmatprep.subr.bf16.mxu0 0
          %3891 = vmatpush2.bf16.msra.mxu0 0
          %3892 = vmatprep.subr.bf16.mxu0 0
          %3893 = vmatpush2.bf16.msra.mxu0 0
          %3894 = vmatprep.subr.bf16.mxu0 0
          %3895 = vmatpush2.bf16.msra.mxu0 0
          %3896 = vmatprep.subr.bf16.mxu0 0
          %3897 = vmatpush2.bf16.msra.mxu0 %v3839
          %3898 = vmatprep.mubr.bf16.mxu0 %v3864
          %3899 = vmatmul.mubr.bf16.gmra.mxu0 %v3860
          %v3900 = vpop.f32.mrf.mxu0
          %v3901 = vadd.f32 %v3847, %v3900
          %v3902 = vpop.f32.mrf.mxu0
          %v3903 = vpop.f32.mrf.mxu0
          %v3904 = vadd.f32 %v3852, %v3903
          %v3905 = vpop.f32.mrf.mxu0
          %3906 = vdwg.mxu0
          %v3907 = vmax.f32 %v3901, 0.0
          %v3908 = vmax.f32 %v3904, 0.0
          %3909 = vrot.lane.b32.xlu0 %v3907, 64
          %v3910 = vpop.permute.xlu0 %3909
          %v3911 = vsel %vm3580, %v3910, %v3907
          %3912 = vrot.lane.b32.xlu0 %v3908, 64
          %v3913 = vpop.permute.xlu0 %3912
          %v3914 = vsel %vm3580, %v3913, %v3908
          %3915 = vrot.lane.b32.xlu0 %v3911, 64
          %v3916 = vpop.permute.xlu0 %3915
          %3917 = vrot.lane.b32.xlu0 %v3914, 64
          %v3918 = vpop.permute.xlu0 %3917
          %v3919 = vsel %vm3580, %v3916, %v3907
          %v3920 = vsel %vm3580, %v3918, %v3908
          %3923 = vrot.lane.b32.xlu0 %v3919, 127
          %v3924 = vpop.permute.xlu0 %3923
          %3925 = vrot.lane.b32.xlu0 %v3920, 127
          %v3926 = vpop.permute.xlu0 %3925
          %v3929 = vmax.f32 %v3907, %v3924
          %v3930 = vmax.f32 %v3908, %v3926
          %3931 = vrot.lane.b32.xlu0 %v3929, 64
          %v3932 = vpop.permute.xlu0 %3931
          %v3933 = vsel %vm3580, %v3932, %v3929
          %3934 = vrot.lane.b32.xlu0 %v3930, 64
          %v3935 = vpop.permute.xlu0 %3934
          %v3936 = vsel %vm3580, %v3935, %v3930
          %3937 = vrot.lane.b32.xlu0 %v3933, 64
          %v3938 = vpop.permute.xlu0 %3937
          %3939 = vrot.lane.b32.xlu0 %v3936, 64
          %v3940 = vpop.permute.xlu0 %3939
          %v3941 = vsel %vm3580, %v3938, %v3929
          %v3942 = vsel %vm3580, %v3940, %v3930
          %3945 = vrot.lane.b32.xlu0 %v3941, 120
          %v3946 = vpop.permute.xlu0 %3945
          %3947 = vrot.lane.b32.xlu0 %v3942, 120
          %v3948 = vpop.permute.xlu0 %3947
          %v3951 = vmax.f32 %v3929, %v3946
          %v3952 = vmax.f32 %v3930, %v3948
          %v3953 = vpack.c.bf16 %v3952, %v3951
          %v3954 = vld [vmem:[%s15] sm:$0xf]
          %v3955 = vld [vmem:[%s15 + $0x4] sm:$0xf]
          %v3956 = vld [vmem:[%s15 + $0x8] sm:$0xf]
          %v3957 = vld [vmem:[%s15 + $0xc] sm:$0xf]
          %v3958 = vld [vmem:[%s15 + $0x10] sm:$0xf]
          %v3959 = vld [vmem:[%s15 + $0x14] sm:$0xf]
          %v3960 = vld [vmem:[%s15 + $0x18] sm:$0xf]
          %v3961 = vld [vmem:[%s15 + $0x1c] sm:$0xf]
          %v3970 = vunpack.c.l.b16 %v3954
          %v3971 = vunpack.c.l.b16 %v3955
          %v3972 = vunpack.c.l.b16 %v3956
          %v3973 = vunpack.c.l.b16 %v3957
          %v3974 = vunpack.c.l.b16 %v3958
          %v3975 = vunpack.c.l.b16 %v3959
          %v3976 = vunpack.c.l.b16 %v3960
          %v3977 = vunpack.c.l.b16 %v3961
          %v3978 = vpack.c.b16 %v3971, %v3970
          %v3979 = vpack.c.b16 %v3973, %v3972
          %v3980 = vpack.c.b16 %v3975, %v3974
          %v3981 = vpack.c.b16 %v3977, %v3976
          %vm3986 = vcmask 523264
          %v3988 = vsel %vm3986, %v3953, 0
          %3990 = vmatprep.subr.bf16.mxu0 0
          %3991 = vmatpush1.bf16.msra.mxu0 0
          %3992 = vmatprep.subr.bf16.mxu0 0
          %3993 = vmatpush1.bf16.msra.mxu0 0
          %3994 = vmatprep.subr.bf16.mxu0 0
          %3995 = vmatpush1.bf16.msra.mxu0 0
          %3996 = vmatprep.subr.bf16.mxu0 0
          %3997 = vmatpush1.bf16.msra.mxu0 0
          %3998 = vmatprep.subr.bf16.mxu0 0
          %3999 = vmatpush1.bf16.msra.mxu0 %v3981
          %4000 = vmatprep.subr.bf16.mxu0 0
          %4001 = vmatpush1.bf16.msra.mxu0 %v3980
          %4002 = vmatprep.subr.bf16.mxu0 0
          %4003 = vmatpush1.bf16.msra.mxu0 %v3979
          %4004 = vmatprep.subr.bf16.mxu0 0
          %4005 = vmatpush1.bf16.msra.mxu0 %v3978
          %4006 = vmatprep.subr.bf16.mxu0 0
          %4007 = vmatpush2.bf16.msra.mxu0 0
          %4008 = vmatprep.subr.bf16.mxu0 0
          %4009 = vmatpush2.bf16.msra.mxu0 0
          %4010 = vmatprep.subr.bf16.mxu0 0
          %4011 = vmatpush2.bf16.msra.mxu0 0
          %4012 = vmatprep.subr.bf16.mxu0 0
          %4013 = vmatpush2.bf16.msra.mxu0 0
          %4014 = vmatprep.subr.bf16.mxu0 0
          %4015 = vmatpush2.bf16.msra.mxu0 0
          %4016 = vmatprep.subr.bf16.mxu0 0
          %4017 = vmatpush2.bf16.msra.mxu0 0
          %4018 = vmatprep.subr.bf16.mxu0 0
          %4019 = vmatpush2.bf16.msra.mxu0 0
          %4020 = vmatprep.subr.bf16.mxu0 0
          %4021 = vmatpush2.bf16.msra.mxu0 0
          %4022 = vmatprep.mubr.bf16.mxu0 0
          %4023 = vmatmul.mubr.bf16.gmra.mxu0 %v3988
          %v4024 = vpop.f32.mrf.mxu0
          %v4025 = vadd.f32 0.0, %v4024
          %v4026 = vpop.f32.mrf.mxu0
          %v4027 = vpop.f32.mrf.mxu0
          %v4028 = vadd.f32 0.0, %v4027
          %v4029 = vpop.f32.mrf.mxu0
          %4030 = vdwg.mxu0
          %s4031 = smul.u32 %s808, 16
          %s4032 = scalar_lea.vmem [#allocation2], %s4031
          %4033 = vst.msk [vmem:[%s4032] sm:$0xff] %vm3326, %v4025
          %4034 = vst.msk [vmem:[%s4032 + $0x8] sm:$0xff] %vm3326, %v4028
        $region113: #{cifar10_cnn_forward.1} parent=107 // loop_footer
          %s812 = sadd.s32 1, %s808
        $region114: #{cifar10_cnn_forward.1} parent=107 // loop_footer_branch
          %807 = sbr.rel target = $region110
        $region115: #{cifar10_cnn_forward.1} parent=107 // loop_exit
          _
        %v4035 = vld [vmem:[#allocation2] sm:$0x1]
        %v4036 = vld [vmem:[#allocation2 + $0x10] sm:$0x1]
        %v4037 = vld [vmem:[#allocation2 + $0x20] sm:$0x1]
        %v4038 = vld [vmem:[#allocation2 + $0x30] sm:$0x1]
        %v4039 = vpack.c.bf16 %v4035, %v4035
        %v4040 = vpack.c.bf16 %v4036, %v4036
        %v4041 = vpack.c.bf16 %v4037, %v4037
        %v4042 = vpack.c.bf16 %v4038, %v4038
        %v4043 = vld [vmem:[%s16] sm:$0xff]
        %v4044 = vld [vmem:[%s16 + $0x8] sm:$0xff]
        %v4045 = vld [vmem:[%s16 + $0x10] sm:$0xff]
        %v4046 = vld [vmem:[%s16 + $0x18] sm:$0xff]
        %v4047 = vld [vmem:[#allocation2 + $0x1] sm:$0x1]
        %v4048 = vld [vmem:[#allocation2 + $0x11] sm:$0x1]
        %v4049 = vld [vmem:[#allocation2 + $0x21] sm:$0x1]
        %v4050 = vld [vmem:[#allocation2 + $0x31] sm:$0x1]
        %v4051 = vpack.c.bf16 %v4047, %v4047
        %v4052 = vpack.c.bf16 %v4048, %v4048
        %v4053 = vpack.c.bf16 %v4049, %v4049
        %v4054 = vpack.c.bf16 %v4050, %v4050
        %s4055 = scalar_lea.vmem %s16, 32
        %v4056 = vld [vmem:[%s4055] sm:$0xff]
        %v4057 = vld [vmem:[%s4055 + $0x8] sm:$0xff]
        %v4058 = vld [vmem:[%s4055 + $0x10] sm:$0xff]
        %v4059 = vld [vmem:[%s4055 + $0x18] sm:$0xff]
        %v4064 = vunpack.c.l.b16 %v4051
        %v4065 = vunpack.c.l.b16 %v4052
        %v4066 = vunpack.c.l.b16 %v4053
        %v4067 = vunpack.c.l.b16 %v4054
        %v4068 = vrot.slane %v4065, 7
        %vm4069 = vcmask 1041409
        %v4070 = vsel %vm4069, %v4068, %v4064
        %v4071 = vrot.slane %v4066, 6
        %vm4072 = vcmask 1042434
        %v4073 = vsel %vm4072, %v4071, %v4070
        %v4074 = vrot.slane %v4067, 5
        %vm4075 = vcmask 1043459
        %v4076 = vsel %vm4075, %v4074, %v4073
        %v4077 = vpack.c.b16 %v4076, %v4076
        %v4082 = vunpack.c.l.b16 %v4056
        %v4083 = vunpack.c.h.b16 %v4056
        %v4084 = vunpack.c.l.b16 %v4057
        %v4085 = vunpack.c.h.b16 %v4057
        %v4086 = vunpack.c.l.b16 %v4058
        %v4087 = vunpack.c.h.b16 %v4058
        %v4088 = vunpack.c.l.b16 %v4059
        %v4089 = vunpack.c.h.b16 %v4059
        %v4090 = vpack.c.b16 %v4086, %v4082
        %v4091 = vpack.c.b16 %v4087, %v4083
        %v4092 = vpack.c.b16 %v4088, %v4084
        %v4093 = vpack.c.b16 %v4089, %v4085
        %vm4098 = vcmask 130048
        %v4100 = vsel %vm4098, %v4077, 0
        %4102 = vmatprep.subr.bf16.mxu0 0
        %4103 = vmatpush1.bf16.msra.mxu0 0
        %4104 = vmatprep.subr.bf16.mxu0 0
        %4105 = vmatpush1.bf16.msra.mxu0 0
        %4106 = vmatprep.subr.bf16.mxu0 0
        %4107 = vmatpush1.bf16.msra.mxu0 0
        %4108 = vmatprep.subr.bf16.mxu0 0
        %4109 = vmatpush1.bf16.msra.mxu0 0
        %4110 = vmatprep.subr.bf16.mxu0 0
        %4111 = vmatpush1.bf16.msra.mxu0 0
        %4112 = vmatprep.subr.bf16.mxu0 0
        %4113 = vmatpush1.bf16.msra.mxu0 0
        %4114 = vmatprep.subr.bf16.mxu0 0
        %4115 = vmatpush1.bf16.msra.mxu0 0
        %4116 = vmatprep.subr.bf16.mxu0 %v4091
        %4117 = vmatpush1.bf16.msra.mxu0 %v4090
        %4118 = vmatprep.subr.bf16.mxu0 0
        %4119 = vmatpush2.bf16.msra.mxu0 0
        %4120 = vmatprep.subr.bf16.mxu0 0
        %4121 = vmatpush2.bf16.msra.mxu0 0
        %4122 = vmatprep.subr.bf16.mxu0 0
        %4123 = vmatpush2.bf16.msra.mxu0 0
        %4124 = vmatprep.subr.bf16.mxu0 0
        %4125 = vmatpush2.bf16.msra.mxu0 0
        %4126 = vmatprep.subr.bf16.mxu0 0
        %4127 = vmatpush2.bf16.msra.mxu0 0
        %4128 = vmatprep.subr.bf16.mxu0 0
        %4129 = vmatpush2.bf16.msra.mxu0 0
        %4130 = vmatprep.subr.bf16.mxu0 0
        %4131 = vmatpush2.bf16.msra.mxu0 0
        %4132 = vmatprep.subr.bf16.mxu0 0
        %4133 = vmatpush2.bf16.msra.mxu0 0
        %4134 = vmatprep.mubr.bf16.mxu0 0
        %4135 = vmatmul.mubr.bf16.gmra.mxu0 %v4100
        %v4136 = vpop.f32.mrf.mxu0
        %v4137 = vadd.f32 0.0, %v4136
        %v4138 = vpop.f32.mrf.mxu0
        %v4139 = vadd.f32 0.0, %v4138
        %v4140 = vpop.f32.mrf.mxu0
        %v4141 = vpop.f32.mrf.mxu0
        %4142 = vdwg.mxu0
        %4143 = vmatprep.subr.bf16.mxu0 0
        %4144 = vmatpush1.bf16.msra.mxu0 0
        %4145 = vmatprep.subr.bf16.mxu0 0
        %4146 = vmatpush1.bf16.msra.mxu0 0
        %4147 = vmatprep.subr.bf16.mxu0 0
        %4148 = vmatpush1.bf16.msra.mxu0 0
        %4149 = vmatprep.subr.bf16.mxu0 0
        %4150 = vmatpush1.bf16.msra.mxu0 0
        %4151 = vmatprep.subr.bf16.mxu0 0
        %4152 = vmatpush1.bf16.msra.mxu0 0
        %4153 = vmatprep.subr.bf16.mxu0 0
        %4154 = vmatpush1.bf16.msra.mxu0 0
        %4155 = vmatprep.subr.bf16.mxu0 0
        %4156 = vmatpush1.bf16.msra.mxu0 0
        %4157 = vmatprep.subr.bf16.mxu0 %v4093
        %4158 = vmatpush1.bf16.msra.mxu0 %v4092
        %4159 = vmatprep.subr.bf16.mxu0 0
        %4160 = vmatpush2.bf16.msra.mxu0 0
        %4161 = vmatprep.subr.bf16.mxu0 0
        %4162 = vmatpush2.bf16.msra.mxu0 0
        %4163 = vmatprep.subr.bf16.mxu0 0
        %4164 = vmatpush2.bf16.msra.mxu0 0
        %4165 = vmatprep.subr.bf16.mxu0 0
        %4166 = vmatpush2.bf16.msra.mxu0 0
        %4167 = vmatprep.subr.bf16.mxu0 0
        %4168 = vmatpush2.bf16.msra.mxu0 0
        %4169 = vmatprep.subr.bf16.mxu0 0
        %4170 = vmatpush2.bf16.msra.mxu0 0
        %4171 = vmatprep.subr.bf16.mxu0 0
        %4172 = vmatpush2.bf16.msra.mxu0 0
        %4173 = vmatprep.subr.bf16.mxu0 0
        %4174 = vmatpush2.bf16.msra.mxu0 0
        %4175 = vmatprep.mubr.bf16.mxu0 0
        %4176 = vmatmul.mubr.bf16.gmra.mxu0 %v4100
        %v4177 = vpop.f32.mrf.mxu0
        %v4178 = vadd.f32 0.0, %v4177
        %v4179 = vpop.f32.mrf.mxu0
        %v4180 = vadd.f32 0.0, %v4179
        %v4181 = vpop.f32.mrf.mxu0
        %v4182 = vpop.f32.mrf.mxu0
        %4183 = vdwg.mxu0
        %v4188 = vunpack.c.l.b16 %v4039
        %v4189 = vunpack.c.l.b16 %v4040
        %v4190 = vunpack.c.l.b16 %v4041
        %v4191 = vunpack.c.l.b16 %v4042
        %v4192 = vrot.slane %v4189, 7
        %v4193 = vsel %vm4069, %v4192, %v4188
        %v4194 = vrot.slane %v4190, 6
        %v4195 = vsel %vm4072, %v4194, %v4193
        %v4196 = vrot.slane %v4191, 5
        %v4197 = vsel %vm4075, %v4196, %v4195
        %v4198 = vpack.c.b16 %v4197, %v4197
        %v4203 = vunpack.c.l.b16 %v4043
        %v4204 = vunpack.c.h.b16 %v4043
        %v4205 = vunpack.c.l.b16 %v4044
        %v4206 = vunpack.c.h.b16 %v4044
        %v4207 = vunpack.c.l.b16 %v4045
        %v4208 = vunpack.c.h.b16 %v4045
        %v4209 = vunpack.c.l.b16 %v4046
        %v4210 = vunpack.c.h.b16 %v4046
        %v4211 = vpack.c.b16 %v4207, %v4203
        %v4212 = vpack.c.b16 %v4208, %v4204
        %v4213 = vpack.c.b16 %v4209, %v4205
        %v4214 = vpack.c.b16 %v4210, %v4206
        %v4220 = vsel %vm4098, %v4198, 0
        %4222 = vmatprep.subr.bf16.mxu0 0
        %4223 = vmatpush1.bf16.msra.mxu0 0
        %4224 = vmatprep.subr.bf16.mxu0 0
        %4225 = vmatpush1.bf16.msra.mxu0 0
        %4226 = vmatprep.subr.bf16.mxu0 0
        %4227 = vmatpush1.bf16.msra.mxu0 0
        %4228 = vmatprep.subr.bf16.mxu0 0
        %4229 = vmatpush1.bf16.msra.mxu0 0
        %4230 = vmatprep.subr.bf16.mxu0 0
        %4231 = vmatpush1.bf16.msra.mxu0 0
        %4232 = vmatprep.subr.bf16.mxu0 0
        %4233 = vmatpush1.bf16.msra.mxu0 0
        %4234 = vmatprep.subr.bf16.mxu0 0
        %4235 = vmatpush1.bf16.msra.mxu0 0
        %4236 = vmatprep.subr.bf16.mxu0 %v4212
        %4237 = vmatpush1.bf16.msra.mxu0 %v4211
        %4238 = vmatprep.subr.bf16.mxu0 0
        %4239 = vmatpush2.bf16.msra.mxu0 0
        %4240 = vmatprep.subr.bf16.mxu0 0
        %4241 = vmatpush2.bf16.msra.mxu0 0
        %4242 = vmatprep.subr.bf16.mxu0 0
        %4243 = vmatpush2.bf16.msra.mxu0 0
        %4244 = vmatprep.subr.bf16.mxu0 0
        %4245 = vmatpush2.bf16.msra.mxu0 0
        %4246 = vmatprep.subr.bf16.mxu0 0
        %4247 = vmatpush2.bf16.msra.mxu0 0
        %4248 = vmatprep.subr.bf16.mxu0 0
        %4249 = vmatpush2.bf16.msra.mxu0 0
        %4250 = vmatprep.subr.bf16.mxu0 0
        %4251 = vmatpush2.bf16.msra.mxu0 0
        %4252 = vmatprep.subr.bf16.mxu0 0
        %4253 = vmatpush2.bf16.msra.mxu0 0
        %4254 = vmatprep.mubr.bf16.mxu0 0
        %4255 = vmatmul.mubr.bf16.gmra.mxu0 %v4220
        %v4256 = vpop.f32.mrf.mxu0
        %v4257 = vadd.f32 %v4137, %v4256
        %v4258 = vpop.f32.mrf.mxu0
        %v4259 = vadd.f32 %v4139, %v4258
        %v4260 = vpop.f32.mrf.mxu0
        %v4261 = vpop.f32.mrf.mxu0
        %4262 = vdwg.mxu0
        %4263 = vmatprep.subr.bf16.mxu0 0
        %4264 = vmatpush1.bf16.msra.mxu0 0
        %4265 = vmatprep.subr.bf16.mxu0 0
        %4266 = vmatpush1.bf16.msra.mxu0 0
        %4267 = vmatprep.subr.bf16.mxu0 0
        %4268 = vmatpush1.bf16.msra.mxu0 0
        %4269 = vmatprep.subr.bf16.mxu0 0
        %4270 = vmatpush1.bf16.msra.mxu0 0
        %4271 = vmatprep.subr.bf16.mxu0 0
        %4272 = vmatpush1.bf16.msra.mxu0 0
        %4273 = vmatprep.subr.bf16.mxu0 0
        %4274 = vmatpush1.bf16.msra.mxu0 0
        %4275 = vmatprep.subr.bf16.mxu0 0
        %4276 = vmatpush1.bf16.msra.mxu0 0
        %4277 = vmatprep.subr.bf16.mxu0 %v4214
        %4278 = vmatpush1.bf16.msra.mxu0 %v4213
        %4279 = vmatprep.subr.bf16.mxu0 0
        %4280 = vmatpush2.bf16.msra.mxu0 0
        %4281 = vmatprep.subr.bf16.mxu0 0
        %4282 = vmatpush2.bf16.msra.mxu0 0
        %4283 = vmatprep.subr.bf16.mxu0 0
        %4284 = vmatpush2.bf16.msra.mxu0 0
        %4285 = vmatprep.subr.bf16.mxu0 0
        %4286 = vmatpush2.bf16.msra.mxu0 0
        %4287 = vmatprep.subr.bf16.mxu0 0
        %4288 = vmatpush2.bf16.msra.mxu0 0
        %4289 = vmatprep.subr.bf16.mxu0 0
        %4290 = vmatpush2.bf16.msra.mxu0 0
        %4291 = vmatprep.subr.bf16.mxu0 0
        %4292 = vmatpush2.bf16.msra.mxu0 0
        %4293 = vmatprep.subr.bf16.mxu0 0
        %4294 = vmatpush2.bf16.msra.mxu0 0
        %4295 = vmatprep.mubr.bf16.mxu0 0
        %4296 = vmatmul.mubr.bf16.gmra.mxu0 %v4220
        %v4297 = vpop.f32.mrf.mxu0
        %v4298 = vadd.f32 %v4178, %v4297
        %v4299 = vpop.f32.mrf.mxu0
        %v4300 = vadd.f32 %v4180, %v4299
        %v4301 = vpop.f32.mrf.mxu0
        %v4302 = vpop.f32.mrf.mxu0
        %4303 = vdwg.mxu0
        %v4304 = vld [vmem:[#allocation2 + $0x2] sm:$0x1]
        %v4305 = vld [vmem:[#allocation2 + $0x12] sm:$0x1]
        %v4306 = vld [vmem:[#allocation2 + $0x22] sm:$0x1]
        %v4307 = vld [vmem:[#allocation2 + $0x32] sm:$0x1]
        %v4308 = vpack.c.bf16 %v4304, %v4304
        %v4309 = vpack.c.bf16 %v4305, %v4305
        %v4310 = vpack.c.bf16 %v4306, %v4306
        %v4311 = vpack.c.bf16 %v4307, %v4307
        %s4312 = scalar_lea.vmem %s16, 64
        %v4313 = vld [vmem:[%s4312] sm:$0xff]
        %v4314 = vld [vmem:[%s4312 + $0x8] sm:$0xff]
        %v4315 = vld [vmem:[%s4312 + $0x10] sm:$0xff]
        %v4316 = vld [vmem:[%s4312 + $0x18] sm:$0xff]
        %v4321 = vunpack.c.l.b16 %v4308
        %v4322 = vunpack.c.l.b16 %v4309
        %v4323 = vunpack.c.l.b16 %v4310
        %v4324 = vunpack.c.l.b16 %v4311
        %v4325 = vrot.slane %v4322, 7
        %v4326 = vsel %vm4069, %v4325, %v4321
        %v4327 = vrot.slane %v4323, 6
        %v4328 = vsel %vm4072, %v4327, %v4326
        %v4329 = vrot.slane %v4324, 5
        %v4330 = vsel %vm4075, %v4329, %v4328
        %v4331 = vpack.c.b16 %v4330, %v4330
        %v4336 = vunpack.c.l.b16 %v4313
        %v4337 = vunpack.c.h.b16 %v4313
        %v4338 = vunpack.c.l.b16 %v4314
        %v4339 = vunpack.c.h.b16 %v4314
        %v4340 = vunpack.c.l.b16 %v4315
        %v4341 = vunpack.c.h.b16 %v4315
        %v4342 = vunpack.c.l.b16 %v4316
        %v4343 = vunpack.c.h.b16 %v4316
        %v4344 = vpack.c.b16 %v4340, %v4336
        %v4345 = vpack.c.b16 %v4341, %v4337
        %v4346 = vpack.c.b16 %v4342, %v4338
        %v4347 = vpack.c.b16 %v4343, %v4339
        %v4353 = vsel %vm4098, %v4331, 0
        %4355 = vmatprep.subr.bf16.mxu0 0
        %4356 = vmatpush1.bf16.msra.mxu0 0
        %4357 = vmatprep.subr.bf16.mxu0 0
        %4358 = vmatpush1.bf16.msra.mxu0 0
        %4359 = vmatprep.subr.bf16.mxu0 0
        %4360 = vmatpush1.bf16.msra.mxu0 0
        %4361 = vmatprep.subr.bf16.mxu0 0
        %4362 = vmatpush1.bf16.msra.mxu0 0
        %4363 = vmatprep.subr.bf16.mxu0 0
        %4364 = vmatpush1.bf16.msra.mxu0 0
        %4365 = vmatprep.subr.bf16.mxu0 0
        %4366 = vmatpush1.bf16.msra.mxu0 0
        %4367 = vmatprep.subr.bf16.mxu0 0
        %4368 = vmatpush1.bf16.msra.mxu0 0
        %4369 = vmatprep.subr.bf16.mxu0 %v4345
        %4370 = vmatpush1.bf16.msra.mxu0 %v4344
        %4371 = vmatprep.subr.bf16.mxu0 0
        %4372 = vmatpush2.bf16.msra.mxu0 0
        %4373 = vmatprep.subr.bf16.mxu0 0
        %4374 = vmatpush2.bf16.msra.mxu0 0
        %4375 = vmatprep.subr.bf16.mxu0 0
        %4376 = vmatpush2.bf16.msra.mxu0 0
        %4377 = vmatprep.subr.bf16.mxu0 0
        %4378 = vmatpush2.bf16.msra.mxu0 0
        %4379 = vmatprep.subr.bf16.mxu0 0
        %4380 = vmatpush2.bf16.msra.mxu0 0
        %4381 = vmatprep.subr.bf16.mxu0 0
        %4382 = vmatpush2.bf16.msra.mxu0 0
        %4383 = vmatprep.subr.bf16.mxu0 0
        %4384 = vmatpush2.bf16.msra.mxu0 0
        %4385 = vmatprep.subr.bf16.mxu0 0
        %4386 = vmatpush2.bf16.msra.mxu0 0
        %4387 = vmatprep.mubr.bf16.mxu0 0
        %4388 = vmatmul.mubr.bf16.gmra.mxu0 %v4353
        %v4389 = vpop.f32.mrf.mxu0
        %v4390 = vadd.f32 0.0, %v4389
        %v4391 = vpop.f32.mrf.mxu0
        %v4392 = vadd.f32 0.0, %v4391
        %v4393 = vpop.f32.mrf.mxu0
        %v4394 = vpop.f32.mrf.mxu0
        %4395 = vdwg.mxu0
        %4396 = vmatprep.subr.bf16.mxu0 0
        %4397 = vmatpush1.bf16.msra.mxu0 0
        %4398 = vmatprep.subr.bf16.mxu0 0
        %4399 = vmatpush1.bf16.msra.mxu0 0
        %4400 = vmatprep.subr.bf16.mxu0 0
        %4401 = vmatpush1.bf16.msra.mxu0 0
        %4402 = vmatprep.subr.bf16.mxu0 0
        %4403 = vmatpush1.bf16.msra.mxu0 0
        %4404 = vmatprep.subr.bf16.mxu0 0
        %4405 = vmatpush1.bf16.msra.mxu0 0
        %4406 = vmatprep.subr.bf16.mxu0 0
        %4407 = vmatpush1.bf16.msra.mxu0 0
        %4408 = vmatprep.subr.bf16.mxu0 0
        %4409 = vmatpush1.bf16.msra.mxu0 0
        %4410 = vmatprep.subr.bf16.mxu0 %v4347
        %4411 = vmatpush1.bf16.msra.mxu0 %v4346
        %4412 = vmatprep.subr.bf16.mxu0 0
        %4413 = vmatpush2.bf16.msra.mxu0 0
        %4414 = vmatprep.subr.bf16.mxu0 0
        %4415 = vmatpush2.bf16.msra.mxu0 0
        %4416 = vmatprep.subr.bf16.mxu0 0
        %4417 = vmatpush2.bf16.msra.mxu0 0
        %4418 = vmatprep.subr.bf16.mxu0 0
        %4419 = vmatpush2.bf16.msra.mxu0 0
        %4420 = vmatprep.subr.bf16.mxu0 0
        %4421 = vmatpush2.bf16.msra.mxu0 0
        %4422 = vmatprep.subr.bf16.mxu0 0
        %4423 = vmatpush2.bf16.msra.mxu0 0
        %4424 = vmatprep.subr.bf16.mxu0 0
        %4425 = vmatpush2.bf16.msra.mxu0 0
        %4426 = vmatprep.subr.bf16.mxu0 0
        %4427 = vmatpush2.bf16.msra.mxu0 0
        %4428 = vmatprep.mubr.bf16.mxu0 0
        %4429 = vmatmul.mubr.bf16.gmra.mxu0 %v4353
        %v4430 = vpop.f32.mrf.mxu0
        %v4431 = vadd.f32 0.0, %v4430
        %v4432 = vpop.f32.mrf.mxu0
        %v4433 = vadd.f32 0.0, %v4432
        %v4434 = vpop.f32.mrf.mxu0
        %v4435 = vpop.f32.mrf.mxu0
        %4436 = vdwg.mxu0
        %v4437 = vadd.f32 %v4257, %v4390
        %v4438 = vadd.f32 %v4259, %v4392
        %v4439 = vadd.f32 %v4298, %v4431
        %v4440 = vadd.f32 %v4300, %v4433
        %v4441 = vld [vmem:[#allocation2 + $0x3] sm:$0x1]
        %v4442 = vld [vmem:[#allocation2 + $0x13] sm:$0x1]
        %v4443 = vld [vmem:[#allocation2 + $0x23] sm:$0x1]
        %v4444 = vld [vmem:[#allocation2 + $0x33] sm:$0x1]
        %v4445 = vpack.c.bf16 %v4441, %v4441
        %v4446 = vpack.c.bf16 %v4442, %v4442
        %v4447 = vpack.c.bf16 %v4443, %v4443
        %v4448 = vpack.c.bf16 %v4444, %v4444
        %s4449 = scalar_lea.vmem %s16, 96
        %v4450 = vld [vmem:[%s4449] sm:$0xff]
        %v4451 = vld [vmem:[%s4449 + $0x8] sm:$0xff]
        %v4452 = vld [vmem:[%s4449 + $0x10] sm:$0xff]
        %v4453 = vld [vmem:[%s4449 + $0x18] sm:$0xff]
        %v4458 = vunpack.c.l.b16 %v4445
        %v4459 = vunpack.c.l.b16 %v4446
        %v4460 = vunpack.c.l.b16 %v4447
        %v4461 = vunpack.c.l.b16 %v4448
        %v4462 = vrot.slane %v4459, 7
        %v4463 = vsel %vm4069, %v4462, %v4458
        %v4464 = vrot.slane %v4460, 6
        %v4465 = vsel %vm4072, %v4464, %v4463
        %v4466 = vrot.slane %v4461, 5
        %v4467 = vsel %vm4075, %v4466, %v4465
        %v4468 = vpack.c.b16 %v4467, %v4467
        %v4473 = vunpack.c.l.b16 %v4450
        %v4474 = vunpack.c.h.b16 %v4450
        %v4475 = vunpack.c.l.b16 %v4451
        %v4476 = vunpack.c.h.b16 %v4451
        %v4477 = vunpack.c.l.b16 %v4452
        %v4478 = vunpack.c.h.b16 %v4452
        %v4479 = vunpack.c.l.b16 %v4453
        %v4480 = vunpack.c.h.b16 %v4453
        %v4481 = vpack.c.b16 %v4477, %v4473
        %v4482 = vpack.c.b16 %v4478, %v4474
        %v4483 = vpack.c.b16 %v4479, %v4475
        %v4484 = vpack.c.b16 %v4480, %v4476
        %v4490 = vsel %vm4098, %v4468, 0
        %4492 = vmatprep.subr.bf16.mxu0 0
        %4493 = vmatpush1.bf16.msra.mxu0 0
        %4494 = vmatprep.subr.bf16.mxu0 0
        %4495 = vmatpush1.bf16.msra.mxu0 0
        %4496 = vmatprep.subr.bf16.mxu0 0
        %4497 = vmatpush1.bf16.msra.mxu0 0
        %4498 = vmatprep.subr.bf16.mxu0 0
        %4499 = vmatpush1.bf16.msra.mxu0 0
        %4500 = vmatprep.subr.bf16.mxu0 0
        %4501 = vmatpush1.bf16.msra.mxu0 0
        %4502 = vmatprep.subr.bf16.mxu0 0
        %4503 = vmatpush1.bf16.msra.mxu0 0
        %4504 = vmatprep.subr.bf16.mxu0 0
        %4505 = vmatpush1.bf16.msra.mxu0 0
        %4506 = vmatprep.subr.bf16.mxu0 %v4482
        %4507 = vmatpush1.bf16.msra.mxu0 %v4481
        %4508 = vmatprep.subr.bf16.mxu0 0
        %4509 = vmatpush2.bf16.msra.mxu0 0
        %4510 = vmatprep.subr.bf16.mxu0 0
        %4511 = vmatpush2.bf16.msra.mxu0 0
        %4512 = vmatprep.subr.bf16.mxu0 0
        %4513 = vmatpush2.bf16.msra.mxu0 0
        %4514 = vmatprep.subr.bf16.mxu0 0
        %4515 = vmatpush2.bf16.msra.mxu0 0
        %4516 = vmatprep.subr.bf16.mxu0 0
        %4517 = vmatpush2.bf16.msra.mxu0 0
        %4518 = vmatprep.subr.bf16.mxu0 0
        %4519 = vmatpush2.bf16.msra.mxu0 0
        %4520 = vmatprep.subr.bf16.mxu0 0
        %4521 = vmatpush2.bf16.msra.mxu0 0
        %4522 = vmatprep.subr.bf16.mxu0 0
        %4523 = vmatpush2.bf16.msra.mxu0 0
        %4524 = vmatprep.mubr.bf16.mxu0 0
        %4525 = vmatmul.mubr.bf16.gmra.mxu0 %v4490
        %v4526 = vpop.f32.mrf.mxu0
        %v4527 = vadd.f32 0.0, %v4526
        %v4528 = vpop.f32.mrf.mxu0
        %v4529 = vadd.f32 0.0, %v4528
        %v4530 = vpop.f32.mrf.mxu0
        %v4531 = vpop.f32.mrf.mxu0
        %4532 = vdwg.mxu0
        %4533 = vmatprep.subr.bf16.mxu0 0
        %4534 = vmatpush1.bf16.msra.mxu0 0
        %4535 = vmatprep.subr.bf16.mxu0 0
        %4536 = vmatpush1.bf16.msra.mxu0 0
        %4537 = vmatprep.subr.bf16.mxu0 0
        %4538 = vmatpush1.bf16.msra.mxu0 0
        %4539 = vmatprep.subr.bf16.mxu0 0
        %4540 = vmatpush1.bf16.msra.mxu0 0
        %4541 = vmatprep.subr.bf16.mxu0 0
        %4542 = vmatpush1.bf16.msra.mxu0 0
        %4543 = vmatprep.subr.bf16.mxu0 0
        %4544 = vmatpush1.bf16.msra.mxu0 0
        %4545 = vmatprep.subr.bf16.mxu0 0
        %4546 = vmatpush1.bf16.msra.mxu0 0
        %4547 = vmatprep.subr.bf16.mxu0 %v4484
        %4548 = vmatpush1.bf16.msra.mxu0 %v4483
        %4549 = vmatprep.subr.bf16.mxu0 0
        %4550 = vmatpush2.bf16.msra.mxu0 0
        %4551 = vmatprep.subr.bf16.mxu0 0
        %4552 = vmatpush2.bf16.msra.mxu0 0
        %4553 = vmatprep.subr.bf16.mxu0 0
        %4554 = vmatpush2.bf16.msra.mxu0 0
        %4555 = vmatprep.subr.bf16.mxu0 0
        %4556 = vmatpush2.bf16.msra.mxu0 0
        %4557 = vmatprep.subr.bf16.mxu0 0
        %4558 = vmatpush2.bf16.msra.mxu0 0
        %4559 = vmatprep.subr.bf16.mxu0 0
        %4560 = vmatpush2.bf16.msra.mxu0 0
        %4561 = vmatprep.subr.bf16.mxu0 0
        %4562 = vmatpush2.bf16.msra.mxu0 0
        %4563 = vmatprep.subr.bf16.mxu0 0
        %4564 = vmatpush2.bf16.msra.mxu0 0
        %4565 = vmatprep.mubr.bf16.mxu0 0
        %4566 = vmatmul.mubr.bf16.gmra.mxu0 %v4490
        %v4567 = vpop.f32.mrf.mxu0
        %v4568 = vadd.f32 0.0, %v4567
        %v4569 = vpop.f32.mrf.mxu0
        %v4570 = vadd.f32 0.0, %v4569
        %v4571 = vpop.f32.mrf.mxu0
        %v4572 = vpop.f32.mrf.mxu0
        %4573 = vdwg.mxu0
        %v4574 = vadd.f32 %v4437, %v4527
        %v4575 = vadd.f32 %v4438, %v4529
        %v4576 = vadd.f32 %v4439, %v4568
        %v4577 = vadd.f32 %v4440, %v4570
        %v4578 = vld [vmem:[#allocation2 + $0x4] sm:$0x1]
        %v4579 = vld [vmem:[#allocation2 + $0x14] sm:$0x1]
        %v4580 = vld [vmem:[#allocation2 + $0x24] sm:$0x1]
        %v4581 = vld [vmem:[#allocation2 + $0x34] sm:$0x1]
        %v4582 = vpack.c.bf16 %v4578, %v4578
        %v4583 = vpack.c.bf16 %v4579, %v4579
        %v4584 = vpack.c.bf16 %v4580, %v4580
        %v4585 = vpack.c.bf16 %v4581, %v4581
        %s4586 = scalar_lea.vmem %s16, 128
        %v4587 = vld [vmem:[%s4586] sm:$0xff]
        %v4588 = vld [vmem:[%s4586 + $0x8] sm:$0xff]
        %v4589 = vld [vmem:[%s4586 + $0x10] sm:$0xff]
        %v4590 = vld [vmem:[%s4586 + $0x18] sm:$0xff]
        %v4595 = vunpack.c.l.b16 %v4582
        %v4596 = vunpack.c.l.b16 %v4583
        %v4597 = vunpack.c.l.b16 %v4584
        %v4598 = vunpack.c.l.b16 %v4585
        %v4599 = vrot.slane %v4596, 7
        %v4600 = vsel %vm4069, %v4599, %v4595
        %v4601 = vrot.slane %v4597, 6
        %v4602 = vsel %vm4072, %v4601, %v4600
        %v4603 = vrot.slane %v4598, 5
        %v4604 = vsel %vm4075, %v4603, %v4602
        %v4605 = vpack.c.b16 %v4604, %v4604
        %v4610 = vunpack.c.l.b16 %v4587
        %v4611 = vunpack.c.h.b16 %v4587
        %v4612 = vunpack.c.l.b16 %v4588
        %v4613 = vunpack.c.h.b16 %v4588
        %v4614 = vunpack.c.l.b16 %v4589
        %v4615 = vunpack.c.h.b16 %v4589
        %v4616 = vunpack.c.l.b16 %v4590
        %v4617 = vunpack.c.h.b16 %v4590
        %v4618 = vpack.c.b16 %v4614, %v4610
        %v4619 = vpack.c.b16 %v4615, %v4611
        %v4620 = vpack.c.b16 %v4616, %v4612
        %v4621 = vpack.c.b16 %v4617, %v4613
        %v4627 = vsel %vm4098, %v4605, 0
        %4629 = vmatprep.subr.bf16.mxu0 0
        %4630 = vmatpush1.bf16.msra.mxu0 0
        %4631 = vmatprep.subr.bf16.mxu0 0
        %4632 = vmatpush1.bf16.msra.mxu0 0
        %4633 = vmatprep.subr.bf16.mxu0 0
        %4634 = vmatpush1.bf16.msra.mxu0 0
        %4635 = vmatprep.subr.bf16.mxu0 0
        %4636 = vmatpush1.bf16.msra.mxu0 0
        %4637 = vmatprep.subr.bf16.mxu0 0
        %4638 = vmatpush1.bf16.msra.mxu0 0
        %4639 = vmatprep.subr.bf16.mxu0 0
        %4640 = vmatpush1.bf16.msra.mxu0 0
        %4641 = vmatprep.subr.bf16.mxu0 0
        %4642 = vmatpush1.bf16.msra.mxu0 0
        %4643 = vmatprep.subr.bf16.mxu0 %v4619
        %4644 = vmatpush1.bf16.msra.mxu0 %v4618
        %4645 = vmatprep.subr.bf16.mxu0 0
        %4646 = vmatpush2.bf16.msra.mxu0 0
        %4647 = vmatprep.subr.bf16.mxu0 0
        %4648 = vmatpush2.bf16.msra.mxu0 0
        %4649 = vmatprep.subr.bf16.mxu0 0
        %4650 = vmatpush2.bf16.msra.mxu0 0
        %4651 = vmatprep.subr.bf16.mxu0 0
        %4652 = vmatpush2.bf16.msra.mxu0 0
        %4653 = vmatprep.subr.bf16.mxu0 0
        %4654 = vmatpush2.bf16.msra.mxu0 0
        %4655 = vmatprep.subr.bf16.mxu0 0
        %4656 = vmatpush2.bf16.msra.mxu0 0
        %4657 = vmatprep.subr.bf16.mxu0 0
        %4658 = vmatpush2.bf16.msra.mxu0 0
        %4659 = vmatprep.subr.bf16.mxu0 0
        %4660 = vmatpush2.bf16.msra.mxu0 0
        %4661 = vmatprep.mubr.bf16.mxu0 0
        %4662 = vmatmul.mubr.bf16.gmra.mxu0 %v4627
        %v4663 = vpop.f32.mrf.mxu0
        %v4664 = vadd.f32 0.0, %v4663
        %v4665 = vpop.f32.mrf.mxu0
        %v4666 = vadd.f32 0.0, %v4665
        %v4667 = vpop.f32.mrf.mxu0
        %v4668 = vpop.f32.mrf.mxu0
        %4669 = vdwg.mxu0
        %4670 = vmatprep.subr.bf16.mxu0 0
        %4671 = vmatpush1.bf16.msra.mxu0 0
        %4672 = vmatprep.subr.bf16.mxu0 0
        %4673 = vmatpush1.bf16.msra.mxu0 0
        %4674 = vmatprep.subr.bf16.mxu0 0
        %4675 = vmatpush1.bf16.msra.mxu0 0
        %4676 = vmatprep.subr.bf16.mxu0 0
        %4677 = vmatpush1.bf16.msra.mxu0 0
        %4678 = vmatprep.subr.bf16.mxu0 0
        %4679 = vmatpush1.bf16.msra.mxu0 0
        %4680 = vmatprep.subr.bf16.mxu0 0
        %4681 = vmatpush1.bf16.msra.mxu0 0
        %4682 = vmatprep.subr.bf16.mxu0 0
        %4683 = vmatpush1.bf16.msra.mxu0 0
        %4684 = vmatprep.subr.bf16.mxu0 %v4621
        %4685 = vmatpush1.bf16.msra.mxu0 %v4620
        %4686 = vmatprep.subr.bf16.mxu0 0
        %4687 = vmatpush2.bf16.msra.mxu0 0
        %4688 = vmatprep.subr.bf16.mxu0 0
        %4689 = vmatpush2.bf16.msra.mxu0 0
        %4690 = vmatprep.subr.bf16.mxu0 0
        %4691 = vmatpush2.bf16.msra.mxu0 0
        %4692 = vmatprep.subr.bf16.mxu0 0
        %4693 = vmatpush2.bf16.msra.mxu0 0
        %4694 = vmatprep.subr.bf16.mxu0 0
        %4695 = vmatpush2.bf16.msra.mxu0 0
        %4696 = vmatprep.subr.bf16.mxu0 0
        %4697 = vmatpush2.bf16.msra.mxu0 0
        %4698 = vmatprep.subr.bf16.mxu0 0
        %4699 = vmatpush2.bf16.msra.mxu0 0
        %4700 = vmatprep.subr.bf16.mxu0 0
        %4701 = vmatpush2.bf16.msra.mxu0 0
        %4702 = vmatprep.mubr.bf16.mxu0 0
        %4703 = vmatmul.mubr.bf16.gmra.mxu0 %v4627
        %v4704 = vpop.f32.mrf.mxu0
        %v4705 = vadd.f32 0.0, %v4704
        %v4706 = vpop.f32.mrf.mxu0
        %v4707 = vadd.f32 0.0, %v4706
        %v4708 = vpop.f32.mrf.mxu0
        %v4709 = vpop.f32.mrf.mxu0
        %4710 = vdwg.mxu0
        %v4711 = vadd.f32 %v4574, %v4664
        %v4712 = vadd.f32 %v4575, %v4666
        %v4713 = vadd.f32 %v4576, %v4705
        %v4714 = vadd.f32 %v4577, %v4707
        %v4715 = vld [vmem:[#allocation2 + $0x5] sm:$0x1]
        %v4716 = vld [vmem:[#allocation2 + $0x15] sm:$0x1]
        %v4717 = vld [vmem:[#allocation2 + $0x25] sm:$0x1]
        %v4718 = vld [vmem:[#allocation2 + $0x35] sm:$0x1]
        %v4719 = vpack.c.bf16 %v4715, %v4715
        %v4720 = vpack.c.bf16 %v4716, %v4716
        %v4721 = vpack.c.bf16 %v4717, %v4717
        %v4722 = vpack.c.bf16 %v4718, %v4718
        %s4723 = scalar_lea.vmem %s16, 160
        %v4724 = vld [vmem:[%s4723] sm:$0xff]
        %v4725 = vld [vmem:[%s4723 + $0x8] sm:$0xff]
        %v4726 = vld [vmem:[%s4723 + $0x10] sm:$0xff]
        %v4727 = vld [vmem:[%s4723 + $0x18] sm:$0xff]
        %v4732 = vunpack.c.l.b16 %v4719
        %v4733 = vunpack.c.l.b16 %v4720
        %v4734 = vunpack.c.l.b16 %v4721
        %v4735 = vunpack.c.l.b16 %v4722
        %v4736 = vrot.slane %v4733, 7
        %v4737 = vsel %vm4069, %v4736, %v4732
        %v4738 = vrot.slane %v4734, 6
        %v4739 = vsel %vm4072, %v4738, %v4737
        %v4740 = vrot.slane %v4735, 5
        %v4741 = vsel %vm4075, %v4740, %v4739
        %v4742 = vpack.c.b16 %v4741, %v4741
        %v4747 = vunpack.c.l.b16 %v4724
        %v4748 = vunpack.c.h.b16 %v4724
        %v4749 = vunpack.c.l.b16 %v4725
        %v4750 = vunpack.c.h.b16 %v4725
        %v4751 = vunpack.c.l.b16 %v4726
        %v4752 = vunpack.c.h.b16 %v4726
        %v4753 = vunpack.c.l.b16 %v4727
        %v4754 = vunpack.c.h.b16 %v4727
        %v4755 = vpack.c.b16 %v4751, %v4747
        %v4756 = vpack.c.b16 %v4752, %v4748
        %v4757 = vpack.c.b16 %v4753, %v4749
        %v4758 = vpack.c.b16 %v4754, %v4750
        %v4764 = vsel %vm4098, %v4742, 0
        %4766 = vmatprep.subr.bf16.mxu0 0
        %4767 = vmatpush1.bf16.msra.mxu0 0
        %4768 = vmatprep.subr.bf16.mxu0 0
        %4769 = vmatpush1.bf16.msra.mxu0 0
        %4770 = vmatprep.subr.bf16.mxu0 0
        %4771 = vmatpush1.bf16.msra.mxu0 0
        %4772 = vmatprep.subr.bf16.mxu0 0
        %4773 = vmatpush1.bf16.msra.mxu0 0
        %4774 = vmatprep.subr.bf16.mxu0 0
        %4775 = vmatpush1.bf16.msra.mxu0 0
        %4776 = vmatprep.subr.bf16.mxu0 0
        %4777 = vmatpush1.bf16.msra.mxu0 0
        %4778 = vmatprep.subr.bf16.mxu0 0
        %4779 = vmatpush1.bf16.msra.mxu0 0
        %4780 = vmatprep.subr.bf16.mxu0 %v4756
        %4781 = vmatpush1.bf16.msra.mxu0 %v4755
        %4782 = vmatprep.subr.bf16.mxu0 0
        %4783 = vmatpush2.bf16.msra.mxu0 0
        %4784 = vmatprep.subr.bf16.mxu0 0
        %4785 = vmatpush2.bf16.msra.mxu0 0
        %4786 = vmatprep.subr.bf16.mxu0 0
        %4787 = vmatpush2.bf16.msra.mxu0 0
        %4788 = vmatprep.subr.bf16.mxu0 0
        %4789 = vmatpush2.bf16.msra.mxu0 0
        %4790 = vmatprep.subr.bf16.mxu0 0
        %4791 = vmatpush2.bf16.msra.mxu0 0
        %4792 = vmatprep.subr.bf16.mxu0 0
        %4793 = vmatpush2.bf16.msra.mxu0 0
        %4794 = vmatprep.subr.bf16.mxu0 0
        %4795 = vmatpush2.bf16.msra.mxu0 0
        %4796 = vmatprep.subr.bf16.mxu0 0
        %4797 = vmatpush2.bf16.msra.mxu0 0
        %4798 = vmatprep.mubr.bf16.mxu0 0
        %4799 = vmatmul.mubr.bf16.gmra.mxu0 %v4764
        %v4800 = vpop.f32.mrf.mxu0
        %v4801 = vadd.f32 0.0, %v4800
        %v4802 = vpop.f32.mrf.mxu0
        %v4803 = vadd.f32 0.0, %v4802
        %v4804 = vpop.f32.mrf.mxu0
        %v4805 = vpop.f32.mrf.mxu0
        %4806 = vdwg.mxu0
        %4807 = vmatprep.subr.bf16.mxu0 0
        %4808 = vmatpush1.bf16.msra.mxu0 0
        %4809 = vmatprep.subr.bf16.mxu0 0
        %4810 = vmatpush1.bf16.msra.mxu0 0
        %4811 = vmatprep.subr.bf16.mxu0 0
        %4812 = vmatpush1.bf16.msra.mxu0 0
        %4813 = vmatprep.subr.bf16.mxu0 0
        %4814 = vmatpush1.bf16.msra.mxu0 0
        %4815 = vmatprep.subr.bf16.mxu0 0
        %4816 = vmatpush1.bf16.msra.mxu0 0
        %4817 = vmatprep.subr.bf16.mxu0 0
        %4818 = vmatpush1.bf16.msra.mxu0 0
        %4819 = vmatprep.subr.bf16.mxu0 0
        %4820 = vmatpush1.bf16.msra.mxu0 0
        %4821 = vmatprep.subr.bf16.mxu0 %v4758
        %4822 = vmatpush1.bf16.msra.mxu0 %v4757
        %4823 = vmatprep.subr.bf16.mxu0 0
        %4824 = vmatpush2.bf16.msra.mxu0 0
        %4825 = vmatprep.subr.bf16.mxu0 0
        %4826 = vmatpush2.bf16.msra.mxu0 0
        %4827 = vmatprep.subr.bf16.mxu0 0
        %4828 = vmatpush2.bf16.msra.mxu0 0
        %4829 = vmatprep.subr.bf16.mxu0 0
        %4830 = vmatpush2.bf16.msra.mxu0 0
        %4831 = vmatprep.subr.bf16.mxu0 0
        %4832 = vmatpush2.bf16.msra.mxu0 0
        %4833 = vmatprep.subr.bf16.mxu0 0
        %4834 = vmatpush2.bf16.msra.mxu0 0
        %4835 = vmatprep.subr.bf16.mxu0 0
        %4836 = vmatpush2.bf16.msra.mxu0 0
        %4837 = vmatprep.subr.bf16.mxu0 0
        %4838 = vmatpush2.bf16.msra.mxu0 0
        %4839 = vmatprep.mubr.bf16.mxu0 0
        %4840 = vmatmul.mubr.bf16.gmra.mxu0 %v4764
        %v4841 = vpop.f32.mrf.mxu0
        %v4842 = vadd.f32 0.0, %v4841
        %v4843 = vpop.f32.mrf.mxu0
        %v4844 = vadd.f32 0.0, %v4843
        %v4845 = vpop.f32.mrf.mxu0
        %v4846 = vpop.f32.mrf.mxu0
        %4847 = vdwg.mxu0
        %v4848 = vadd.f32 %v4711, %v4801
        %v4849 = vadd.f32 %v4712, %v4803
        %v4850 = vadd.f32 %v4713, %v4842
        %v4851 = vadd.f32 %v4714, %v4844
        %v4852 = vld [vmem:[#allocation2 + $0x6] sm:$0x1]
        %v4853 = vld [vmem:[#allocation2 + $0x16] sm:$0x1]
        %v4854 = vld [vmem:[#allocation2 + $0x26] sm:$0x1]
        %v4855 = vld [vmem:[#allocation2 + $0x36] sm:$0x1]
        %v4856 = vpack.c.bf16 %v4852, %v4852
        %v4857 = vpack.c.bf16 %v4853, %v4853
        %v4858 = vpack.c.bf16 %v4854, %v4854
        %v4859 = vpack.c.bf16 %v4855, %v4855
        %s4860 = scalar_lea.vmem %s16, 192
        %v4861 = vld [vmem:[%s4860] sm:$0xff]
        %v4862 = vld [vmem:[%s4860 + $0x8] sm:$0xff]
        %v4863 = vld [vmem:[%s4860 + $0x10] sm:$0xff]
        %v4864 = vld [vmem:[%s4860 + $0x18] sm:$0xff]
        %v4869 = vunpack.c.l.b16 %v4856
        %v4870 = vunpack.c.l.b16 %v4857
        %v4871 = vunpack.c.l.b16 %v4858
        %v4872 = vunpack.c.l.b16 %v4859
        %v4873 = vrot.slane %v4870, 7
        %v4874 = vsel %vm4069, %v4873, %v4869
        %v4875 = vrot.slane %v4871, 6
        %v4876 = vsel %vm4072, %v4875, %v4874
        %v4877 = vrot.slane %v4872, 5
        %v4878 = vsel %vm4075, %v4877, %v4876
        %v4879 = vpack.c.b16 %v4878, %v4878
        %v4884 = vunpack.c.l.b16 %v4861
        %v4885 = vunpack.c.h.b16 %v4861
        %v4886 = vunpack.c.l.b16 %v4862
        %v4887 = vunpack.c.h.b16 %v4862
        %v4888 = vunpack.c.l.b16 %v4863
        %v4889 = vunpack.c.h.b16 %v4863
        %v4890 = vunpack.c.l.b16 %v4864
        %v4891 = vunpack.c.h.b16 %v4864
        %v4892 = vpack.c.b16 %v4888, %v4884
        %v4893 = vpack.c.b16 %v4889, %v4885
        %v4894 = vpack.c.b16 %v4890, %v4886
        %v4895 = vpack.c.b16 %v4891, %v4887
        %v4901 = vsel %vm4098, %v4879, 0
        %4903 = vmatprep.subr.bf16.mxu0 0
        %4904 = vmatpush1.bf16.msra.mxu0 0
        %4905 = vmatprep.subr.bf16.mxu0 0
        %4906 = vmatpush1.bf16.msra.mxu0 0
        %4907 = vmatprep.subr.bf16.mxu0 0
        %4908 = vmatpush1.bf16.msra.mxu0 0
        %4909 = vmatprep.subr.bf16.mxu0 0
        %4910 = vmatpush1.bf16.msra.mxu0 0
        %4911 = vmatprep.subr.bf16.mxu0 0
        %4912 = vmatpush1.bf16.msra.mxu0 0
        %4913 = vmatprep.subr.bf16.mxu0 0
        %4914 = vmatpush1.bf16.msra.mxu0 0
        %4915 = vmatprep.subr.bf16.mxu0 0
        %4916 = vmatpush1.bf16.msra.mxu0 0
        %4917 = vmatprep.subr.bf16.mxu0 %v4893
        %4918 = vmatpush1.bf16.msra.mxu0 %v4892
        %4919 = vmatprep.subr.bf16.mxu0 0
        %4920 = vmatpush2.bf16.msra.mxu0 0
        %4921 = vmatprep.subr.bf16.mxu0 0
        %4922 = vmatpush2.bf16.msra.mxu0 0
        %4923 = vmatprep.subr.bf16.mxu0 0
        %4924 = vmatpush2.bf16.msra.mxu0 0
        %4925 = vmatprep.subr.bf16.mxu0 0
        %4926 = vmatpush2.bf16.msra.mxu0 0
        %4927 = vmatprep.subr.bf16.mxu0 0
        %4928 = vmatpush2.bf16.msra.mxu0 0
        %4929 = vmatprep.subr.bf16.mxu0 0
        %4930 = vmatpush2.bf16.msra.mxu0 0
        %4931 = vmatprep.subr.bf16.mxu0 0
        %4932 = vmatpush2.bf16.msra.mxu0 0
        %4933 = vmatprep.subr.bf16.mxu0 0
        %4934 = vmatpush2.bf16.msra.mxu0 0
        %4935 = vmatprep.mubr.bf16.mxu0 0
        %4936 = vmatmul.mubr.bf16.gmra.mxu0 %v4901
        %v4937 = vpop.f32.mrf.mxu0
        %v4938 = vadd.f32 0.0, %v4937
        %v4939 = vpop.f32.mrf.mxu0
        %v4940 = vadd.f32 0.0, %v4939
        %v4941 = vpop.f32.mrf.mxu0
        %v4942 = vpop.f32.mrf.mxu0
        %4943 = vdwg.mxu0
        %4944 = vmatprep.subr.bf16.mxu0 0
        %4945 = vmatpush1.bf16.msra.mxu0 0
        %4946 = vmatprep.subr.bf16.mxu0 0
        %4947 = vmatpush1.bf16.msra.mxu0 0
        %4948 = vmatprep.subr.bf16.mxu0 0
        %4949 = vmatpush1.bf16.msra.mxu0 0
        %4950 = vmatprep.subr.bf16.mxu0 0
        %4951 = vmatpush1.bf16.msra.mxu0 0
        %4952 = vmatprep.subr.bf16.mxu0 0
        %4953 = vmatpush1.bf16.msra.mxu0 0
        %4954 = vmatprep.subr.bf16.mxu0 0
        %4955 = vmatpush1.bf16.msra.mxu0 0
        %4956 = vmatprep.subr.bf16.mxu0 0
        %4957 = vmatpush1.bf16.msra.mxu0 0
        %4958 = vmatprep.subr.bf16.mxu0 %v4895
        %4959 = vmatpush1.bf16.msra.mxu0 %v4894
        %4960 = vmatprep.subr.bf16.mxu0 0
        %4961 = vmatpush2.bf16.msra.mxu0 0
        %4962 = vmatprep.subr.bf16.mxu0 0
        %4963 = vmatpush2.bf16.msra.mxu0 0
        %4964 = vmatprep.subr.bf16.mxu0 0
        %4965 = vmatpush2.bf16.msra.mxu0 0
        %4966 = vmatprep.subr.bf16.mxu0 0
        %4967 = vmatpush2.bf16.msra.mxu0 0
        %4968 = vmatprep.subr.bf16.mxu0 0
        %4969 = vmatpush2.bf16.msra.mxu0 0
        %4970 = vmatprep.subr.bf16.mxu0 0
        %4971 = vmatpush2.bf16.msra.mxu0 0
        %4972 = vmatprep.subr.bf16.mxu0 0
        %4973 = vmatpush2.bf16.msra.mxu0 0
        %4974 = vmatprep.subr.bf16.mxu0 0
        %4975 = vmatpush2.bf16.msra.mxu0 0
        %4976 = vmatprep.mubr.bf16.mxu0 0
        %4977 = vmatmul.mubr.bf16.gmra.mxu0 %v4901
        %v4978 = vpop.f32.mrf.mxu0
        %v4979 = vadd.f32 0.0, %v4978
        %v4980 = vpop.f32.mrf.mxu0
        %v4981 = vadd.f32 0.0, %v4980
        %v4982 = vpop.f32.mrf.mxu0
        %v4983 = vpop.f32.mrf.mxu0
        %4984 = vdwg.mxu0
        %v4985 = vadd.f32 %v4848, %v4938
        %v4986 = vadd.f32 %v4849, %v4940
        %v4987 = vadd.f32 %v4850, %v4979
        %v4988 = vadd.f32 %v4851, %v4981
        %v4989 = vld [vmem:[#allocation2 + $0x7] sm:$0x1]
        %v4990 = vld [vmem:[#allocation2 + $0x17] sm:$0x1]
        %v4991 = vld [vmem:[#allocation2 + $0x27] sm:$0x1]
        %v4992 = vld [vmem:[#allocation2 + $0x37] sm:$0x1]
        %v4993 = vpack.c.bf16 %v4989, %v4989
        %v4994 = vpack.c.bf16 %v4990, %v4990
        %v4995 = vpack.c.bf16 %v4991, %v4991
        %v4996 = vpack.c.bf16 %v4992, %v4992
        %s4997 = scalar_lea.vmem %s16, 224
        %v4998 = vld [vmem:[%s4997] sm:$0xff]
        %v4999 = vld [vmem:[%s4997 + $0x8] sm:$0xff]
        %v5000 = vld [vmem:[%s4997 + $0x10] sm:$0xff]
        %v5001 = vld [vmem:[%s4997 + $0x18] sm:$0xff]
        %v5006 = vunpack.c.l.b16 %v4993
        %v5007 = vunpack.c.l.b16 %v4994
        %v5008 = vunpack.c.l.b16 %v4995
        %v5009 = vunpack.c.l.b16 %v4996
        %v5010 = vrot.slane %v5007, 7
        %v5011 = vsel %vm4069, %v5010, %v5006
        %v5012 = vrot.slane %v5008, 6
        %v5013 = vsel %vm4072, %v5012, %v5011
        %v5014 = vrot.slane %v5009, 5
        %v5015 = vsel %vm4075, %v5014, %v5013
        %v5016 = vpack.c.b16 %v5015, %v5015
        %v5021 = vunpack.c.l.b16 %v4998
        %v5022 = vunpack.c.h.b16 %v4998
        %v5023 = vunpack.c.l.b16 %v4999
        %v5024 = vunpack.c.h.b16 %v4999
        %v5025 = vunpack.c.l.b16 %v5000
        %v5026 = vunpack.c.h.b16 %v5000
        %v5027 = vunpack.c.l.b16 %v5001
        %v5028 = vunpack.c.h.b16 %v5001
        %v5029 = vpack.c.b16 %v5025, %v5021
        %v5030 = vpack.c.b16 %v5026, %v5022
        %v5031 = vpack.c.b16 %v5027, %v5023
        %v5032 = vpack.c.b16 %v5028, %v5024
        %v5038 = vsel %vm4098, %v5016, 0
        %5040 = vmatprep.subr.bf16.mxu0 0
        %5041 = vmatpush1.bf16.msra.mxu0 0
        %5042 = vmatprep.subr.bf16.mxu0 0
        %5043 = vmatpush1.bf16.msra.mxu0 0
        %5044 = vmatprep.subr.bf16.mxu0 0
        %5045 = vmatpush1.bf16.msra.mxu0 0
        %5046 = vmatprep.subr.bf16.mxu0 0
        %5047 = vmatpush1.bf16.msra.mxu0 0
        %5048 = vmatprep.subr.bf16.mxu0 0
        %5049 = vmatpush1.bf16.msra.mxu0 0
        %5050 = vmatprep.subr.bf16.mxu0 0
        %5051 = vmatpush1.bf16.msra.mxu0 0
        %5052 = vmatprep.subr.bf16.mxu0 0
        %5053 = vmatpush1.bf16.msra.mxu0 0
        %5054 = vmatprep.subr.bf16.mxu0 %v5030
        %5055 = vmatpush1.bf16.msra.mxu0 %v5029
        %5056 = vmatprep.subr.bf16.mxu0 0
        %5057 = vmatpush2.bf16.msra.mxu0 0
        %5058 = vmatprep.subr.bf16.mxu0 0
        %5059 = vmatpush2.bf16.msra.mxu0 0
        %5060 = vmatprep.subr.bf16.mxu0 0
        %5061 = vmatpush2.bf16.msra.mxu0 0
        %5062 = vmatprep.subr.bf16.mxu0 0
        %5063 = vmatpush2.bf16.msra.mxu0 0
        %5064 = vmatprep.subr.bf16.mxu0 0
        %5065 = vmatpush2.bf16.msra.mxu0 0
        %5066 = vmatprep.subr.bf16.mxu0 0
        %5067 = vmatpush2.bf16.msra.mxu0 0
        %5068 = vmatprep.subr.bf16.mxu0 0
        %5069 = vmatpush2.bf16.msra.mxu0 0
        %5070 = vmatprep.subr.bf16.mxu0 0
        %5071 = vmatpush2.bf16.msra.mxu0 0
        %5072 = vmatprep.mubr.bf16.mxu0 0
        %5073 = vmatmul.mubr.bf16.gmra.mxu0 %v5038
        %v5074 = vpop.f32.mrf.mxu0
        %v5075 = vadd.f32 0.0, %v5074
        %v5076 = vpop.f32.mrf.mxu0
        %v5077 = vadd.f32 0.0, %v5076
        %v5078 = vpop.f32.mrf.mxu0
        %v5079 = vpop.f32.mrf.mxu0
        %5080 = vdwg.mxu0
        %5081 = vmatprep.subr.bf16.mxu0 0
        %5082 = vmatpush1.bf16.msra.mxu0 0
        %5083 = vmatprep.subr.bf16.mxu0 0
        %5084 = vmatpush1.bf16.msra.mxu0 0
        %5085 = vmatprep.subr.bf16.mxu0 0
        %5086 = vmatpush1.bf16.msra.mxu0 0
        %5087 = vmatprep.subr.bf16.mxu0 0
        %5088 = vmatpush1.bf16.msra.mxu0 0
        %5089 = vmatprep.subr.bf16.mxu0 0
        %5090 = vmatpush1.bf16.msra.mxu0 0
        %5091 = vmatprep.subr.bf16.mxu0 0
        %5092 = vmatpush1.bf16.msra.mxu0 0
        %5093 = vmatprep.subr.bf16.mxu0 0
        %5094 = vmatpush1.bf16.msra.mxu0 0
        %5095 = vmatprep.subr.bf16.mxu0 %v5032
        %5096 = vmatpush1.bf16.msra.mxu0 %v5031
        %5097 = vmatprep.subr.bf16.mxu0 0
        %5098 = vmatpush2.bf16.msra.mxu0 0
        %5099 = vmatprep.subr.bf16.mxu0 0
        %5100 = vmatpush2.bf16.msra.mxu0 0
        %5101 = vmatprep.subr.bf16.mxu0 0
        %5102 = vmatpush2.bf16.msra.mxu0 0
        %5103 = vmatprep.subr.bf16.mxu0 0
        %5104 = vmatpush2.bf16.msra.mxu0 0
        %5105 = vmatprep.subr.bf16.mxu0 0
        %5106 = vmatpush2.bf16.msra.mxu0 0
        %5107 = vmatprep.subr.bf16.mxu0 0
        %5108 = vmatpush2.bf16.msra.mxu0 0
        %5109 = vmatprep.subr.bf16.mxu0 0
        %5110 = vmatpush2.bf16.msra.mxu0 0
        %5111 = vmatprep.subr.bf16.mxu0 0
        %5112 = vmatpush2.bf16.msra.mxu0 0
        %5113 = vmatprep.mubr.bf16.mxu0 0
        %5114 = vmatmul.mubr.bf16.gmra.mxu0 %v5038
        %v5115 = vpop.f32.mrf.mxu0
        %v5116 = vadd.f32 0.0, %v5115
        %v5117 = vpop.f32.mrf.mxu0
        %v5118 = vadd.f32 0.0, %v5117
        %v5119 = vpop.f32.mrf.mxu0
        %v5120 = vpop.f32.mrf.mxu0
        %5121 = vdwg.mxu0
        %v5122 = vadd.f32 %v4985, %v5075
        %v5123 = vadd.f32 %v4986, %v5077
        %v5124 = vadd.f32 %v4987, %v5116
        %v5125 = vadd.f32 %v4988, %v5118
        %v5126 = vld [vmem:[#allocation2 + $0x8] sm:$0x1]
        %v5127 = vld [vmem:[#allocation2 + $0x18] sm:$0x1]
        %v5128 = vld [vmem:[#allocation2 + $0x28] sm:$0x1]
        %v5129 = vld [vmem:[#allocation2 + $0x38] sm:$0x1]
        %v5130 = vpack.c.bf16 %v5126, %v5126
        %v5131 = vpack.c.bf16 %v5127, %v5127
        %v5132 = vpack.c.bf16 %v5128, %v5128
        %v5133 = vpack.c.bf16 %v5129, %v5129
        %s5134 = scalar_lea.vmem %s16, 256
        %v5135 = vld [vmem:[%s5134] sm:$0xff]
        %v5136 = vld [vmem:[%s5134 + $0x8] sm:$0xff]
        %v5137 = vld [vmem:[%s5134 + $0x10] sm:$0xff]
        %v5138 = vld [vmem:[%s5134 + $0x18] sm:$0xff]
        %v5143 = vunpack.c.l.b16 %v5130
        %v5144 = vunpack.c.l.b16 %v5131
        %v5145 = vunpack.c.l.b16 %v5132
        %v5146 = vunpack.c.l.b16 %v5133
        %v5147 = vrot.slane %v5144, 7
        %v5148 = vsel %vm4069, %v5147, %v5143
        %v5149 = vrot.slane %v5145, 6
        %v5150 = vsel %vm4072, %v5149, %v5148
        %v5151 = vrot.slane %v5146, 5
        %v5152 = vsel %vm4075, %v5151, %v5150
        %v5153 = vpack.c.b16 %v5152, %v5152
        %v5158 = vunpack.c.l.b16 %v5135
        %v5159 = vunpack.c.h.b16 %v5135
        %v5160 = vunpack.c.l.b16 %v5136
        %v5161 = vunpack.c.h.b16 %v5136
        %v5162 = vunpack.c.l.b16 %v5137
        %v5163 = vunpack.c.h.b16 %v5137
        %v5164 = vunpack.c.l.b16 %v5138
        %v5165 = vunpack.c.h.b16 %v5138
        %v5166 = vpack.c.b16 %v5162, %v5158
        %v5167 = vpack.c.b16 %v5163, %v5159
        %v5168 = vpack.c.b16 %v5164, %v5160
        %v5169 = vpack.c.b16 %v5165, %v5161
        %v5175 = vsel %vm4098, %v5153, 0
        %5177 = vmatprep.subr.bf16.mxu0 0
        %5178 = vmatpush1.bf16.msra.mxu0 0
        %5179 = vmatprep.subr.bf16.mxu0 0
        %5180 = vmatpush1.bf16.msra.mxu0 0
        %5181 = vmatprep.subr.bf16.mxu0 0
        %5182 = vmatpush1.bf16.msra.mxu0 0
        %5183 = vmatprep.subr.bf16.mxu0 0
        %5184 = vmatpush1.bf16.msra.mxu0 0
        %5185 = vmatprep.subr.bf16.mxu0 0
        %5186 = vmatpush1.bf16.msra.mxu0 0
        %5187 = vmatprep.subr.bf16.mxu0 0
        %5188 = vmatpush1.bf16.msra.mxu0 0
        %5189 = vmatprep.subr.bf16.mxu0 0
        %5190 = vmatpush1.bf16.msra.mxu0 0
        %5191 = vmatprep.subr.bf16.mxu0 %v5167
        %5192 = vmatpush1.bf16.msra.mxu0 %v5166
        %5193 = vmatprep.subr.bf16.mxu0 0
        %5194 = vmatpush2.bf16.msra.mxu0 0
        %5195 = vmatprep.subr.bf16.mxu0 0
        %5196 = vmatpush2.bf16.msra.mxu0 0
        %5197 = vmatprep.subr.bf16.mxu0 0
        %5198 = vmatpush2.bf16.msra.mxu0 0
        %5199 = vmatprep.subr.bf16.mxu0 0
        %5200 = vmatpush2.bf16.msra.mxu0 0
        %5201 = vmatprep.subr.bf16.mxu0 0
        %5202 = vmatpush2.bf16.msra.mxu0 0
        %5203 = vmatprep.subr.bf16.mxu0 0
        %5204 = vmatpush2.bf16.msra.mxu0 0
        %5205 = vmatprep.subr.bf16.mxu0 0
        %5206 = vmatpush2.bf16.msra.mxu0 0
        %5207 = vmatprep.subr.bf16.mxu0 0
        %5208 = vmatpush2.bf16.msra.mxu0 0
        %5209 = vmatprep.mubr.bf16.mxu0 0
        %5210 = vmatmul.mubr.bf16.gmra.mxu0 %v5175
        %v5211 = vpop.f32.mrf.mxu0
        %v5212 = vadd.f32 0.0, %v5211
        %v5213 = vpop.f32.mrf.mxu0
        %v5214 = vadd.f32 0.0, %v5213
        %v5215 = vpop.f32.mrf.mxu0
        %v5216 = vpop.f32.mrf.mxu0
        %5217 = vdwg.mxu0
        %5218 = vmatprep.subr.bf16.mxu0 0
        %5219 = vmatpush1.bf16.msra.mxu0 0
        %5220 = vmatprep.subr.bf16.mxu0 0
        %5221 = vmatpush1.bf16.msra.mxu0 0
        %5222 = vmatprep.subr.bf16.mxu0 0
        %5223 = vmatpush1.bf16.msra.mxu0 0
        %5224 = vmatprep.subr.bf16.mxu0 0
        %5225 = vmatpush1.bf16.msra.mxu0 0
        %5226 = vmatprep.subr.bf16.mxu0 0
        %5227 = vmatpush1.bf16.msra.mxu0 0
        %5228 = vmatprep.subr.bf16.mxu0 0
        %5229 = vmatpush1.bf16.msra.mxu0 0
        %5230 = vmatprep.subr.bf16.mxu0 0
        %5231 = vmatpush1.bf16.msra.mxu0 0
        %5232 = vmatprep.subr.bf16.mxu0 %v5169
        %5233 = vmatpush1.bf16.msra.mxu0 %v5168
        %5234 = vmatprep.subr.bf16.mxu0 0
        %5235 = vmatpush2.bf16.msra.mxu0 0
        %5236 = vmatprep.subr.bf16.mxu0 0
        %5237 = vmatpush2.bf16.msra.mxu0 0
        %5238 = vmatprep.subr.bf16.mxu0 0
        %5239 = vmatpush2.bf16.msra.mxu0 0
        %5240 = vmatprep.subr.bf16.mxu0 0
        %5241 = vmatpush2.bf16.msra.mxu0 0
        %5242 = vmatprep.subr.bf16.mxu0 0
        %5243 = vmatpush2.bf16.msra.mxu0 0
        %5244 = vmatprep.subr.bf16.mxu0 0
        %5245 = vmatpush2.bf16.msra.mxu0 0
        %5246 = vmatprep.subr.bf16.mxu0 0
        %5247 = vmatpush2.bf16.msra.mxu0 0
        %5248 = vmatprep.subr.bf16.mxu0 0
        %5249 = vmatpush2.bf16.msra.mxu0 0
        %5250 = vmatprep.mubr.bf16.mxu0 0
        %5251 = vmatmul.mubr.bf16.gmra.mxu0 %v5175
        %v5252 = vpop.f32.mrf.mxu0
        %v5253 = vadd.f32 0.0, %v5252
        %v5254 = vpop.f32.mrf.mxu0
        %v5255 = vadd.f32 0.0, %v5254
        %v5256 = vpop.f32.mrf.mxu0
        %v5257 = vpop.f32.mrf.mxu0
        %5258 = vdwg.mxu0
        %v5259 = vadd.f32 %v5122, %v5212
        %v5260 = vadd.f32 %v5123, %v5214
        %v5261 = vadd.f32 %v5124, %v5253
        %v5262 = vadd.f32 %v5125, %v5255
        %v5263 = vld [vmem:[#allocation2 + $0x9] sm:$0x1]
        %v5264 = vld [vmem:[#allocation2 + $0x19] sm:$0x1]
        %v5265 = vld [vmem:[#allocation2 + $0x29] sm:$0x1]
        %v5266 = vld [vmem:[#allocation2 + $0x39] sm:$0x1]
        %v5267 = vpack.c.bf16 %v5263, %v5263
        %v5268 = vpack.c.bf16 %v5264, %v5264
        %v5269 = vpack.c.bf16 %v5265, %v5265
        %v5270 = vpack.c.bf16 %v5266, %v5266
        %s5271 = scalar_lea.vmem %s16, 288
        %v5272 = vld [vmem:[%s5271] sm:$0xff]
        %v5273 = vld [vmem:[%s5271 + $0x8] sm:$0xff]
        %v5274 = vld [vmem:[%s5271 + $0x10] sm:$0xff]
        %v5275 = vld [vmem:[%s5271 + $0x18] sm:$0xff]
        %v5280 = vunpack.c.l.b16 %v5267
        %v5281 = vunpack.c.l.b16 %v5268
        %v5282 = vunpack.c.l.b16 %v5269
        %v5283 = vunpack.c.l.b16 %v5270
        %v5284 = vrot.slane %v5281, 7
        %v5285 = vsel %vm4069, %v5284, %v5280
        %v5286 = vrot.slane %v5282, 6
        %v5287 = vsel %vm4072, %v5286, %v5285
        %v5288 = vrot.slane %v5283, 5
        %v5289 = vsel %vm4075, %v5288, %v5287
        %v5290 = vpack.c.b16 %v5289, %v5289
        %v5295 = vunpack.c.l.b16 %v5272
        %v5296 = vunpack.c.h.b16 %v5272
        %v5297 = vunpack.c.l.b16 %v5273
        %v5298 = vunpack.c.h.b16 %v5273
        %v5299 = vunpack.c.l.b16 %v5274
        %v5300 = vunpack.c.h.b16 %v5274
        %v5301 = vunpack.c.l.b16 %v5275
        %v5302 = vunpack.c.h.b16 %v5275
        %v5303 = vpack.c.b16 %v5299, %v5295
        %v5304 = vpack.c.b16 %v5300, %v5296
        %v5305 = vpack.c.b16 %v5301, %v5297
        %v5306 = vpack.c.b16 %v5302, %v5298
        %v5312 = vsel %vm4098, %v5290, 0
        %5314 = vmatprep.subr.bf16.mxu0 0
        %5315 = vmatpush1.bf16.msra.mxu0 0
        %5316 = vmatprep.subr.bf16.mxu0 0
        %5317 = vmatpush1.bf16.msra.mxu0 0
        %5318 = vmatprep.subr.bf16.mxu0 0
        %5319 = vmatpush1.bf16.msra.mxu0 0
        %5320 = vmatprep.subr.bf16.mxu0 0
        %5321 = vmatpush1.bf16.msra.mxu0 0
        %5322 = vmatprep.subr.bf16.mxu0 0
        %5323 = vmatpush1.bf16.msra.mxu0 0
        %5324 = vmatprep.subr.bf16.mxu0 0
        %5325 = vmatpush1.bf16.msra.mxu0 0
        %5326 = vmatprep.subr.bf16.mxu0 0
        %5327 = vmatpush1.bf16.msra.mxu0 0
        %5328 = vmatprep.subr.bf16.mxu0 %v5304
        %5329 = vmatpush1.bf16.msra.mxu0 %v5303
        %5330 = vmatprep.subr.bf16.mxu0 0
        %5331 = vmatpush2.bf16.msra.mxu0 0
        %5332 = vmatprep.subr.bf16.mxu0 0
        %5333 = vmatpush2.bf16.msra.mxu0 0
        %5334 = vmatprep.subr.bf16.mxu0 0
        %5335 = vmatpush2.bf16.msra.mxu0 0
        %5336 = vmatprep.subr.bf16.mxu0 0
        %5337 = vmatpush2.bf16.msra.mxu0 0
        %5338 = vmatprep.subr.bf16.mxu0 0
        %5339 = vmatpush2.bf16.msra.mxu0 0
        %5340 = vmatprep.subr.bf16.mxu0 0
        %5341 = vmatpush2.bf16.msra.mxu0 0
        %5342 = vmatprep.subr.bf16.mxu0 0
        %5343 = vmatpush2.bf16.msra.mxu0 0
        %5344 = vmatprep.subr.bf16.mxu0 0
        %5345 = vmatpush2.bf16.msra.mxu0 0
        %5346 = vmatprep.mubr.bf16.mxu0 0
        %5347 = vmatmul.mubr.bf16.gmra.mxu0 %v5312
        %v5348 = vpop.f32.mrf.mxu0
        %v5349 = vadd.f32 0.0, %v5348
        %v5350 = vpop.f32.mrf.mxu0
        %v5351 = vadd.f32 0.0, %v5350
        %v5352 = vpop.f32.mrf.mxu0
        %v5353 = vpop.f32.mrf.mxu0
        %5354 = vdwg.mxu0
        %5355 = vmatprep.subr.bf16.mxu0 0
        %5356 = vmatpush1.bf16.msra.mxu0 0
        %5357 = vmatprep.subr.bf16.mxu0 0
        %5358 = vmatpush1.bf16.msra.mxu0 0
        %5359 = vmatprep.subr.bf16.mxu0 0
        %5360 = vmatpush1.bf16.msra.mxu0 0
        %5361 = vmatprep.subr.bf16.mxu0 0
        %5362 = vmatpush1.bf16.msra.mxu0 0
        %5363 = vmatprep.subr.bf16.mxu0 0
        %5364 = vmatpush1.bf16.msra.mxu0 0
        %5365 = vmatprep.subr.bf16.mxu0 0
        %5366 = vmatpush1.bf16.msra.mxu0 0
        %5367 = vmatprep.subr.bf16.mxu0 0
        %5368 = vmatpush1.bf16.msra.mxu0 0
        %5369 = vmatprep.subr.bf16.mxu0 %v5306
        %5370 = vmatpush1.bf16.msra.mxu0 %v5305
        %5371 = vmatprep.subr.bf16.mxu0 0
        %5372 = vmatpush2.bf16.msra.mxu0 0
        %5373 = vmatprep.subr.bf16.mxu0 0
        %5374 = vmatpush2.bf16.msra.mxu0 0
        %5375 = vmatprep.subr.bf16.mxu0 0
        %5376 = vmatpush2.bf16.msra.mxu0 0
        %5377 = vmatprep.subr.bf16.mxu0 0
        %5378 = vmatpush2.bf16.msra.mxu0 0
        %5379 = vmatprep.subr.bf16.mxu0 0
        %5380 = vmatpush2.bf16.msra.mxu0 0
        %5381 = vmatprep.subr.bf16.mxu0 0
        %5382 = vmatpush2.bf16.msra.mxu0 0
        %5383 = vmatprep.subr.bf16.mxu0 0
        %5384 = vmatpush2.bf16.msra.mxu0 0
        %5385 = vmatprep.subr.bf16.mxu0 0
        %5386 = vmatpush2.bf16.msra.mxu0 0
        %5387 = vmatprep.mubr.bf16.mxu0 0
        %5388 = vmatmul.mubr.bf16.gmra.mxu0 %v5312
        %v5389 = vpop.f32.mrf.mxu0
        %v5390 = vadd.f32 0.0, %v5389
        %v5391 = vpop.f32.mrf.mxu0
        %v5392 = vadd.f32 0.0, %v5391
        %v5393 = vpop.f32.mrf.mxu0
        %v5394 = vpop.f32.mrf.mxu0
        %5395 = vdwg.mxu0
        %v5396 = vadd.f32 %v5259, %v5349
        %v5397 = vadd.f32 %v5260, %v5351
        %v5398 = vadd.f32 %v5261, %v5390
        %v5399 = vadd.f32 %v5262, %v5392
        %v5400 = vld [vmem:[#allocation2 + $0xa] sm:$0x1]
        %v5401 = vld [vmem:[#allocation2 + $0x1a] sm:$0x1]
        %v5402 = vld [vmem:[#allocation2 + $0x2a] sm:$0x1]
        %v5403 = vld [vmem:[#allocation2 + $0x3a] sm:$0x1]
        %v5404 = vpack.c.bf16 %v5400, %v5400
        %v5405 = vpack.c.bf16 %v5401, %v5401
        %v5406 = vpack.c.bf16 %v5402, %v5402
        %v5407 = vpack.c.bf16 %v5403, %v5403
        %s5408 = scalar_lea.vmem %s16, 320
        %v5409 = vld [vmem:[%s5408] sm:$0xff]
        %v5410 = vld [vmem:[%s5408 + $0x8] sm:$0xff]
        %v5411 = vld [vmem:[%s5408 + $0x10] sm:$0xff]
        %v5412 = vld [vmem:[%s5408 + $0x18] sm:$0xff]
        %v5417 = vunpack.c.l.b16 %v5404
        %v5418 = vunpack.c.l.b16 %v5405
        %v5419 = vunpack.c.l.b16 %v5406
        %v5420 = vunpack.c.l.b16 %v5407
        %v5421 = vrot.slane %v5418, 7
        %v5422 = vsel %vm4069, %v5421, %v5417
        %v5423 = vrot.slane %v5419, 6
        %v5424 = vsel %vm4072, %v5423, %v5422
        %v5425 = vrot.slane %v5420, 5
        %v5426 = vsel %vm4075, %v5425, %v5424
        %v5427 = vpack.c.b16 %v5426, %v5426
        %v5432 = vunpack.c.l.b16 %v5409
        %v5433 = vunpack.c.h.b16 %v5409
        %v5434 = vunpack.c.l.b16 %v5410
        %v5435 = vunpack.c.h.b16 %v5410
        %v5436 = vunpack.c.l.b16 %v5411
        %v5437 = vunpack.c.h.b16 %v5411
        %v5438 = vunpack.c.l.b16 %v5412
        %v5439 = vunpack.c.h.b16 %v5412
        %v5440 = vpack.c.b16 %v5436, %v5432
        %v5441 = vpack.c.b16 %v5437, %v5433
        %v5442 = vpack.c.b16 %v5438, %v5434
        %v5443 = vpack.c.b16 %v5439, %v5435
        %v5449 = vsel %vm4098, %v5427, 0
        %5451 = vmatprep.subr.bf16.mxu0 0
        %5452 = vmatpush1.bf16.msra.mxu0 0
        %5453 = vmatprep.subr.bf16.mxu0 0
        %5454 = vmatpush1.bf16.msra.mxu0 0
        %5455 = vmatprep.subr.bf16.mxu0 0
        %5456 = vmatpush1.bf16.msra.mxu0 0
        %5457 = vmatprep.subr.bf16.mxu0 0
        %5458 = vmatpush1.bf16.msra.mxu0 0
        %5459 = vmatprep.subr.bf16.mxu0 0
        %5460 = vmatpush1.bf16.msra.mxu0 0
        %5461 = vmatprep.subr.bf16.mxu0 0
        %5462 = vmatpush1.bf16.msra.mxu0 0
        %5463 = vmatprep.subr.bf16.mxu0 0
        %5464 = vmatpush1.bf16.msra.mxu0 0
        %5465 = vmatprep.subr.bf16.mxu0 %v5441
        %5466 = vmatpush1.bf16.msra.mxu0 %v5440
        %5467 = vmatprep.subr.bf16.mxu0 0
        %5468 = vmatpush2.bf16.msra.mxu0 0
        %5469 = vmatprep.subr.bf16.mxu0 0
        %5470 = vmatpush2.bf16.msra.mxu0 0
        %5471 = vmatprep.subr.bf16.mxu0 0
        %5472 = vmatpush2.bf16.msra.mxu0 0
        %5473 = vmatprep.subr.bf16.mxu0 0
        %5474 = vmatpush2.bf16.msra.mxu0 0
        %5475 = vmatprep.subr.bf16.mxu0 0
        %5476 = vmatpush2.bf16.msra.mxu0 0
        %5477 = vmatprep.subr.bf16.mxu0 0
        %5478 = vmatpush2.bf16.msra.mxu0 0
        %5479 = vmatprep.subr.bf16.mxu0 0
        %5480 = vmatpush2.bf16.msra.mxu0 0
        %5481 = vmatprep.subr.bf16.mxu0 0
        %5482 = vmatpush2.bf16.msra.mxu0 0
        %5483 = vmatprep.mubr.bf16.mxu0 0
        %5484 = vmatmul.mubr.bf16.gmra.mxu0 %v5449
        %v5485 = vpop.f32.mrf.mxu0
        %v5486 = vadd.f32 0.0, %v5485
        %v5487 = vpop.f32.mrf.mxu0
        %v5488 = vadd.f32 0.0, %v5487
        %v5489 = vpop.f32.mrf.mxu0
        %v5490 = vpop.f32.mrf.mxu0
        %5491 = vdwg.mxu0
        %5492 = vmatprep.subr.bf16.mxu0 0
        %5493 = vmatpush1.bf16.msra.mxu0 0
        %5494 = vmatprep.subr.bf16.mxu0 0
        %5495 = vmatpush1.bf16.msra.mxu0 0
        %5496 = vmatprep.subr.bf16.mxu0 0
        %5497 = vmatpush1.bf16.msra.mxu0 0
        %5498 = vmatprep.subr.bf16.mxu0 0
        %5499 = vmatpush1.bf16.msra.mxu0 0
        %5500 = vmatprep.subr.bf16.mxu0 0
        %5501 = vmatpush1.bf16.msra.mxu0 0
        %5502 = vmatprep.subr.bf16.mxu0 0
        %5503 = vmatpush1.bf16.msra.mxu0 0
        %5504 = vmatprep.subr.bf16.mxu0 0
        %5505 = vmatpush1.bf16.msra.mxu0 0
        %5506 = vmatprep.subr.bf16.mxu0 %v5443
        %5507 = vmatpush1.bf16.msra.mxu0 %v5442
        %5508 = vmatprep.subr.bf16.mxu0 0
        %5509 = vmatpush2.bf16.msra.mxu0 0
        %5510 = vmatprep.subr.bf16.mxu0 0
        %5511 = vmatpush2.bf16.msra.mxu0 0
        %5512 = vmatprep.subr.bf16.mxu0 0
        %5513 = vmatpush2.bf16.msra.mxu0 0
        %5514 = vmatprep.subr.bf16.mxu0 0
        %5515 = vmatpush2.bf16.msra.mxu0 0
        %5516 = vmatprep.subr.bf16.mxu0 0
        %5517 = vmatpush2.bf16.msra.mxu0 0
        %5518 = vmatprep.subr.bf16.mxu0 0
        %5519 = vmatpush2.bf16.msra.mxu0 0
        %5520 = vmatprep.subr.bf16.mxu0 0
        %5521 = vmatpush2.bf16.msra.mxu0 0
        %5522 = vmatprep.subr.bf16.mxu0 0
        %5523 = vmatpush2.bf16.msra.mxu0 0
        %5524 = vmatprep.mubr.bf16.mxu0 0
        %5525 = vmatmul.mubr.bf16.gmra.mxu0 %v5449
        %v5526 = vpop.f32.mrf.mxu0
        %v5527 = vadd.f32 0.0, %v5526
        %v5528 = vpop.f32.mrf.mxu0
        %v5529 = vadd.f32 0.0, %v5528
        %v5530 = vpop.f32.mrf.mxu0
        %v5531 = vpop.f32.mrf.mxu0
        %5532 = vdwg.mxu0
        %v5533 = vadd.f32 %v5396, %v5486
        %v5534 = vadd.f32 %v5397, %v5488
        %v5535 = vadd.f32 %v5398, %v5527
        %v5536 = vadd.f32 %v5399, %v5529
        %v5537 = vld [vmem:[#allocation2 + $0xb] sm:$0x1]
        %v5538 = vld [vmem:[#allocation2 + $0x1b] sm:$0x1]
        %v5539 = vld [vmem:[#allocation2 + $0x2b] sm:$0x1]
        %v5540 = vld [vmem:[#allocation2 + $0x3b] sm:$0x1]
        %v5541 = vpack.c.bf16 %v5537, %v5537
        %v5542 = vpack.c.bf16 %v5538, %v5538
        %v5543 = vpack.c.bf16 %v5539, %v5539
        %v5544 = vpack.c.bf16 %v5540, %v5540
        %s5545 = scalar_lea.vmem %s16, 352
        %v5546 = vld [vmem:[%s5545] sm:$0xff]
        %v5547 = vld [vmem:[%s5545 + $0x8] sm:$0xff]
        %v5548 = vld [vmem:[%s5545 + $0x10] sm:$0xff]
        %v5549 = vld [vmem:[%s5545 + $0x18] sm:$0xff]
        %v5554 = vunpack.c.l.b16 %v5541
        %v5555 = vunpack.c.l.b16 %v5542
        %v5556 = vunpack.c.l.b16 %v5543
        %v5557 = vunpack.c.l.b16 %v5544
        %v5558 = vrot.slane %v5555, 7
        %v5559 = vsel %vm4069, %v5558, %v5554
        %v5560 = vrot.slane %v5556, 6
        %v5561 = vsel %vm4072, %v5560, %v5559
        %v5562 = vrot.slane %v5557, 5
        %v5563 = vsel %vm4075, %v5562, %v5561
        %v5564 = vpack.c.b16 %v5563, %v5563
        %v5569 = vunpack.c.l.b16 %v5546
        %v5570 = vunpack.c.h.b16 %v5546
        %v5571 = vunpack.c.l.b16 %v5547
        %v5572 = vunpack.c.h.b16 %v5547
        %v5573 = vunpack.c.l.b16 %v5548
        %v5574 = vunpack.c.h.b16 %v5548
        %v5575 = vunpack.c.l.b16 %v5549
        %v5576 = vunpack.c.h.b16 %v5549
        %v5577 = vpack.c.b16 %v5573, %v5569
        %v5578 = vpack.c.b16 %v5574, %v5570
        %v5579 = vpack.c.b16 %v5575, %v5571
        %v5580 = vpack.c.b16 %v5576, %v5572
        %v5586 = vsel %vm4098, %v5564, 0
        %5588 = vmatprep.subr.bf16.mxu0 0
        %5589 = vmatpush1.bf16.msra.mxu0 0
        %5590 = vmatprep.subr.bf16.mxu0 0
        %5591 = vmatpush1.bf16.msra.mxu0 0
        %5592 = vmatprep.subr.bf16.mxu0 0
        %5593 = vmatpush1.bf16.msra.mxu0 0
        %5594 = vmatprep.subr.bf16.mxu0 0
        %5595 = vmatpush1.bf16.msra.mxu0 0
        %5596 = vmatprep.subr.bf16.mxu0 0
        %5597 = vmatpush1.bf16.msra.mxu0 0
        %5598 = vmatprep.subr.bf16.mxu0 0
        %5599 = vmatpush1.bf16.msra.mxu0 0
        %5600 = vmatprep.subr.bf16.mxu0 0
        %5601 = vmatpush1.bf16.msra.mxu0 0
        %5602 = vmatprep.subr.bf16.mxu0 %v5578
        %5603 = vmatpush1.bf16.msra.mxu0 %v5577
        %5604 = vmatprep.subr.bf16.mxu0 0
        %5605 = vmatpush2.bf16.msra.mxu0 0
        %5606 = vmatprep.subr.bf16.mxu0 0
        %5607 = vmatpush2.bf16.msra.mxu0 0
        %5608 = vmatprep.subr.bf16.mxu0 0
        %5609 = vmatpush2.bf16.msra.mxu0 0
        %5610 = vmatprep.subr.bf16.mxu0 0
        %5611 = vmatpush2.bf16.msra.mxu0 0
        %5612 = vmatprep.subr.bf16.mxu0 0
        %5613 = vmatpush2.bf16.msra.mxu0 0
        %5614 = vmatprep.subr.bf16.mxu0 0
        %5615 = vmatpush2.bf16.msra.mxu0 0
        %5616 = vmatprep.subr.bf16.mxu0 0
        %5617 = vmatpush2.bf16.msra.mxu0 0
        %5618 = vmatprep.subr.bf16.mxu0 0
        %5619 = vmatpush2.bf16.msra.mxu0 0
        %5620 = vmatprep.mubr.bf16.mxu0 0
        %5621 = vmatmul.mubr.bf16.gmra.mxu0 %v5586
        %v5622 = vpop.f32.mrf.mxu0
        %v5623 = vadd.f32 0.0, %v5622
        %v5624 = vpop.f32.mrf.mxu0
        %v5625 = vadd.f32 0.0, %v5624
        %v5626 = vpop.f32.mrf.mxu0
        %v5627 = vpop.f32.mrf.mxu0
        %5628 = vdwg.mxu0
        %5629 = vmatprep.subr.bf16.mxu0 0
        %5630 = vmatpush1.bf16.msra.mxu0 0
        %5631 = vmatprep.subr.bf16.mxu0 0
        %5632 = vmatpush1.bf16.msra.mxu0 0
        %5633 = vmatprep.subr.bf16.mxu0 0
        %5634 = vmatpush1.bf16.msra.mxu0 0
        %5635 = vmatprep.subr.bf16.mxu0 0
        %5636 = vmatpush1.bf16.msra.mxu0 0
        %5637 = vmatprep.subr.bf16.mxu0 0
        %5638 = vmatpush1.bf16.msra.mxu0 0
        %5639 = vmatprep.subr.bf16.mxu0 0
        %5640 = vmatpush1.bf16.msra.mxu0 0
        %5641 = vmatprep.subr.bf16.mxu0 0
        %5642 = vmatpush1.bf16.msra.mxu0 0
        %5643 = vmatprep.subr.bf16.mxu0 %v5580
        %5644 = vmatpush1.bf16.msra.mxu0 %v5579
        %5645 = vmatprep.subr.bf16.mxu0 0
        %5646 = vmatpush2.bf16.msra.mxu0 0
        %5647 = vmatprep.subr.bf16.mxu0 0
        %5648 = vmatpush2.bf16.msra.mxu0 0
        %5649 = vmatprep.subr.bf16.mxu0 0
        %5650 = vmatpush2.bf16.msra.mxu0 0
        %5651 = vmatprep.subr.bf16.mxu0 0
        %5652 = vmatpush2.bf16.msra.mxu0 0
        %5653 = vmatprep.subr.bf16.mxu0 0
        %5654 = vmatpush2.bf16.msra.mxu0 0
        %5655 = vmatprep.subr.bf16.mxu0 0
        %5656 = vmatpush2.bf16.msra.mxu0 0
        %5657 = vmatprep.subr.bf16.mxu0 0
        %5658 = vmatpush2.bf16.msra.mxu0 0
        %5659 = vmatprep.subr.bf16.mxu0 0
        %5660 = vmatpush2.bf16.msra.mxu0 0
        %5661 = vmatprep.mubr.bf16.mxu0 0
        %5662 = vmatmul.mubr.bf16.gmra.mxu0 %v5586
        %v5663 = vpop.f32.mrf.mxu0
        %v5664 = vadd.f32 0.0, %v5663
        %v5665 = vpop.f32.mrf.mxu0
        %v5666 = vadd.f32 0.0, %v5665
        %v5667 = vpop.f32.mrf.mxu0
        %v5668 = vpop.f32.mrf.mxu0
        %5669 = vdwg.mxu0
        %v5670 = vadd.f32 %v5533, %v5623
        %v5671 = vadd.f32 %v5534, %v5625
        %v5672 = vadd.f32 %v5535, %v5664
        %v5673 = vadd.f32 %v5536, %v5666
        %v5674 = vld [vmem:[#allocation2 + $0xc] sm:$0x1]
        %v5675 = vld [vmem:[#allocation2 + $0x1c] sm:$0x1]
        %v5676 = vld [vmem:[#allocation2 + $0x2c] sm:$0x1]
        %v5677 = vld [vmem:[#allocation2 + $0x3c] sm:$0x1]
        %v5678 = vpack.c.bf16 %v5674, %v5674
        %v5679 = vpack.c.bf16 %v5675, %v5675
        %v5680 = vpack.c.bf16 %v5676, %v5676
        %v5681 = vpack.c.bf16 %v5677, %v5677
        %s5682 = scalar_lea.vmem %s16, 384
        %v5683 = vld [vmem:[%s5682] sm:$0xff]
        %v5684 = vld [vmem:[%s5682 + $0x8] sm:$0xff]
        %v5685 = vld [vmem:[%s5682 + $0x10] sm:$0xff]
        %v5686 = vld [vmem:[%s5682 + $0x18] sm:$0xff]
        %v5691 = vunpack.c.l.b16 %v5678
        %v5692 = vunpack.c.l.b16 %v5679
        %v5693 = vunpack.c.l.b16 %v5680
        %v5694 = vunpack.c.l.b16 %v5681
        %v5695 = vrot.slane %v5692, 7
        %v5696 = vsel %vm4069, %v5695, %v5691
        %v5697 = vrot.slane %v5693, 6
        %v5698 = vsel %vm4072, %v5697, %v5696
        %v5699 = vrot.slane %v5694, 5
        %v5700 = vsel %vm4075, %v5699, %v5698
        %v5701 = vpack.c.b16 %v5700, %v5700
        %v5706 = vunpack.c.l.b16 %v5683
        %v5707 = vunpack.c.h.b16 %v5683
        %v5708 = vunpack.c.l.b16 %v5684
        %v5709 = vunpack.c.h.b16 %v5684
        %v5710 = vunpack.c.l.b16 %v5685
        %v5711 = vunpack.c.h.b16 %v5685
        %v5712 = vunpack.c.l.b16 %v5686
        %v5713 = vunpack.c.h.b16 %v5686
        %v5714 = vpack.c.b16 %v5710, %v5706
        %v5715 = vpack.c.b16 %v5711, %v5707
        %v5716 = vpack.c.b16 %v5712, %v5708
        %v5717 = vpack.c.b16 %v5713, %v5709
        %v5723 = vsel %vm4098, %v5701, 0
        %5725 = vmatprep.subr.bf16.mxu0 0
        %5726 = vmatpush1.bf16.msra.mxu0 0
        %5727 = vmatprep.subr.bf16.mxu0 0
        %5728 = vmatpush1.bf16.msra.mxu0 0
        %5729 = vmatprep.subr.bf16.mxu0 0
        %5730 = vmatpush1.bf16.msra.mxu0 0
        %5731 = vmatprep.subr.bf16.mxu0 0
        %5732 = vmatpush1.bf16.msra.mxu0 0
        %5733 = vmatprep.subr.bf16.mxu0 0
        %5734 = vmatpush1.bf16.msra.mxu0 0
        %5735 = vmatprep.subr.bf16.mxu0 0
        %5736 = vmatpush1.bf16.msra.mxu0 0
        %5737 = vmatprep.subr.bf16.mxu0 0
        %5738 = vmatpush1.bf16.msra.mxu0 0
        %5739 = vmatprep.subr.bf16.mxu0 %v5715
        %5740 = vmatpush1.bf16.msra.mxu0 %v5714
        %5741 = vmatprep.subr.bf16.mxu0 0
        %5742 = vmatpush2.bf16.msra.mxu0 0
        %5743 = vmatprep.subr.bf16.mxu0 0
        %5744 = vmatpush2.bf16.msra.mxu0 0
        %5745 = vmatprep.subr.bf16.mxu0 0
        %5746 = vmatpush2.bf16.msra.mxu0 0
        %5747 = vmatprep.subr.bf16.mxu0 0
        %5748 = vmatpush2.bf16.msra.mxu0 0
        %5749 = vmatprep.subr.bf16.mxu0 0
        %5750 = vmatpush2.bf16.msra.mxu0 0
        %5751 = vmatprep.subr.bf16.mxu0 0
        %5752 = vmatpush2.bf16.msra.mxu0 0
        %5753 = vmatprep.subr.bf16.mxu0 0
        %5754 = vmatpush2.bf16.msra.mxu0 0
        %5755 = vmatprep.subr.bf16.mxu0 0
        %5756 = vmatpush2.bf16.msra.mxu0 0
        %5757 = vmatprep.mubr.bf16.mxu0 0
        %5758 = vmatmul.mubr.bf16.gmra.mxu0 %v5723
        %v5759 = vpop.f32.mrf.mxu0
        %v5760 = vadd.f32 0.0, %v5759
        %v5761 = vpop.f32.mrf.mxu0
        %v5762 = vadd.f32 0.0, %v5761
        %v5763 = vpop.f32.mrf.mxu0
        %v5764 = vpop.f32.mrf.mxu0
        %5765 = vdwg.mxu0
        %5766 = vmatprep.subr.bf16.mxu0 0
        %5767 = vmatpush1.bf16.msra.mxu0 0
        %5768 = vmatprep.subr.bf16.mxu0 0
        %5769 = vmatpush1.bf16.msra.mxu0 0
        %5770 = vmatprep.subr.bf16.mxu0 0
        %5771 = vmatpush1.bf16.msra.mxu0 0
        %5772 = vmatprep.subr.bf16.mxu0 0
        %5773 = vmatpush1.bf16.msra.mxu0 0
        %5774 = vmatprep.subr.bf16.mxu0 0
        %5775 = vmatpush1.bf16.msra.mxu0 0
        %5776 = vmatprep.subr.bf16.mxu0 0
        %5777 = vmatpush1.bf16.msra.mxu0 0
        %5778 = vmatprep.subr.bf16.mxu0 0
        %5779 = vmatpush1.bf16.msra.mxu0 0
        %5780 = vmatprep.subr.bf16.mxu0 %v5717
        %5781 = vmatpush1.bf16.msra.mxu0 %v5716
        %5782 = vmatprep.subr.bf16.mxu0 0
        %5783 = vmatpush2.bf16.msra.mxu0 0
        %5784 = vmatprep.subr.bf16.mxu0 0
        %5785 = vmatpush2.bf16.msra.mxu0 0
        %5786 = vmatprep.subr.bf16.mxu0 0
        %5787 = vmatpush2.bf16.msra.mxu0 0
        %5788 = vmatprep.subr.bf16.mxu0 0
        %5789 = vmatpush2.bf16.msra.mxu0 0
        %5790 = vmatprep.subr.bf16.mxu0 0
        %5791 = vmatpush2.bf16.msra.mxu0 0
        %5792 = vmatprep.subr.bf16.mxu0 0
        %5793 = vmatpush2.bf16.msra.mxu0 0
        %5794 = vmatprep.subr.bf16.mxu0 0
        %5795 = vmatpush2.bf16.msra.mxu0 0
        %5796 = vmatprep.subr.bf16.mxu0 0
        %5797 = vmatpush2.bf16.msra.mxu0 0
        %5798 = vmatprep.mubr.bf16.mxu0 0
        %5799 = vmatmul.mubr.bf16.gmra.mxu0 %v5723
        %v5800 = vpop.f32.mrf.mxu0
        %v5801 = vadd.f32 0.0, %v5800
        %v5802 = vpop.f32.mrf.mxu0
        %v5803 = vadd.f32 0.0, %v5802
        %v5804 = vpop.f32.mrf.mxu0
        %v5805 = vpop.f32.mrf.mxu0
        %5806 = vdwg.mxu0
        %v5807 = vadd.f32 %v5670, %v5760
        %v5808 = vadd.f32 %v5671, %v5762
        %v5809 = vadd.f32 %v5672, %v5801
        %v5810 = vadd.f32 %v5673, %v5803
        %v5811 = vld [vmem:[#allocation2 + $0xd] sm:$0x1]
        %v5812 = vld [vmem:[#allocation2 + $0x1d] sm:$0x1]
        %v5813 = vld [vmem:[#allocation2 + $0x2d] sm:$0x1]
        %v5814 = vld [vmem:[#allocation2 + $0x3d] sm:$0x1]
        %v5815 = vpack.c.bf16 %v5811, %v5811
        %v5816 = vpack.c.bf16 %v5812, %v5812
        %v5817 = vpack.c.bf16 %v5813, %v5813
        %v5818 = vpack.c.bf16 %v5814, %v5814
        %s5819 = scalar_lea.vmem %s16, 416
        %v5820 = vld [vmem:[%s5819] sm:$0xff]
        %v5821 = vld [vmem:[%s5819 + $0x8] sm:$0xff]
        %v5822 = vld [vmem:[%s5819 + $0x10] sm:$0xff]
        %v5823 = vld [vmem:[%s5819 + $0x18] sm:$0xff]
        %v5828 = vunpack.c.l.b16 %v5815
        %v5829 = vunpack.c.l.b16 %v5816
        %v5830 = vunpack.c.l.b16 %v5817
        %v5831 = vunpack.c.l.b16 %v5818
        %v5832 = vrot.slane %v5829, 7
        %v5833 = vsel %vm4069, %v5832, %v5828
        %v5834 = vrot.slane %v5830, 6
        %v5835 = vsel %vm4072, %v5834, %v5833
        %v5836 = vrot.slane %v5831, 5
        %v5837 = vsel %vm4075, %v5836, %v5835
        %v5838 = vpack.c.b16 %v5837, %v5837
        %v5843 = vunpack.c.l.b16 %v5820
        %v5844 = vunpack.c.h.b16 %v5820
        %v5845 = vunpack.c.l.b16 %v5821
        %v5846 = vunpack.c.h.b16 %v5821
        %v5847 = vunpack.c.l.b16 %v5822
        %v5848 = vunpack.c.h.b16 %v5822
        %v5849 = vunpack.c.l.b16 %v5823
        %v5850 = vunpack.c.h.b16 %v5823
        %v5851 = vpack.c.b16 %v5847, %v5843
        %v5852 = vpack.c.b16 %v5848, %v5844
        %v5853 = vpack.c.b16 %v5849, %v5845
        %v5854 = vpack.c.b16 %v5850, %v5846
        %v5860 = vsel %vm4098, %v5838, 0
        %5862 = vmatprep.subr.bf16.mxu0 0
        %5863 = vmatpush1.bf16.msra.mxu0 0
        %5864 = vmatprep.subr.bf16.mxu0 0
        %5865 = vmatpush1.bf16.msra.mxu0 0
        %5866 = vmatprep.subr.bf16.mxu0 0
        %5867 = vmatpush1.bf16.msra.mxu0 0
        %5868 = vmatprep.subr.bf16.mxu0 0
        %5869 = vmatpush1.bf16.msra.mxu0 0
        %5870 = vmatprep.subr.bf16.mxu0 0
        %5871 = vmatpush1.bf16.msra.mxu0 0
        %5872 = vmatprep.subr.bf16.mxu0 0
        %5873 = vmatpush1.bf16.msra.mxu0 0
        %5874 = vmatprep.subr.bf16.mxu0 0
        %5875 = vmatpush1.bf16.msra.mxu0 0
        %5876 = vmatprep.subr.bf16.mxu0 %v5852
        %5877 = vmatpush1.bf16.msra.mxu0 %v5851
        %5878 = vmatprep.subr.bf16.mxu0 0
        %5879 = vmatpush2.bf16.msra.mxu0 0
        %5880 = vmatprep.subr.bf16.mxu0 0
        %5881 = vmatpush2.bf16.msra.mxu0 0
        %5882 = vmatprep.subr.bf16.mxu0 0
        %5883 = vmatpush2.bf16.msra.mxu0 0
        %5884 = vmatprep.subr.bf16.mxu0 0
        %5885 = vmatpush2.bf16.msra.mxu0 0
        %5886 = vmatprep.subr.bf16.mxu0 0
        %5887 = vmatpush2.bf16.msra.mxu0 0
        %5888 = vmatprep.subr.bf16.mxu0 0
        %5889 = vmatpush2.bf16.msra.mxu0 0
        %5890 = vmatprep.subr.bf16.mxu0 0
        %5891 = vmatpush2.bf16.msra.mxu0 0
        %5892 = vmatprep.subr.bf16.mxu0 0
        %5893 = vmatpush2.bf16.msra.mxu0 0
        %5894 = vmatprep.mubr.bf16.mxu0 0
        %5895 = vmatmul.mubr.bf16.gmra.mxu0 %v5860
        %v5896 = vpop.f32.mrf.mxu0
        %v5897 = vadd.f32 0.0, %v5896
        %v5898 = vpop.f32.mrf.mxu0
        %v5899 = vadd.f32 0.0, %v5898
        %v5900 = vpop.f32.mrf.mxu0
        %v5901 = vpop.f32.mrf.mxu0
        %5902 = vdwg.mxu0
        %5903 = vmatprep.subr.bf16.mxu0 0
        %5904 = vmatpush1.bf16.msra.mxu0 0
        %5905 = vmatprep.subr.bf16.mxu0 0
        %5906 = vmatpush1.bf16.msra.mxu0 0
        %5907 = vmatprep.subr.bf16.mxu0 0
        %5908 = vmatpush1.bf16.msra.mxu0 0
        %5909 = vmatprep.subr.bf16.mxu0 0
        %5910 = vmatpush1.bf16.msra.mxu0 0
        %5911 = vmatprep.subr.bf16.mxu0 0
        %5912 = vmatpush1.bf16.msra.mxu0 0
        %5913 = vmatprep.subr.bf16.mxu0 0
        %5914 = vmatpush1.bf16.msra.mxu0 0
        %5915 = vmatprep.subr.bf16.mxu0 0
        %5916 = vmatpush1.bf16.msra.mxu0 0
        %5917 = vmatprep.subr.bf16.mxu0 %v5854
        %5918 = vmatpush1.bf16.msra.mxu0 %v5853
        %5919 = vmatprep.subr.bf16.mxu0 0
        %5920 = vmatpush2.bf16.msra.mxu0 0
        %5921 = vmatprep.subr.bf16.mxu0 0
        %5922 = vmatpush2.bf16.msra.mxu0 0
        %5923 = vmatprep.subr.bf16.mxu0 0
        %5924 = vmatpush2.bf16.msra.mxu0 0
        %5925 = vmatprep.subr.bf16.mxu0 0
        %5926 = vmatpush2.bf16.msra.mxu0 0
        %5927 = vmatprep.subr.bf16.mxu0 0
        %5928 = vmatpush2.bf16.msra.mxu0 0
        %5929 = vmatprep.subr.bf16.mxu0 0
        %5930 = vmatpush2.bf16.msra.mxu0 0
        %5931 = vmatprep.subr.bf16.mxu0 0
        %5932 = vmatpush2.bf16.msra.mxu0 0
        %5933 = vmatprep.subr.bf16.mxu0 0
        %5934 = vmatpush2.bf16.msra.mxu0 0
        %5935 = vmatprep.mubr.bf16.mxu0 0
        %5936 = vmatmul.mubr.bf16.gmra.mxu0 %v5860
        %v5937 = vpop.f32.mrf.mxu0
        %v5938 = vadd.f32 0.0, %v5937
        %v5939 = vpop.f32.mrf.mxu0
        %v5940 = vadd.f32 0.0, %v5939
        %v5941 = vpop.f32.mrf.mxu0
        %v5942 = vpop.f32.mrf.mxu0
        %5943 = vdwg.mxu0
        %v5944 = vadd.f32 %v5807, %v5897
        %v5945 = vadd.f32 %v5808, %v5899
        %v5946 = vadd.f32 %v5809, %v5938
        %v5947 = vadd.f32 %v5810, %v5940
        %v5948 = vld [vmem:[#allocation2 + $0xe] sm:$0x1]
        %v5949 = vld [vmem:[#allocation2 + $0x1e] sm:$0x1]
        %v5950 = vld [vmem:[#allocation2 + $0x2e] sm:$0x1]
        %v5951 = vld [vmem:[#allocation2 + $0x3e] sm:$0x1]
        %v5952 = vpack.c.bf16 %v5948, %v5948
        %v5953 = vpack.c.bf16 %v5949, %v5949
        %v5954 = vpack.c.bf16 %v5950, %v5950
        %v5955 = vpack.c.bf16 %v5951, %v5951
        %s5956 = scalar_lea.vmem %s16, 448
        %v5957 = vld [vmem:[%s5956] sm:$0xff]
        %v5958 = vld [vmem:[%s5956 + $0x8] sm:$0xff]
        %v5959 = vld [vmem:[%s5956 + $0x10] sm:$0xff]
        %v5960 = vld [vmem:[%s5956 + $0x18] sm:$0xff]
        %v5965 = vunpack.c.l.b16 %v5952
        %v5966 = vunpack.c.l.b16 %v5953
        %v5967 = vunpack.c.l.b16 %v5954
        %v5968 = vunpack.c.l.b16 %v5955
        %v5969 = vrot.slane %v5966, 7
        %v5970 = vsel %vm4069, %v5969, %v5965
        %v5971 = vrot.slane %v5967, 6
        %v5972 = vsel %vm4072, %v5971, %v5970
        %v5973 = vrot.slane %v5968, 5
        %v5974 = vsel %vm4075, %v5973, %v5972
        %v5975 = vpack.c.b16 %v5974, %v5974
        %v5980 = vunpack.c.l.b16 %v5957
        %v5981 = vunpack.c.h.b16 %v5957
        %v5982 = vunpack.c.l.b16 %v5958
        %v5983 = vunpack.c.h.b16 %v5958
        %v5984 = vunpack.c.l.b16 %v5959
        %v5985 = vunpack.c.h.b16 %v5959
        %v5986 = vunpack.c.l.b16 %v5960
        %v5987 = vunpack.c.h.b16 %v5960
        %v5988 = vpack.c.b16 %v5984, %v5980
        %v5989 = vpack.c.b16 %v5985, %v5981
        %v5990 = vpack.c.b16 %v5986, %v5982
        %v5991 = vpack.c.b16 %v5987, %v5983
        %v5997 = vsel %vm4098, %v5975, 0
        %5999 = vmatprep.subr.bf16.mxu0 0
        %6000 = vmatpush1.bf16.msra.mxu0 0
        %6001 = vmatprep.subr.bf16.mxu0 0
        %6002 = vmatpush1.bf16.msra.mxu0 0
        %6003 = vmatprep.subr.bf16.mxu0 0
        %6004 = vmatpush1.bf16.msra.mxu0 0
        %6005 = vmatprep.subr.bf16.mxu0 0
        %6006 = vmatpush1.bf16.msra.mxu0 0
        %6007 = vmatprep.subr.bf16.mxu0 0
        %6008 = vmatpush1.bf16.msra.mxu0 0
        %6009 = vmatprep.subr.bf16.mxu0 0
        %6010 = vmatpush1.bf16.msra.mxu0 0
        %6011 = vmatprep.subr.bf16.mxu0 0
        %6012 = vmatpush1.bf16.msra.mxu0 0
        %6013 = vmatprep.subr.bf16.mxu0 %v5989
        %6014 = vmatpush1.bf16.msra.mxu0 %v5988
        %6015 = vmatprep.subr.bf16.mxu0 0
        %6016 = vmatpush2.bf16.msra.mxu0 0
        %6017 = vmatprep.subr.bf16.mxu0 0
        %6018 = vmatpush2.bf16.msra.mxu0 0
        %6019 = vmatprep.subr.bf16.mxu0 0
        %6020 = vmatpush2.bf16.msra.mxu0 0
        %6021 = vmatprep.subr.bf16.mxu0 0
        %6022 = vmatpush2.bf16.msra.mxu0 0
        %6023 = vmatprep.subr.bf16.mxu0 0
        %6024 = vmatpush2.bf16.msra.mxu0 0
        %6025 = vmatprep.subr.bf16.mxu0 0
        %6026 = vmatpush2.bf16.msra.mxu0 0
        %6027 = vmatprep.subr.bf16.mxu0 0
        %6028 = vmatpush2.bf16.msra.mxu0 0
        %6029 = vmatprep.subr.bf16.mxu0 0
        %6030 = vmatpush2.bf16.msra.mxu0 0
        %6031 = vmatprep.mubr.bf16.mxu0 0
        %6032 = vmatmul.mubr.bf16.gmra.mxu0 %v5997
        %v6033 = vpop.f32.mrf.mxu0
        %v6034 = vadd.f32 0.0, %v6033
        %v6035 = vpop.f32.mrf.mxu0
        %v6036 = vadd.f32 0.0, %v6035
        %v6037 = vpop.f32.mrf.mxu0
        %v6038 = vpop.f32.mrf.mxu0
        %6039 = vdwg.mxu0
        %6040 = vmatprep.subr.bf16.mxu0 0
        %6041 = vmatpush1.bf16.msra.mxu0 0
        %6042 = vmatprep.subr.bf16.mxu0 0
        %6043 = vmatpush1.bf16.msra.mxu0 0
        %6044 = vmatprep.subr.bf16.mxu0 0
        %6045 = vmatpush1.bf16.msra.mxu0 0
        %6046 = vmatprep.subr.bf16.mxu0 0
        %6047 = vmatpush1.bf16.msra.mxu0 0
        %6048 = vmatprep.subr.bf16.mxu0 0
        %6049 = vmatpush1.bf16.msra.mxu0 0
        %6050 = vmatprep.subr.bf16.mxu0 0
        %6051 = vmatpush1.bf16.msra.mxu0 0
        %6052 = vmatprep.subr.bf16.mxu0 0
        %6053 = vmatpush1.bf16.msra.mxu0 0
        %6054 = vmatprep.subr.bf16.mxu0 %v5991
        %6055 = vmatpush1.bf16.msra.mxu0 %v5990
        %6056 = vmatprep.subr.bf16.mxu0 0
        %6057 = vmatpush2.bf16.msra.mxu0 0
        %6058 = vmatprep.subr.bf16.mxu0 0
        %6059 = vmatpush2.bf16.msra.mxu0 0
        %6060 = vmatprep.subr.bf16.mxu0 0
        %6061 = vmatpush2.bf16.msra.mxu0 0
        %6062 = vmatprep.subr.bf16.mxu0 0
        %6063 = vmatpush2.bf16.msra.mxu0 0
        %6064 = vmatprep.subr.bf16.mxu0 0
        %6065 = vmatpush2.bf16.msra.mxu0 0
        %6066 = vmatprep.subr.bf16.mxu0 0
        %6067 = vmatpush2.bf16.msra.mxu0 0
        %6068 = vmatprep.subr.bf16.mxu0 0
        %6069 = vmatpush2.bf16.msra.mxu0 0
        %6070 = vmatprep.subr.bf16.mxu0 0
        %6071 = vmatpush2.bf16.msra.mxu0 0
        %6072 = vmatprep.mubr.bf16.mxu0 0
        %6073 = vmatmul.mubr.bf16.gmra.mxu0 %v5997
        %v6074 = vpop.f32.mrf.mxu0
        %v6075 = vadd.f32 0.0, %v6074
        %v6076 = vpop.f32.mrf.mxu0
        %v6077 = vadd.f32 0.0, %v6076
        %v6078 = vpop.f32.mrf.mxu0
        %v6079 = vpop.f32.mrf.mxu0
        %6080 = vdwg.mxu0
        %v6081 = vadd.f32 %v5944, %v6034
        %v6082 = vadd.f32 %v5945, %v6036
        %v6083 = vadd.f32 %v5946, %v6075
        %v6084 = vadd.f32 %v5947, %v6077
        %v6085 = vld [vmem:[#allocation2 + $0xf] sm:$0x1]
        %v6086 = vld [vmem:[#allocation2 + $0x1f] sm:$0x1]
        %v6087 = vld [vmem:[#allocation2 + $0x2f] sm:$0x1]
        %v6088 = vld [vmem:[#allocation2 + $0x3f] sm:$0x1]
        %v6089 = vpack.c.bf16 %v6085, %v6085
        %v6090 = vpack.c.bf16 %v6086, %v6086
        %v6091 = vpack.c.bf16 %v6087, %v6087
        %v6092 = vpack.c.bf16 %v6088, %v6088
        %s6093 = scalar_lea.vmem %s16, 480
        %v6094 = vld [vmem:[%s6093] sm:$0xff]
        %v6095 = vld [vmem:[%s6093 + $0x8] sm:$0xff]
        %v6096 = vld [vmem:[%s6093 + $0x10] sm:$0xff]
        %v6097 = vld [vmem:[%s6093 + $0x18] sm:$0xff]
        %v6102 = vunpack.c.l.b16 %v6089
        %v6103 = vunpack.c.l.b16 %v6090
        %v6104 = vunpack.c.l.b16 %v6091
        %v6105 = vunpack.c.l.b16 %v6092
        %v6106 = vrot.slane %v6103, 7
        %v6107 = vsel %vm4069, %v6106, %v6102
        %v6108 = vrot.slane %v6104, 6
        %v6109 = vsel %vm4072, %v6108, %v6107
        %v6110 = vrot.slane %v6105, 5
        %v6111 = vsel %vm4075, %v6110, %v6109
        %v6112 = vpack.c.b16 %v6111, %v6111
        %v6117 = vunpack.c.l.b16 %v6094
        %v6118 = vunpack.c.h.b16 %v6094
        %v6119 = vunpack.c.l.b16 %v6095
        %v6120 = vunpack.c.h.b16 %v6095
        %v6121 = vunpack.c.l.b16 %v6096
        %v6122 = vunpack.c.h.b16 %v6096
        %v6123 = vunpack.c.l.b16 %v6097
        %v6124 = vunpack.c.h.b16 %v6097
        %v6125 = vpack.c.b16 %v6121, %v6117
        %v6126 = vpack.c.b16 %v6122, %v6118
        %v6127 = vpack.c.b16 %v6123, %v6119
        %v6128 = vpack.c.b16 %v6124, %v6120
        %v6134 = vsel %vm4098, %v6112, 0
        %6136 = vmatprep.subr.bf16.mxu0 0
        %6137 = vmatpush1.bf16.msra.mxu0 0
        %6138 = vmatprep.subr.bf16.mxu0 0
        %6139 = vmatpush1.bf16.msra.mxu0 0
        %6140 = vmatprep.subr.bf16.mxu0 0
        %6141 = vmatpush1.bf16.msra.mxu0 0
        %6142 = vmatprep.subr.bf16.mxu0 0
        %6143 = vmatpush1.bf16.msra.mxu0 0
        %6144 = vmatprep.subr.bf16.mxu0 0
        %6145 = vmatpush1.bf16.msra.mxu0 0
        %6146 = vmatprep.subr.bf16.mxu0 0
        %6147 = vmatpush1.bf16.msra.mxu0 0
        %6148 = vmatprep.subr.bf16.mxu0 0
        %6149 = vmatpush1.bf16.msra.mxu0 0
        %6150 = vmatprep.subr.bf16.mxu0 %v6126
        %6151 = vmatpush1.bf16.msra.mxu0 %v6125
        %6152 = vmatprep.subr.bf16.mxu0 0
        %6153 = vmatpush2.bf16.msra.mxu0 0
        %6154 = vmatprep.subr.bf16.mxu0 0
        %6155 = vmatpush2.bf16.msra.mxu0 0
        %6156 = vmatprep.subr.bf16.mxu0 0
        %6157 = vmatpush2.bf16.msra.mxu0 0
        %6158 = vmatprep.subr.bf16.mxu0 0
        %6159 = vmatpush2.bf16.msra.mxu0 0
        %6160 = vmatprep.subr.bf16.mxu0 0
        %6161 = vmatpush2.bf16.msra.mxu0 0
        %6162 = vmatprep.subr.bf16.mxu0 0
        %6163 = vmatpush2.bf16.msra.mxu0 0
        %6164 = vmatprep.subr.bf16.mxu0 0
        %6165 = vmatpush2.bf16.msra.mxu0 0
        %6166 = vmatprep.subr.bf16.mxu0 0
        %6167 = vmatpush2.bf16.msra.mxu0 0
        %6168 = vmatprep.mubr.bf16.mxu0 0
        %6169 = vmatmul.mubr.bf16.gmra.mxu0 %v6134
        %v6170 = vpop.f32.mrf.mxu0
        %v6171 = vadd.f32 0.0, %v6170
        %v6172 = vpop.f32.mrf.mxu0
        %v6173 = vadd.f32 0.0, %v6172
        %v6174 = vpop.f32.mrf.mxu0
        %v6175 = vpop.f32.mrf.mxu0
        %6176 = vdwg.mxu0
        %6177 = vmatprep.subr.bf16.mxu0 0
        %6178 = vmatpush1.bf16.msra.mxu0 0
        %6179 = vmatprep.subr.bf16.mxu0 0
        %6180 = vmatpush1.bf16.msra.mxu0 0
        %6181 = vmatprep.subr.bf16.mxu0 0
        %6182 = vmatpush1.bf16.msra.mxu0 0
        %6183 = vmatprep.subr.bf16.mxu0 0
        %6184 = vmatpush1.bf16.msra.mxu0 0
        %6185 = vmatprep.subr.bf16.mxu0 0
        %6186 = vmatpush1.bf16.msra.mxu0 0
        %6187 = vmatprep.subr.bf16.mxu0 0
        %6188 = vmatpush1.bf16.msra.mxu0 0
        %6189 = vmatprep.subr.bf16.mxu0 0
        %6190 = vmatpush1.bf16.msra.mxu0 0
        %6191 = vmatprep.subr.bf16.mxu0 %v6128
        %6192 = vmatpush1.bf16.msra.mxu0 %v6127
        %6193 = vmatprep.subr.bf16.mxu0 0
        %6194 = vmatpush2.bf16.msra.mxu0 0
        %6195 = vmatprep.subr.bf16.mxu0 0
        %6196 = vmatpush2.bf16.msra.mxu0 0
        %6197 = vmatprep.subr.bf16.mxu0 0
        %6198 = vmatpush2.bf16.msra.mxu0 0
        %6199 = vmatprep.subr.bf16.mxu0 0
        %6200 = vmatpush2.bf16.msra.mxu0 0
        %6201 = vmatprep.subr.bf16.mxu0 0
        %6202 = vmatpush2.bf16.msra.mxu0 0
        %6203 = vmatprep.subr.bf16.mxu0 0
        %6204 = vmatpush2.bf16.msra.mxu0 0
        %6205 = vmatprep.subr.bf16.mxu0 0
        %6206 = vmatpush2.bf16.msra.mxu0 0
        %6207 = vmatprep.subr.bf16.mxu0 0
        %6208 = vmatpush2.bf16.msra.mxu0 0
        %6209 = vmatprep.mubr.bf16.mxu0 0
        %6210 = vmatmul.mubr.bf16.gmra.mxu0 %v6134
        %v6211 = vpop.f32.mrf.mxu0
        %v6212 = vadd.f32 0.0, %v6211
        %v6213 = vpop.f32.mrf.mxu0
        %v6214 = vadd.f32 0.0, %v6213
        %v6215 = vpop.f32.mrf.mxu0
        %v6216 = vpop.f32.mrf.mxu0
        %6217 = vdwg.mxu0
        %v6218 = vadd.f32 %v6081, %v6171
        %v6219 = vadd.f32 %v6082, %v6173
        %v6220 = vadd.f32 %v6083, %v6212
        %v6221 = vadd.f32 %v6084, %v6214
        %v6222 = vld [vmem:[%s17] sm:$0xf]
        %v6224 = vlaneseq
        %v6225 = vshrl.u32 %v6224, 7
        %v6226 = vsub.s32 0, %v6225
        %v6227 = vrot.slane %v6222, %v6226
        %v6228 = vlaneseq
        %v6229 = vshrl.u32 %v6228, 7
        %v6230 = vsub.s32 1, %v6229
        %v6231 = vrot.slane %v6222, %v6230
        %v6232 = vlaneseq
        %v6233 = vshrl.u32 %v6232, 7
        %v6234 = vsub.s32 2, %v6233
        %v6235 = vrot.slane %v6222, %v6234
        %v6236 = vlaneseq
        %v6237 = vshrl.u32 %v6236, 7
        %v6238 = vsub.s32 3, %v6237
        %v6239 = vrot.slane %v6222, %v6238
        %v6244 = vadd.f32 %v6218, %v6227
        %v6245 = vadd.f32 %v6219, %v6231
        %v6246 = vadd.f32 %v6220, %v6235
        %v6247 = vadd.f32 %v6221, %v6239
        %v6248 = vmax.f32 %v6244, 0.0
        %v6249 = vmax.f32 %v6245, 0.0
        %v6250 = vmax.f32 %v6246, 0.0
        %v6251 = vmax.f32 %v6247, 0.0
        %v6252 = vpack.c.bf16 %v6248, %v6248
        %v6253 = vpack.c.bf16 %v6249, %v6249
        %v6254 = vpack.c.bf16 %v6250, %v6250
        %v6255 = vpack.c.bf16 %v6251, %v6251
        %v6256 = vld [vmem:[%s18] sm:$0xf]
        %v6257 = vld [vmem:[%s18 + $0x4] sm:$0xf]
        %v6258 = vld [vmem:[%s18 + $0x8] sm:$0xf]
        %v6259 = vld [vmem:[%s18 + $0xc] sm:$0xf]
        %v6260 = vld [vmem:[%s18 + $0x10] sm:$0xf]
        %v6261 = vld [vmem:[%s18 + $0x14] sm:$0xf]
        %v6262 = vld [vmem:[%s18 + $0x18] sm:$0xf]
        %v6263 = vld [vmem:[%s18 + $0x1c] sm:$0xf]
        %v6264 = vld [vmem:[%s18 + $0x20] sm:$0xf]
        %v6265 = vld [vmem:[%s18 + $0x24] sm:$0xf]
        %v6266 = vld [vmem:[%s18 + $0x28] sm:$0xf]
        %v6267 = vld [vmem:[%s18 + $0x2c] sm:$0xf]
        %v6268 = vld [vmem:[%s18 + $0x30] sm:$0xf]
        %v6269 = vld [vmem:[%s18 + $0x34] sm:$0xf]
        %v6270 = vld [vmem:[%s18 + $0x38] sm:$0xf]
        %v6271 = vld [vmem:[%s18 + $0x3c] sm:$0xf]
        %v6272 = vld [vmem:[%s18 + $0x40] sm:$0xf]
        %v6273 = vld [vmem:[%s18 + $0x44] sm:$0xf]
        %v6274 = vld [vmem:[%s18 + $0x48] sm:$0xf]
        %v6275 = vld [vmem:[%s18 + $0x4c] sm:$0xf]
        %v6276 = vld [vmem:[%s18 + $0x50] sm:$0xf]
        %v6277 = vld [vmem:[%s18 + $0x54] sm:$0xf]
        %v6278 = vld [vmem:[%s18 + $0x58] sm:$0xf]
        %v6279 = vld [vmem:[%s18 + $0x5c] sm:$0xf]
        %v6280 = vld [vmem:[%s18 + $0x60] sm:$0xf]
        %v6281 = vld [vmem:[%s18 + $0x64] sm:$0xf]
        %v6282 = vld [vmem:[%s18 + $0x68] sm:$0xf]
        %v6283 = vld [vmem:[%s18 + $0x6c] sm:$0xf]
        %v6284 = vld [vmem:[%s18 + $0x70] sm:$0xf]
        %v6285 = vld [vmem:[%s18 + $0x74] sm:$0xf]
        %v6286 = vld [vmem:[%s18 + $0x78] sm:$0xf]
        %v6287 = vld [vmem:[%s18 + $0x7c] sm:$0xf]
        %v6288 = vld [vmem:[%s18 + $0x80] sm:$0xf]
        %v6289 = vld [vmem:[%s18 + $0x84] sm:$0xf]
        %v6290 = vld [vmem:[%s18 + $0x88] sm:$0xf]
        %v6291 = vld [vmem:[%s18 + $0x8c] sm:$0xf]
        %v6292 = vld [vmem:[%s18 + $0x90] sm:$0xf]
        %v6293 = vld [vmem:[%s18 + $0x94] sm:$0xf]
        %v6294 = vld [vmem:[%s18 + $0x98] sm:$0xf]
        %v6295 = vld [vmem:[%s18 + $0x9c] sm:$0xf]
        %v6296 = vld [vmem:[%s18 + $0xa0] sm:$0xf]
        %v6297 = vld [vmem:[%s18 + $0xa4] sm:$0xf]
        %v6298 = vld [vmem:[%s18 + $0xa8] sm:$0xf]
        %v6299 = vld [vmem:[%s18 + $0xac] sm:$0xf]
        %v6300 = vld [vmem:[%s18 + $0xb0] sm:$0xf]
        %v6301 = vld [vmem:[%s18 + $0xb4] sm:$0xf]
        %v6302 = vld [vmem:[%s18 + $0xb8] sm:$0xf]
        %v6303 = vld [vmem:[%s18 + $0xbc] sm:$0xf]
        %v6304 = vld [vmem:[%s18 + $0xc0] sm:$0xf]
        %v6305 = vld [vmem:[%s18 + $0xc4] sm:$0xf]
        %v6306 = vld [vmem:[%s18 + $0xc8] sm:$0xf]
        %v6307 = vld [vmem:[%s18 + $0xcc] sm:$0xf]
        %v6308 = vld [vmem:[%s18 + $0xd0] sm:$0xf]
        %v6309 = vld [vmem:[%s18 + $0xd4] sm:$0xf]
        %v6310 = vld [vmem:[%s18 + $0xd8] sm:$0xf]
        %v6311 = vld [vmem:[%s18 + $0xdc] sm:$0xf]
        %v6312 = vld [vmem:[%s18 + $0xe0] sm:$0xf]
        %v6313 = vld [vmem:[%s18 + $0xe4] sm:$0xf]
        %v6314 = vld [vmem:[%s18 + $0xe8] sm:$0xf]
        %v6315 = vld [vmem:[%s18 + $0xec] sm:$0xf]
        %v6316 = vld [vmem:[%s18 + $0xf0] sm:$0xf]
        %v6317 = vld [vmem:[%s18 + $0xf4] sm:$0xf]
        %v6318 = vld [vmem:[%s18 + $0xf8] sm:$0xf]
        %v6319 = vld [vmem:[%s18 + $0xfc] sm:$0xf]
        %v6320 = vld [vmem:[%s19] sm:$0x1]
        %v6322 = vlaneseq
        %v6323 = vshrl.u32 %v6322, 7
        %v6324 = vsub.s32 0, %v6323
        %v6325 = vrot.slane %v6320, %v6324
        %v6391 = vunpack.c.l.b16 %v6256
        %v6392 = vunpack.c.l.b16 %v6257
        %v6393 = vunpack.c.l.b16 %v6258
        %v6394 = vunpack.c.l.b16 %v6259
        %v6395 = vunpack.c.l.b16 %v6260
        %v6396 = vunpack.c.l.b16 %v6261
        %v6397 = vunpack.c.l.b16 %v6262
        %v6398 = vunpack.c.l.b16 %v6263
        %v6399 = vunpack.c.l.b16 %v6264
        %v6400 = vunpack.c.l.b16 %v6265
        %v6401 = vunpack.c.l.b16 %v6266
        %v6402 = vunpack.c.l.b16 %v6267
        %v6403 = vunpack.c.l.b16 %v6268
        %v6404 = vunpack.c.l.b16 %v6269
        %v6405 = vunpack.c.l.b16 %v6270
        %v6406 = vunpack.c.l.b16 %v6271
        %v6407 = vunpack.c.l.b16 %v6272
        %v6408 = vunpack.c.l.b16 %v6273
        %v6409 = vunpack.c.l.b16 %v6274
        %v6410 = vunpack.c.l.b16 %v6275
        %v6411 = vunpack.c.l.b16 %v6276
        %v6412 = vunpack.c.l.b16 %v6277
        %v6413 = vunpack.c.l.b16 %v6278
        %v6414 = vunpack.c.l.b16 %v6279
        %v6415 = vunpack.c.l.b16 %v6280
        %v6416 = vunpack.c.l.b16 %v6281
        %v6417 = vunpack.c.l.b16 %v6282
        %v6418 = vunpack.c.l.b16 %v6283
        %v6419 = vunpack.c.l.b16 %v6284
        %v6420 = vunpack.c.l.b16 %v6285
        %v6421 = vunpack.c.l.b16 %v6286
        %v6422 = vunpack.c.l.b16 %v6287
        %v6423 = vunpack.c.l.b16 %v6288
        %v6424 = vunpack.c.l.b16 %v6289
        %v6425 = vunpack.c.l.b16 %v6290
        %v6426 = vunpack.c.l.b16 %v6291
        %v6427 = vunpack.c.l.b16 %v6292
        %v6428 = vunpack.c.l.b16 %v6293
        %v6429 = vunpack.c.l.b16 %v6294
        %v6430 = vunpack.c.l.b16 %v6295
        %v6431 = vunpack.c.l.b16 %v6296
        %v6432 = vunpack.c.l.b16 %v6297
        %v6433 = vunpack.c.l.b16 %v6298
        %v6434 = vunpack.c.l.b16 %v6299
        %v6435 = vunpack.c.l.b16 %v6300
        %v6436 = vunpack.c.l.b16 %v6301
        %v6437 = vunpack.c.l.b16 %v6302
        %v6438 = vunpack.c.l.b16 %v6303
        %v6439 = vunpack.c.l.b16 %v6304
        %v6440 = vunpack.c.l.b16 %v6305
        %v6441 = vunpack.c.l.b16 %v6306
        %v6442 = vunpack.c.l.b16 %v6307
        %v6443 = vunpack.c.l.b16 %v6308
        %v6444 = vunpack.c.l.b16 %v6309
        %v6445 = vunpack.c.l.b16 %v6310
        %v6446 = vunpack.c.l.b16 %v6311
        %v6447 = vunpack.c.l.b16 %v6312
        %v6448 = vunpack.c.l.b16 %v6313
        %v6449 = vunpack.c.l.b16 %v6314
        %v6450 = vunpack.c.l.b16 %v6315
        %v6451 = vunpack.c.l.b16 %v6316
        %v6452 = vunpack.c.l.b16 %v6317
        %v6453 = vunpack.c.l.b16 %v6318
        %v6454 = vunpack.c.l.b16 %v6319
        %v6455 = vpack.c.b16 %v6392, %v6391
        %v6456 = vpack.c.b16 %v6394, %v6393
        %v6457 = vpack.c.b16 %v6396, %v6395
        %v6458 = vpack.c.b16 %v6398, %v6397
        %v6459 = vpack.c.b16 %v6400, %v6399
        %v6460 = vpack.c.b16 %v6402, %v6401
        %v6461 = vpack.c.b16 %v6404, %v6403
        %v6462 = vpack.c.b16 %v6406, %v6405
        %v6463 = vpack.c.b16 %v6408, %v6407
        %v6464 = vpack.c.b16 %v6410, %v6409
        %v6465 = vpack.c.b16 %v6412, %v6411
        %v6466 = vpack.c.b16 %v6414, %v6413
        %v6467 = vpack.c.b16 %v6416, %v6415
        %v6468 = vpack.c.b16 %v6418, %v6417
        %v6469 = vpack.c.b16 %v6420, %v6419
        %v6470 = vpack.c.b16 %v6422, %v6421
        %v6471 = vpack.c.b16 %v6424, %v6423
        %v6472 = vpack.c.b16 %v6426, %v6425
        %v6473 = vpack.c.b16 %v6428, %v6427
        %v6474 = vpack.c.b16 %v6430, %v6429
        %v6475 = vpack.c.b16 %v6432, %v6431
        %v6476 = vpack.c.b16 %v6434, %v6433
        %v6477 = vpack.c.b16 %v6436, %v6435
        %v6478 = vpack.c.b16 %v6438, %v6437
        %v6479 = vpack.c.b16 %v6440, %v6439
        %v6480 = vpack.c.b16 %v6442, %v6441
        %v6481 = vpack.c.b16 %v6444, %v6443
        %v6482 = vpack.c.b16 %v6446, %v6445
        %v6483 = vpack.c.b16 %v6448, %v6447
        %v6484 = vpack.c.b16 %v6450, %v6449
        %v6485 = vpack.c.b16 %v6452, %v6451
        %v6486 = vpack.c.b16 %v6454, %v6453
        %6519 = vmatprep.subr.bf16.mxu0 0
        %6520 = vmatpush1.bf16.msra.mxu0 %v6462
        %6521 = vmatprep.subr.bf16.mxu0 0
        %6522 = vmatpush1.bf16.msra.mxu0 %v6461
        %6523 = vmatprep.subr.bf16.mxu0 0
        %6524 = vmatpush1.bf16.msra.mxu0 %v6460
        %6525 = vmatprep.subr.bf16.mxu0 0
        %6526 = vmatpush1.bf16.msra.mxu0 %v6459
        %6527 = vmatprep.subr.bf16.mxu0 0
        %6528 = vmatpush1.bf16.msra.mxu0 %v6458
        %6529 = vmatprep.subr.bf16.mxu0 0
        %6530 = vmatpush1.bf16.msra.mxu0 %v6457
        %6531 = vmatprep.subr.bf16.mxu0 0
        %6532 = vmatpush1.bf16.msra.mxu0 %v6456
        %6533 = vmatprep.subr.bf16.mxu0 0
        %6534 = vmatpush1.bf16.msra.mxu0 %v6455
        %6535 = vmatprep.subr.bf16.mxu0 0
        %6536 = vmatpush2.bf16.msra.mxu0 %v6470
        %6537 = vmatprep.subr.bf16.mxu0 0
        %6538 = vmatpush2.bf16.msra.mxu0 %v6469
        %6539 = vmatprep.subr.bf16.mxu0 0
        %6540 = vmatpush2.bf16.msra.mxu0 %v6468
        %6541 = vmatprep.subr.bf16.mxu0 0
        %6542 = vmatpush2.bf16.msra.mxu0 %v6467
        %6543 = vmatprep.subr.bf16.mxu0 0
        %6544 = vmatpush2.bf16.msra.mxu0 %v6466
        %6545 = vmatprep.subr.bf16.mxu0 0
        %6546 = vmatpush2.bf16.msra.mxu0 %v6465
        %6547 = vmatprep.subr.bf16.mxu0 0
        %6548 = vmatpush2.bf16.msra.mxu0 %v6464
        %6549 = vmatprep.subr.bf16.mxu0 0
        %6550 = vmatpush2.bf16.msra.mxu0 %v6463
        %6551 = vmatprep.mubr.bf16.mxu0 %v6253
        %6552 = vmatmul.mubr.bf16.gmra.mxu0 %v6252
        %v6553 = vpop.f32.mrf.mxu0
        %v6554 = vadd.f32 %v6325, %v6553
        %v6555 = vpop.f32.mrf.mxu0
        %v6556 = vpop.f32.mrf.mxu0
        %v6557 = vpop.f32.mrf.mxu0
        %6558 = vdwg.mxu0
        %6559 = vmatprep.subr.bf16.mxu0 0
        %6560 = vmatpush1.bf16.msra.mxu0 %v6478
        %6561 = vmatprep.subr.bf16.mxu0 0
        %6562 = vmatpush1.bf16.msra.mxu0 %v6477
        %6563 = vmatprep.subr.bf16.mxu0 0
        %6564 = vmatpush1.bf16.msra.mxu0 %v6476
        %6565 = vmatprep.subr.bf16.mxu0 0
        %6566 = vmatpush1.bf16.msra.mxu0 %v6475
        %6567 = vmatprep.subr.bf16.mxu0 0
        %6568 = vmatpush1.bf16.msra.mxu0 %v6474
        %6569 = vmatprep.subr.bf16.mxu0 0
        %6570 = vmatpush1.bf16.msra.mxu0 %v6473
        %6571 = vmatprep.subr.bf16.mxu0 0
        %6572 = vmatpush1.bf16.msra.mxu0 %v6472
        %6573 = vmatprep.subr.bf16.mxu0 0
        %6574 = vmatpush1.bf16.msra.mxu0 %v6471
        %6575 = vmatprep.subr.bf16.mxu0 0
        %6576 = vmatpush2.bf16.msra.mxu0 %v6486
        %6577 = vmatprep.subr.bf16.mxu0 0
        %6578 = vmatpush2.bf16.msra.mxu0 %v6485
        %6579 = vmatprep.subr.bf16.mxu0 0
        %6580 = vmatpush2.bf16.msra.mxu0 %v6484
        %6581 = vmatprep.subr.bf16.mxu0 0
        %6582 = vmatpush2.bf16.msra.mxu0 %v6483
        %6583 = vmatprep.subr.bf16.mxu0 0
        %6584 = vmatpush2.bf16.msra.mxu0 %v6482
        %6585 = vmatprep.subr.bf16.mxu0 0
        %6586 = vmatpush2.bf16.msra.mxu0 %v6481
        %6587 = vmatprep.subr.bf16.mxu0 0
        %6588 = vmatpush2.bf16.msra.mxu0 %v6480
        %6589 = vmatprep.subr.bf16.mxu0 0
        %6590 = vmatpush2.bf16.msra.mxu0 %v6479
        %6591 = vmatprep.mubr.bf16.mxu0 %v6255
        %6592 = vmatmul.mubr.bf16.gmra.mxu0 %v6254
        %v6593 = vpop.f32.mrf.mxu0
        %v6594 = vadd.f32 %v6554, %v6593
        %v6595 = vpop.f32.mrf.mxu0
        %v6596 = vpop.f32.mrf.mxu0
        %v6597 = vpop.f32.mrf.mxu0
        %6598 = vdwg.mxu0
        %v6599 = vmax.f32 %v6594, 0.0
        %v6600 = vpack.c.bf16 %v6599, %v6599
        %v6601 = vld [vmem:[%s20] sm:$0xf]
        %v6602 = vld [vmem:[%s20 + $0x4] sm:$0xf]
        %v6603 = vld [vmem:[%s20 + $0x8] sm:$0xf]
        %v6604 = vld [vmem:[%s20 + $0xc] sm:$0xf]
        %v6605 = vld [vmem:[%s20 + $0x10] sm:$0xf]
        %v6606 = vld [vmem:[%s20 + $0x14] sm:$0xf]
        %v6607 = vld [vmem:[%s20 + $0x18] sm:$0xf]
        %v6608 = vld [vmem:[%s20 + $0x1c] sm:$0xf]
        %v6609 = vld [vmem:[%s20 + $0x20] sm:$0xf]
        %v6610 = vld [vmem:[%s20 + $0x24] sm:$0xf]
        %v6611 = vld [vmem:[%s20 + $0x28] sm:$0xf]
        %v6612 = vld [vmem:[%s20 + $0x2c] sm:$0xf]
        %v6613 = vld [vmem:[%s20 + $0x30] sm:$0xf]
        %v6614 = vld [vmem:[%s20 + $0x34] sm:$0xf]
        %v6615 = vld [vmem:[%s20 + $0x38] sm:$0xf]
        %v6616 = vld [vmem:[%s20 + $0x3c] sm:$0xf]
        %v6617 = vld [vmem:[%s21] sm:$0x1]
        %v6619 = vlaneseq
        %v6620 = vshrl.u32 %v6619, 7
        %v6621 = vsub.s32 0, %v6620
        %v6622 = vrot.slane %v6617, %v6621
        %v6640 = vunpack.c.l.b16 %v6601
        %v6641 = vunpack.c.l.b16 %v6602
        %v6642 = vunpack.c.l.b16 %v6603
        %v6643 = vunpack.c.l.b16 %v6604
        %v6644 = vunpack.c.l.b16 %v6605
        %v6645 = vunpack.c.l.b16 %v6606
        %v6646 = vunpack.c.l.b16 %v6607
        %v6647 = vunpack.c.l.b16 %v6608
        %v6648 = vunpack.c.l.b16 %v6609
        %v6649 = vunpack.c.l.b16 %v6610
        %v6650 = vunpack.c.l.b16 %v6611
        %v6651 = vunpack.c.l.b16 %v6612
        %v6652 = vunpack.c.l.b16 %v6613
        %v6653 = vunpack.c.l.b16 %v6614
        %v6654 = vunpack.c.l.b16 %v6615
        %v6655 = vunpack.c.l.b16 %v6616
        %v6656 = vpack.c.b16 %v6641, %v6640
        %v6657 = vpack.c.b16 %v6643, %v6642
        %v6658 = vpack.c.b16 %v6645, %v6644
        %v6659 = vpack.c.b16 %v6647, %v6646
        %v6660 = vpack.c.b16 %v6649, %v6648
        %v6661 = vpack.c.b16 %v6651, %v6650
        %v6662 = vpack.c.b16 %v6653, %v6652
        %v6663 = vpack.c.b16 %v6655, %v6654
        %6672 = vmatprep.subr.bf16.mxu0 0
        %6673 = vmatpush1.bf16.msra.mxu0 %v6663
        %6674 = vmatprep.subr.bf16.mxu0 0
        %6675 = vmatpush1.bf16.msra.mxu0 %v6662
        %6676 = vmatprep.subr.bf16.mxu0 0
        %6677 = vmatpush1.bf16.msra.mxu0 %v6661
        %6678 = vmatprep.subr.bf16.mxu0 0
        %6679 = vmatpush1.bf16.msra.mxu0 %v6660
        %6680 = vmatprep.subr.bf16.mxu0 0
        %6681 = vmatpush1.bf16.msra.mxu0 %v6659
        %6682 = vmatprep.subr.bf16.mxu0 0
        %6683 = vmatpush1.bf16.msra.mxu0 %v6658
        %6684 = vmatprep.subr.bf16.mxu0 0
        %6685 = vmatpush1.bf16.msra.mxu0 %v6657
        %6686 = vmatprep.subr.bf16.mxu0 0
        %6687 = vmatpush1.bf16.msra.mxu0 %v6656
        %6688 = vmatprep.subr.bf16.mxu0 0
        %6689 = vmatpush2.bf16.msra.mxu0 0
        %6690 = vmatprep.subr.bf16.mxu0 0
        %6691 = vmatpush2.bf16.msra.mxu0 0
        %6692 = vmatprep.subr.bf16.mxu0 0
        %6693 = vmatpush2.bf16.msra.mxu0 0
        %6694 = vmatprep.subr.bf16.mxu0 0
        %6695 = vmatpush2.bf16.msra.mxu0 0
        %6696 = vmatprep.subr.bf16.mxu0 0
        %6697 = vmatpush2.bf16.msra.mxu0 0
        %6698 = vmatprep.subr.bf16.mxu0 0
        %6699 = vmatpush2.bf16.msra.mxu0 0
        %6700 = vmatprep.subr.bf16.mxu0 0
        %6701 = vmatpush2.bf16.msra.mxu0 0
        %6702 = vmatprep.subr.bf16.mxu0 0
        %6703 = vmatpush2.bf16.msra.mxu0 0
        %6704 = vmatprep.mubr.bf16.mxu0 0
        %6705 = vmatmul.mubr.bf16.gmra.mxu0 %v6600
        %v6706 = vpop.f32.mrf.mxu0
        %v6707 = vadd.f32 %v6622, %v6706
        %v6708 = vpop.f32.mrf.mxu0
        %v6709 = vpop.f32.mrf.mxu0
        %v6710 = vpop.f32.mrf.mxu0
        %6711 = vdwg.mxu0
        %6712 = vst [vmem:[%s679] sm:$0xf] %v6707
        %s6713 = sand.u32 %s511, 1
        %s6714 = scalar_lea.sflag [#allocation4], %s6713
        %s6715 = sand.u32 %s511, 1
        %s6716 = smul.addr %s6715, 4
        %s6717 = scalar_lea.vmem [#allocation3], %s6716
        // Predicated region
        $region116: #{cifar10_cnn_forward.1} parent=107 // pred_check
          %p6718 = pneg %p521
        $region117: #{cifar10_cnn_forward.1} parent=107 // pred_check_branch
          %6720 = sbr.rel (%p6718) target = $region119
        $region118: #{cifar10_cnn_forward.1} parent=107 // pred_region
          %s6722 = ssub.s32 64, 64
          %6723 = vsyncadd %s6714, %s6722
          %s6724 = smul.addr %s36, 64
          %s6725 = scalar_lea.hbm %s22, %s6724
          %s6727 = sshll.u32 %s6717, 4
          %s6728 = int_to_ptr.vmem [resolvable:$true] %s6727
          %6730 = dma.vmem_to_hbm [thread:$0]  %s6728, 64, %s6725, %s6714
        $region119: #{cifar10_cnn_forward.1} parent=107 // pred_fallthru
          _
      $region108: #{cifar10_cnn_forward.1} parent=5 // pred_fallthru
        _
      %p6731 = scmp.le.s32.totalorder 2, %s31
      // Predicated region
      $region120: #{cifar10_cnn_forward.1} parent=5 // pred_check
        %p6732 = pneg %p6731
      $region121: #{cifar10_cnn_forward.1} parent=5 // pred_check_branch
        %6734 = sbr.rel (%p6732) target = $region123
      $region122: #{cifar10_cnn_forward.1} parent=5 // pred_region
        %s6735 = ssub.s32 %s31, 2
        // Predicated region
        $region124: #{cifar10_cnn_forward.1} parent=122 // pred_check
          %p6736 = pneg %p527
        $region125: #{cifar10_cnn_forward.1} parent=122 // pred_check_branch
          %6738 = sbr.rel (%p6736) target = $region127
        $region126: #{cifar10_cnn_forward.1} parent=122 // pred_region
          %s6739 = sand.u32 %s512, 1
          %s6740 = scalar_lea.sflag [#allocation4], %s6739
          %s6741 = sand.u32 %s512, 1
          %s6742 = smul.addr %s6741, 4
          %s6743 = scalar_lea.vmem [#allocation3], %s6742
          %6744 = dma.done %s6740, 64
        $region127: #{cifar10_cnn_forward.1} parent=122 // pred_fallthru
          _
      $region123: #{cifar10_cnn_forward.1} parent=5 // pred_fallthru
        _
    $region6: #{cifar10_cnn_forward.1} parent=1 // loop_footer
      %s35 = sadd.s32 1, %s31
    $region7: #{cifar10_cnn_forward.1} parent=1 // loop_footer_branch
      %30 = sbr.rel target = $region3
    $region8: #{cifar10_cnn_forward.1} parent=1 // loop_exit
      _
    %6745 = vsyncpa [#allocation4], 1
    %s6746 = scalar_lea.sflag [#allocation4], 1
    %6747 = vsyncpa %s6746, 1

</llo_original>
